<compile_context>
chip_gen: v7x
topology: tpu7x:2x2x1
jax: 0.10.0
libtpu: 0.0.40
codegen_flags: <defaults>
</compile_context>

<pallas_src>
import jax
import jax.numpy as jnp
from jax.experimental import pallas as pl
from jax.experimental.pallas import tpu as pltpu


INPUT_DIM = 2560
HIDDEN_DIMS = [512, 256, 64]
HEAD_PAD_DIM = 128   # layer-3 width padded 64 -> 128 (full vreg lanes)
OUT_DIM = 1


def mlp_kernel(x_ref,
               w1_ref, b1_ref,
               w2_ref, b2_ref,
               w3_ref, b3_ref,
               w4_ref, b4_ref,
               o_ref):
    # x streams from HBM as f32; cast to bf16 here (VPU) instead of a wrapper-side XLA pass.
    x = x_ref[...].astype(jnp.bfloat16)
    # Layer 1: Linear(2560 -> 512) + ReLU.  bf16 operands, f32 accumulate (MXU).
    h = jnp.dot(x, w1_ref[...], preferred_element_type=jnp.float32)
    h = jnp.maximum(h + b1_ref[...], 0.0)
    # Layer 2: Linear(512 -> 256) + ReLU.
    h = jnp.dot(h.astype(jnp.bfloat16), w2_ref[...], preferred_element_type=jnp.float32)
    h = jnp.maximum(h + b2_ref[...], 0.0)
    # Layer 3: Linear(256 -> 64) + ReLU (output channels zero-padded to 128; pad cols stay 0).
    h = jnp.dot(h.astype(jnp.bfloat16), w3_ref[...], preferred_element_type=jnp.float32)
    h = jnp.maximum(h + b3_ref[...], 0.0)
    # Head: Linear(128(pad) -> 1) as VPU multiply + sublane reduce (keeps the MXU free for the
    # next tile's layer-1 matmul).  Kept in f32 (v5e has no bf16 VALU).  Lane-dense (1, bt) out.
    ht = h.T                                                     # (128, bt)  XLU transpose
    logits = jnp.sum(ht * w4_ref[...], axis=0, keepdims=True)    # (1, bt)
    o_ref[...] = (logits + b4_ref[...]).astype(o_ref.dtype)


def prepare_params(params):
    """Cast matmul weights to bf16, zero-pad layer 3 to 128 wide, keep biases / head in f32."""
    (w1, b1), (w2, b2), (w3, b3), (w4, b4) = params
    pad = HEAD_PAD_DIM - HIDDEN_DIMS[2]                          # 128 - 64
    w1 = w1.astype(jnp.bfloat16)                                 # (2560, 512)
    w2 = w2.astype(jnp.bfloat16)                                 # (512, 256)
    w3 = jnp.pad(w3, ((0, 0), (0, pad))).astype(jnp.bfloat16)    # (256, 128)
    b3 = jnp.pad(b3, ((0, 0), (0, pad))).astype(jnp.float32)     # (1, 128)
    w4 = jnp.pad(w4, ((0, pad), (0, 0))).astype(jnp.float32)     # (128, 1)  VPU head weights
    b1 = b1.astype(jnp.float32)
    b2 = b2.astype(jnp.float32)
    b4 = b4.astype(jnp.float32)                                  # (1, 1)
    return (w1, b1), (w2, b2), (w3, b3), (w4, b4)


def _pick_batch_tile(B):
    # Amortize per-grid-step overhead with a bigger tile at large B, but keep >= 2 grid
    # steps so both v7x TensorCores (and megacore) get work.  Capped at 512: v5e is already
    # <10% step-overhead at 256 and gains nothing from 1024; 512 is also v6e/v7x-friendly.
    if B >= 1024:
        return 512
    return 256


def mlp_classifier_forward(x, params, *, batch_tile=None):
    """x: (B, INPUT_DIM) float32. params: list of (W, b) with W (in, out), b (1, out) float32."""
    B, D = x.shape
    assert D == INPUT_DIM
    if batch_tile is None:
        batch_tile = _pick_batch_tile(B)

    prepared = prepare_params(params)
    (w1, b1), (w2, b2), (w3, b3), (w4, b4) = prepared

    # No wrapper pad / cast: ragged last block handled by Pallas (partial input block rows are
    # row-independent garbage; OOB output lanes are masked on writeback and sliced off below).
    num_tiles = pl.cdiv(B, batch_tile)

    def weight_spec(shape):
        # Grid-invariant block (same for every grid step): single-buffered, no re-DMA.
        return pl.BlockSpec(shape, lambda i: (0, 0), pipeline_mode=pl.Buffered(1))

    weight_bytes = sum(a.size * a.dtype.itemsize for pair in prepared for a in pair)

    # VMEM budget: 2x f32 x tile (double-buffered) + single-buffered weights + in-kernel
    # temporaries (bf16 x copy + f32/bf16 activations) + slack; clamp to <= 48 MiB (v7x safe).
    x_tile_bytes = batch_tile * INPUT_DIM * 4
    interm_bytes = batch_tile * INPUT_DIM * 2 + batch_tile * (512 + 256 + 128) * 6
    vmem_limit = 2 * x_tile_bytes + weight_bytes + interm_bytes + (4 << 20)
    vmem_limit = int(max(32 << 20, min(48 << 20, vmem_limit)))

    flops = 2 * B * (INPUT_DIM * 512 + 512 * 256 + 256 * HEAD_PAD_DIM + HEAD_PAD_DIM)
    bytes_accessed = x.size * x.dtype.itemsize + weight_bytes + B * 4

    out = pl.pallas_call(
        mlp_kernel,
        out_shape=jax.ShapeDtypeStruct((1, B), jnp.float32),     # lane-dense output slab
        grid_spec=pltpu.PrefetchScalarGridSpec(
            num_scalar_prefetch=0,
            grid=(num_tiles,),
            in_specs=[
                pl.BlockSpec((batch_tile, INPUT_DIM), lambda i: (i, 0)),   # f32 x tile
                weight_spec(w1.shape), weight_spec(b1.shape),
                weight_spec(w2.shape), weight_spec(b2.shape),
                weight_spec(w3.shape), weight_spec(b3.shape),
                weight_spec(w4.shape), weight_spec(b4.shape),
            ],
            out_specs=pl.BlockSpec((1, batch_tile), lambda i: (0, i)),
        ),
        compiler_params=pltpu.CompilerParams(
            dimension_semantics=("parallel",),      # megacore / v7x 2-TC sharding over batch
            vmem_limit_bytes=vmem_limit,
        ),
        cost_estimate=pl.CostEstimate(
            flops=flops, transcendentals=0, bytes_accessed=bytes_accessed),
    )(x, w1, b1, w2, b2, w3, b3, w4, b4)

    # Lane-dense (1, B) slab -> (B, 1).  Pure layout plumbing.
    return out[0].reshape(B, OUT_DIM)


def init_params(key):
    """Deterministic init matching nn.Linear shapes (weights stored as (in, out))."""
    dims = [INPUT_DIM] + HIDDEN_DIMS + [OUT_DIM]
    params = []
    for din, dout in zip(dims[:-1], dims[1:]):
        kw, kb, key = jax.random.split(key, 3)
        bound = 1.0 / (din ** 0.5)   # same scale as PyTorch Linear default init
        w = jax.random.uniform(kw, (din, dout), jnp.float32, -bound, bound)
        b = jax.random.uniform(kb, (1, dout), jnp.float32, -bound, bound)
        params.append((w, b))
    return params


def reference_forward(x, params):
    h = x
    for (w, b) in params[:-1]:
        h = jnp.maximum(h @ w + b, 0.0)
    w, b = params[-1]
    return h @ w + b


if __name__ == "__main__":
    key = jax.random.PRNGKey(0)
    kx, kp = jax.random.split(key)

    # Non-multiple of the 256-row tile: exercises the ragged last-block path and gives a
    # 2-step grid (both v7x TensorCores get a tile).
    batch = 300
    x = jax.random.normal(kx, (batch, INPUT_DIM), jnp.float32)
    params = init_params(kp)

    out = mlp_classifier_forward(x, params)
    out = jax.block_until_ready(out)

    ref = reference_forward(x, params)
    assert out.shape == (batch, OUT_DIM), out.shape
    # bf16 matmul operands with f32 accumulation vs f32 reference -> loose tolerance.
    assert jnp.allclose(out, ref, atol=5e-2, rtol=5e-2), "mismatch vs reference"

    print("KERNEL_OK")
</pallas_src>

<mosaic_0001>
module attributes {stable_mosaic.version = 11 : i64} {
  func.func @mlp_kernel(%arg0: i32, %arg1: memref<256x2560xf32, #tpu.memory_space<vmem>>, %arg2: memref<2560x512xbf16, #tpu.memory_space<vmem>>, %arg3: memref<1x512xf32, #tpu.memory_space<vmem>>, %arg4: memref<512x256xbf16, #tpu.memory_space<vmem>>, %arg5: memref<1x256xf32, #tpu.memory_space<vmem>>, %arg6: memref<256x128xbf16, #tpu.memory_space<vmem>>, %arg7: memref<1x128xf32, #tpu.memory_space<vmem>>, %arg8: memref<128x1xf32, #tpu.memory_space<vmem>>, %arg9: memref<1x1xf32, #tpu.memory_space<vmem>>, %arg10: memref<1x256xf32, #tpu.memory_space<vmem>>) attributes {dimension_semantics = [#tpu.dimension_semantics<parallel>], iteration_bounds = array<i64: 2>, scalar_prefetch = 0 : i64, scratch_operands = 0 : i64, tpu.core_type = #tpu.core_type<tc>, window_params = [{transform_indices = @transform_0, window_bounds = array<i64: 256, 2560>}, {pipeline_mode = #tpu.pipeline_mode<synchronous>, transform_indices = @transform_1, window_bounds = array<i64: 2560, 512>}, {pipeline_mode = #tpu.pipeline_mode<synchronous>, transform_indices = @transform_2, window_bounds = array<i64: 1, 512>}, {pipeline_mode = #tpu.pipeline_mode<synchronous>, transform_indices = @transform_3, window_bounds = array<i64: 512, 256>}, {pipeline_mode = #tpu.pipeline_mode<synchronous>, transform_indices = @transform_4, window_bounds = array<i64: 1, 256>}, {pipeline_mode = #tpu.pipeline_mode<synchronous>, transform_indices = @transform_5, window_bounds = array<i64: 256, 128>}, {pipeline_mode = #tpu.pipeline_mode<synchronous>, transform_indices = @transform_6, window_bounds = array<i64: 1, 128>}, {pipeline_mode = #tpu.pipeline_mode<synchronous>, transform_indices = @transform_7, window_bounds = array<i64: 128, 1>}, {pipeline_mode = #tpu.pipeline_mode<synchronous>, transform_indices = @transform_8, window_bounds = array<i64: 1, 1>}, {transform_indices = @transform_9, window_bounds = array<i64: 1, 256>}]} {
    %c0 = arith.constant 0 : index
    %c0_0 = arith.constant 0 : index
    %0 = vector.load %arg1[%c0, %c0_0] : memref<256x2560xf32, #tpu.memory_space<vmem>>, vector<256x2560xf32>
    %1 = arith.truncf %0 : vector<256x2560xf32> to vector<256x2560xbf16>
    %c0_1 = arith.constant 0 : index
    %c0_2 = arith.constant 0 : index
    %2 = vector.load %arg2[%c0_1, %c0_2] : memref<2560x512xbf16, #tpu.memory_space<vmem>>, vector<2560x512xbf16>
    %cst = arith.constant dense<0.000000e+00> : vector<256x512xf32>
    %3 = tpu.matmul %1, %2, %cst {dimension_numbers = #tpu.dot_dimension_numbers<[1], [0], [0], [1], [0, 0, 1, 1], [], []>} : vector<256x2560xbf16>, vector<2560x512xbf16>, vector<256x512xf32> -> vector<256x512xf32>
    %c0_3 = arith.constant 0 : index
    %c0_4 = arith.constant 0 : index
    %4 = vector.load %arg3[%c0_3, %c0_4] : memref<1x512xf32, #tpu.memory_space<vmem>>, vector<1x512xf32>
    %5 = vector.broadcast %4 : vector<1x512xf32> to vector<256x512xf32>
    %6 = arith.addf %3, %5 : vector<256x512xf32>
    %cst_5 = arith.constant 0.000000e+00 : f32
    %7 = vector.broadcast %cst_5 : f32 to vector<256x512xf32>
    %8 = arith.maximumf %6, %7 : vector<256x512xf32>
    %9 = arith.truncf %8 : vector<256x512xf32> to vector<256x512xbf16>
    %c0_6 = arith.constant 0 : index
    %c0_7 = arith.constant 0 : index
    %10 = vector.load %arg4[%c0_6, %c0_7] : memref<512x256xbf16, #tpu.memory_space<vmem>>, vector<512x256xbf16>
    %cst_8 = arith.constant dense<0.000000e+00> : vector<256x256xf32>
    %11 = tpu.matmul %9, %10, %cst_8 {dimension_numbers = #tpu.dot_dimension_numbers<[1], [0], [0], [1], [0, 0, 1, 1], [], []>} : vector<256x512xbf16>, vector<512x256xbf16>, vector<256x256xf32> -> vector<256x256xf32>
    %c0_9 = arith.constant 0 : index
    %c0_10 = arith.constant 0 : index
    %12 = vector.load %arg5[%c0_9, %c0_10] : memref<1x256xf32, #tpu.memory_space<vmem>>, vector<1x256xf32>
    %13 = vector.broadcast %12 : vector<1x256xf32> to vector<256x256xf32>
    %14 = arith.addf %11, %13 : vector<256x256xf32>
    %cst_11 = arith.constant 0.000000e+00 : f32
    %15 = vector.broadcast %cst_11 : f32 to vector<256x256xf32>
    %16 = arith.maximumf %14, %15 : vector<256x256xf32>
    %17 = arith.truncf %16 : vector<256x256xf32> to vector<256x256xbf16>
    %c0_12 = arith.constant 0 : index
    %c0_13 = arith.constant 0 : index
    %18 = vector.load %arg6[%c0_12, %c0_13] : memref<256x128xbf16, #tpu.memory_space<vmem>>, vector<256x128xbf16>
    %cst_14 = arith.constant dense<0.000000e+00> : vector<256x128xf32>
    %19 = tpu.matmul %17, %18, %cst_14 {dimension_numbers = #tpu.dot_dimension_numbers<[1], [0], [0], [1], [0, 0, 1, 1], [], []>} : vector<256x256xbf16>, vector<256x128xbf16>, vector<256x128xf32> -> vector<256x128xf32>
    %c0_15 = arith.constant 0 : index
    %c0_16 = arith.constant 0 : index
    %20 = vector.load %arg7[%c0_15, %c0_16] : memref<1x128xf32, #tpu.memory_space<vmem>>, vector<1x128xf32>
    %21 = vector.broadcast %20 : vector<1x128xf32> to vector<256x128xf32>
    %22 = arith.addf %19, %21 : vector<256x128xf32>
    %cst_17 = arith.constant 0.000000e+00 : f32
    %23 = vector.broadcast %cst_17 : f32 to vector<256x128xf32>
    %24 = arith.maximumf %22, %23 : vector<256x128xf32>
    %25 = tpu.transpose %24, [1, 0] : vector<256x128xf32> -> vector<128x256xf32>
    %c0_18 = arith.constant 0 : index
    %c0_19 = arith.constant 0 : index
    %26 = vector.load %arg8[%c0_18, %c0_19] : memref<128x1xf32, #tpu.memory_space<vmem>>, vector<128x1xf32>
    %27 = vector.broadcast %26 : vector<128x1xf32> to vector<128x256xf32>
    %28 = arith.mulf %25, %27 : vector<128x256xf32>
    %cst_20 = arith.constant dense<0.000000e+00> : vector<256xf32>
    %29 = vector.multi_reduction <add>, %28, %cst_20 [0] : vector<128x256xf32> to vector<256xf32>
    %30 = vector.shape_cast %29 : vector<256xf32> to vector<1x256xf32>
    %c0_21 = arith.constant 0 : index
    %c0_22 = arith.constant 0 : index
    %31 = vector.load %arg9[%c0_21, %c0_22] : memref<1x1xf32, #tpu.memory_space<vmem>>, vector<1x1xf32>
    %32 = vector.broadcast %31 : vector<1x1xf32> to vector<1x256xf32>
    %33 = arith.addf %30, %32 : vector<1x256xf32>
    %c0_23 = arith.constant 0 : index
    %c0_24 = arith.constant 0 : index
    %34 = vector.load %arg10[%c0_23, %c0_24] : memref<1x256xf32, #tpu.memory_space<vmem>>, vector<1x256xf32>
    tpu.vector_store %arg10[%c0_23, %c0_24], %33 {strides = array<i32>} : memref<1x256xf32, #tpu.memory_space<vmem>>, vector<1x256xf32>,
    return
  }
  func.func @transform_0(%arg0: i32) -> (i32, i32) {
    %c0_i32 = arith.constant 0 : i32
    %c0_i32_0 = arith.constant 0 : i32
    return %arg0, %c0_i32 : i32, i32
  }
  func.func @transform_1(%arg0: i32) -> (i32, i32) {
    %c0_i32 = arith.constant 0 : i32
    %c0_i32_0 = arith.constant 0 : i32
    %c0_i32_1 = arith.constant 0 : i32
    return %c0_i32, %c0_i32_0 : i32, i32
  }
  func.func @transform_2(%arg0: i32) -> (i32, i32) {
    %c0_i32 = arith.constant 0 : i32
    %c0_i32_0 = arith.constant 0 : i32
    %c0_i32_1 = arith.constant 0 : i32
    return %c0_i32, %c0_i32_0 : i32, i32
  }
  func.func @transform_3(%arg0: i32) -> (i32, i32) {
    %c0_i32 = arith.constant 0 : i32
    %c0_i32_0 = arith.constant 0 : i32
    %c0_i32_1 = arith.constant 0 : i32
    return %c0_i32, %c0_i32_0 : i32, i32
  }
  func.func @transform_4(%arg0: i32) -> (i32, i32) {
    %c0_i32 = arith.constant 0 : i32
    %c0_i32_0 = arith.constant 0 : i32
    %c0_i32_1 = arith.constant 0 : i32
    return %c0_i32, %c0_i32_0 : i32, i32
  }
  func.func @transform_5(%arg0: i32) -> (i32, i32) {
    %c0_i32 = arith.constant 0 : i32
    %c0_i32_0 = arith.constant 0 : i32
    %c0_i32_1 = arith.constant 0 : i32
    return %c0_i32, %c0_i32_0 : i32, i32
  }
  func.func @transform_6(%arg0: i32) -> (i32, i32) {
    %c0_i32 = arith.constant 0 : i32
    %c0_i32_0 = arith.constant 0 : i32
    %c0_i32_1 = arith.constant 0 : i32
    return %c0_i32, %c0_i32_0 : i32, i32
  }
  func.func @transform_7(%arg0: i32) -> (i32, i32) {
    %c0_i32 = arith.constant 0 : i32
    %c0_i32_0 = arith.constant 0 : i32
    %c0_i32_1 = arith.constant 0 : i32
    return %c0_i32, %c0_i32_0 : i32, i32
  }
  func.func @transform_8(%arg0: i32) -> (i32, i32) {
    %c0_i32 = arith.constant 0 : i32
    %c0_i32_0 = arith.constant 0 : i32
    %c0_i32_1 = arith.constant 0 : i32
    return %c0_i32, %c0_i32_0 : i32, i32
  }
  func.func @transform_9(%arg0: i32) -> (i32, i32) {
    %c0_i32 = arith.constant 0 : i32
    %c0_i32_0 = arith.constant 0 : i32
    return %c0_i32, %arg0 : i32, i32
  }
}

</mosaic_0001>

<llo_original>
// kernel: tpu_custom_call.1
$region0: #{tpu_custom_call.1}
  #allocation0 [shape = 'u32[]', space=smem, size = 0x4, offset = 0x4, fixed_abs, tag = 'smem constant byte address 0x4 - core index']
  #allocation1 [shape = 'u32[144,128]{1,0:T(1,128)}', space=vmem, size = 0x12000, scoped, tag = 'internal scratch']
  #allocation2 [shape = 'f32[1,1]{1,0:T(1,128)S(1)}', space=vmem, size = 0x200, scoped, tag = 'scoped memory for tpu_custom_call.1']
  %s0 = inlined_call_operand.hbm [shape: f32[300,2560], index: 0, kind: input, shape index: {}]
  %s1 = inlined_call_operand.hbm [shape: bf16[2560,512], index: 1, kind: input, shape index: {}]
  %s2 = inlined_call_operand.hbm [shape: f32[1,512], index: 2, kind: input, shape index: {}]
  %s3 = inlined_call_operand.hbm [shape: bf16[512,256], index: 3, kind: input, shape index: {}]
  %s4 = inlined_call_operand.hbm [shape: f32[1,256], index: 4, kind: input, shape index: {}]
  %s5 = inlined_call_operand.hbm [shape: bf16[256,128], index: 5, kind: input, shape index: {}]
  %s6 = inlined_call_operand.hbm [shape: f32[1,128], index: 6, kind: input, shape index: {}]
  %s7 = inlined_call_operand.vmem [shape: f32[128,1], index: 7, kind: input, shape index: {}]
  %s8 = inlined_call_operand.<no memory space> [shape: f32[1,1], index: 8, kind: input, shape index: {}]
  %s9 = inlined_call_operand.hbm [shape: f32[1,300], index: 9, kind: output, shape index: {}]
  %s10 = sld [smem:[#allocation0]]
  $region97: #{tpu_custom_call.1} parent=0
    _
  %s12 = ssub.s32 1, %s10
  %s13 = scalar_select 0, %s12, %s10
  %v14 = vstv %s8
  %15 = vst [vmem:[#allocation2] sm:$0x1] %v14
  $region1: #{tpu_custom_call.1} parent=0
    #allocation3 [shape = 'u8[5242880]{0}', space=vmem, size = 0x500000, scoped, tag = 'input window, operand 0']
    #allocation4 [shape = 's32[2]{0}', space=sflag, size = 0x8, scoped, tag = 'scoped memory for tpu_custom_call.1']
    #allocation5 [shape = 's32[2]{0}', space=sflag, size = 0x8, scoped, tag = 'scoped memory for tpu_custom_call.1']
    #allocation6 [shape = 'u8[2621440]{0}', space=vmem, size = 0x280000, scoped, tag = 'input window, operand 1, single buffered']
    #allocation7 [shape = 's32[1]{0}', space=sflag, size = 0x4, scoped, tag = 'scoped memory for tpu_custom_call.1']
    #allocation8 [shape = 'u8[2048]{0}', space=vmem, size = 0x800, scoped, tag = 'input window, operand 2, single buffered']
    #allocation9 [shape = 'u8[262144]{0}', space=vmem, size = 0x40000, scoped, tag = 'input window, operand 3, single buffered']
    #allocation10 [shape = 's32[1]{0}', space=sflag, size = 0x4, scoped, tag = 'scoped memory for tpu_custom_call.1']
    #allocation11 [shape = 'u8[1024]{0}', space=vmem, size = 0x400, scoped, tag = 'input window, operand 4, single buffered']
    #allocation12 [shape = 'u8[65536]{0}', space=vmem, size = 0x10000, scoped, tag = 'input window, operand 5, single buffered']
    #allocation13 [shape = 's32[1]{0}', space=sflag, size = 0x4, scoped, tag = 'scoped memory for tpu_custom_call.1']
    #allocation14 [shape = 'u8[512]{0}', space=vmem, size = 0x400, scoped, tag = 'input window, operand 6, single buffered']
    #allocation15 [shape = 'u8[2048]{0}', space=vmem, size = 0x800, scoped, tag = 'output window, operand 0']
    %16 = vsyncpa [#allocation4], 0
    %s17 = scalar_lea.sflag [#allocation4], 1
    %18 = vsyncpa %s17, 0
    %19 = vsyncpa [#allocation7], 0
    %20 = vsyncpa [#allocation10], 0
    %21 = vsyncpa [#allocation13], 0
    %22 = vsyncpa [#allocation5], 0
    %s23 = scalar_lea.sflag [#allocation5], 1
    %24 = vsyncpa %s23, 0
    loop: start=0, step=1, limit=4
    $region2: #{tpu_custom_call.1} parent=1 // loop_pre_header
      _
    $region3: #{tpu_custom_call.1} parent=1 // loop_header
      %s26 = sphi 0, %s30
      %p27 = scmp.ge.s32.totalorder %s26, 4
      %s36 = sphi 0, %s38
      %s39 = sphi 0, %s36
      %s40 = sphi 0, %s39
      %s56 = sphi 0, %s40
      %s60 = sphi 0, %s60
      %s62 = sphi 0, %s60
      %s63 = sphi 0, %s62
      %s77 = sphi 0, %s63
      %s81 = sphi 0, %s81
      %s83 = sphi 0, %s81
      %s84 = sphi 0, %s83
      %s98 = sphi 0, %s84
      %s102 = sphi 0, %s102
      %s104 = sphi 0, %s102
      %s105 = sphi 0, %s104
      %s119 = sphi 0, %s105
      %s123 = sphi 0, %s123
      %s125 = sphi 0, %s123
      %s126 = sphi 0, %s125
      %s140 = sphi 0, %s126
      %s144 = sphi 0, %s144
      %s146 = sphi 0, %s144
      %s147 = sphi 0, %s146
      %s161 = sphi 0, %s147
      %s165 = sphi 0, %s165
      %s167 = sphi 0, %s165
      %s168 = sphi 0, %s167
      %s182 = sphi 0, %s168
      %s186 = sphi 0, %s186
      %s188 = sphi 0, %s186
      %s189 = sphi 0, %s188
      %s203 = sphi 0, %s189
      %s207 = sphi 0, %s207
      %s209 = sphi 0, %s207
      %s210 = sphi 0, %s209
      %s224 = sphi 0, %s210
      %s230 = sphi 0, %s232
      %s233 = sphi 0, %s230
      %s234 = sphi 0, %s233
      %s250 = sphi 0, %s234
    $region4: #{tpu_custom_call.1} parent=1 // loop_header_branch
      %29 = sbr.rel (%p27) target = $region8
    $region5: #{tpu_custom_call.1} parent=1 // loop_body
      %s31 = ssub.s32 %s26, 1
      %s32 = ssub.s32 %s26, 2
      %s33 = sadd.s32 %s26, 1
      %s34 = ssub.s32 %s26, %s33
      %p35 = scmp.eq.s32.totalorder %s34, 0
      %s37 = sadd.s32 %s36, 1
      %s38 = scalar_select %p35, %s36, %s37
      %p41 = pneg %p35
      %p42 = scmp.eq.s32.totalorder %s26, 1
      %p43 = por %p41, %p42
      %p44 = scmp.ne.s32.totalorder %s36, %s39
      %p45 = scmp.eq.s32.totalorder %s26, 0
      %p46 = por %p44, %p45
      %p47 = scmp.ne.s32.totalorder %s36, %s39
      %p48 = scmp.eq.s32.totalorder %s31, 1
      %p49 = por %p47, %p48
      %p50 = scmp.ne.s32.totalorder %s39, %s40
      %p51 = scmp.eq.s32.totalorder %s31, 0
      %p52 = por %p50, %p51
      %p53 = scmp.ne.s32.totalorder %s39, %s40
      %p54 = scmp.eq.s32.totalorder %s32, 1
      %p55 = por %p53, %p54
      %p57 = scmp.ne.s32.totalorder %s40, %s56
      %p58 = scmp.eq.s32.totalorder %s32, 0
      %p59 = por %p57, %p58
      %s61 = sadd.s32 %s60, 1
      %p64 = scmp.eq.s32.totalorder %s26, 1
      %p65 = scmp.ne.s32.totalorder %s60, %s62
      %p66 = scmp.eq.s32.totalorder %s26, 0
      %p67 = por %p65, %p66
      %p68 = scmp.ne.s32.totalorder %s60, %s62
      %p69 = scmp.eq.s32.totalorder %s31, 1
      %p70 = por %p68, %p69
      %p71 = scmp.ne.s32.totalorder %s62, %s63
      %p72 = scmp.eq.s32.totalorder %s31, 0
      %p73 = por %p71, %p72
      %p74 = scmp.ne.s32.totalorder %s62, %s63
      %p75 = scmp.eq.s32.totalorder %s32, 1
      %p76 = por %p74, %p75
      %p78 = scmp.ne.s32.totalorder %s63, %s77
      %p79 = scmp.eq.s32.totalorder %s32, 0
      %p80 = por %p78, %p79
      %s82 = sadd.s32 %s81, 1
      %p85 = scmp.eq.s32.totalorder %s26, 1
      %p86 = scmp.ne.s32.totalorder %s81, %s83
      %p87 = scmp.eq.s32.totalorder %s26, 0
      %p88 = por %p86, %p87
      %p89 = scmp.ne.s32.totalorder %s81, %s83
      %p90 = scmp.eq.s32.totalorder %s31, 1
      %p91 = por %p89, %p90
      %p92 = scmp.ne.s32.totalorder %s83, %s84
      %p93 = scmp.eq.s32.totalorder %s31, 0
      %p94 = por %p92, %p93
      %p95 = scmp.ne.s32.totalorder %s83, %s84
      %p96 = scmp.eq.s32.totalorder %s32, 1
      %p97 = por %p95, %p96
      %p99 = scmp.ne.s32.totalorder %s84, %s98
      %p100 = scmp.eq.s32.totalorder %s32, 0
      %p101 = por %p99, %p100
      %s103 = sadd.s32 %s102, 1
      %p106 = scmp.eq.s32.totalorder %s26, 1
      %p107 = scmp.ne.s32.totalorder %s102, %s104
      %p108 = scmp.eq.s32.totalorder %s26, 0
      %p109 = por %p107, %p108
      %p110 = scmp.ne.s32.totalorder %s102, %s104
      %p111 = scmp.eq.s32.totalorder %s31, 1
      %p112 = por %p110, %p111
      %p113 = scmp.ne.s32.totalorder %s104, %s105
      %p114 = scmp.eq.s32.totalorder %s31, 0
      %p115 = por %p113, %p114
      %p116 = scmp.ne.s32.totalorder %s104, %s105
      %p117 = scmp.eq.s32.totalorder %s32, 1
      %p118 = por %p116, %p117
      %p120 = scmp.ne.s32.totalorder %s105, %s119
      %p121 = scmp.eq.s32.totalorder %s32, 0
      %p122 = por %p120, %p121
      %s124 = sadd.s32 %s123, 1
      %p127 = scmp.eq.s32.totalorder %s26, 1
      %p128 = scmp.ne.s32.totalorder %s123, %s125
      %p129 = scmp.eq.s32.totalorder %s26, 0
      %p130 = por %p128, %p129
      %p131 = scmp.ne.s32.totalorder %s123, %s125
      %p132 = scmp.eq.s32.totalorder %s31, 1
      %p133 = por %p131, %p132
      %p134 = scmp.ne.s32.totalorder %s125, %s126
      %p135 = scmp.eq.s32.totalorder %s31, 0
      %p136 = por %p134, %p135
      %p137 = scmp.ne.s32.totalorder %s125, %s126
      %p138 = scmp.eq.s32.totalorder %s32, 1
      %p139 = por %p137, %p138
      %p141 = scmp.ne.s32.totalorder %s126, %s140
      %p142 = scmp.eq.s32.totalorder %s32, 0
      %p143 = por %p141, %p142
      %s145 = sadd.s32 %s144, 1
      %p148 = scmp.eq.s32.totalorder %s26, 1
      %p149 = scmp.ne.s32.totalorder %s144, %s146
      %p150 = scmp.eq.s32.totalorder %s26, 0
      %p151 = por %p149, %p150
      %p152 = scmp.ne.s32.totalorder %s144, %s146
      %p153 = scmp.eq.s32.totalorder %s31, 1
      %p154 = por %p152, %p153
      %p155 = scmp.ne.s32.totalorder %s146, %s147
      %p156 = scmp.eq.s32.totalorder %s31, 0
      %p157 = por %p155, %p156
      %p158 = scmp.ne.s32.totalorder %s146, %s147
      %p159 = scmp.eq.s32.totalorder %s32, 1
      %p160 = por %p158, %p159
      %p162 = scmp.ne.s32.totalorder %s147, %s161
      %p163 = scmp.eq.s32.totalorder %s32, 0
      %p164 = por %p162, %p163
      %s166 = sadd.s32 %s165, 1
      %p169 = scmp.eq.s32.totalorder %s26, 1
      %p170 = scmp.ne.s32.totalorder %s165, %s167
      %p171 = scmp.eq.s32.totalorder %s26, 0
      %p172 = por %p170, %p171
      %p173 = scmp.ne.s32.totalorder %s165, %s167
      %p174 = scmp.eq.s32.totalorder %s31, 1
      %p175 = por %p173, %p174
      %p176 = scmp.ne.s32.totalorder %s167, %s168
      %p177 = scmp.eq.s32.totalorder %s31, 0
      %p178 = por %p176, %p177
      %p179 = scmp.ne.s32.totalorder %s167, %s168
      %p180 = scmp.eq.s32.totalorder %s32, 1
      %p181 = por %p179, %p180
      %p183 = scmp.ne.s32.totalorder %s168, %s182
      %p184 = scmp.eq.s32.totalorder %s32, 0
      %p185 = por %p183, %p184
      %s187 = sadd.s32 %s186, 1
      %p190 = scmp.eq.s32.totalorder %s26, 1
      %p191 = scmp.ne.s32.totalorder %s186, %s188
      %p192 = scmp.eq.s32.totalorder %s26, 0
      %p193 = por %p191, %p192
      %p194 = scmp.ne.s32.totalorder %s186, %s188
      %p195 = scmp.eq.s32.totalorder %s31, 1
      %p196 = por %p194, %p195
      %p197 = scmp.ne.s32.totalorder %s188, %s189
      %p198 = scmp.eq.s32.totalorder %s31, 0
      %p199 = por %p197, %p198
      %p200 = scmp.ne.s32.totalorder %s188, %s189
      %p201 = scmp.eq.s32.totalorder %s32, 1
      %p202 = por %p200, %p201
      %p204 = scmp.ne.s32.totalorder %s189, %s203
      %p205 = scmp.eq.s32.totalorder %s32, 0
      %p206 = por %p204, %p205
      %s208 = sadd.s32 %s207, 1
      %p211 = scmp.eq.s32.totalorder %s26, 1
      %p212 = scmp.ne.s32.totalorder %s207, %s209
      %p213 = scmp.eq.s32.totalorder %s26, 0
      %p214 = por %p212, %p213
      %p215 = scmp.ne.s32.totalorder %s207, %s209
      %p216 = scmp.eq.s32.totalorder %s31, 1
      %p217 = por %p215, %p216
      %p218 = scmp.ne.s32.totalorder %s209, %s210
      %p219 = scmp.eq.s32.totalorder %s31, 0
      %p220 = por %p218, %p219
      %p221 = scmp.ne.s32.totalorder %s209, %s210
      %p222 = scmp.eq.s32.totalorder %s32, 1
      %p223 = por %p221, %p222
      %p225 = scmp.ne.s32.totalorder %s210, %s224
      %p226 = scmp.eq.s32.totalorder %s32, 0
      %p227 = por %p225, %p226
      %s228 = ssub.s32 %s26, %s33
      %p229 = scmp.eq.s32.totalorder %s228, 0
      %s231 = sadd.s32 %s230, 1
      %s232 = scalar_select %p229, %s230, %s231
      %p235 = pneg %p229
      %p236 = scmp.eq.s32.totalorder %s26, 1
      %p237 = por %p235, %p236
      %p238 = scmp.ne.s32.totalorder %s230, %s233
      %p239 = scmp.eq.s32.totalorder %s26, 0
      %p240 = por %p238, %p239
      %p241 = scmp.ne.s32.totalorder %s230, %s233
      %p242 = scmp.eq.s32.totalorder %s31, 1
      %p243 = por %p241, %p242
      %p244 = scmp.ne.s32.totalorder %s233, %s234
      %p245 = scmp.eq.s32.totalorder %s31, 0
      %p246 = por %p244, %p245
      %p247 = scmp.ne.s32.totalorder %s233, %s234
      %p248 = scmp.eq.s32.totalorder %s32, 1
      %p249 = por %p247, %p248
      %p251 = scmp.ne.s32.totalorder %s234, %s250
      %p252 = scmp.eq.s32.totalorder %s32, 0
      %p253 = por %p251, %p252
      %p254 = scmp.le.s32.totalorder 1, %s26
      %p255 = scmp.lt.s32.totalorder %s26, 3
      %p256 = pnand %p254, %p255
      %p257 = pneg %p256
      // Predicated region
      $region9: #{tpu_custom_call.1} parent=5 // pred_check
        _
      $region10: #{tpu_custom_call.1} parent=5 // pred_check_branch
        %259 = sbr.rel (%p256) target = $region12
      $region11: #{tpu_custom_call.1} parent=5 // pred_region
        %s260 = ssub.s32 %s26, 1
        // Predicated region
        $region13: #{tpu_custom_call.1} parent=11 // pred_check
          %p261 = pneg %p73
        $region14: #{tpu_custom_call.1} parent=11 // pred_check_branch
          %263 = sbr.rel (%p261) target = $region16
        $region15: #{tpu_custom_call.1} parent=11 // pred_region
          %s265 = ssub.s32 81920, 81920
          %266 = vsyncadd [#allocation7], %s265
          %s267 = sshll.u32 [#allocation6], 4
          %s268 = int_to_ptr.vmem [resolvable:$true] %s267
          %273 = dma.hbm_to_vmem [thread:$0]  %s1, 81920, %s268, [#allocation7], 256, 256, 16
        $region16: #{tpu_custom_call.1} parent=11 // pred_fallthru
          _
        // Predicated region
        $region17: #{tpu_custom_call.1} parent=11 // pred_check
          %p274 = pneg %p94
        $region18: #{tpu_custom_call.1} parent=11 // pred_check_branch
          %276 = sbr.rel (%p274) target = $region20
        $region19: #{tpu_custom_call.1} parent=11 // pred_region
          %s278 = ssub.s32 64, 64
          %279 = vsyncadd [#allocation7], %s278
          %s281 = sshll.u32 [#allocation8], 4
          %s282 = int_to_ptr.vmem [resolvable:$true] %s281
          %284 = dma.hbm_to_vmem [thread:$0]  %s2, 64, %s282, [#allocation7]
        $region20: #{tpu_custom_call.1} parent=11 // pred_fallthru
          _
        // Predicated region
        $region21: #{tpu_custom_call.1} parent=11 // pred_check
          %p285 = pneg %p115
        $region22: #{tpu_custom_call.1} parent=11 // pred_check_branch
          %287 = sbr.rel (%p285) target = $region24
        $region23: #{tpu_custom_call.1} parent=11 // pred_region
          %s289 = ssub.s32 8192, 8192
          %290 = vsyncadd [#allocation10], %s289
          %s291 = sshll.u32 [#allocation9], 4
          %s292 = int_to_ptr.vmem [resolvable:$true] %s291
          %297 = dma.hbm_to_vmem [thread:$0]  %s3, 8192, %s292, [#allocation10], 128, 128, 8
        $region24: #{tpu_custom_call.1} parent=11 // pred_fallthru
          _
        // Predicated region
        $region25: #{tpu_custom_call.1} parent=11 // pred_check
          %p298 = pneg %p136
        $region26: #{tpu_custom_call.1} parent=11 // pred_check_branch
          %300 = sbr.rel (%p298) target = $region28
        $region27: #{tpu_custom_call.1} parent=11 // pred_region
          %s302 = ssub.s32 32, 32
          %303 = vsyncadd [#allocation10], %s302
          %s305 = sshll.u32 [#allocation11], 4
          %s306 = int_to_ptr.vmem [resolvable:$true] %s305
          %308 = dma.hbm_to_vmem [thread:$0]  %s4, 32, %s306, [#allocation10]
        $region28: #{tpu_custom_call.1} parent=11 // pred_fallthru
          _
        // Predicated region
        $region29: #{tpu_custom_call.1} parent=11 // pred_check
          %p309 = pneg %p157
        $region30: #{tpu_custom_call.1} parent=11 // pred_check_branch
          %311 = sbr.rel (%p309) target = $region32
        $region31: #{tpu_custom_call.1} parent=11 // pred_region
          %s313 = ssub.s32 2048, 2048
          %314 = vsyncadd [#allocation13], %s313
          %s315 = sshll.u32 [#allocation12], 4
          %s316 = int_to_ptr.vmem [resolvable:$true] %s315
          %321 = dma.hbm_to_vmem [thread:$0]  %s5, 2048, %s316, [#allocation13], 64, 64, 4
        $region32: #{tpu_custom_call.1} parent=11 // pred_fallthru
          _
        // Predicated region
        $region33: #{tpu_custom_call.1} parent=11 // pred_check
          %p322 = pneg %p178
        $region34: #{tpu_custom_call.1} parent=11 // pred_check_branch
          %324 = sbr.rel (%p322) target = $region36
        $region35: #{tpu_custom_call.1} parent=11 // pred_region
          %s326 = ssub.s32 16, 16
          %327 = vsyncadd [#allocation13], %s326
          %s329 = sshll.u32 [#allocation14], 4
          %s330 = int_to_ptr.vmem [resolvable:$true] %s329
          %332 = dma.hbm_to_vmem [thread:$0]  %s6, 16, %s330, [#allocation13]
        $region36: #{tpu_custom_call.1} parent=11 // pred_fallthru
          _
        // Predicated region
        $region37: #{tpu_custom_call.1} parent=11 // pred_check
          %p333 = pneg %p199
        $region38: #{tpu_custom_call.1} parent=11 // pred_check_branch
          %335 = sbr.rel (%p333) target = $region40
        $region39: #{tpu_custom_call.1} parent=11 // pred_region
          _
        $region40: #{tpu_custom_call.1} parent=11 // pred_fallthru
          _
        // Predicated region
        $region41: #{tpu_custom_call.1} parent=11 // pred_check
          %p336 = pneg %p220
        $region42: #{tpu_custom_call.1} parent=11 // pred_check_branch
          %338 = sbr.rel (%p336) target = $region44
        $region43: #{tpu_custom_call.1} parent=11 // pred_region
          _
        $region44: #{tpu_custom_call.1} parent=11 // pred_fallthru
          _
      $region12: #{tpu_custom_call.1} parent=5 // pred_fallthru
        _
      %p339 = scmp.lt.s32.totalorder %s26, 2
      // Predicated region
      $region45: #{tpu_custom_call.1} parent=5 // pred_check
        %p340 = pneg %p339
      $region46: #{tpu_custom_call.1} parent=5 // pred_check_branch
        %342 = sbr.rel (%p340) target = $region48
      $region47: #{tpu_custom_call.1} parent=5 // pred_region
        // Predicated region
        $region49: #{tpu_custom_call.1} parent=47 // pred_check
          %p343 = pneg %p46
        $region50: #{tpu_custom_call.1} parent=47 // pred_check_branch
          %345 = sbr.rel (%p343) target = $region52
        $region51: #{tpu_custom_call.1} parent=47 // pred_region
          %s346 = sand.u32 %s36, 1
          %s347 = scalar_lea.sflag [#allocation4], %s346
          %s348 = sand.u32 %s36, 1
          %s349 = smul.addr %s348, 5120
          %s350 = scalar_lea.vmem [#allocation3], %s349
          %s351 = smul.u32 32, %s26
          %s352 = ssub.s32 38, %s351
          %p353 = scmp.lt.s32.totalorder %s352, 32
          %s354 = scalar_select %p353, %s352, 32
          %s355 = smul.u32 128, %s354
          %s356 = smul.u32 %s355, 20
          %s358 = ssub.s32 81920, %s356
          %359 = vsyncadd %s347, %s358
          %p360 = scmp.ne.s32.totalorder 0, %s356
          %s361 = smul.addr %s351, 20
          %s362 = smul.addr %s361, 128
          %s363 = scalar_lea.hbm %s0, %s362
          %s364 = smul.u32 160, %s354
          %s365 = sshll.u32 %s350, 4
          %s366 = int_to_ptr.vmem [resolvable:$true] %s365
          %s367 = sshll.u32 %s364, 4
          %371 = dma.hbm_to_vmem [thread:$0]  (%p360), %s363, %s367, %s366, %s347, 2560, 2560, 160
        $region52: #{tpu_custom_call.1} parent=47 // pred_fallthru
          _
      $region48: #{tpu_custom_call.1} parent=5 // pred_fallthru
        _
      %p372 = scmp.le.s32.totalorder 1, %s26
      %p373 = scmp.lt.s32.totalorder %s26, 3
      %p374 = pnand %p372, %p373
      %p375 = pneg %p374
      // Predicated region
      $region53: #{tpu_custom_call.1} parent=5 // pred_check
        _
      $region54: #{tpu_custom_call.1} parent=5 // pred_check_branch
        %377 = sbr.rel (%p374) target = $region56
      $region55: #{tpu_custom_call.1} parent=5 // pred_region
        %s378 = ssub.s32 %s26, 1
        %s379 = sand.u32 %s39, 1
        %s380 = scalar_lea.sflag [#allocation4], %s379
        %s381 = sand.u32 %s39, 1
        %s382 = smul.addr %s381, 5120
        %s383 = scalar_lea.vmem [#allocation3], %s382
        // Predicated region
        $region57: #{tpu_custom_call.1} parent=55 // pred_check
          %p384 = pneg %p52
        $region58: #{tpu_custom_call.1} parent=55 // pred_check_branch
          %386 = sbr.rel (%p384) target = $region60
        $region59: #{tpu_custom_call.1} parent=55 // pred_region
          %387 = dma.done %s380, 81920
        $region60: #{tpu_custom_call.1} parent=55 // pred_fallthru
          _
        // Predicated region
        $region61: #{tpu_custom_call.1} parent=55 // pred_check
          %p388 = pneg %p73
        $region62: #{tpu_custom_call.1} parent=55 // pred_check_branch
          %390 = sbr.rel (%p388) target = $region64
        $region63: #{tpu_custom_call.1} parent=55 // pred_region
          %391 = dma.done [#allocation7], 81920
        $region64: #{tpu_custom_call.1} parent=55 // pred_fallthru
          _
        // Predicated region
        $region65: #{tpu_custom_call.1} parent=55 // pred_check
          %p392 = pneg %p94
        $region66: #{tpu_custom_call.1} parent=55 // pred_check_branch
          %394 = sbr.rel (%p392) target = $region68
        $region67: #{tpu_custom_call.1} parent=55 // pred_region
          %395 = dma.done [#allocation7], 64
        $region68: #{tpu_custom_call.1} parent=55 // pred_fallthru
          _
        // Predicated region
        $region69: #{tpu_custom_call.1} parent=55 // pred_check
          %p396 = pneg %p115
        $region70: #{tpu_custom_call.1} parent=55 // pred_check_branch
          %398 = sbr.rel (%p396) target = $region72
        $region71: #{tpu_custom_call.1} parent=55 // pred_region
          %399 = dma.done [#allocation10], 8192
        $region72: #{tpu_custom_call.1} parent=55 // pred_fallthru
          _
        // Predicated region
        $region73: #{tpu_custom_call.1} parent=55 // pred_check
          %p400 = pneg %p136
        $region74: #{tpu_custom_call.1} parent=55 // pred_check_branch
          %402 = sbr.rel (%p400) target = $region76
        $region75: #{tpu_custom_call.1} parent=55 // pred_region
          %403 = dma.done [#allocation10], 32
        $region76: #{tpu_custom_call.1} parent=55 // pred_fallthru
          _
        // Predicated region
        $region77: #{tpu_custom_call.1} parent=55 // pred_check
          %p404 = pneg %p157
        $region78: #{tpu_custom_call.1} parent=55 // pred_check_branch
          %406 = sbr.rel (%p404) target = $region80
        $region79: #{tpu_custom_call.1} parent=55 // pred_region
          %407 = dma.done [#allocation13], 2048
        $region80: #{tpu_custom_call.1} parent=55 // pred_fallthru
          _
        // Predicated region
        $region81: #{tpu_custom_call.1} parent=55 // pred_check
          %p408 = pneg %p178
        $region82: #{tpu_custom_call.1} parent=55 // pred_check_branch
          %410 = sbr.rel (%p408) target = $region84
        $region83: #{tpu_custom_call.1} parent=55 // pred_region
          %411 = dma.done [#allocation13], 16
        $region84: #{tpu_custom_call.1} parent=55 // pred_fallthru
          _
        %s412 = sand.u32 %s39, 1
        %s413 = scalar_lea.sflag [#allocation4], %s412
        %s414 = sand.u32 %s39, 1
        %s415 = smul.addr %s414, 5120
        %s416 = scalar_lea.vmem [#allocation3], %s415
        %p417 = pneg %p52
        %p418 = pneg %p49
        %p419 = pneg %p73
        %p420 = pneg %p70
        %p421 = pneg %p94
        %p422 = pneg %p91
        %p423 = pneg %p115
        %p424 = pneg %p112
        %p425 = pneg %p136
        %p426 = pneg %p133
        %p427 = pneg %p157
        %p428 = pneg %p154
        %p429 = pneg %p178
        %p430 = pneg %p175
        %p431 = pneg %p199
        %p432 = pneg %p196
        %p433 = pneg %p220
        %p434 = pneg %p217
        %p435 = pneg %p246
        %p436 = pneg %p243
        %s437 = sand.u32 %s233, 1
        %s438 = scalar_lea.sflag [#allocation5], %s437
        %s439 = sand.u32 %s233, 1
        %s440 = smul.addr %s439, 2
        %s441 = scalar_lea.vmem [#allocation15], %s440
        %s442 = smul.u32 32, %s31
        %s443 = ssub.s32 38, %s442
        %p444 = scmp.lt.s32.totalorder %s443, 32
        %s445 = scalar_select %p444, %s443, 32
        %s446 = smul.u32 128, %s445
        %s447 = smul.u32 %s446, 20
        %s448 = smul.u32 2, %s31
        %s449 = ssub.s32 3, %s448
        %p450 = scmp.lt.s32.totalorder %s449, 2
        %s451 = scalar_select %p450, %s449, 2
        %s452 = smul.u32 16, %s451
        %v454 = vld [vmem:[%s383] sm:$0xff]
        %v455 = vld [vmem:[%s383 + $0x8] sm:$0xff]
        %v456 = vld [vmem:[%s383 + $0x10] sm:$0xff]
        %v457 = vld [vmem:[%s383 + $0x18] sm:$0xff]
        %v458 = vld [vmem:[%s383 + $0x20] sm:$0xff]
        %v459 = vld [vmem:[%s383 + $0x28] sm:$0xff]
        %v460 = vld [vmem:[%s383 + $0x30] sm:$0xff]
        %v461 = vld [vmem:[%s383 + $0x38] sm:$0xff]
        %v462 = vld [vmem:[%s383 + $0x40] sm:$0xff]
        %v463 = vld [vmem:[%s383 + $0x48] sm:$0xff]
        %v464 = vld [vmem:[%s383 + $0x50] sm:$0xff]
        %v465 = vld [vmem:[%s383 + $0x58] sm:$0xff]
        %v466 = vld [vmem:[%s383 + $0x60] sm:$0xff]
        %v467 = vld [vmem:[%s383 + $0x68] sm:$0xff]
        %v468 = vld [vmem:[%s383 + $0x70] sm:$0xff]
        %v469 = vld [vmem:[%s383 + $0x78] sm:$0xff]
        %v470 = vld [vmem:[%s383 + $0x80] sm:$0xff]
        %v471 = vld [vmem:[%s383 + $0x88] sm:$0xff]
        %v472 = vld [vmem:[%s383 + $0x90] sm:$0xff]
        %v473 = vld [vmem:[%s383 + $0x98] sm:$0xff]
        %v474 = vld [vmem:[%s383 + $0xa0] sm:$0xff]
        %v475 = vld [vmem:[%s383 + $0xa8] sm:$0xff]
        %v476 = vld [vmem:[%s383 + $0xb0] sm:$0xff]
        %v477 = vld [vmem:[%s383 + $0xb8] sm:$0xff]
        %v478 = vld [vmem:[%s383 + $0xc0] sm:$0xff]
        %v479 = vld [vmem:[%s383 + $0xc8] sm:$0xff]
        %v480 = vld [vmem:[%s383 + $0xd0] sm:$0xff]
        %v481 = vld [vmem:[%s383 + $0xd8] sm:$0xff]
        %v482 = vld [vmem:[%s383 + $0xe0] sm:$0xff]
        %v483 = vld [vmem:[%s383 + $0xe8] sm:$0xff]
        %v484 = vld [vmem:[%s383 + $0xf0] sm:$0xff]
        %v485 = vld [vmem:[%s383 + $0xf8] sm:$0xff]
        %v486 = vld [vmem:[%s383 + $0x100] sm:$0xff]
        %v487 = vld [vmem:[%s383 + $0x108] sm:$0xff]
        %v488 = vld [vmem:[%s383 + $0x110] sm:$0xff]
        %v489 = vld [vmem:[%s383 + $0x118] sm:$0xff]
        %v490 = vld [vmem:[%s383 + $0x120] sm:$0xff]
        %v491 = vld [vmem:[%s383 + $0x128] sm:$0xff]
        %v492 = vld [vmem:[%s383 + $0x130] sm:$0xff]
        %v493 = vld [vmem:[%s383 + $0x138] sm:$0xff]
        %v494 = vld [vmem:[%s383 + $0x140] sm:$0xff]
        %v495 = vld [vmem:[%s383 + $0x148] sm:$0xff]
        %v496 = vld [vmem:[%s383 + $0x150] sm:$0xff]
        %v497 = vld [vmem:[%s383 + $0x158] sm:$0xff]
        %v498 = vld [vmem:[%s383 + $0x160] sm:$0xff]
        %v499 = vld [vmem:[%s383 + $0x168] sm:$0xff]
        %v500 = vld [vmem:[%s383 + $0x170] sm:$0xff]
        %v501 = vld [vmem:[%s383 + $0x178] sm:$0xff]
        %v502 = vld [vmem:[%s383 + $0x180] sm:$0xff]
        %v503 = vld [vmem:[%s383 + $0x188] sm:$0xff]
        %v504 = vld [vmem:[%s383 + $0x190] sm:$0xff]
        %v505 = vld [vmem:[%s383 + $0x198] sm:$0xff]
        %v506 = vld [vmem:[%s383 + $0x1a0] sm:$0xff]
        %v507 = vld [vmem:[%s383 + $0x1a8] sm:$0xff]
        %v508 = vld [vmem:[%s383 + $0x1b0] sm:$0xff]
        %v509 = vld [vmem:[%s383 + $0x1b8] sm:$0xff]
        %v510 = vld [vmem:[%s383 + $0x1c0] sm:$0xff]
        %v511 = vld [vmem:[%s383 + $0x1c8] sm:$0xff]
        %v512 = vld [vmem:[%s383 + $0x1d0] sm:$0xff]
        %v513 = vld [vmem:[%s383 + $0x1d8] sm:$0xff]
        %v514 = vld [vmem:[%s383 + $0x1e0] sm:$0xff]
        %v515 = vld [vmem:[%s383 + $0x1e8] sm:$0xff]
        %v516 = vld [vmem:[%s383 + $0x1f0] sm:$0xff]
        %v517 = vld [vmem:[%s383 + $0x1f8] sm:$0xff]
        %v518 = vld [vmem:[%s383 + $0x200] sm:$0xff]
        %v519 = vld [vmem:[%s383 + $0x208] sm:$0xff]
        %v520 = vld [vmem:[%s383 + $0x210] sm:$0xff]
        %v521 = vld [vmem:[%s383 + $0x218] sm:$0xff]
        %v522 = vld [vmem:[%s383 + $0x220] sm:$0xff]
        %v523 = vld [vmem:[%s383 + $0x228] sm:$0xff]
        %v524 = vld [vmem:[%s383 + $0x230] sm:$0xff]
        %v525 = vld [vmem:[%s383 + $0x238] sm:$0xff]
        %v526 = vld [vmem:[%s383 + $0x240] sm:$0xff]
        %v527 = vld [vmem:[%s383 + $0x248] sm:$0xff]
        %v528 = vld [vmem:[%s383 + $0x250] sm:$0xff]
        %v529 = vld [vmem:[%s383 + $0x258] sm:$0xff]
        %v530 = vld [vmem:[%s383 + $0x260] sm:$0xff]
        %v531 = vld [vmem:[%s383 + $0x268] sm:$0xff]
        %v532 = vld [vmem:[%s383 + $0x270] sm:$0xff]
        %v533 = vld [vmem:[%s383 + $0x278] sm:$0xff]
        %v534 = vld [vmem:[%s383 + $0x280] sm:$0xff]
        %v535 = vld [vmem:[%s383 + $0x288] sm:$0xff]
        %v536 = vld [vmem:[%s383 + $0x290] sm:$0xff]
        %v537 = vld [vmem:[%s383 + $0x298] sm:$0xff]
        %v538 = vld [vmem:[%s383 + $0x2a0] sm:$0xff]
        %v539 = vld [vmem:[%s383 + $0x2a8] sm:$0xff]
        %v540 = vld [vmem:[%s383 + $0x2b0] sm:$0xff]
        %v541 = vld [vmem:[%s383 + $0x2b8] sm:$0xff]
        %v542 = vld [vmem:[%s383 + $0x2c0] sm:$0xff]
        %v543 = vld [vmem:[%s383 + $0x2c8] sm:$0xff]
        %v544 = vld [vmem:[%s383 + $0x2d0] sm:$0xff]
        %v545 = vld [vmem:[%s383 + $0x2d8] sm:$0xff]
        %v546 = vld [vmem:[%s383 + $0x2e0] sm:$0xff]
        %v547 = vld [vmem:[%s383 + $0x2e8] sm:$0xff]
        %v548 = vld [vmem:[%s383 + $0x2f0] sm:$0xff]
        %v549 = vld [vmem:[%s383 + $0x2f8] sm:$0xff]
        %v550 = vld [vmem:[%s383 + $0x300] sm:$0xff]
        %v551 = vld [vmem:[%s383 + $0x308] sm:$0xff]
        %v552 = vld [vmem:[%s383 + $0x310] sm:$0xff]
        %v553 = vld [vmem:[%s383 + $0x318] sm:$0xff]
        %v554 = vld [vmem:[%s383 + $0x320] sm:$0xff]
        %v555 = vld [vmem:[%s383 + $0x328] sm:$0xff]
        %v556 = vld [vmem:[%s383 + $0x330] sm:$0xff]
        %v557 = vld [vmem:[%s383 + $0x338] sm:$0xff]
        %v558 = vld [vmem:[%s383 + $0x340] sm:$0xff]
        %v559 = vld [vmem:[%s383 + $0x348] sm:$0xff]
        %v560 = vld [vmem:[%s383 + $0x350] sm:$0xff]
        %v561 = vld [vmem:[%s383 + $0x358] sm:$0xff]
        %v562 = vld [vmem:[%s383 + $0x360] sm:$0xff]
        %v563 = vld [vmem:[%s383 + $0x368] sm:$0xff]
        %v564 = vld [vmem:[%s383 + $0x370] sm:$0xff]
        %v565 = vld [vmem:[%s383 + $0x378] sm:$0xff]
        %v566 = vld [vmem:[%s383 + $0x380] sm:$0xff]
        %v567 = vld [vmem:[%s383 + $0x388] sm:$0xff]
        %v568 = vld [vmem:[%s383 + $0x390] sm:$0xff]
        %v569 = vld [vmem:[%s383 + $0x398] sm:$0xff]
        %v570 = vld [vmem:[%s383 + $0x3a0] sm:$0xff]
        %v571 = vld [vmem:[%s383 + $0x3a8] sm:$0xff]
        %v572 = vld [vmem:[%s383 + $0x3b0] sm:$0xff]
        %v573 = vld [vmem:[%s383 + $0x3b8] sm:$0xff]
        %v574 = vld [vmem:[%s383 + $0x3c0] sm:$0xff]
        %v575 = vld [vmem:[%s383 + $0x3c8] sm:$0xff]
        %v576 = vld [vmem:[%s383 + $0x3d0] sm:$0xff]
        %v577 = vld [vmem:[%s383 + $0x3d8] sm:$0xff]
        %v578 = vld [vmem:[%s383 + $0x3e0] sm:$0xff]
        %v579 = vld [vmem:[%s383 + $0x3e8] sm:$0xff]
        %v580 = vld [vmem:[%s383 + $0x3f0] sm:$0xff]
        %v581 = vld [vmem:[%s383 + $0x3f8] sm:$0xff]
        %v582 = vld [vmem:[%s383 + $0x400] sm:$0xff]
        %v583 = vld [vmem:[%s383 + $0x408] sm:$0xff]
        %v584 = vld [vmem:[%s383 + $0x410] sm:$0xff]
        %v585 = vld [vmem:[%s383 + $0x418] sm:$0xff]
        %v586 = vld [vmem:[%s383 + $0x420] sm:$0xff]
        %v587 = vld [vmem:[%s383 + $0x428] sm:$0xff]
        %v588 = vld [vmem:[%s383 + $0x430] sm:$0xff]
        %v589 = vld [vmem:[%s383 + $0x438] sm:$0xff]
        %v590 = vld [vmem:[%s383 + $0x440] sm:$0xff]
        %v591 = vld [vmem:[%s383 + $0x448] sm:$0xff]
        %v592 = vld [vmem:[%s383 + $0x450] sm:$0xff]
        %v593 = vld [vmem:[%s383 + $0x458] sm:$0xff]
        %v594 = vld [vmem:[%s383 + $0x460] sm:$0xff]
        %v595 = vld [vmem:[%s383 + $0x468] sm:$0xff]
        %v596 = vld [vmem:[%s383 + $0x470] sm:$0xff]
        %v597 = vld [vmem:[%s383 + $0x478] sm:$0xff]
        %v598 = vld [vmem:[%s383 + $0x480] sm:$0xff]
        %v599 = vld [vmem:[%s383 + $0x488] sm:$0xff]
        %v600 = vld [vmem:[%s383 + $0x490] sm:$0xff]
        %v601 = vld [vmem:[%s383 + $0x498] sm:$0xff]
        %v602 = vld [vmem:[%s383 + $0x4a0] sm:$0xff]
        %v603 = vld [vmem:[%s383 + $0x4a8] sm:$0xff]
        %v604 = vld [vmem:[%s383 + $0x4b0] sm:$0xff]
        %v605 = vld [vmem:[%s383 + $0x4b8] sm:$0xff]
        %v606 = vld [vmem:[%s383 + $0x4c0] sm:$0xff]
        %v607 = vld [vmem:[%s383 + $0x4c8] sm:$0xff]
        %v608 = vld [vmem:[%s383 + $0x4d0] sm:$0xff]
        %v609 = vld [vmem:[%s383 + $0x4d8] sm:$0xff]
        %v610 = vld [vmem:[%s383 + $0x4e0] sm:$0xff]
        %v611 = vld [vmem:[%s383 + $0x4e8] sm:$0xff]
        %v612 = vld [vmem:[%s383 + $0x4f0] sm:$0xff]
        %v613 = vld [vmem:[%s383 + $0x4f8] sm:$0xff]
        %v614 = vld [vmem:[%s383 + $0x500] sm:$0xff]
        %v615 = vld [vmem:[%s383 + $0x508] sm:$0xff]
        %v616 = vld [vmem:[%s383 + $0x510] sm:$0xff]
        %v617 = vld [vmem:[%s383 + $0x518] sm:$0xff]
        %v618 = vld [vmem:[%s383 + $0x520] sm:$0xff]
        %v619 = vld [vmem:[%s383 + $0x528] sm:$0xff]
        %v620 = vld [vmem:[%s383 + $0x530] sm:$0xff]
        %v621 = vld [vmem:[%s383 + $0x538] sm:$0xff]
        %v622 = vld [vmem:[%s383 + $0x540] sm:$0xff]
        %v623 = vld [vmem:[%s383 + $0x548] sm:$0xff]
        %v624 = vld [vmem:[%s383 + $0x550] sm:$0xff]
        %v625 = vld [vmem:[%s383 + $0x558] sm:$0xff]
        %v626 = vld [vmem:[%s383 + $0x560] sm:$0xff]
        %v627 = vld [vmem:[%s383 + $0x568] sm:$0xff]
        %v628 = vld [vmem:[%s383 + $0x570] sm:$0xff]
        %v629 = vld [vmem:[%s383 + $0x578] sm:$0xff]
        %v630 = vld [vmem:[%s383 + $0x580] sm:$0xff]
        %v631 = vld [vmem:[%s383 + $0x588] sm:$0xff]
        %v632 = vld [vmem:[%s383 + $0x590] sm:$0xff]
        %v633 = vld [vmem:[%s383 + $0x598] sm:$0xff]
        %v634 = vld [vmem:[%s383 + $0x5a0] sm:$0xff]
        %v635 = vld [vmem:[%s383 + $0x5a8] sm:$0xff]
        %v636 = vld [vmem:[%s383 + $0x5b0] sm:$0xff]
        %v637 = vld [vmem:[%s383 + $0x5b8] sm:$0xff]
        %v638 = vld [vmem:[%s383 + $0x5c0] sm:$0xff]
        %v639 = vld [vmem:[%s383 + $0x5c8] sm:$0xff]
        %v640 = vld [vmem:[%s383 + $0x5d0] sm:$0xff]
        %v641 = vld [vmem:[%s383 + $0x5d8] sm:$0xff]
        %v642 = vld [vmem:[%s383 + $0x5e0] sm:$0xff]
        %v643 = vld [vmem:[%s383 + $0x5e8] sm:$0xff]
        %v644 = vld [vmem:[%s383 + $0x5f0] sm:$0xff]
        %v645 = vld [vmem:[%s383 + $0x5f8] sm:$0xff]
        %v646 = vld [vmem:[%s383 + $0x600] sm:$0xff]
        %v647 = vld [vmem:[%s383 + $0x608] sm:$0xff]
        %v648 = vld [vmem:[%s383 + $0x610] sm:$0xff]
        %v649 = vld [vmem:[%s383 + $0x618] sm:$0xff]
        %v650 = vld [vmem:[%s383 + $0x620] sm:$0xff]
        %v651 = vld [vmem:[%s383 + $0x628] sm:$0xff]
        %v652 = vld [vmem:[%s383 + $0x630] sm:$0xff]
        %v653 = vld [vmem:[%s383 + $0x638] sm:$0xff]
        %v654 = vld [vmem:[%s383 + $0x640] sm:$0xff]
        %v655 = vld [vmem:[%s383 + $0x648] sm:$0xff]
        %v656 = vld [vmem:[%s383 + $0x650] sm:$0xff]
        %v657 = vld [vmem:[%s383 + $0x658] sm:$0xff]
        %v658 = vld [vmem:[%s383 + $0x660] sm:$0xff]
        %v659 = vld [vmem:[%s383 + $0x668] sm:$0xff]
        %v660 = vld [vmem:[%s383 + $0x670] sm:$0xff]
        %v661 = vld [vmem:[%s383 + $0x678] sm:$0xff]
        %v662 = vld [vmem:[%s383 + $0x680] sm:$0xff]
        %v663 = vld [vmem:[%s383 + $0x688] sm:$0xff]
        %v664 = vld [vmem:[%s383 + $0x690] sm:$0xff]
        %v665 = vld [vmem:[%s383 + $0x698] sm:$0xff]
        %v666 = vld [vmem:[%s383 + $0x6a0] sm:$0xff]
        %v667 = vld [vmem:[%s383 + $0x6a8] sm:$0xff]
        %v668 = vld [vmem:[%s383 + $0x6b0] sm:$0xff]
        %v669 = vld [vmem:[%s383 + $0x6b8] sm:$0xff]
        %v670 = vld [vmem:[%s383 + $0x6c0] sm:$0xff]
        %v671 = vld [vmem:[%s383 + $0x6c8] sm:$0xff]
        %v672 = vld [vmem:[%s383 + $0x6d0] sm:$0xff]
        %v673 = vld [vmem:[%s383 + $0x6d8] sm:$0xff]
        %v674 = vld [vmem:[%s383 + $0x6e0] sm:$0xff]
        %v675 = vld [vmem:[%s383 + $0x6e8] sm:$0xff]
        %v676 = vld [vmem:[%s383 + $0x6f0] sm:$0xff]
        %v677 = vld [vmem:[%s383 + $0x6f8] sm:$0xff]
        %v678 = vld [vmem:[%s383 + $0x700] sm:$0xff]
        %v679 = vld [vmem:[%s383 + $0x708] sm:$0xff]
        %v680 = vld [vmem:[%s383 + $0x710] sm:$0xff]
        %v681 = vld [vmem:[%s383 + $0x718] sm:$0xff]
        %v682 = vld [vmem:[%s383 + $0x720] sm:$0xff]
        %v683 = vld [vmem:[%s383 + $0x728] sm:$0xff]
        %v684 = vld [vmem:[%s383 + $0x730] sm:$0xff]
        %v685 = vld [vmem:[%s383 + $0x738] sm:$0xff]
        %v686 = vld [vmem:[%s383 + $0x740] sm:$0xff]
        %v687 = vld [vmem:[%s383 + $0x748] sm:$0xff]
        %v688 = vld [vmem:[%s383 + $0x750] sm:$0xff]
        %v689 = vld [vmem:[%s383 + $0x758] sm:$0xff]
        %v690 = vld [vmem:[%s383 + $0x760] sm:$0xff]
        %v691 = vld [vmem:[%s383 + $0x768] sm:$0xff]
        %v692 = vld [vmem:[%s383 + $0x770] sm:$0xff]
        %v693 = vld [vmem:[%s383 + $0x778] sm:$0xff]
        %v694 = vld [vmem:[%s383 + $0x780] sm:$0xff]
        %v695 = vld [vmem:[%s383 + $0x788] sm:$0xff]
        %v696 = vld [vmem:[%s383 + $0x790] sm:$0xff]
        %v697 = vld [vmem:[%s383 + $0x798] sm:$0xff]
        %v698 = vld [vmem:[%s383 + $0x7a0] sm:$0xff]
        %v699 = vld [vmem:[%s383 + $0x7a8] sm:$0xff]
        %v700 = vld [vmem:[%s383 + $0x7b0] sm:$0xff]
        %v701 = vld [vmem:[%s383 + $0x7b8] sm:$0xff]
        %v702 = vld [vmem:[%s383 + $0x7c0] sm:$0xff]
        %v703 = vld [vmem:[%s383 + $0x7c8] sm:$0xff]
        %v704 = vld [vmem:[%s383 + $0x7d0] sm:$0xff]
        %v705 = vld [vmem:[%s383 + $0x7d8] sm:$0xff]
        %v706 = vld [vmem:[%s383 + $0x7e0] sm:$0xff]
        %v707 = vld [vmem:[%s383 + $0x7e8] sm:$0xff]
        %v708 = vld [vmem:[%s383 + $0x7f0] sm:$0xff]
        %v709 = vld [vmem:[%s383 + $0x7f8] sm:$0xff]
        %v710 = vld [vmem:[%s383 + $0x800] sm:$0xff]
        %v711 = vld [vmem:[%s383 + $0x808] sm:$0xff]
        %v712 = vld [vmem:[%s383 + $0x810] sm:$0xff]
        %v713 = vld [vmem:[%s383 + $0x818] sm:$0xff]
        %v714 = vld [vmem:[%s383 + $0x820] sm:$0xff]
        %v715 = vld [vmem:[%s383 + $0x828] sm:$0xff]
        %v716 = vld [vmem:[%s383 + $0x830] sm:$0xff]
        %v717 = vld [vmem:[%s383 + $0x838] sm:$0xff]
        %v718 = vld [vmem:[%s383 + $0x840] sm:$0xff]
        %v719 = vld [vmem:[%s383 + $0x848] sm:$0xff]
        %v720 = vld [vmem:[%s383 + $0x850] sm:$0xff]
        %v721 = vld [vmem:[%s383 + $0x858] sm:$0xff]
        %v722 = vld [vmem:[%s383 + $0x860] sm:$0xff]
        %v723 = vld [vmem:[%s383 + $0x868] sm:$0xff]
        %v724 = vld [vmem:[%s383 + $0x870] sm:$0xff]
        %v725 = vld [vmem:[%s383 + $0x878] sm:$0xff]
        %v726 = vld [vmem:[%s383 + $0x880] sm:$0xff]
        %v727 = vld [vmem:[%s383 + $0x888] sm:$0xff]
        %v728 = vld [vmem:[%s383 + $0x890] sm:$0xff]
        %v729 = vld [vmem:[%s383 + $0x898] sm:$0xff]
        %v730 = vld [vmem:[%s383 + $0x8a0] sm:$0xff]
        %v731 = vld [vmem:[%s383 + $0x8a8] sm:$0xff]
        %v732 = vld [vmem:[%s383 + $0x8b0] sm:$0xff]
        %v733 = vld [vmem:[%s383 + $0x8b8] sm:$0xff]
        %v734 = vld [vmem:[%s383 + $0x8c0] sm:$0xff]
        %v735 = vld [vmem:[%s383 + $0x8c8] sm:$0xff]
        %v736 = vld [vmem:[%s383 + $0x8d0] sm:$0xff]
        %v737 = vld [vmem:[%s383 + $0x8d8] sm:$0xff]
        %v738 = vld [vmem:[%s383 + $0x8e0] sm:$0xff]
        %v739 = vld [vmem:[%s383 + $0x8e8] sm:$0xff]
        %v740 = vld [vmem:[%s383 + $0x8f0] sm:$0xff]
        %v741 = vld [vmem:[%s383 + $0x8f8] sm:$0xff]
        %v742 = vld [vmem:[%s383 + $0x900] sm:$0xff]
        %v743 = vld [vmem:[%s383 + $0x908] sm:$0xff]
        %v744 = vld [vmem:[%s383 + $0x910] sm:$0xff]
        %v745 = vld [vmem:[%s383 + $0x918] sm:$0xff]
        %v746 = vld [vmem:[%s383 + $0x920] sm:$0xff]
        %v747 = vld [vmem:[%s383 + $0x928] sm:$0xff]
        %v748 = vld [vmem:[%s383 + $0x930] sm:$0xff]
        %v749 = vld [vmem:[%s383 + $0x938] sm:$0xff]
        %v750 = vld [vmem:[%s383 + $0x940] sm:$0xff]
        %v751 = vld [vmem:[%s383 + $0x948] sm:$0xff]
        %v752 = vld [vmem:[%s383 + $0x950] sm:$0xff]
        %v753 = vld [vmem:[%s383 + $0x958] sm:$0xff]
        %v754 = vld [vmem:[%s383 + $0x960] sm:$0xff]
        %v755 = vld [vmem:[%s383 + $0x968] sm:$0xff]
        %v756 = vld [vmem:[%s383 + $0x970] sm:$0xff]
        %v757 = vld [vmem:[%s383 + $0x978] sm:$0xff]
        %v758 = vld [vmem:[%s383 + $0x980] sm:$0xff]
        %v759 = vld [vmem:[%s383 + $0x988] sm:$0xff]
        %v760 = vld [vmem:[%s383 + $0x990] sm:$0xff]
        %v761 = vld [vmem:[%s383 + $0x998] sm:$0xff]
        %v762 = vld [vmem:[%s383 + $0x9a0] sm:$0xff]
        %v763 = vld [vmem:[%s383 + $0x9a8] sm:$0xff]
        %v764 = vld [vmem:[%s383 + $0x9b0] sm:$0xff]
        %v765 = vld [vmem:[%s383 + $0x9b8] sm:$0xff]
        %v766 = vld [vmem:[%s383 + $0x9c0] sm:$0xff]
        %v767 = vld [vmem:[%s383 + $0x9c8] sm:$0xff]
        %v768 = vld [vmem:[%s383 + $0x9d0] sm:$0xff]
        %v769 = vld [vmem:[%s383 + $0x9d8] sm:$0xff]
        %v770 = vld [vmem:[%s383 + $0x9e0] sm:$0xff]
        %v771 = vld [vmem:[%s383 + $0x9e8] sm:$0xff]
        %v772 = vld [vmem:[%s383 + $0x9f0] sm:$0xff]
        %v773 = vld [vmem:[%s383 + $0x9f8] sm:$0xff]
        %v774 = vld [vmem:[%s383 + $0xa00] sm:$0xff]
        %v775 = vld [vmem:[%s383 + $0xa08] sm:$0xff]
        %v776 = vld [vmem:[%s383 + $0xa10] sm:$0xff]
        %v777 = vld [vmem:[%s383 + $0xa18] sm:$0xff]
        %v778 = vld [vmem:[%s383 + $0xa20] sm:$0xff]
        %v779 = vld [vmem:[%s383 + $0xa28] sm:$0xff]
        %v780 = vld [vmem:[%s383 + $0xa30] sm:$0xff]
        %v781 = vld [vmem:[%s383 + $0xa38] sm:$0xff]
        %v782 = vld [vmem:[%s383 + $0xa40] sm:$0xff]
        %v783 = vld [vmem:[%s383 + $0xa48] sm:$0xff]
        %v784 = vld [vmem:[%s383 + $0xa50] sm:$0xff]
        %v785 = vld [vmem:[%s383 + $0xa58] sm:$0xff]
        %v786 = vld [vmem:[%s383 + $0xa60] sm:$0xff]
        %v787 = vld [vmem:[%s383 + $0xa68] sm:$0xff]
        %v788 = vld [vmem:[%s383 + $0xa70] sm:$0xff]
        %v789 = vld [vmem:[%s383 + $0xa78] sm:$0xff]
        %v790 = vld [vmem:[%s383 + $0xa80] sm:$0xff]
        %v791 = vld [vmem:[%s383 + $0xa88] sm:$0xff]
        %v792 = vld [vmem:[%s383 + $0xa90] sm:$0xff]
        %v793 = vld [vmem:[%s383 + $0xa98] sm:$0xff]
        %v794 = vld [vmem:[%s383 + $0xaa0] sm:$0xff]
        %v795 = vld [vmem:[%s383 + $0xaa8] sm:$0xff]
        %v796 = vld [vmem:[%s383 + $0xab0] sm:$0xff]
        %v797 = vld [vmem:[%s383 + $0xab8] sm:$0xff]
        %v798 = vld [vmem:[%s383 + $0xac0] sm:$0xff]
        %v799 = vld [vmem:[%s383 + $0xac8] sm:$0xff]
        %v800 = vld [vmem:[%s383 + $0xad0] sm:$0xff]
        %v801 = vld [vmem:[%s383 + $0xad8] sm:$0xff]
        %v802 = vld [vmem:[%s383 + $0xae0] sm:$0xff]
        %v803 = vld [vmem:[%s383 + $0xae8] sm:$0xff]
        %v804 = vld [vmem:[%s383 + $0xaf0] sm:$0xff]
        %v805 = vld [vmem:[%s383 + $0xaf8] sm:$0xff]
        %v806 = vld [vmem:[%s383 + $0xb00] sm:$0xff]
        %v807 = vld [vmem:[%s383 + $0xb08] sm:$0xff]
        %v808 = vld [vmem:[%s383 + $0xb10] sm:$0xff]
        %v809 = vld [vmem:[%s383 + $0xb18] sm:$0xff]
        %v810 = vld [vmem:[%s383 + $0xb20] sm:$0xff]
        %v811 = vld [vmem:[%s383 + $0xb28] sm:$0xff]
        %v812 = vld [vmem:[%s383 + $0xb30] sm:$0xff]
        %v813 = vld [vmem:[%s383 + $0xb38] sm:$0xff]
        %v814 = vld [vmem:[%s383 + $0xb40] sm:$0xff]
        %v815 = vld [vmem:[%s383 + $0xb48] sm:$0xff]
        %v816 = vld [vmem:[%s383 + $0xb50] sm:$0xff]
        %v817 = vld [vmem:[%s383 + $0xb58] sm:$0xff]
        %v818 = vld [vmem:[%s383 + $0xb60] sm:$0xff]
        %v819 = vld [vmem:[%s383 + $0xb68] sm:$0xff]
        %v820 = vld [vmem:[%s383 + $0xb70] sm:$0xff]
        %v821 = vld [vmem:[%s383 + $0xb78] sm:$0xff]
        %v822 = vld [vmem:[%s383 + $0xb80] sm:$0xff]
        %v823 = vld [vmem:[%s383 + $0xb88] sm:$0xff]
        %v824 = vld [vmem:[%s383 + $0xb90] sm:$0xff]
        %v825 = vld [vmem:[%s383 + $0xb98] sm:$0xff]
        %v826 = vld [vmem:[%s383 + $0xba0] sm:$0xff]
        %v827 = vld [vmem:[%s383 + $0xba8] sm:$0xff]
        %v828 = vld [vmem:[%s383 + $0xbb0] sm:$0xff]
        %v829 = vld [vmem:[%s383 + $0xbb8] sm:$0xff]
        %v830 = vld [vmem:[%s383 + $0xbc0] sm:$0xff]
        %v831 = vld [vmem:[%s383 + $0xbc8] sm:$0xff]
        %v832 = vld [vmem:[%s383 + $0xbd0] sm:$0xff]
        %v833 = vld [vmem:[%s383 + $0xbd8] sm:$0xff]
        %v834 = vld [vmem:[%s383 + $0xbe0] sm:$0xff]
        %v835 = vld [vmem:[%s383 + $0xbe8] sm:$0xff]
        %v836 = vld [vmem:[%s383 + $0xbf0] sm:$0xff]
        %v837 = vld [vmem:[%s383 + $0xbf8] sm:$0xff]
        %v838 = vld [vmem:[%s383 + $0xc00] sm:$0xff]
        %v839 = vld [vmem:[%s383 + $0xc08] sm:$0xff]
        %v840 = vld [vmem:[%s383 + $0xc10] sm:$0xff]
        %v841 = vld [vmem:[%s383 + $0xc18] sm:$0xff]
        %v842 = vld [vmem:[%s383 + $0xc20] sm:$0xff]
        %v843 = vld [vmem:[%s383 + $0xc28] sm:$0xff]
        %v844 = vld [vmem:[%s383 + $0xc30] sm:$0xff]
        %v845 = vld [vmem:[%s383 + $0xc38] sm:$0xff]
        %v846 = vld [vmem:[%s383 + $0xc40] sm:$0xff]
        %v847 = vld [vmem:[%s383 + $0xc48] sm:$0xff]
        %v848 = vld [vmem:[%s383 + $0xc50] sm:$0xff]
        %v849 = vld [vmem:[%s383 + $0xc58] sm:$0xff]
        %v850 = vld [vmem:[%s383 + $0xc60] sm:$0xff]
        %v851 = vld [vmem:[%s383 + $0xc68] sm:$0xff]
        %v852 = vld [vmem:[%s383 + $0xc70] sm:$0xff]
        %v853 = vld [vmem:[%s383 + $0xc78] sm:$0xff]
        %v854 = vld [vmem:[%s383 + $0xc80] sm:$0xff]
        %v855 = vld [vmem:[%s383 + $0xc88] sm:$0xff]
        %v856 = vld [vmem:[%s383 + $0xc90] sm:$0xff]
        %v857 = vld [vmem:[%s383 + $0xc98] sm:$0xff]
        %v858 = vld [vmem:[%s383 + $0xca0] sm:$0xff]
        %v859 = vld [vmem:[%s383 + $0xca8] sm:$0xff]
        %v860 = vld [vmem:[%s383 + $0xcb0] sm:$0xff]
        %v861 = vld [vmem:[%s383 + $0xcb8] sm:$0xff]
        %v862 = vld [vmem:[%s383 + $0xcc0] sm:$0xff]
        %v863 = vld [vmem:[%s383 + $0xcc8] sm:$0xff]
        %v864 = vld [vmem:[%s383 + $0xcd0] sm:$0xff]
        %v865 = vld [vmem:[%s383 + $0xcd8] sm:$0xff]
        %v866 = vld [vmem:[%s383 + $0xce0] sm:$0xff]
        %v867 = vld [vmem:[%s383 + $0xce8] sm:$0xff]
        %v868 = vld [vmem:[%s383 + $0xcf0] sm:$0xff]
        %v869 = vld [vmem:[%s383 + $0xcf8] sm:$0xff]
        %v870 = vld [vmem:[%s383 + $0xd00] sm:$0xff]
        %v871 = vld [vmem:[%s383 + $0xd08] sm:$0xff]
        %v872 = vld [vmem:[%s383 + $0xd10] sm:$0xff]
        %v873 = vld [vmem:[%s383 + $0xd18] sm:$0xff]
        %v874 = vld [vmem:[%s383 + $0xd20] sm:$0xff]
        %v875 = vld [vmem:[%s383 + $0xd28] sm:$0xff]
        %v876 = vld [vmem:[%s383 + $0xd30] sm:$0xff]
        %v877 = vld [vmem:[%s383 + $0xd38] sm:$0xff]
        %v878 = vld [vmem:[%s383 + $0xd40] sm:$0xff]
        %v879 = vld [vmem:[%s383 + $0xd48] sm:$0xff]
        %v880 = vld [vmem:[%s383 + $0xd50] sm:$0xff]
        %v881 = vld [vmem:[%s383 + $0xd58] sm:$0xff]
        %v882 = vld [vmem:[%s383 + $0xd60] sm:$0xff]
        %v883 = vld [vmem:[%s383 + $0xd68] sm:$0xff]
        %v884 = vld [vmem:[%s383 + $0xd70] sm:$0xff]
        %v885 = vld [vmem:[%s383 + $0xd78] sm:$0xff]
        %v886 = vld [vmem:[%s383 + $0xd80] sm:$0xff]
        %v887 = vld [vmem:[%s383 + $0xd88] sm:$0xff]
        %v888 = vld [vmem:[%s383 + $0xd90] sm:$0xff]
        %v889 = vld [vmem:[%s383 + $0xd98] sm:$0xff]
        %v890 = vld [vmem:[%s383 + $0xda0] sm:$0xff]
        %v891 = vld [vmem:[%s383 + $0xda8] sm:$0xff]
        %v892 = vld [vmem:[%s383 + $0xdb0] sm:$0xff]
        %v893 = vld [vmem:[%s383 + $0xdb8] sm:$0xff]
        %v894 = vld [vmem:[%s383 + $0xdc0] sm:$0xff]
        %v895 = vld [vmem:[%s383 + $0xdc8] sm:$0xff]
        %v896 = vld [vmem:[%s383 + $0xdd0] sm:$0xff]
        %v897 = vld [vmem:[%s383 + $0xdd8] sm:$0xff]
        %v898 = vld [vmem:[%s383 + $0xde0] sm:$0xff]
        %v899 = vld [vmem:[%s383 + $0xde8] sm:$0xff]
        %v900 = vld [vmem:[%s383 + $0xdf0] sm:$0xff]
        %v901 = vld [vmem:[%s383 + $0xdf8] sm:$0xff]
        %v902 = vld [vmem:[%s383 + $0xe00] sm:$0xff]
        %v903 = vld [vmem:[%s383 + $0xe08] sm:$0xff]
        %v904 = vld [vmem:[%s383 + $0xe10] sm:$0xff]
        %v905 = vld [vmem:[%s383 + $0xe18] sm:$0xff]
        %v906 = vld [vmem:[%s383 + $0xe20] sm:$0xff]
        %v907 = vld [vmem:[%s383 + $0xe28] sm:$0xff]
        %v908 = vld [vmem:[%s383 + $0xe30] sm:$0xff]
        %v909 = vld [vmem:[%s383 + $0xe38] sm:$0xff]
        %v910 = vld [vmem:[%s383 + $0xe40] sm:$0xff]
        %v911 = vld [vmem:[%s383 + $0xe48] sm:$0xff]
        %v912 = vld [vmem:[%s383 + $0xe50] sm:$0xff]
        %v913 = vld [vmem:[%s383 + $0xe58] sm:$0xff]
        %v914 = vld [vmem:[%s383 + $0xe60] sm:$0xff]
        %v915 = vld [vmem:[%s383 + $0xe68] sm:$0xff]
        %v916 = vld [vmem:[%s383 + $0xe70] sm:$0xff]
        %v917 = vld [vmem:[%s383 + $0xe78] sm:$0xff]
        %v918 = vld [vmem:[%s383 + $0xe80] sm:$0xff]
        %v919 = vld [vmem:[%s383 + $0xe88] sm:$0xff]
        %v920 = vld [vmem:[%s383 + $0xe90] sm:$0xff]
        %v921 = vld [vmem:[%s383 + $0xe98] sm:$0xff]
        %v922 = vld [vmem:[%s383 + $0xea0] sm:$0xff]
        %v923 = vld [vmem:[%s383 + $0xea8] sm:$0xff]
        %v924 = vld [vmem:[%s383 + $0xeb0] sm:$0xff]
        %v925 = vld [vmem:[%s383 + $0xeb8] sm:$0xff]
        %v926 = vld [vmem:[%s383 + $0xec0] sm:$0xff]
        %v927 = vld [vmem:[%s383 + $0xec8] sm:$0xff]
        %v928 = vld [vmem:[%s383 + $0xed0] sm:$0xff]
        %v929 = vld [vmem:[%s383 + $0xed8] sm:$0xff]
        %v930 = vld [vmem:[%s383 + $0xee0] sm:$0xff]
        %v931 = vld [vmem:[%s383 + $0xee8] sm:$0xff]
        %v932 = vld [vmem:[%s383 + $0xef0] sm:$0xff]
        %v933 = vld [vmem:[%s383 + $0xef8] sm:$0xff]
        %v934 = vld [vmem:[%s383 + $0xf00] sm:$0xff]
        %v935 = vld [vmem:[%s383 + $0xf08] sm:$0xff]
        %v936 = vld [vmem:[%s383 + $0xf10] sm:$0xff]
        %v937 = vld [vmem:[%s383 + $0xf18] sm:$0xff]
        %v938 = vld [vmem:[%s383 + $0xf20] sm:$0xff]
        %v939 = vld [vmem:[%s383 + $0xf28] sm:$0xff]
        %v940 = vld [vmem:[%s383 + $0xf30] sm:$0xff]
        %v941 = vld [vmem:[%s383 + $0xf38] sm:$0xff]
        %v942 = vld [vmem:[%s383 + $0xf40] sm:$0xff]
        %v943 = vld [vmem:[%s383 + $0xf48] sm:$0xff]
        %v944 = vld [vmem:[%s383 + $0xf50] sm:$0xff]
        %v945 = vld [vmem:[%s383 + $0xf58] sm:$0xff]
        %v946 = vld [vmem:[%s383 + $0xf60] sm:$0xff]
        %v947 = vld [vmem:[%s383 + $0xf68] sm:$0xff]
        %v948 = vld [vmem:[%s383 + $0xf70] sm:$0xff]
        %v949 = vld [vmem:[%s383 + $0xf78] sm:$0xff]
        %v950 = vld [vmem:[%s383 + $0xf80] sm:$0xff]
        %v951 = vld [vmem:[%s383 + $0xf88] sm:$0xff]
        %v952 = vld [vmem:[%s383 + $0xf90] sm:$0xff]
        %v953 = vld [vmem:[%s383 + $0xf98] sm:$0xff]
        %v954 = vld [vmem:[%s383 + $0xfa0] sm:$0xff]
        %v955 = vld [vmem:[%s383 + $0xfa8] sm:$0xff]
        %v956 = vld [vmem:[%s383 + $0xfb0] sm:$0xff]
        %v957 = vld [vmem:[%s383 + $0xfb8] sm:$0xff]
        %v958 = vld [vmem:[%s383 + $0xfc0] sm:$0xff]
        %v959 = vld [vmem:[%s383 + $0xfc8] sm:$0xff]
        %v960 = vld [vmem:[%s383 + $0xfd0] sm:$0xff]
        %v961 = vld [vmem:[%s383 + $0xfd8] sm:$0xff]
        %v962 = vld [vmem:[%s383 + $0xfe0] sm:$0xff]
        %v963 = vld [vmem:[%s383 + $0xfe8] sm:$0xff]
        %v964 = vld [vmem:[%s383 + $0xff0] sm:$0xff]
        %v965 = vld [vmem:[%s383 + $0xff8] sm:$0xff]
        %v966 = vld [vmem:[%s383 + $0x1000] sm:$0xff]
        %v967 = vld [vmem:[%s383 + $0x1008] sm:$0xff]
        %v968 = vld [vmem:[%s383 + $0x1010] sm:$0xff]
        %v969 = vld [vmem:[%s383 + $0x1018] sm:$0xff]
        %v970 = vld [vmem:[%s383 + $0x1020] sm:$0xff]
        %v971 = vld [vmem:[%s383 + $0x1028] sm:$0xff]
        %v972 = vld [vmem:[%s383 + $0x1030] sm:$0xff]
        %v973 = vld [vmem:[%s383 + $0x1038] sm:$0xff]
        %v974 = vld [vmem:[%s383 + $0x1040] sm:$0xff]
        %v975 = vld [vmem:[%s383 + $0x1048] sm:$0xff]
        %v976 = vld [vmem:[%s383 + $0x1050] sm:$0xff]
        %v977 = vld [vmem:[%s383 + $0x1058] sm:$0xff]
        %v978 = vld [vmem:[%s383 + $0x1060] sm:$0xff]
        %v979 = vld [vmem:[%s383 + $0x1068] sm:$0xff]
        %v980 = vld [vmem:[%s383 + $0x1070] sm:$0xff]
        %v981 = vld [vmem:[%s383 + $0x1078] sm:$0xff]
        %v982 = vld [vmem:[%s383 + $0x1080] sm:$0xff]
        %v983 = vld [vmem:[%s383 + $0x1088] sm:$0xff]
        %v984 = vld [vmem:[%s383 + $0x1090] sm:$0xff]
        %v985 = vld [vmem:[%s383 + $0x1098] sm:$0xff]
        %v986 = vld [vmem:[%s383 + $0x10a0] sm:$0xff]
        %v987 = vld [vmem:[%s383 + $0x10a8] sm:$0xff]
        %v988 = vld [vmem:[%s383 + $0x10b0] sm:$0xff]
        %v989 = vld [vmem:[%s383 + $0x10b8] sm:$0xff]
        %v990 = vld [vmem:[%s383 + $0x10c0] sm:$0xff]
        %v991 = vld [vmem:[%s383 + $0x10c8] sm:$0xff]
        %v992 = vld [vmem:[%s383 + $0x10d0] sm:$0xff]
        %v993 = vld [vmem:[%s383 + $0x10d8] sm:$0xff]
        %v994 = vld [vmem:[%s383 + $0x10e0] sm:$0xff]
        %v995 = vld [vmem:[%s383 + $0x10e8] sm:$0xff]
        %v996 = vld [vmem:[%s383 + $0x10f0] sm:$0xff]
        %v997 = vld [vmem:[%s383 + $0x10f8] sm:$0xff]
        %v998 = vld [vmem:[%s383 + $0x1100] sm:$0xff]
        %v999 = vld [vmem:[%s383 + $0x1108] sm:$0xff]
        %v1000 = vld [vmem:[%s383 + $0x1110] sm:$0xff]
        %v1001 = vld [vmem:[%s383 + $0x1118] sm:$0xff]
        %v1002 = vld [vmem:[%s383 + $0x1120] sm:$0xff]
        %v1003 = vld [vmem:[%s383 + $0x1128] sm:$0xff]
        %v1004 = vld [vmem:[%s383 + $0x1130] sm:$0xff]
        %v1005 = vld [vmem:[%s383 + $0x1138] sm:$0xff]
        %v1006 = vld [vmem:[%s383 + $0x1140] sm:$0xff]
        %v1007 = vld [vmem:[%s383 + $0x1148] sm:$0xff]
        %v1008 = vld [vmem:[%s383 + $0x1150] sm:$0xff]
        %v1009 = vld [vmem:[%s383 + $0x1158] sm:$0xff]
        %v1010 = vld [vmem:[%s383 + $0x1160] sm:$0xff]
        %v1011 = vld [vmem:[%s383 + $0x1168] sm:$0xff]
        %v1012 = vld [vmem:[%s383 + $0x1170] sm:$0xff]
        %v1013 = vld [vmem:[%s383 + $0x1178] sm:$0xff]
        %v1014 = vld [vmem:[%s383 + $0x1180] sm:$0xff]
        %v1015 = vld [vmem:[%s383 + $0x1188] sm:$0xff]
        %v1016 = vld [vmem:[%s383 + $0x1190] sm:$0xff]
        %v1017 = vld [vmem:[%s383 + $0x1198] sm:$0xff]
        %v1018 = vld [vmem:[%s383 + $0x11a0] sm:$0xff]
        %v1019 = vld [vmem:[%s383 + $0x11a8] sm:$0xff]
        %v1020 = vld [vmem:[%s383 + $0x11b0] sm:$0xff]
        %v1021 = vld [vmem:[%s383 + $0x11b8] sm:$0xff]
        %v1022 = vld [vmem:[%s383 + $0x11c0] sm:$0xff]
        %v1023 = vld [vmem:[%s383 + $0x11c8] sm:$0xff]
        %v1024 = vld [vmem:[%s383 + $0x11d0] sm:$0xff]
        %v1025 = vld [vmem:[%s383 + $0x11d8] sm:$0xff]
        %v1026 = vld [vmem:[%s383 + $0x11e0] sm:$0xff]
        %v1027 = vld [vmem:[%s383 + $0x11e8] sm:$0xff]
        %v1028 = vld [vmem:[%s383 + $0x11f0] sm:$0xff]
        %v1029 = vld [vmem:[%s383 + $0x11f8] sm:$0xff]
        %v1030 = vld [vmem:[%s383 + $0x1200] sm:$0xff]
        %v1031 = vld [vmem:[%s383 + $0x1208] sm:$0xff]
        %v1032 = vld [vmem:[%s383 + $0x1210] sm:$0xff]
        %v1033 = vld [vmem:[%s383 + $0x1218] sm:$0xff]
        %v1034 = vld [vmem:[%s383 + $0x1220] sm:$0xff]
        %v1035 = vld [vmem:[%s383 + $0x1228] sm:$0xff]
        %v1036 = vld [vmem:[%s383 + $0x1230] sm:$0xff]
        %v1037 = vld [vmem:[%s383 + $0x1238] sm:$0xff]
        %v1038 = vld [vmem:[%s383 + $0x1240] sm:$0xff]
        %v1039 = vld [vmem:[%s383 + $0x1248] sm:$0xff]
        %v1040 = vld [vmem:[%s383 + $0x1250] sm:$0xff]
        %v1041 = vld [vmem:[%s383 + $0x1258] sm:$0xff]
        %v1042 = vld [vmem:[%s383 + $0x1260] sm:$0xff]
        %v1043 = vld [vmem:[%s383 + $0x1268] sm:$0xff]
        %v1044 = vld [vmem:[%s383 + $0x1270] sm:$0xff]
        %v1045 = vld [vmem:[%s383 + $0x1278] sm:$0xff]
        %v1046 = vld [vmem:[%s383 + $0x1280] sm:$0xff]
        %v1047 = vld [vmem:[%s383 + $0x1288] sm:$0xff]
        %v1048 = vld [vmem:[%s383 + $0x1290] sm:$0xff]
        %v1049 = vld [vmem:[%s383 + $0x1298] sm:$0xff]
        %v1050 = vld [vmem:[%s383 + $0x12a0] sm:$0xff]
        %v1051 = vld [vmem:[%s383 + $0x12a8] sm:$0xff]
        %v1052 = vld [vmem:[%s383 + $0x12b0] sm:$0xff]
        %v1053 = vld [vmem:[%s383 + $0x12b8] sm:$0xff]
        %v1054 = vld [vmem:[%s383 + $0x12c0] sm:$0xff]
        %v1055 = vld [vmem:[%s383 + $0x12c8] sm:$0xff]
        %v1056 = vld [vmem:[%s383 + $0x12d0] sm:$0xff]
        %v1057 = vld [vmem:[%s383 + $0x12d8] sm:$0xff]
        %v1058 = vld [vmem:[%s383 + $0x12e0] sm:$0xff]
        %v1059 = vld [vmem:[%s383 + $0x12e8] sm:$0xff]
        %v1060 = vld [vmem:[%s383 + $0x12f0] sm:$0xff]
        %v1061 = vld [vmem:[%s383 + $0x12f8] sm:$0xff]
        %v1062 = vld [vmem:[%s383 + $0x1300] sm:$0xff]
        %v1063 = vld [vmem:[%s383 + $0x1308] sm:$0xff]
        %v1064 = vld [vmem:[%s383 + $0x1310] sm:$0xff]
        %v1065 = vld [vmem:[%s383 + $0x1318] sm:$0xff]
        %v1066 = vld [vmem:[%s383 + $0x1320] sm:$0xff]
        %v1067 = vld [vmem:[%s383 + $0x1328] sm:$0xff]
        %v1068 = vld [vmem:[%s383 + $0x1330] sm:$0xff]
        %v1069 = vld [vmem:[%s383 + $0x1338] sm:$0xff]
        %v1070 = vld [vmem:[%s383 + $0x1340] sm:$0xff]
        %v1071 = vld [vmem:[%s383 + $0x1348] sm:$0xff]
        %v1072 = vld [vmem:[%s383 + $0x1350] sm:$0xff]
        %v1073 = vld [vmem:[%s383 + $0x1358] sm:$0xff]
        %v1074 = vld [vmem:[%s383 + $0x1360] sm:$0xff]
        %v1075 = vld [vmem:[%s383 + $0x1368] sm:$0xff]
        %v1076 = vld [vmem:[%s383 + $0x1370] sm:$0xff]
        %v1077 = vld [vmem:[%s383 + $0x1378] sm:$0xff]
        %v1078 = vld [vmem:[%s383 + $0x1380] sm:$0xff]
        %v1079 = vld [vmem:[%s383 + $0x1388] sm:$0xff]
        %v1080 = vld [vmem:[%s383 + $0x1390] sm:$0xff]
        %v1081 = vld [vmem:[%s383 + $0x1398] sm:$0xff]
        %v1082 = vld [vmem:[%s383 + $0x13a0] sm:$0xff]
        %v1083 = vld [vmem:[%s383 + $0x13a8] sm:$0xff]
        %v1084 = vld [vmem:[%s383 + $0x13b0] sm:$0xff]
        %v1085 = vld [vmem:[%s383 + $0x13b8] sm:$0xff]
        %v1086 = vld [vmem:[%s383 + $0x13c0] sm:$0xff]
        %v1087 = vld [vmem:[%s383 + $0x13c8] sm:$0xff]
        %v1088 = vld [vmem:[%s383 + $0x13d0] sm:$0xff]
        %v1089 = vld [vmem:[%s383 + $0x13d8] sm:$0xff]
        %v1090 = vld [vmem:[%s383 + $0x13e0] sm:$0xff]
        %v1091 = vld [vmem:[%s383 + $0x13e8] sm:$0xff]
        %v1092 = vld [vmem:[%s383 + $0x13f0] sm:$0xff]
        %v1093 = vld [vmem:[%s383 + $0x13f8] sm:$0xff]
        %v1094 = vpack.c.bf16 %v474, %v454
        %v1095 = vpack.c.bf16 %v475, %v455
        %v1096 = vpack.c.bf16 %v476, %v456
        %v1097 = vpack.c.bf16 %v477, %v457
        %v1098 = vpack.c.bf16 %v478, %v458
        %v1099 = vpack.c.bf16 %v479, %v459
        %v1100 = vpack.c.bf16 %v480, %v460
        %v1101 = vpack.c.bf16 %v481, %v461
        %v1102 = vpack.c.bf16 %v482, %v462
        %v1103 = vpack.c.bf16 %v483, %v463
        %v1104 = vpack.c.bf16 %v484, %v464
        %v1105 = vpack.c.bf16 %v485, %v465
        %v1106 = vpack.c.bf16 %v486, %v466
        %v1107 = vpack.c.bf16 %v487, %v467
        %v1108 = vpack.c.bf16 %v488, %v468
        %v1109 = vpack.c.bf16 %v489, %v469
        %v1110 = vpack.c.bf16 %v490, %v470
        %v1111 = vpack.c.bf16 %v491, %v471
        %v1112 = vpack.c.bf16 %v492, %v472
        %v1113 = vpack.c.bf16 %v493, %v473
        %v1114 = vpack.c.bf16 %v514, %v494
        %v1115 = vpack.c.bf16 %v515, %v495
        %v1116 = vpack.c.bf16 %v516, %v496
        %v1117 = vpack.c.bf16 %v517, %v497
        %v1118 = vpack.c.bf16 %v518, %v498
        %v1119 = vpack.c.bf16 %v519, %v499
        %v1120 = vpack.c.bf16 %v520, %v500
        %v1121 = vpack.c.bf16 %v521, %v501
        %v1122 = vpack.c.bf16 %v522, %v502
        %v1123 = vpack.c.bf16 %v523, %v503
        %v1124 = vpack.c.bf16 %v524, %v504
        %v1125 = vpack.c.bf16 %v525, %v505
        %v1126 = vpack.c.bf16 %v526, %v506
        %v1127 = vpack.c.bf16 %v527, %v507
        %v1128 = vpack.c.bf16 %v528, %v508
        %v1129 = vpack.c.bf16 %v529, %v509
        %v1130 = vpack.c.bf16 %v530, %v510
        %v1131 = vpack.c.bf16 %v531, %v511
        %v1132 = vpack.c.bf16 %v532, %v512
        %v1133 = vpack.c.bf16 %v533, %v513
        %v1134 = vpack.c.bf16 %v554, %v534
        %v1135 = vpack.c.bf16 %v555, %v535
        %v1136 = vpack.c.bf16 %v556, %v536
        %v1137 = vpack.c.bf16 %v557, %v537
        %v1138 = vpack.c.bf16 %v558, %v538
        %v1139 = vpack.c.bf16 %v559, %v539
        %v1140 = vpack.c.bf16 %v560, %v540
        %v1141 = vpack.c.bf16 %v561, %v541
        %v1142 = vpack.c.bf16 %v562, %v542
        %v1143 = vpack.c.bf16 %v563, %v543
        %v1144 = vpack.c.bf16 %v564, %v544
        %v1145 = vpack.c.bf16 %v565, %v545
        %v1146 = vpack.c.bf16 %v566, %v546
        %v1147 = vpack.c.bf16 %v567, %v547
        %v1148 = vpack.c.bf16 %v568, %v548
        %v1149 = vpack.c.bf16 %v569, %v549
        %v1150 = vpack.c.bf16 %v570, %v550
        %v1151 = vpack.c.bf16 %v571, %v551
        %v1152 = vpack.c.bf16 %v572, %v552
        %v1153 = vpack.c.bf16 %v573, %v553
        %v1154 = vpack.c.bf16 %v594, %v574
        %v1155 = vpack.c.bf16 %v595, %v575
        %v1156 = vpack.c.bf16 %v596, %v576
        %v1157 = vpack.c.bf16 %v597, %v577
        %v1158 = vpack.c.bf16 %v598, %v578
        %v1159 = vpack.c.bf16 %v599, %v579
        %v1160 = vpack.c.bf16 %v600, %v580
        %v1161 = vpack.c.bf16 %v601, %v581
        %v1162 = vpack.c.bf16 %v602, %v582
        %v1163 = vpack.c.bf16 %v603, %v583
        %v1164 = vpack.c.bf16 %v604, %v584
        %v1165 = vpack.c.bf16 %v605, %v585
        %v1166 = vpack.c.bf16 %v606, %v586
        %v1167 = vpack.c.bf16 %v607, %v587
        %v1168 = vpack.c.bf16 %v608, %v588
        %v1169 = vpack.c.bf16 %v609, %v589
        %v1170 = vpack.c.bf16 %v610, %v590
        %v1171 = vpack.c.bf16 %v611, %v591
        %v1172 = vpack.c.bf16 %v612, %v592
        %v1173 = vpack.c.bf16 %v613, %v593
        %v1174 = vpack.c.bf16 %v634, %v614
        %v1175 = vpack.c.bf16 %v635, %v615
        %v1176 = vpack.c.bf16 %v636, %v616
        %v1177 = vpack.c.bf16 %v637, %v617
        %v1178 = vpack.c.bf16 %v638, %v618
        %v1179 = vpack.c.bf16 %v639, %v619
        %v1180 = vpack.c.bf16 %v640, %v620
        %v1181 = vpack.c.bf16 %v641, %v621
        %v1182 = vpack.c.bf16 %v642, %v622
        %v1183 = vpack.c.bf16 %v643, %v623
        %v1184 = vpack.c.bf16 %v644, %v624
        %v1185 = vpack.c.bf16 %v645, %v625
        %v1186 = vpack.c.bf16 %v646, %v626
        %v1187 = vpack.c.bf16 %v647, %v627
        %v1188 = vpack.c.bf16 %v648, %v628
        %v1189 = vpack.c.bf16 %v649, %v629
        %v1190 = vpack.c.bf16 %v650, %v630
        %v1191 = vpack.c.bf16 %v651, %v631
        %v1192 = vpack.c.bf16 %v652, %v632
        %v1193 = vpack.c.bf16 %v653, %v633
        %v1194 = vpack.c.bf16 %v674, %v654
        %v1195 = vpack.c.bf16 %v675, %v655
        %v1196 = vpack.c.bf16 %v676, %v656
        %v1197 = vpack.c.bf16 %v677, %v657
        %v1198 = vpack.c.bf16 %v678, %v658
        %v1199 = vpack.c.bf16 %v679, %v659
        %v1200 = vpack.c.bf16 %v680, %v660
        %v1201 = vpack.c.bf16 %v681, %v661
        %v1202 = vpack.c.bf16 %v682, %v662
        %v1203 = vpack.c.bf16 %v683, %v663
        %v1204 = vpack.c.bf16 %v684, %v664
        %v1205 = vpack.c.bf16 %v685, %v665
        %v1206 = vpack.c.bf16 %v686, %v666
        %v1207 = vpack.c.bf16 %v687, %v667
        %v1208 = vpack.c.bf16 %v688, %v668
        %v1209 = vpack.c.bf16 %v689, %v669
        %v1210 = vpack.c.bf16 %v690, %v670
        %v1211 = vpack.c.bf16 %v691, %v671
        %v1212 = vpack.c.bf16 %v692, %v672
        %v1213 = vpack.c.bf16 %v693, %v673
        %v1214 = vpack.c.bf16 %v714, %v694
        %v1215 = vpack.c.bf16 %v715, %v695
        %v1216 = vpack.c.bf16 %v716, %v696
        %v1217 = vpack.c.bf16 %v717, %v697
        %v1218 = vpack.c.bf16 %v718, %v698
        %v1219 = vpack.c.bf16 %v719, %v699
        %v1220 = vpack.c.bf16 %v720, %v700
        %v1221 = vpack.c.bf16 %v721, %v701
        %v1222 = vpack.c.bf16 %v722, %v702
        %v1223 = vpack.c.bf16 %v723, %v703
        %v1224 = vpack.c.bf16 %v724, %v704
        %v1225 = vpack.c.bf16 %v725, %v705
        %v1226 = vpack.c.bf16 %v726, %v706
        %v1227 = vpack.c.bf16 %v727, %v707
        %v1228 = vpack.c.bf16 %v728, %v708
        %v1229 = vpack.c.bf16 %v729, %v709
        %v1230 = vpack.c.bf16 %v730, %v710
        %v1231 = vpack.c.bf16 %v731, %v711
        %v1232 = vpack.c.bf16 %v732, %v712
        %v1233 = vpack.c.bf16 %v733, %v713
        %v1234 = vpack.c.bf16 %v754, %v734
        %v1235 = vpack.c.bf16 %v755, %v735
        %v1236 = vpack.c.bf16 %v756, %v736
        %v1237 = vpack.c.bf16 %v757, %v737
        %v1238 = vpack.c.bf16 %v758, %v738
        %v1239 = vpack.c.bf16 %v759, %v739
        %v1240 = vpack.c.bf16 %v760, %v740
        %v1241 = vpack.c.bf16 %v761, %v741
        %v1242 = vpack.c.bf16 %v762, %v742
        %v1243 = vpack.c.bf16 %v763, %v743
        %v1244 = vpack.c.bf16 %v764, %v744
        %v1245 = vpack.c.bf16 %v765, %v745
        %v1246 = vpack.c.bf16 %v766, %v746
        %v1247 = vpack.c.bf16 %v767, %v747
        %v1248 = vpack.c.bf16 %v768, %v748
        %v1249 = vpack.c.bf16 %v769, %v749
        %v1250 = vpack.c.bf16 %v770, %v750
        %v1251 = vpack.c.bf16 %v771, %v751
        %v1252 = vpack.c.bf16 %v772, %v752
        %v1253 = vpack.c.bf16 %v773, %v753
        %v1254 = vpack.c.bf16 %v794, %v774
        %v1255 = vpack.c.bf16 %v795, %v775
        %v1256 = vpack.c.bf16 %v796, %v776
        %v1257 = vpack.c.bf16 %v797, %v777
        %v1258 = vpack.c.bf16 %v798, %v778
        %v1259 = vpack.c.bf16 %v799, %v779
        %v1260 = vpack.c.bf16 %v800, %v780
        %v1261 = vpack.c.bf16 %v801, %v781
        %v1262 = vpack.c.bf16 %v802, %v782
        %v1263 = vpack.c.bf16 %v803, %v783
        %v1264 = vpack.c.bf16 %v804, %v784
        %v1265 = vpack.c.bf16 %v805, %v785
        %v1266 = vpack.c.bf16 %v806, %v786
        %v1267 = vpack.c.bf16 %v807, %v787
        %v1268 = vpack.c.bf16 %v808, %v788
        %v1269 = vpack.c.bf16 %v809, %v789
        %v1270 = vpack.c.bf16 %v810, %v790
        %v1271 = vpack.c.bf16 %v811, %v791
        %v1272 = vpack.c.bf16 %v812, %v792
        %v1273 = vpack.c.bf16 %v813, %v793
        %v1274 = vpack.c.bf16 %v834, %v814
        %v1275 = vpack.c.bf16 %v835, %v815
        %v1276 = vpack.c.bf16 %v836, %v816
        %v1277 = vpack.c.bf16 %v837, %v817
        %v1278 = vpack.c.bf16 %v838, %v818
        %v1279 = vpack.c.bf16 %v839, %v819
        %v1280 = vpack.c.bf16 %v840, %v820
        %v1281 = vpack.c.bf16 %v841, %v821
        %v1282 = vpack.c.bf16 %v842, %v822
        %v1283 = vpack.c.bf16 %v843, %v823
        %v1284 = vpack.c.bf16 %v844, %v824
        %v1285 = vpack.c.bf16 %v845, %v825
        %v1286 = vpack.c.bf16 %v846, %v826
        %v1287 = vpack.c.bf16 %v847, %v827
        %v1288 = vpack.c.bf16 %v848, %v828
        %v1289 = vpack.c.bf16 %v849, %v829
        %v1290 = vpack.c.bf16 %v850, %v830
        %v1291 = vpack.c.bf16 %v851, %v831
        %v1292 = vpack.c.bf16 %v852, %v832
        %v1293 = vpack.c.bf16 %v853, %v833
        %v1294 = vpack.c.bf16 %v874, %v854
        %v1295 = vpack.c.bf16 %v875, %v855
        %v1296 = vpack.c.bf16 %v876, %v856
        %v1297 = vpack.c.bf16 %v877, %v857
        %v1298 = vpack.c.bf16 %v878, %v858
        %v1299 = vpack.c.bf16 %v879, %v859
        %v1300 = vpack.c.bf16 %v880, %v860
        %v1301 = vpack.c.bf16 %v881, %v861
        %v1302 = vpack.c.bf16 %v882, %v862
        %v1303 = vpack.c.bf16 %v883, %v863
        %v1304 = vpack.c.bf16 %v884, %v864
        %v1305 = vpack.c.bf16 %v885, %v865
        %v1306 = vpack.c.bf16 %v886, %v866
        %v1307 = vpack.c.bf16 %v887, %v867
        %v1308 = vpack.c.bf16 %v888, %v868
        %v1309 = vpack.c.bf16 %v889, %v869
        %v1310 = vpack.c.bf16 %v890, %v870
        %v1311 = vpack.c.bf16 %v891, %v871
        %v1312 = vpack.c.bf16 %v892, %v872
        %v1313 = vpack.c.bf16 %v893, %v873
        %v1314 = vpack.c.bf16 %v914, %v894
        %v1315 = vpack.c.bf16 %v915, %v895
        %v1316 = vpack.c.bf16 %v916, %v896
        %v1317 = vpack.c.bf16 %v917, %v897
        %v1318 = vpack.c.bf16 %v918, %v898
        %v1319 = vpack.c.bf16 %v919, %v899
        %v1320 = vpack.c.bf16 %v920, %v900
        %v1321 = vpack.c.bf16 %v921, %v901
        %v1322 = vpack.c.bf16 %v922, %v902
        %v1323 = vpack.c.bf16 %v923, %v903
        %v1324 = vpack.c.bf16 %v924, %v904
        %v1325 = vpack.c.bf16 %v925, %v905
        %v1326 = vpack.c.bf16 %v926, %v906
        %v1327 = vpack.c.bf16 %v927, %v907
        %v1328 = vpack.c.bf16 %v928, %v908
        %v1329 = vpack.c.bf16 %v929, %v909
        %v1330 = vpack.c.bf16 %v930, %v910
        %v1331 = vpack.c.bf16 %v931, %v911
        %v1332 = vpack.c.bf16 %v932, %v912
        %v1333 = vpack.c.bf16 %v933, %v913
        %v1334 = vpack.c.bf16 %v954, %v934
        %v1335 = vpack.c.bf16 %v955, %v935
        %v1336 = vpack.c.bf16 %v956, %v936
        %v1337 = vpack.c.bf16 %v957, %v937
        %v1338 = vpack.c.bf16 %v958, %v938
        %v1339 = vpack.c.bf16 %v959, %v939
        %v1340 = vpack.c.bf16 %v960, %v940
        %v1341 = vpack.c.bf16 %v961, %v941
        %v1342 = vpack.c.bf16 %v962, %v942
        %v1343 = vpack.c.bf16 %v963, %v943
        %v1344 = vpack.c.bf16 %v964, %v944
        %v1345 = vpack.c.bf16 %v965, %v945
        %v1346 = vpack.c.bf16 %v966, %v946
        %v1347 = vpack.c.bf16 %v967, %v947
        %v1348 = vpack.c.bf16 %v968, %v948
        %v1349 = vpack.c.bf16 %v969, %v949
        %v1350 = vpack.c.bf16 %v970, %v950
        %v1351 = vpack.c.bf16 %v971, %v951
        %v1352 = vpack.c.bf16 %v972, %v952
        %v1353 = vpack.c.bf16 %v973, %v953
        %v1354 = vpack.c.bf16 %v994, %v974
        %v1355 = vpack.c.bf16 %v995, %v975
        %v1356 = vpack.c.bf16 %v996, %v976
        %v1357 = vpack.c.bf16 %v997, %v977
        %v1358 = vpack.c.bf16 %v998, %v978
        %v1359 = vpack.c.bf16 %v999, %v979
        %v1360 = vpack.c.bf16 %v1000, %v980
        %v1361 = vpack.c.bf16 %v1001, %v981
        %v1362 = vpack.c.bf16 %v1002, %v982
        %v1363 = vpack.c.bf16 %v1003, %v983
        %v1364 = vpack.c.bf16 %v1004, %v984
        %v1365 = vpack.c.bf16 %v1005, %v985
        %v1366 = vpack.c.bf16 %v1006, %v986
        %v1367 = vpack.c.bf16 %v1007, %v987
        %v1368 = vpack.c.bf16 %v1008, %v988
        %v1369 = vpack.c.bf16 %v1009, %v989
        %v1370 = vpack.c.bf16 %v1010, %v990
        %v1371 = vpack.c.bf16 %v1011, %v991
        %v1372 = vpack.c.bf16 %v1012, %v992
        %v1373 = vpack.c.bf16 %v1013, %v993
        %v1374 = vpack.c.bf16 %v1034, %v1014
        %v1375 = vpack.c.bf16 %v1035, %v1015
        %v1376 = vpack.c.bf16 %v1036, %v1016
        %v1377 = vpack.c.bf16 %v1037, %v1017
        %v1378 = vpack.c.bf16 %v1038, %v1018
        %v1379 = vpack.c.bf16 %v1039, %v1019
        %v1380 = vpack.c.bf16 %v1040, %v1020
        %v1381 = vpack.c.bf16 %v1041, %v1021
        %v1382 = vpack.c.bf16 %v1042, %v1022
        %v1383 = vpack.c.bf16 %v1043, %v1023
        %v1384 = vpack.c.bf16 %v1044, %v1024
        %v1385 = vpack.c.bf16 %v1045, %v1025
        %v1386 = vpack.c.bf16 %v1046, %v1026
        %v1387 = vpack.c.bf16 %v1047, %v1027
        %v1388 = vpack.c.bf16 %v1048, %v1028
        %v1389 = vpack.c.bf16 %v1049, %v1029
        %v1390 = vpack.c.bf16 %v1050, %v1030
        %v1391 = vpack.c.bf16 %v1051, %v1031
        %v1392 = vpack.c.bf16 %v1052, %v1032
        %v1393 = vpack.c.bf16 %v1053, %v1033
        %v1394 = vpack.c.bf16 %v1074, %v1054
        %v1395 = vpack.c.bf16 %v1075, %v1055
        %v1396 = vpack.c.bf16 %v1076, %v1056
        %v1397 = vpack.c.bf16 %v1077, %v1057
        %v1398 = vpack.c.bf16 %v1078, %v1058
        %v1399 = vpack.c.bf16 %v1079, %v1059
        %v1400 = vpack.c.bf16 %v1080, %v1060
        %v1401 = vpack.c.bf16 %v1081, %v1061
        %v1402 = vpack.c.bf16 %v1082, %v1062
        %v1403 = vpack.c.bf16 %v1083, %v1063
        %v1404 = vpack.c.bf16 %v1084, %v1064
        %v1405 = vpack.c.bf16 %v1085, %v1065
        %v1406 = vpack.c.bf16 %v1086, %v1066
        %v1407 = vpack.c.bf16 %v1087, %v1067
        %v1408 = vpack.c.bf16 %v1088, %v1068
        %v1409 = vpack.c.bf16 %v1089, %v1069
        %v1410 = vpack.c.bf16 %v1090, %v1070
        %v1411 = vpack.c.bf16 %v1091, %v1071
        %v1412 = vpack.c.bf16 %v1092, %v1072
        %v1413 = vpack.c.bf16 %v1093, %v1073
        %v1414 = vld [vmem:[#allocation6] sm:$0xff]
        %v1415 = vld [vmem:[#allocation6 + $0x8] sm:$0xff]
        %v1416 = vld [vmem:[#allocation6 + $0x10] sm:$0xff]
        %v1417 = vld [vmem:[#allocation6 + $0x18] sm:$0xff]
        %v1418 = vld [vmem:[#allocation6 + $0x20] sm:$0xff]
        %v1419 = vld [vmem:[#allocation6 + $0x28] sm:$0xff]
        %v1420 = vld [vmem:[#allocation6 + $0x30] sm:$0xff]
        %v1421 = vld [vmem:[#allocation6 + $0x38] sm:$0xff]
        %v1422 = vld [vmem:[#allocation6 + $0x40] sm:$0xff]
        %v1423 = vld [vmem:[#allocation6 + $0x48] sm:$0xff]
        %v1424 = vld [vmem:[#allocation6 + $0x50] sm:$0xff]
        %v1425 = vld [vmem:[#allocation6 + $0x58] sm:$0xff]
        %v1426 = vld [vmem:[#allocation6 + $0x60] sm:$0xff]
        %v1427 = vld [vmem:[#allocation6 + $0x68] sm:$0xff]
        %v1428 = vld [vmem:[#allocation6 + $0x70] sm:$0xff]
        %v1429 = vld [vmem:[#allocation6 + $0x78] sm:$0xff]
        %v1430 = vld [vmem:[#allocation6 + $0x80] sm:$0xff]
        %v1431 = vld [vmem:[#allocation6 + $0x88] sm:$0xff]
        %v1432 = vld [vmem:[#allocation6 + $0x90] sm:$0xff]
        %v1433 = vld [vmem:[#allocation6 + $0x98] sm:$0xff]
        %v1434 = vld [vmem:[#allocation6 + $0xa0] sm:$0xff]
        %v1435 = vld [vmem:[#allocation6 + $0xa8] sm:$0xff]
        %v1436 = vld [vmem:[#allocation6 + $0xb0] sm:$0xff]
        %v1437 = vld [vmem:[#allocation6 + $0xb8] sm:$0xff]
        %v1438 = vld [vmem:[#allocation6 + $0xc0] sm:$0xff]
        %v1439 = vld [vmem:[#allocation6 + $0xc8] sm:$0xff]
        %v1440 = vld [vmem:[#allocation6 + $0xd0] sm:$0xff]
        %v1441 = vld [vmem:[#allocation6 + $0xd8] sm:$0xff]
        %v1442 = vld [vmem:[#allocation6 + $0xe0] sm:$0xff]
        %v1443 = vld [vmem:[#allocation6 + $0xe8] sm:$0xff]
        %v1444 = vld [vmem:[#allocation6 + $0xf0] sm:$0xff]
        %v1445 = vld [vmem:[#allocation6 + $0xf8] sm:$0xff]
        %v1446 = vld [vmem:[#allocation6 + $0x100] sm:$0xff]
        %v1447 = vld [vmem:[#allocation6 + $0x108] sm:$0xff]
        %v1448 = vld [vmem:[#allocation6 + $0x110] sm:$0xff]
        %v1449 = vld [vmem:[#allocation6 + $0x118] sm:$0xff]
        %v1450 = vld [vmem:[#allocation6 + $0x120] sm:$0xff]
        %v1451 = vld [vmem:[#allocation6 + $0x128] sm:$0xff]
        %v1452 = vld [vmem:[#allocation6 + $0x130] sm:$0xff]
        %v1453 = vld [vmem:[#allocation6 + $0x138] sm:$0xff]
        %v1454 = vld [vmem:[#allocation6 + $0x140] sm:$0xff]
        %v1455 = vld [vmem:[#allocation6 + $0x148] sm:$0xff]
        %v1456 = vld [vmem:[#allocation6 + $0x150] sm:$0xff]
        %v1457 = vld [vmem:[#allocation6 + $0x158] sm:$0xff]
        %v1458 = vld [vmem:[#allocation6 + $0x160] sm:$0xff]
        %v1459 = vld [vmem:[#allocation6 + $0x168] sm:$0xff]
        %v1460 = vld [vmem:[#allocation6 + $0x170] sm:$0xff]
        %v1461 = vld [vmem:[#allocation6 + $0x178] sm:$0xff]
        %v1462 = vld [vmem:[#allocation6 + $0x180] sm:$0xff]
        %v1463 = vld [vmem:[#allocation6 + $0x188] sm:$0xff]
        %v1464 = vld [vmem:[#allocation6 + $0x190] sm:$0xff]
        %v1465 = vld [vmem:[#allocation6 + $0x198] sm:$0xff]
        %v1466 = vld [vmem:[#allocation6 + $0x1a0] sm:$0xff]
        %v1467 = vld [vmem:[#allocation6 + $0x1a8] sm:$0xff]
        %v1468 = vld [vmem:[#allocation6 + $0x1b0] sm:$0xff]
        %v1469 = vld [vmem:[#allocation6 + $0x1b8] sm:$0xff]
        %v1470 = vld [vmem:[#allocation6 + $0x1c0] sm:$0xff]
        %v1471 = vld [vmem:[#allocation6 + $0x1c8] sm:$0xff]
        %v1472 = vld [vmem:[#allocation6 + $0x1d0] sm:$0xff]
        %v1473 = vld [vmem:[#allocation6 + $0x1d8] sm:$0xff]
        %v1474 = vld [vmem:[#allocation6 + $0x1e0] sm:$0xff]
        %v1475 = vld [vmem:[#allocation6 + $0x1e8] sm:$0xff]
        %v1476 = vld [vmem:[#allocation6 + $0x1f0] sm:$0xff]
        %v1477 = vld [vmem:[#allocation6 + $0x1f8] sm:$0xff]
        %v1478 = vld [vmem:[#allocation6 + $0x200] sm:$0xff]
        %v1479 = vld [vmem:[#allocation6 + $0x208] sm:$0xff]
        %v1480 = vld [vmem:[#allocation6 + $0x210] sm:$0xff]
        %v1481 = vld [vmem:[#allocation6 + $0x218] sm:$0xff]
        %v1482 = vld [vmem:[#allocation6 + $0x220] sm:$0xff]
        %v1483 = vld [vmem:[#allocation6 + $0x228] sm:$0xff]
        %v1484 = vld [vmem:[#allocation6 + $0x230] sm:$0xff]
        %v1485 = vld [vmem:[#allocation6 + $0x238] sm:$0xff]
        %v1486 = vld [vmem:[#allocation6 + $0x240] sm:$0xff]
        %v1487 = vld [vmem:[#allocation6 + $0x248] sm:$0xff]
        %v1488 = vld [vmem:[#allocation6 + $0x250] sm:$0xff]
        %v1489 = vld [vmem:[#allocation6 + $0x258] sm:$0xff]
        %v1490 = vld [vmem:[#allocation6 + $0x260] sm:$0xff]
        %v1491 = vld [vmem:[#allocation6 + $0x268] sm:$0xff]
        %v1492 = vld [vmem:[#allocation6 + $0x270] sm:$0xff]
        %v1493 = vld [vmem:[#allocation6 + $0x278] sm:$0xff]
        %v1494 = vld [vmem:[#allocation6 + $0x280] sm:$0xff]
        %v1495 = vld [vmem:[#allocation6 + $0x288] sm:$0xff]
        %v1496 = vld [vmem:[#allocation6 + $0x290] sm:$0xff]
        %v1497 = vld [vmem:[#allocation6 + $0x298] sm:$0xff]
        %v1498 = vld [vmem:[#allocation6 + $0x2a0] sm:$0xff]
        %v1499 = vld [vmem:[#allocation6 + $0x2a8] sm:$0xff]
        %v1500 = vld [vmem:[#allocation6 + $0x2b0] sm:$0xff]
        %v1501 = vld [vmem:[#allocation6 + $0x2b8] sm:$0xff]
        %v1502 = vld [vmem:[#allocation6 + $0x2c0] sm:$0xff]
        %v1503 = vld [vmem:[#allocation6 + $0x2c8] sm:$0xff]
        %v1504 = vld [vmem:[#allocation6 + $0x2d0] sm:$0xff]
        %v1505 = vld [vmem:[#allocation6 + $0x2d8] sm:$0xff]
        %v1506 = vld [vmem:[#allocation6 + $0x2e0] sm:$0xff]
        %v1507 = vld [vmem:[#allocation6 + $0x2e8] sm:$0xff]
        %v1508 = vld [vmem:[#allocation6 + $0x2f0] sm:$0xff]
        %v1509 = vld [vmem:[#allocation6 + $0x2f8] sm:$0xff]
        %v1510 = vld [vmem:[#allocation6 + $0x300] sm:$0xff]
        %v1511 = vld [vmem:[#allocation6 + $0x308] sm:$0xff]
        %v1512 = vld [vmem:[#allocation6 + $0x310] sm:$0xff]
        %v1513 = vld [vmem:[#allocation6 + $0x318] sm:$0xff]
        %v1514 = vld [vmem:[#allocation6 + $0x320] sm:$0xff]
        %v1515 = vld [vmem:[#allocation6 + $0x328] sm:$0xff]
        %v1516 = vld [vmem:[#allocation6 + $0x330] sm:$0xff]
        %v1517 = vld [vmem:[#allocation6 + $0x338] sm:$0xff]
        %v1518 = vld [vmem:[#allocation6 + $0x340] sm:$0xff]
        %v1519 = vld [vmem:[#allocation6 + $0x348] sm:$0xff]
        %v1520 = vld [vmem:[#allocation6 + $0x350] sm:$0xff]
        %v1521 = vld [vmem:[#allocation6 + $0x358] sm:$0xff]
        %v1522 = vld [vmem:[#allocation6 + $0x360] sm:$0xff]
        %v1523 = vld [vmem:[#allocation6 + $0x368] sm:$0xff]
        %v1524 = vld [vmem:[#allocation6 + $0x370] sm:$0xff]
        %v1525 = vld [vmem:[#allocation6 + $0x378] sm:$0xff]
        %v1526 = vld [vmem:[#allocation6 + $0x380] sm:$0xff]
        %v1527 = vld [vmem:[#allocation6 + $0x388] sm:$0xff]
        %v1528 = vld [vmem:[#allocation6 + $0x390] sm:$0xff]
        %v1529 = vld [vmem:[#allocation6 + $0x398] sm:$0xff]
        %v1530 = vld [vmem:[#allocation6 + $0x3a0] sm:$0xff]
        %v1531 = vld [vmem:[#allocation6 + $0x3a8] sm:$0xff]
        %v1532 = vld [vmem:[#allocation6 + $0x3b0] sm:$0xff]
        %v1533 = vld [vmem:[#allocation6 + $0x3b8] sm:$0xff]
        %v1534 = vld [vmem:[#allocation6 + $0x3c0] sm:$0xff]
        %v1535 = vld [vmem:[#allocation6 + $0x3c8] sm:$0xff]
        %v1536 = vld [vmem:[#allocation6 + $0x3d0] sm:$0xff]
        %v1537 = vld [vmem:[#allocation6 + $0x3d8] sm:$0xff]
        %v1538 = vld [vmem:[#allocation6 + $0x3e0] sm:$0xff]
        %v1539 = vld [vmem:[#allocation6 + $0x3e8] sm:$0xff]
        %v1540 = vld [vmem:[#allocation6 + $0x3f0] sm:$0xff]
        %v1541 = vld [vmem:[#allocation6 + $0x3f8] sm:$0xff]
        %v1542 = vld [vmem:[#allocation6 + $0x400] sm:$0xff]
        %v1543 = vld [vmem:[#allocation6 + $0x408] sm:$0xff]
        %v1544 = vld [vmem:[#allocation6 + $0x410] sm:$0xff]
        %v1545 = vld [vmem:[#allocation6 + $0x418] sm:$0xff]
        %v1546 = vld [vmem:[#allocation6 + $0x420] sm:$0xff]
        %v1547 = vld [vmem:[#allocation6 + $0x428] sm:$0xff]
        %v1548 = vld [vmem:[#allocation6 + $0x430] sm:$0xff]
        %v1549 = vld [vmem:[#allocation6 + $0x438] sm:$0xff]
        %v1550 = vld [vmem:[#allocation6 + $0x440] sm:$0xff]
        %v1551 = vld [vmem:[#allocation6 + $0x448] sm:$0xff]
        %v1552 = vld [vmem:[#allocation6 + $0x450] sm:$0xff]
        %v1553 = vld [vmem:[#allocation6 + $0x458] sm:$0xff]
        %v1554 = vld [vmem:[#allocation6 + $0x460] sm:$0xff]
        %v1555 = vld [vmem:[#allocation6 + $0x468] sm:$0xff]
        %v1556 = vld [vmem:[#allocation6 + $0x470] sm:$0xff]
        %v1557 = vld [vmem:[#allocation6 + $0x478] sm:$0xff]
        %v1558 = vld [vmem:[#allocation6 + $0x480] sm:$0xff]
        %v1559 = vld [vmem:[#allocation6 + $0x488] sm:$0xff]
        %v1560 = vld [vmem:[#allocation6 + $0x490] sm:$0xff]
        %v1561 = vld [vmem:[#allocation6 + $0x498] sm:$0xff]
        %v1562 = vld [vmem:[#allocation6 + $0x4a0] sm:$0xff]
        %v1563 = vld [vmem:[#allocation6 + $0x4a8] sm:$0xff]
        %v1564 = vld [vmem:[#allocation6 + $0x4b0] sm:$0xff]
        %v1565 = vld [vmem:[#allocation6 + $0x4b8] sm:$0xff]
        %v1566 = vld [vmem:[#allocation6 + $0x4c0] sm:$0xff]
        %v1567 = vld [vmem:[#allocation6 + $0x4c8] sm:$0xff]
        %v1568 = vld [vmem:[#allocation6 + $0x4d0] sm:$0xff]
        %v1569 = vld [vmem:[#allocation6 + $0x4d8] sm:$0xff]
        %v1570 = vld [vmem:[#allocation6 + $0x4e0] sm:$0xff]
        %v1571 = vld [vmem:[#allocation6 + $0x4e8] sm:$0xff]
        %v1572 = vld [vmem:[#allocation6 + $0x4f0] sm:$0xff]
        %v1573 = vld [vmem:[#allocation6 + $0x4f8] sm:$0xff]
        %v1574 = vld [vmem:[#allocation6 + $0x500] sm:$0xff]
        %v1575 = vld [vmem:[#allocation6 + $0x508] sm:$0xff]
        %v1576 = vld [vmem:[#allocation6 + $0x510] sm:$0xff]
        %v1577 = vld [vmem:[#allocation6 + $0x518] sm:$0xff]
        %v1578 = vld [vmem:[#allocation6 + $0x520] sm:$0xff]
        %v1579 = vld [vmem:[#allocation6 + $0x528] sm:$0xff]
        %v1580 = vld [vmem:[#allocation6 + $0x530] sm:$0xff]
        %v1581 = vld [vmem:[#allocation6 + $0x538] sm:$0xff]
        %v1582 = vld [vmem:[#allocation6 + $0x540] sm:$0xff]
        %v1583 = vld [vmem:[#allocation6 + $0x548] sm:$0xff]
        %v1584 = vld [vmem:[#allocation6 + $0x550] sm:$0xff]
        %v1585 = vld [vmem:[#allocation6 + $0x558] sm:$0xff]
        %v1586 = vld [vmem:[#allocation6 + $0x560] sm:$0xff]
        %v1587 = vld [vmem:[#allocation6 + $0x568] sm:$0xff]
        %v1588 = vld [vmem:[#allocation6 + $0x570] sm:$0xff]
        %v1589 = vld [vmem:[#allocation6 + $0x578] sm:$0xff]
        %v1590 = vld [vmem:[#allocation6 + $0x580] sm:$0xff]
        %v1591 = vld [vmem:[#allocation6 + $0x588] sm:$0xff]
        %v1592 = vld [vmem:[#allocation6 + $0x590] sm:$0xff]
        %v1593 = vld [vmem:[#allocation6 + $0x598] sm:$0xff]
        %v1594 = vld [vmem:[#allocation6 + $0x5a0] sm:$0xff]
        %v1595 = vld [vmem:[#allocation6 + $0x5a8] sm:$0xff]
        %v1596 = vld [vmem:[#allocation6 + $0x5b0] sm:$0xff]
        %v1597 = vld [vmem:[#allocation6 + $0x5b8] sm:$0xff]
        %v1598 = vld [vmem:[#allocation6 + $0x5c0] sm:$0xff]
        %v1599 = vld [vmem:[#allocation6 + $0x5c8] sm:$0xff]
        %v1600 = vld [vmem:[#allocation6 + $0x5d0] sm:$0xff]
        %v1601 = vld [vmem:[#allocation6 + $0x5d8] sm:$0xff]
        %v1602 = vld [vmem:[#allocation6 + $0x5e0] sm:$0xff]
        %v1603 = vld [vmem:[#allocation6 + $0x5e8] sm:$0xff]
        %v1604 = vld [vmem:[#allocation6 + $0x5f0] sm:$0xff]
        %v1605 = vld [vmem:[#allocation6 + $0x5f8] sm:$0xff]
        %v1606 = vld [vmem:[#allocation6 + $0x600] sm:$0xff]
        %v1607 = vld [vmem:[#allocation6 + $0x608] sm:$0xff]
        %v1608 = vld [vmem:[#allocation6 + $0x610] sm:$0xff]
        %v1609 = vld [vmem:[#allocation6 + $0x618] sm:$0xff]
        %v1610 = vld [vmem:[#allocation6 + $0x620] sm:$0xff]
        %v1611 = vld [vmem:[#allocation6 + $0x628] sm:$0xff]
        %v1612 = vld [vmem:[#allocation6 + $0x630] sm:$0xff]
        %v1613 = vld [vmem:[#allocation6 + $0x638] sm:$0xff]
        %v1614 = vld [vmem:[#allocation6 + $0x640] sm:$0xff]
        %v1615 = vld [vmem:[#allocation6 + $0x648] sm:$0xff]
        %v1616 = vld [vmem:[#allocation6 + $0x650] sm:$0xff]
        %v1617 = vld [vmem:[#allocation6 + $0x658] sm:$0xff]
        %v1618 = vld [vmem:[#allocation6 + $0x660] sm:$0xff]
        %v1619 = vld [vmem:[#allocation6 + $0x668] sm:$0xff]
        %v1620 = vld [vmem:[#allocation6 + $0x670] sm:$0xff]
        %v1621 = vld [vmem:[#allocation6 + $0x678] sm:$0xff]
        %v1622 = vld [vmem:[#allocation6 + $0x680] sm:$0xff]
        %v1623 = vld [vmem:[#allocation6 + $0x688] sm:$0xff]
        %v1624 = vld [vmem:[#allocation6 + $0x690] sm:$0xff]
        %v1625 = vld [vmem:[#allocation6 + $0x698] sm:$0xff]
        %v1626 = vld [vmem:[#allocation6 + $0x6a0] sm:$0xff]
        %v1627 = vld [vmem:[#allocation6 + $0x6a8] sm:$0xff]
        %v1628 = vld [vmem:[#allocation6 + $0x6b0] sm:$0xff]
        %v1629 = vld [vmem:[#allocation6 + $0x6b8] sm:$0xff]
        %v1630 = vld [vmem:[#allocation6 + $0x6c0] sm:$0xff]
        %v1631 = vld [vmem:[#allocation6 + $0x6c8] sm:$0xff]
        %v1632 = vld [vmem:[#allocation6 + $0x6d0] sm:$0xff]
        %v1633 = vld [vmem:[#allocation6 + $0x6d8] sm:$0xff]
        %v1634 = vld [vmem:[#allocation6 + $0x6e0] sm:$0xff]
        %v1635 = vld [vmem:[#allocation6 + $0x6e8] sm:$0xff]
        %v1636 = vld [vmem:[#allocation6 + $0x6f0] sm:$0xff]
        %v1637 = vld [vmem:[#allocation6 + $0x6f8] sm:$0xff]
        %v1638 = vld [vmem:[#allocation6 + $0x700] sm:$0xff]
        %v1639 = vld [vmem:[#allocation6 + $0x708] sm:$0xff]
        %v1640 = vld [vmem:[#allocation6 + $0x710] sm:$0xff]
        %v1641 = vld [vmem:[#allocation6 + $0x718] sm:$0xff]
        %v1642 = vld [vmem:[#allocation6 + $0x720] sm:$0xff]
        %v1643 = vld [vmem:[#allocation6 + $0x728] sm:$0xff]
        %v1644 = vld [vmem:[#allocation6 + $0x730] sm:$0xff]
        %v1645 = vld [vmem:[#allocation6 + $0x738] sm:$0xff]
        %v1646 = vld [vmem:[#allocation6 + $0x740] sm:$0xff]
        %v1647 = vld [vmem:[#allocation6 + $0x748] sm:$0xff]
        %v1648 = vld [vmem:[#allocation6 + $0x750] sm:$0xff]
        %v1649 = vld [vmem:[#allocation6 + $0x758] sm:$0xff]
        %v1650 = vld [vmem:[#allocation6 + $0x760] sm:$0xff]
        %v1651 = vld [vmem:[#allocation6 + $0x768] sm:$0xff]
        %v1652 = vld [vmem:[#allocation6 + $0x770] sm:$0xff]
        %v1653 = vld [vmem:[#allocation6 + $0x778] sm:$0xff]
        %v1654 = vld [vmem:[#allocation6 + $0x780] sm:$0xff]
        %v1655 = vld [vmem:[#allocation6 + $0x788] sm:$0xff]
        %v1656 = vld [vmem:[#allocation6 + $0x790] sm:$0xff]
        %v1657 = vld [vmem:[#allocation6 + $0x798] sm:$0xff]
        %v1658 = vld [vmem:[#allocation6 + $0x7a0] sm:$0xff]
        %v1659 = vld [vmem:[#allocation6 + $0x7a8] sm:$0xff]
        %v1660 = vld [vmem:[#allocation6 + $0x7b0] sm:$0xff]
        %v1661 = vld [vmem:[#allocation6 + $0x7b8] sm:$0xff]
        %v1662 = vld [vmem:[#allocation6 + $0x7c0] sm:$0xff]
        %v1663 = vld [vmem:[#allocation6 + $0x7c8] sm:$0xff]
        %v1664 = vld [vmem:[#allocation6 + $0x7d0] sm:$0xff]
        %v1665 = vld [vmem:[#allocation6 + $0x7d8] sm:$0xff]
        %v1666 = vld [vmem:[#allocation6 + $0x7e0] sm:$0xff]
        %v1667 = vld [vmem:[#allocation6 + $0x7e8] sm:$0xff]
        %v1668 = vld [vmem:[#allocation6 + $0x7f0] sm:$0xff]
        %v1669 = vld [vmem:[#allocation6 + $0x7f8] sm:$0xff]
        %v1670 = vld [vmem:[#allocation6 + $0x800] sm:$0xff]
        %v1671 = vld [vmem:[#allocation6 + $0x808] sm:$0xff]
        %v1672 = vld [vmem:[#allocation6 + $0x810] sm:$0xff]
        %v1673 = vld [vmem:[#allocation6 + $0x818] sm:$0xff]
        %v1674 = vld [vmem:[#allocation6 + $0x820] sm:$0xff]
        %v1675 = vld [vmem:[#allocation6 + $0x828] sm:$0xff]
        %v1676 = vld [vmem:[#allocation6 + $0x830] sm:$0xff]
        %v1677 = vld [vmem:[#allocation6 + $0x838] sm:$0xff]
        %v1678 = vld [vmem:[#allocation6 + $0x840] sm:$0xff]
        %v1679 = vld [vmem:[#allocation6 + $0x848] sm:$0xff]
        %v1680 = vld [vmem:[#allocation6 + $0x850] sm:$0xff]
        %v1681 = vld [vmem:[#allocation6 + $0x858] sm:$0xff]
        %v1682 = vld [vmem:[#allocation6 + $0x860] sm:$0xff]
        %v1683 = vld [vmem:[#allocation6 + $0x868] sm:$0xff]
        %v1684 = vld [vmem:[#allocation6 + $0x870] sm:$0xff]
        %v1685 = vld [vmem:[#allocation6 + $0x878] sm:$0xff]
        %v1686 = vld [vmem:[#allocation6 + $0x880] sm:$0xff]
        %v1687 = vld [vmem:[#allocation6 + $0x888] sm:$0xff]
        %v1688 = vld [vmem:[#allocation6 + $0x890] sm:$0xff]
        %v1689 = vld [vmem:[#allocation6 + $0x898] sm:$0xff]
        %v1690 = vld [vmem:[#allocation6 + $0x8a0] sm:$0xff]
        %v1691 = vld [vmem:[#allocation6 + $0x8a8] sm:$0xff]
        %v1692 = vld [vmem:[#allocation6 + $0x8b0] sm:$0xff]
        %v1693 = vld [vmem:[#allocation6 + $0x8b8] sm:$0xff]
        %v1694 = vld [vmem:[#allocation6 + $0x8c0] sm:$0xff]
        %v1695 = vld [vmem:[#allocation6 + $0x8c8] sm:$0xff]
        %v1696 = vld [vmem:[#allocation6 + $0x8d0] sm:$0xff]
        %v1697 = vld [vmem:[#allocation6 + $0x8d8] sm:$0xff]
        %v1698 = vld [vmem:[#allocation6 + $0x8e0] sm:$0xff]
        %v1699 = vld [vmem:[#allocation6 + $0x8e8] sm:$0xff]
        %v1700 = vld [vmem:[#allocation6 + $0x8f0] sm:$0xff]
        %v1701 = vld [vmem:[#allocation6 + $0x8f8] sm:$0xff]
        %v1702 = vld [vmem:[#allocation6 + $0x900] sm:$0xff]
        %v1703 = vld [vmem:[#allocation6 + $0x908] sm:$0xff]
        %v1704 = vld [vmem:[#allocation6 + $0x910] sm:$0xff]
        %v1705 = vld [vmem:[#allocation6 + $0x918] sm:$0xff]
        %v1706 = vld [vmem:[#allocation6 + $0x920] sm:$0xff]
        %v1707 = vld [vmem:[#allocation6 + $0x928] sm:$0xff]
        %v1708 = vld [vmem:[#allocation6 + $0x930] sm:$0xff]
        %v1709 = vld [vmem:[#allocation6 + $0x938] sm:$0xff]
        %v1710 = vld [vmem:[#allocation6 + $0x940] sm:$0xff]
        %v1711 = vld [vmem:[#allocation6 + $0x948] sm:$0xff]
        %v1712 = vld [vmem:[#allocation6 + $0x950] sm:$0xff]
        %v1713 = vld [vmem:[#allocation6 + $0x958] sm:$0xff]
        %v1714 = vld [vmem:[#allocation6 + $0x960] sm:$0xff]
        %v1715 = vld [vmem:[#allocation6 + $0x968] sm:$0xff]
        %v1716 = vld [vmem:[#allocation6 + $0x970] sm:$0xff]
        %v1717 = vld [vmem:[#allocation6 + $0x978] sm:$0xff]
        %v1718 = vld [vmem:[#allocation6 + $0x980] sm:$0xff]
        %v1719 = vld [vmem:[#allocation6 + $0x988] sm:$0xff]
        %v1720 = vld [vmem:[#allocation6 + $0x990] sm:$0xff]
        %v1721 = vld [vmem:[#allocation6 + $0x998] sm:$0xff]
        %v1722 = vld [vmem:[#allocation6 + $0x9a0] sm:$0xff]
        %v1723 = vld [vmem:[#allocation6 + $0x9a8] sm:$0xff]
        %v1724 = vld [vmem:[#allocation6 + $0x9b0] sm:$0xff]
        %v1725 = vld [vmem:[#allocation6 + $0x9b8] sm:$0xff]
        %v1726 = vld [vmem:[#allocation6 + $0x9c0] sm:$0xff]
        %v1727 = vld [vmem:[#allocation6 + $0x9c8] sm:$0xff]
        %v1728 = vld [vmem:[#allocation6 + $0x9d0] sm:$0xff]
        %v1729 = vld [vmem:[#allocation6 + $0x9d8] sm:$0xff]
        %v1730 = vld [vmem:[#allocation6 + $0x9e0] sm:$0xff]
        %v1731 = vld [vmem:[#allocation6 + $0x9e8] sm:$0xff]
        %v1732 = vld [vmem:[#allocation6 + $0x9f0] sm:$0xff]
        %v1733 = vld [vmem:[#allocation6 + $0x9f8] sm:$0xff]
        %v1734 = vld [vmem:[#allocation6 + $0xa00] sm:$0xff]
        %v1735 = vld [vmem:[#allocation6 + $0xa08] sm:$0xff]
        %v1736 = vld [vmem:[#allocation6 + $0xa10] sm:$0xff]
        %v1737 = vld [vmem:[#allocation6 + $0xa18] sm:$0xff]
        %v1738 = vld [vmem:[#allocation6 + $0xa20] sm:$0xff]
        %v1739 = vld [vmem:[#allocation6 + $0xa28] sm:$0xff]
        %v1740 = vld [vmem:[#allocation6 + $0xa30] sm:$0xff]
        %v1741 = vld [vmem:[#allocation6 + $0xa38] sm:$0xff]
        %v1742 = vld [vmem:[#allocation6 + $0xa40] sm:$0xff]
        %v1743 = vld [vmem:[#allocation6 + $0xa48] sm:$0xff]
        %v1744 = vld [vmem:[#allocation6 + $0xa50] sm:$0xff]
        %v1745 = vld [vmem:[#allocation6 + $0xa58] sm:$0xff]
        %v1746 = vld [vmem:[#allocation6 + $0xa60] sm:$0xff]
        %v1747 = vld [vmem:[#allocation6 + $0xa68] sm:$0xff]
        %v1748 = vld [vmem:[#allocation6 + $0xa70] sm:$0xff]
        %v1749 = vld [vmem:[#allocation6 + $0xa78] sm:$0xff]
        %v1750 = vld [vmem:[#allocation6 + $0xa80] sm:$0xff]
        %v1751 = vld [vmem:[#allocation6 + $0xa88] sm:$0xff]
        %v1752 = vld [vmem:[#allocation6 + $0xa90] sm:$0xff]
        %v1753 = vld [vmem:[#allocation6 + $0xa98] sm:$0xff]
        %v1754 = vld [vmem:[#allocation6 + $0xaa0] sm:$0xff]
        %v1755 = vld [vmem:[#allocation6 + $0xaa8] sm:$0xff]
        %v1756 = vld [vmem:[#allocation6 + $0xab0] sm:$0xff]
        %v1757 = vld [vmem:[#allocation6 + $0xab8] sm:$0xff]
        %v1758 = vld [vmem:[#allocation6 + $0xac0] sm:$0xff]
        %v1759 = vld [vmem:[#allocation6 + $0xac8] sm:$0xff]
        %v1760 = vld [vmem:[#allocation6 + $0xad0] sm:$0xff]
        %v1761 = vld [vmem:[#allocation6 + $0xad8] sm:$0xff]
        %v1762 = vld [vmem:[#allocation6 + $0xae0] sm:$0xff]
        %v1763 = vld [vmem:[#allocation6 + $0xae8] sm:$0xff]
        %v1764 = vld [vmem:[#allocation6 + $0xaf0] sm:$0xff]
        %v1765 = vld [vmem:[#allocation6 + $0xaf8] sm:$0xff]
        %v1766 = vld [vmem:[#allocation6 + $0xb00] sm:$0xff]
        %v1767 = vld [vmem:[#allocation6 + $0xb08] sm:$0xff]
        %v1768 = vld [vmem:[#allocation6 + $0xb10] sm:$0xff]
        %v1769 = vld [vmem:[#allocation6 + $0xb18] sm:$0xff]
        %v1770 = vld [vmem:[#allocation6 + $0xb20] sm:$0xff]
        %v1771 = vld [vmem:[#allocation6 + $0xb28] sm:$0xff]
        %v1772 = vld [vmem:[#allocation6 + $0xb30] sm:$0xff]
        %v1773 = vld [vmem:[#allocation6 + $0xb38] sm:$0xff]
        %v1774 = vld [vmem:[#allocation6 + $0xb40] sm:$0xff]
        %v1775 = vld [vmem:[#allocation6 + $0xb48] sm:$0xff]
        %v1776 = vld [vmem:[#allocation6 + $0xb50] sm:$0xff]
        %v1777 = vld [vmem:[#allocation6 + $0xb58] sm:$0xff]
        %v1778 = vld [vmem:[#allocation6 + $0xb60] sm:$0xff]
        %v1779 = vld [vmem:[#allocation6 + $0xb68] sm:$0xff]
        %v1780 = vld [vmem:[#allocation6 + $0xb70] sm:$0xff]
        %v1781 = vld [vmem:[#allocation6 + $0xb78] sm:$0xff]
        %v1782 = vld [vmem:[#allocation6 + $0xb80] sm:$0xff]
        %v1783 = vld [vmem:[#allocation6 + $0xb88] sm:$0xff]
        %v1784 = vld [vmem:[#allocation6 + $0xb90] sm:$0xff]
        %v1785 = vld [vmem:[#allocation6 + $0xb98] sm:$0xff]
        %v1786 = vld [vmem:[#allocation6 + $0xba0] sm:$0xff]
        %v1787 = vld [vmem:[#allocation6 + $0xba8] sm:$0xff]
        %v1788 = vld [vmem:[#allocation6 + $0xbb0] sm:$0xff]
        %v1789 = vld [vmem:[#allocation6 + $0xbb8] sm:$0xff]
        %v1790 = vld [vmem:[#allocation6 + $0xbc0] sm:$0xff]
        %v1791 = vld [vmem:[#allocation6 + $0xbc8] sm:$0xff]
        %v1792 = vld [vmem:[#allocation6 + $0xbd0] sm:$0xff]
        %v1793 = vld [vmem:[#allocation6 + $0xbd8] sm:$0xff]
        %v1794 = vld [vmem:[#allocation6 + $0xbe0] sm:$0xff]
        %v1795 = vld [vmem:[#allocation6 + $0xbe8] sm:$0xff]
        %v1796 = vld [vmem:[#allocation6 + $0xbf0] sm:$0xff]
        %v1797 = vld [vmem:[#allocation6 + $0xbf8] sm:$0xff]
        %v1798 = vld [vmem:[#allocation6 + $0xc00] sm:$0xff]
        %v1799 = vld [vmem:[#allocation6 + $0xc08] sm:$0xff]
        %v1800 = vld [vmem:[#allocation6 + $0xc10] sm:$0xff]
        %v1801 = vld [vmem:[#allocation6 + $0xc18] sm:$0xff]
        %v1802 = vld [vmem:[#allocation6 + $0xc20] sm:$0xff]
        %v1803 = vld [vmem:[#allocation6 + $0xc28] sm:$0xff]
        %v1804 = vld [vmem:[#allocation6 + $0xc30] sm:$0xff]
        %v1805 = vld [vmem:[#allocation6 + $0xc38] sm:$0xff]
        %v1806 = vld [vmem:[#allocation6 + $0xc40] sm:$0xff]
        %v1807 = vld [vmem:[#allocation6 + $0xc48] sm:$0xff]
        %v1808 = vld [vmem:[#allocation6 + $0xc50] sm:$0xff]
        %v1809 = vld [vmem:[#allocation6 + $0xc58] sm:$0xff]
        %v1810 = vld [vmem:[#allocation6 + $0xc60] sm:$0xff]
        %v1811 = vld [vmem:[#allocation6 + $0xc68] sm:$0xff]
        %v1812 = vld [vmem:[#allocation6 + $0xc70] sm:$0xff]
        %v1813 = vld [vmem:[#allocation6 + $0xc78] sm:$0xff]
        %v1814 = vld [vmem:[#allocation6 + $0xc80] sm:$0xff]
        %v1815 = vld [vmem:[#allocation6 + $0xc88] sm:$0xff]
        %v1816 = vld [vmem:[#allocation6 + $0xc90] sm:$0xff]
        %v1817 = vld [vmem:[#allocation6 + $0xc98] sm:$0xff]
        %v1818 = vld [vmem:[#allocation6 + $0xca0] sm:$0xff]
        %v1819 = vld [vmem:[#allocation6 + $0xca8] sm:$0xff]
        %v1820 = vld [vmem:[#allocation6 + $0xcb0] sm:$0xff]
        %v1821 = vld [vmem:[#allocation6 + $0xcb8] sm:$0xff]
        %v1822 = vld [vmem:[#allocation6 + $0xcc0] sm:$0xff]
        %v1823 = vld [vmem:[#allocation6 + $0xcc8] sm:$0xff]
        %v1824 = vld [vmem:[#allocation6 + $0xcd0] sm:$0xff]
        %v1825 = vld [vmem:[#allocation6 + $0xcd8] sm:$0xff]
        %v1826 = vld [vmem:[#allocation6 + $0xce0] sm:$0xff]
        %v1827 = vld [vmem:[#allocation6 + $0xce8] sm:$0xff]
        %v1828 = vld [vmem:[#allocation6 + $0xcf0] sm:$0xff]
        %v1829 = vld [vmem:[#allocation6 + $0xcf8] sm:$0xff]
        %v1830 = vld [vmem:[#allocation6 + $0xd00] sm:$0xff]
        %v1831 = vld [vmem:[#allocation6 + $0xd08] sm:$0xff]
        %v1832 = vld [vmem:[#allocation6 + $0xd10] sm:$0xff]
        %v1833 = vld [vmem:[#allocation6 + $0xd18] sm:$0xff]
        %v1834 = vld [vmem:[#allocation6 + $0xd20] sm:$0xff]
        %v1835 = vld [vmem:[#allocation6 + $0xd28] sm:$0xff]
        %v1836 = vld [vmem:[#allocation6 + $0xd30] sm:$0xff]
        %v1837 = vld [vmem:[#allocation6 + $0xd38] sm:$0xff]
        %v1838 = vld [vmem:[#allocation6 + $0xd40] sm:$0xff]
        %v1839 = vld [vmem:[#allocation6 + $0xd48] sm:$0xff]
        %v1840 = vld [vmem:[#allocation6 + $0xd50] sm:$0xff]
        %v1841 = vld [vmem:[#allocation6 + $0xd58] sm:$0xff]
        %v1842 = vld [vmem:[#allocation6 + $0xd60] sm:$0xff]
        %v1843 = vld [vmem:[#allocation6 + $0xd68] sm:$0xff]
        %v1844 = vld [vmem:[#allocation6 + $0xd70] sm:$0xff]
        %v1845 = vld [vmem:[#allocation6 + $0xd78] sm:$0xff]
        %v1846 = vld [vmem:[#allocation6 + $0xd80] sm:$0xff]
        %v1847 = vld [vmem:[#allocation6 + $0xd88] sm:$0xff]
        %v1848 = vld [vmem:[#allocation6 + $0xd90] sm:$0xff]
        %v1849 = vld [vmem:[#allocation6 + $0xd98] sm:$0xff]
        %v1850 = vld [vmem:[#allocation6 + $0xda0] sm:$0xff]
        %v1851 = vld [vmem:[#allocation6 + $0xda8] sm:$0xff]
        %v1852 = vld [vmem:[#allocation6 + $0xdb0] sm:$0xff]
        %v1853 = vld [vmem:[#allocation6 + $0xdb8] sm:$0xff]
        %v1854 = vld [vmem:[#allocation6 + $0xdc0] sm:$0xff]
        %v1855 = vld [vmem:[#allocation6 + $0xdc8] sm:$0xff]
        %v1856 = vld [vmem:[#allocation6 + $0xdd0] sm:$0xff]
        %v1857 = vld [vmem:[#allocation6 + $0xdd8] sm:$0xff]
        %v1858 = vld [vmem:[#allocation6 + $0xde0] sm:$0xff]
        %v1859 = vld [vmem:[#allocation6 + $0xde8] sm:$0xff]
        %v1860 = vld [vmem:[#allocation6 + $0xdf0] sm:$0xff]
        %v1861 = vld [vmem:[#allocation6 + $0xdf8] sm:$0xff]
        %v1862 = vld [vmem:[#allocation6 + $0xe00] sm:$0xff]
        %v1863 = vld [vmem:[#allocation6 + $0xe08] sm:$0xff]
        %v1864 = vld [vmem:[#allocation6 + $0xe10] sm:$0xff]
        %v1865 = vld [vmem:[#allocation6 + $0xe18] sm:$0xff]
        %v1866 = vld [vmem:[#allocation6 + $0xe20] sm:$0xff]
        %v1867 = vld [vmem:[#allocation6 + $0xe28] sm:$0xff]
        %v1868 = vld [vmem:[#allocation6 + $0xe30] sm:$0xff]
        %v1869 = vld [vmem:[#allocation6 + $0xe38] sm:$0xff]
        %v1870 = vld [vmem:[#allocation6 + $0xe40] sm:$0xff]
        %v1871 = vld [vmem:[#allocation6 + $0xe48] sm:$0xff]
        %v1872 = vld [vmem:[#allocation6 + $0xe50] sm:$0xff]
        %v1873 = vld [vmem:[#allocation6 + $0xe58] sm:$0xff]
        %v1874 = vld [vmem:[#allocation6 + $0xe60] sm:$0xff]
        %v1875 = vld [vmem:[#allocation6 + $0xe68] sm:$0xff]
        %v1876 = vld [vmem:[#allocation6 + $0xe70] sm:$0xff]
        %v1877 = vld [vmem:[#allocation6 + $0xe78] sm:$0xff]
        %v1878 = vld [vmem:[#allocation6 + $0xe80] sm:$0xff]
        %v1879 = vld [vmem:[#allocation6 + $0xe88] sm:$0xff]
        %v1880 = vld [vmem:[#allocation6 + $0xe90] sm:$0xff]
        %v1881 = vld [vmem:[#allocation6 + $0xe98] sm:$0xff]
        %v1882 = vld [vmem:[#allocation6 + $0xea0] sm:$0xff]
        %v1883 = vld [vmem:[#allocation6 + $0xea8] sm:$0xff]
        %v1884 = vld [vmem:[#allocation6 + $0xeb0] sm:$0xff]
        %v1885 = vld [vmem:[#allocation6 + $0xeb8] sm:$0xff]
        %v1886 = vld [vmem:[#allocation6 + $0xec0] sm:$0xff]
        %v1887 = vld [vmem:[#allocation6 + $0xec8] sm:$0xff]
        %v1888 = vld [vmem:[#allocation6 + $0xed0] sm:$0xff]
        %v1889 = vld [vmem:[#allocation6 + $0xed8] sm:$0xff]
        %v1890 = vld [vmem:[#allocation6 + $0xee0] sm:$0xff]
        %v1891 = vld [vmem:[#allocation6 + $0xee8] sm:$0xff]
        %v1892 = vld [vmem:[#allocation6 + $0xef0] sm:$0xff]
        %v1893 = vld [vmem:[#allocation6 + $0xef8] sm:$0xff]
        %v1894 = vld [vmem:[#allocation6 + $0xf00] sm:$0xff]
        %v1895 = vld [vmem:[#allocation6 + $0xf08] sm:$0xff]
        %v1896 = vld [vmem:[#allocation6 + $0xf10] sm:$0xff]
        %v1897 = vld [vmem:[#allocation6 + $0xf18] sm:$0xff]
        %v1898 = vld [vmem:[#allocation6 + $0xf20] sm:$0xff]
        %v1899 = vld [vmem:[#allocation6 + $0xf28] sm:$0xff]
        %v1900 = vld [vmem:[#allocation6 + $0xf30] sm:$0xff]
        %v1901 = vld [vmem:[#allocation6 + $0xf38] sm:$0xff]
        %v1902 = vld [vmem:[#allocation6 + $0xf40] sm:$0xff]
        %v1903 = vld [vmem:[#allocation6 + $0xf48] sm:$0xff]
        %v1904 = vld [vmem:[#allocation6 + $0xf50] sm:$0xff]
        %v1905 = vld [vmem:[#allocation6 + $0xf58] sm:$0xff]
        %v1906 = vld [vmem:[#allocation6 + $0xf60] sm:$0xff]
        %v1907 = vld [vmem:[#allocation6 + $0xf68] sm:$0xff]
        %v1908 = vld [vmem:[#allocation6 + $0xf70] sm:$0xff]
        %v1909 = vld [vmem:[#allocation6 + $0xf78] sm:$0xff]
        %v1910 = vld [vmem:[#allocation6 + $0xf80] sm:$0xff]
        %v1911 = vld [vmem:[#allocation6 + $0xf88] sm:$0xff]
        %v1912 = vld [vmem:[#allocation6 + $0xf90] sm:$0xff]
        %v1913 = vld [vmem:[#allocation6 + $0xf98] sm:$0xff]
        %v1914 = vld [vmem:[#allocation6 + $0xfa0] sm:$0xff]
        %v1915 = vld [vmem:[#allocation6 + $0xfa8] sm:$0xff]
        %v1916 = vld [vmem:[#allocation6 + $0xfb0] sm:$0xff]
        %v1917 = vld [vmem:[#allocation6 + $0xfb8] sm:$0xff]
        %v1918 = vld [vmem:[#allocation6 + $0xfc0] sm:$0xff]
        %v1919 = vld [vmem:[#allocation6 + $0xfc8] sm:$0xff]
        %v1920 = vld [vmem:[#allocation6 + $0xfd0] sm:$0xff]
        %v1921 = vld [vmem:[#allocation6 + $0xfd8] sm:$0xff]
        %v1922 = vld [vmem:[#allocation6 + $0xfe0] sm:$0xff]
        %v1923 = vld [vmem:[#allocation6 + $0xfe8] sm:$0xff]
        %v1924 = vld [vmem:[#allocation6 + $0xff0] sm:$0xff]
        %v1925 = vld [vmem:[#allocation6 + $0xff8] sm:$0xff]
        %v1926 = vld [vmem:[#allocation6 + $0x1000] sm:$0xff]
        %v1927 = vld [vmem:[#allocation6 + $0x1008] sm:$0xff]
        %v1928 = vld [vmem:[#allocation6 + $0x1010] sm:$0xff]
        %v1929 = vld [vmem:[#allocation6 + $0x1018] sm:$0xff]
        %v1930 = vld [vmem:[#allocation6 + $0x1020] sm:$0xff]
        %v1931 = vld [vmem:[#allocation6 + $0x1028] sm:$0xff]
        %v1932 = vld [vmem:[#allocation6 + $0x1030] sm:$0xff]
        %v1933 = vld [vmem:[#allocation6 + $0x1038] sm:$0xff]
        %v1934 = vld [vmem:[#allocation6 + $0x1040] sm:$0xff]
        %v1935 = vld [vmem:[#allocation6 + $0x1048] sm:$0xff]
        %v1936 = vld [vmem:[#allocation6 + $0x1050] sm:$0xff]
        %v1937 = vld [vmem:[#allocation6 + $0x1058] sm:$0xff]
        %v1938 = vld [vmem:[#allocation6 + $0x1060] sm:$0xff]
        %v1939 = vld [vmem:[#allocation6 + $0x1068] sm:$0xff]
        %v1940 = vld [vmem:[#allocation6 + $0x1070] sm:$0xff]
        %v1941 = vld [vmem:[#allocation6 + $0x1078] sm:$0xff]
        %v1942 = vld [vmem:[#allocation6 + $0x1080] sm:$0xff]
        %v1943 = vld [vmem:[#allocation6 + $0x1088] sm:$0xff]
        %v1944 = vld [vmem:[#allocation6 + $0x1090] sm:$0xff]
        %v1945 = vld [vmem:[#allocation6 + $0x1098] sm:$0xff]
        %v1946 = vld [vmem:[#allocation6 + $0x10a0] sm:$0xff]
        %v1947 = vld [vmem:[#allocation6 + $0x10a8] sm:$0xff]
        %v1948 = vld [vmem:[#allocation6 + $0x10b0] sm:$0xff]
        %v1949 = vld [vmem:[#allocation6 + $0x10b8] sm:$0xff]
        %v1950 = vld [vmem:[#allocation6 + $0x10c0] sm:$0xff]
        %v1951 = vld [vmem:[#allocation6 + $0x10c8] sm:$0xff]
        %v1952 = vld [vmem:[#allocation6 + $0x10d0] sm:$0xff]
        %v1953 = vld [vmem:[#allocation6 + $0x10d8] sm:$0xff]
        %v1954 = vld [vmem:[#allocation6 + $0x10e0] sm:$0xff]
        %v1955 = vld [vmem:[#allocation6 + $0x10e8] sm:$0xff]
        %v1956 = vld [vmem:[#allocation6 + $0x10f0] sm:$0xff]
        %v1957 = vld [vmem:[#allocation6 + $0x10f8] sm:$0xff]
        %v1958 = vld [vmem:[#allocation6 + $0x1100] sm:$0xff]
        %v1959 = vld [vmem:[#allocation6 + $0x1108] sm:$0xff]
        %v1960 = vld [vmem:[#allocation6 + $0x1110] sm:$0xff]
        %v1961 = vld [vmem:[#allocation6 + $0x1118] sm:$0xff]
        %v1962 = vld [vmem:[#allocation6 + $0x1120] sm:$0xff]
        %v1963 = vld [vmem:[#allocation6 + $0x1128] sm:$0xff]
        %v1964 = vld [vmem:[#allocation6 + $0x1130] sm:$0xff]
        %v1965 = vld [vmem:[#allocation6 + $0x1138] sm:$0xff]
        %v1966 = vld [vmem:[#allocation6 + $0x1140] sm:$0xff]
        %v1967 = vld [vmem:[#allocation6 + $0x1148] sm:$0xff]
        %v1968 = vld [vmem:[#allocation6 + $0x1150] sm:$0xff]
        %v1969 = vld [vmem:[#allocation6 + $0x1158] sm:$0xff]
        %v1970 = vld [vmem:[#allocation6 + $0x1160] sm:$0xff]
        %v1971 = vld [vmem:[#allocation6 + $0x1168] sm:$0xff]
        %v1972 = vld [vmem:[#allocation6 + $0x1170] sm:$0xff]
        %v1973 = vld [vmem:[#allocation6 + $0x1178] sm:$0xff]
        %v1974 = vld [vmem:[#allocation6 + $0x1180] sm:$0xff]
        %v1975 = vld [vmem:[#allocation6 + $0x1188] sm:$0xff]
        %v1976 = vld [vmem:[#allocation6 + $0x1190] sm:$0xff]
        %v1977 = vld [vmem:[#allocation6 + $0x1198] sm:$0xff]
        %v1978 = vld [vmem:[#allocation6 + $0x11a0] sm:$0xff]
        %v1979 = vld [vmem:[#allocation6 + $0x11a8] sm:$0xff]
        %v1980 = vld [vmem:[#allocation6 + $0x11b0] sm:$0xff]
        %v1981 = vld [vmem:[#allocation6 + $0x11b8] sm:$0xff]
        %v1982 = vld [vmem:[#allocation6 + $0x11c0] sm:$0xff]
        %v1983 = vld [vmem:[#allocation6 + $0x11c8] sm:$0xff]
        %v1984 = vld [vmem:[#allocation6 + $0x11d0] sm:$0xff]
        %v1985 = vld [vmem:[#allocation6 + $0x11d8] sm:$0xff]
        %v1986 = vld [vmem:[#allocation6 + $0x11e0] sm:$0xff]
        %v1987 = vld [vmem:[#allocation6 + $0x11e8] sm:$0xff]
        %v1988 = vld [vmem:[#allocation6 + $0x11f0] sm:$0xff]
        %v1989 = vld [vmem:[#allocation6 + $0x11f8] sm:$0xff]
        %v1990 = vld [vmem:[#allocation6 + $0x1200] sm:$0xff]
        %v1991 = vld [vmem:[#allocation6 + $0x1208] sm:$0xff]
        %v1992 = vld [vmem:[#allocation6 + $0x1210] sm:$0xff]
        %v1993 = vld [vmem:[#allocation6 + $0x1218] sm:$0xff]
        %v1994 = vld [vmem:[#allocation6 + $0x1220] sm:$0xff]
        %v1995 = vld [vmem:[#allocation6 + $0x1228] sm:$0xff]
        %v1996 = vld [vmem:[#allocation6 + $0x1230] sm:$0xff]
        %v1997 = vld [vmem:[#allocation6 + $0x1238] sm:$0xff]
        %v1998 = vld [vmem:[#allocation6 + $0x1240] sm:$0xff]
        %v1999 = vld [vmem:[#allocation6 + $0x1248] sm:$0xff]
        %v2000 = vld [vmem:[#allocation6 + $0x1250] sm:$0xff]
        %v2001 = vld [vmem:[#allocation6 + $0x1258] sm:$0xff]
        %v2002 = vld [vmem:[#allocation6 + $0x1260] sm:$0xff]
        %v2003 = vld [vmem:[#allocation6 + $0x1268] sm:$0xff]
        %v2004 = vld [vmem:[#allocation6 + $0x1270] sm:$0xff]
        %v2005 = vld [vmem:[#allocation6 + $0x1278] sm:$0xff]
        %v2006 = vld [vmem:[#allocation6 + $0x1280] sm:$0xff]
        %v2007 = vld [vmem:[#allocation6 + $0x1288] sm:$0xff]
        %v2008 = vld [vmem:[#allocation6 + $0x1290] sm:$0xff]
        %v2009 = vld [vmem:[#allocation6 + $0x1298] sm:$0xff]
        %v2010 = vld [vmem:[#allocation6 + $0x12a0] sm:$0xff]
        %v2011 = vld [vmem:[#allocation6 + $0x12a8] sm:$0xff]
        %v2012 = vld [vmem:[#allocation6 + $0x12b0] sm:$0xff]
        %v2013 = vld [vmem:[#allocation6 + $0x12b8] sm:$0xff]
        %v2014 = vld [vmem:[#allocation6 + $0x12c0] sm:$0xff]
        %v2015 = vld [vmem:[#allocation6 + $0x12c8] sm:$0xff]
        %v2016 = vld [vmem:[#allocation6 + $0x12d0] sm:$0xff]
        %v2017 = vld [vmem:[#allocation6 + $0x12d8] sm:$0xff]
        %v2018 = vld [vmem:[#allocation6 + $0x12e0] sm:$0xff]
        %v2019 = vld [vmem:[#allocation6 + $0x12e8] sm:$0xff]
        %v2020 = vld [vmem:[#allocation6 + $0x12f0] sm:$0xff]
        %v2021 = vld [vmem:[#allocation6 + $0x12f8] sm:$0xff]
        %v2022 = vld [vmem:[#allocation6 + $0x1300] sm:$0xff]
        %v2023 = vld [vmem:[#allocation6 + $0x1308] sm:$0xff]
        %v2024 = vld [vmem:[#allocation6 + $0x1310] sm:$0xff]
        %v2025 = vld [vmem:[#allocation6 + $0x1318] sm:$0xff]
        %v2026 = vld [vmem:[#allocation6 + $0x1320] sm:$0xff]
        %v2027 = vld [vmem:[#allocation6 + $0x1328] sm:$0xff]
        %v2028 = vld [vmem:[#allocation6 + $0x1330] sm:$0xff]
        %v2029 = vld [vmem:[#allocation6 + $0x1338] sm:$0xff]
        %v2030 = vld [vmem:[#allocation6 + $0x1340] sm:$0xff]
        %v2031 = vld [vmem:[#allocation6 + $0x1348] sm:$0xff]
        %v2032 = vld [vmem:[#allocation6 + $0x1350] sm:$0xff]
        %v2033 = vld [vmem:[#allocation6 + $0x1358] sm:$0xff]
        %v2034 = vld [vmem:[#allocation6 + $0x1360] sm:$0xff]
        %v2035 = vld [vmem:[#allocation6 + $0x1368] sm:$0xff]
        %v2036 = vld [vmem:[#allocation6 + $0x1370] sm:$0xff]
        %v2037 = vld [vmem:[#allocation6 + $0x1378] sm:$0xff]
        %v2038 = vld [vmem:[#allocation6 + $0x1380] sm:$0xff]
        %v2039 = vld [vmem:[#allocation6 + $0x1388] sm:$0xff]
        %v2040 = vld [vmem:[#allocation6 + $0x1390] sm:$0xff]
        %v2041 = vld [vmem:[#allocation6 + $0x1398] sm:$0xff]
        %v2042 = vld [vmem:[#allocation6 + $0x13a0] sm:$0xff]
        %v2043 = vld [vmem:[#allocation6 + $0x13a8] sm:$0xff]
        %v2044 = vld [vmem:[#allocation6 + $0x13b0] sm:$0xff]
        %v2045 = vld [vmem:[#allocation6 + $0x13b8] sm:$0xff]
        %v2046 = vld [vmem:[#allocation6 + $0x13c0] sm:$0xff]
        %v2047 = vld [vmem:[#allocation6 + $0x13c8] sm:$0xff]
        %v2048 = vld [vmem:[#allocation6 + $0x13d0] sm:$0xff]
        %v2049 = vld [vmem:[#allocation6 + $0x13d8] sm:$0xff]
        %v2050 = vld [vmem:[#allocation6 + $0x13e0] sm:$0xff]
        %v2051 = vld [vmem:[#allocation6 + $0x13e8] sm:$0xff]
        %v2052 = vld [vmem:[#allocation6 + $0x13f0] sm:$0xff]
        %v2053 = vld [vmem:[#allocation6 + $0x13f8] sm:$0xff]
        %v2054 = vld [vmem:[#allocation8] sm:$0xf]
        %v2056 = vlaneseq
        %v2057 = vshrl.u32 %v2056, 7
        %v2058 = vsub.s32 0, %v2057
        %v2059 = vrot.slane %v2054, %v2058
        %v2060 = vlaneseq
        %v2061 = vshrl.u32 %v2060, 7
        %v2062 = vsub.s32 1, %v2061
        %v2063 = vrot.slane %v2054, %v2062
        %v2064 = vlaneseq
        %v2065 = vshrl.u32 %v2064, 7
        %v2066 = vsub.s32 2, %v2065
        %v2067 = vrot.slane %v2054, %v2066
        %v2068 = vlaneseq
        %v2069 = vshrl.u32 %v2068, 7
        %v2070 = vsub.s32 3, %v2069
        %v2071 = vrot.slane %v2054, %v2070
        %v2716 = vunpack.c.l.b16 %v1414
        %v2717 = vunpack.c.h.b16 %v1414
        %v2718 = vunpack.c.l.b16 %v1415
        %v2719 = vunpack.c.h.b16 %v1415
        %v2720 = vunpack.c.l.b16 %v1416
        %v2721 = vunpack.c.h.b16 %v1416
        %v2722 = vunpack.c.l.b16 %v1417
        %v2723 = vunpack.c.h.b16 %v1417
        %v2724 = vunpack.c.l.b16 %v1418
        %v2725 = vunpack.c.h.b16 %v1418
        %v2726 = vunpack.c.l.b16 %v1419
        %v2727 = vunpack.c.h.b16 %v1419
        %v2728 = vunpack.c.l.b16 %v1420
        %v2729 = vunpack.c.h.b16 %v1420
        %v2730 = vunpack.c.l.b16 %v1421
        %v2731 = vunpack.c.h.b16 %v1421
        %v2732 = vunpack.c.l.b16 %v1422
        %v2733 = vunpack.c.h.b16 %v1422
        %v2734 = vunpack.c.l.b16 %v1423
        %v2735 = vunpack.c.h.b16 %v1423
        %v2736 = vunpack.c.l.b16 %v1424
        %v2737 = vunpack.c.h.b16 %v1424
        %v2738 = vunpack.c.l.b16 %v1425
        %v2739 = vunpack.c.h.b16 %v1425
        %v2740 = vunpack.c.l.b16 %v1426
        %v2741 = vunpack.c.h.b16 %v1426
        %v2742 = vunpack.c.l.b16 %v1427
        %v2743 = vunpack.c.h.b16 %v1427
        %v2744 = vunpack.c.l.b16 %v1428
        %v2745 = vunpack.c.h.b16 %v1428
        %v2746 = vunpack.c.l.b16 %v1429
        %v2747 = vunpack.c.h.b16 %v1429
        %v2748 = vunpack.c.l.b16 %v1430
        %v2749 = vunpack.c.h.b16 %v1430
        %v2750 = vunpack.c.l.b16 %v1431
        %v2751 = vunpack.c.h.b16 %v1431
        %v2752 = vunpack.c.l.b16 %v1432
        %v2753 = vunpack.c.h.b16 %v1432
        %v2754 = vunpack.c.l.b16 %v1433
        %v2755 = vunpack.c.h.b16 %v1433
        %v2756 = vunpack.c.l.b16 %v1434
        %v2757 = vunpack.c.h.b16 %v1434
        %v2758 = vunpack.c.l.b16 %v1435
        %v2759 = vunpack.c.h.b16 %v1435
        %v2760 = vunpack.c.l.b16 %v1436
        %v2761 = vunpack.c.h.b16 %v1436
        %v2762 = vunpack.c.l.b16 %v1437
        %v2763 = vunpack.c.h.b16 %v1437
        %v2764 = vunpack.c.l.b16 %v1438
        %v2765 = vunpack.c.h.b16 %v1438
        %v2766 = vunpack.c.l.b16 %v1439
        %v2767 = vunpack.c.h.b16 %v1439
        %v2768 = vunpack.c.l.b16 %v1440
        %v2769 = vunpack.c.h.b16 %v1440
        %v2770 = vunpack.c.l.b16 %v1441
        %v2771 = vunpack.c.h.b16 %v1441
        %v2772 = vunpack.c.l.b16 %v1442
        %v2773 = vunpack.c.h.b16 %v1442
        %v2774 = vunpack.c.l.b16 %v1443
        %v2775 = vunpack.c.h.b16 %v1443
        %v2776 = vunpack.c.l.b16 %v1444
        %v2777 = vunpack.c.h.b16 %v1444
        %v2778 = vunpack.c.l.b16 %v1445
        %v2779 = vunpack.c.h.b16 %v1445
        %v2780 = vunpack.c.l.b16 %v1446
        %v2781 = vunpack.c.h.b16 %v1446
        %v2782 = vunpack.c.l.b16 %v1447
        %v2783 = vunpack.c.h.b16 %v1447
        %v2784 = vunpack.c.l.b16 %v1448
        %v2785 = vunpack.c.h.b16 %v1448
        %v2786 = vunpack.c.l.b16 %v1449
        %v2787 = vunpack.c.h.b16 %v1449
        %v2788 = vunpack.c.l.b16 %v1450
        %v2789 = vunpack.c.h.b16 %v1450
        %v2790 = vunpack.c.l.b16 %v1451
        %v2791 = vunpack.c.h.b16 %v1451
        %v2792 = vunpack.c.l.b16 %v1452
        %v2793 = vunpack.c.h.b16 %v1452
        %v2794 = vunpack.c.l.b16 %v1453
        %v2795 = vunpack.c.h.b16 %v1453
        %v2796 = vunpack.c.l.b16 %v1454
        %v2797 = vunpack.c.h.b16 %v1454
        %v2798 = vunpack.c.l.b16 %v1455
        %v2799 = vunpack.c.h.b16 %v1455
        %v2800 = vunpack.c.l.b16 %v1456
        %v2801 = vunpack.c.h.b16 %v1456
        %v2802 = vunpack.c.l.b16 %v1457
        %v2803 = vunpack.c.h.b16 %v1457
        %v2804 = vunpack.c.l.b16 %v1458
        %v2805 = vunpack.c.h.b16 %v1458
        %v2806 = vunpack.c.l.b16 %v1459
        %v2807 = vunpack.c.h.b16 %v1459
        %v2808 = vunpack.c.l.b16 %v1460
        %v2809 = vunpack.c.h.b16 %v1460
        %v2810 = vunpack.c.l.b16 %v1461
        %v2811 = vunpack.c.h.b16 %v1461
        %v2812 = vunpack.c.l.b16 %v1462
        %v2813 = vunpack.c.h.b16 %v1462
        %v2814 = vunpack.c.l.b16 %v1463
        %v2815 = vunpack.c.h.b16 %v1463
        %v2816 = vunpack.c.l.b16 %v1464
        %v2817 = vunpack.c.h.b16 %v1464
        %v2818 = vunpack.c.l.b16 %v1465
        %v2819 = vunpack.c.h.b16 %v1465
        %v2820 = vunpack.c.l.b16 %v1466
        %v2821 = vunpack.c.h.b16 %v1466
        %v2822 = vunpack.c.l.b16 %v1467
        %v2823 = vunpack.c.h.b16 %v1467
        %v2824 = vunpack.c.l.b16 %v1468
        %v2825 = vunpack.c.h.b16 %v1468
        %v2826 = vunpack.c.l.b16 %v1469
        %v2827 = vunpack.c.h.b16 %v1469
        %v2828 = vunpack.c.l.b16 %v1470
        %v2829 = vunpack.c.h.b16 %v1470
        %v2830 = vunpack.c.l.b16 %v1471
        %v2831 = vunpack.c.h.b16 %v1471
        %v2832 = vunpack.c.l.b16 %v1472
        %v2833 = vunpack.c.h.b16 %v1472
        %v2834 = vunpack.c.l.b16 %v1473
        %v2835 = vunpack.c.h.b16 %v1473
        %v2836 = vunpack.c.l.b16 %v1474
        %v2837 = vunpack.c.h.b16 %v1474
        %v2838 = vunpack.c.l.b16 %v1475
        %v2839 = vunpack.c.h.b16 %v1475
        %v2840 = vunpack.c.l.b16 %v1476
        %v2841 = vunpack.c.h.b16 %v1476
        %v2842 = vunpack.c.l.b16 %v1477
        %v2843 = vunpack.c.h.b16 %v1477
        %v2844 = vunpack.c.l.b16 %v1478
        %v2845 = vunpack.c.h.b16 %v1478
        %v2846 = vunpack.c.l.b16 %v1479
        %v2847 = vunpack.c.h.b16 %v1479
        %v2848 = vunpack.c.l.b16 %v1480
        %v2849 = vunpack.c.h.b16 %v1480
        %v2850 = vunpack.c.l.b16 %v1481
        %v2851 = vunpack.c.h.b16 %v1481
        %v2852 = vunpack.c.l.b16 %v1482
        %v2853 = vunpack.c.h.b16 %v1482
        %v2854 = vunpack.c.l.b16 %v1483
        %v2855 = vunpack.c.h.b16 %v1483
        %v2856 = vunpack.c.l.b16 %v1484
        %v2857 = vunpack.c.h.b16 %v1484
        %v2858 = vunpack.c.l.b16 %v1485
        %v2859 = vunpack.c.h.b16 %v1485
        %v2860 = vunpack.c.l.b16 %v1486
        %v2861 = vunpack.c.h.b16 %v1486
        %v2862 = vunpack.c.l.b16 %v1487
        %v2863 = vunpack.c.h.b16 %v1487
        %v2864 = vunpack.c.l.b16 %v1488
        %v2865 = vunpack.c.h.b16 %v1488
        %v2866 = vunpack.c.l.b16 %v1489
        %v2867 = vunpack.c.h.b16 %v1489
        %v2868 = vunpack.c.l.b16 %v1490
        %v2869 = vunpack.c.h.b16 %v1490
        %v2870 = vunpack.c.l.b16 %v1491
        %v2871 = vunpack.c.h.b16 %v1491
        %v2872 = vunpack.c.l.b16 %v1492
        %v2873 = vunpack.c.h.b16 %v1492
        %v2874 = vunpack.c.l.b16 %v1493
        %v2875 = vunpack.c.h.b16 %v1493
        %v2876 = vunpack.c.l.b16 %v1494
        %v2877 = vunpack.c.h.b16 %v1494
        %v2878 = vunpack.c.l.b16 %v1495
        %v2879 = vunpack.c.h.b16 %v1495
        %v2880 = vunpack.c.l.b16 %v1496
        %v2881 = vunpack.c.h.b16 %v1496
        %v2882 = vunpack.c.l.b16 %v1497
        %v2883 = vunpack.c.h.b16 %v1497
        %v2884 = vunpack.c.l.b16 %v1498
        %v2885 = vunpack.c.h.b16 %v1498
        %v2886 = vunpack.c.l.b16 %v1499
        %v2887 = vunpack.c.h.b16 %v1499
        %v2888 = vunpack.c.l.b16 %v1500
        %v2889 = vunpack.c.h.b16 %v1500
        %v2890 = vunpack.c.l.b16 %v1501
        %v2891 = vunpack.c.h.b16 %v1501
        %v2892 = vunpack.c.l.b16 %v1502
        %v2893 = vunpack.c.h.b16 %v1502
        %v2894 = vunpack.c.l.b16 %v1503
        %v2895 = vunpack.c.h.b16 %v1503
        %v2896 = vunpack.c.l.b16 %v1504
        %v2897 = vunpack.c.h.b16 %v1504
        %v2898 = vunpack.c.l.b16 %v1505
        %v2899 = vunpack.c.h.b16 %v1505
        %v2900 = vunpack.c.l.b16 %v1506
        %v2901 = vunpack.c.h.b16 %v1506
        %v2902 = vunpack.c.l.b16 %v1507
        %v2903 = vunpack.c.h.b16 %v1507
        %v2904 = vunpack.c.l.b16 %v1508
        %v2905 = vunpack.c.h.b16 %v1508
        %v2906 = vunpack.c.l.b16 %v1509
        %v2907 = vunpack.c.h.b16 %v1509
        %v2908 = vunpack.c.l.b16 %v1510
        %v2909 = vunpack.c.h.b16 %v1510
        %v2910 = vunpack.c.l.b16 %v1511
        %v2911 = vunpack.c.h.b16 %v1511
        %v2912 = vunpack.c.l.b16 %v1512
        %v2913 = vunpack.c.h.b16 %v1512
        %v2914 = vunpack.c.l.b16 %v1513
        %v2915 = vunpack.c.h.b16 %v1513
        %v2916 = vunpack.c.l.b16 %v1514
        %v2917 = vunpack.c.h.b16 %v1514
        %v2918 = vunpack.c.l.b16 %v1515
        %v2919 = vunpack.c.h.b16 %v1515
        %v2920 = vunpack.c.l.b16 %v1516
        %v2921 = vunpack.c.h.b16 %v1516
        %v2922 = vunpack.c.l.b16 %v1517
        %v2923 = vunpack.c.h.b16 %v1517
        %v2924 = vunpack.c.l.b16 %v1518
        %v2925 = vunpack.c.h.b16 %v1518
        %v2926 = vunpack.c.l.b16 %v1519
        %v2927 = vunpack.c.h.b16 %v1519
        %v2928 = vunpack.c.l.b16 %v1520
        %v2929 = vunpack.c.h.b16 %v1520
        %v2930 = vunpack.c.l.b16 %v1521
        %v2931 = vunpack.c.h.b16 %v1521
        %v2932 = vunpack.c.l.b16 %v1522
        %v2933 = vunpack.c.h.b16 %v1522
        %v2934 = vunpack.c.l.b16 %v1523
        %v2935 = vunpack.c.h.b16 %v1523
        %v2936 = vunpack.c.l.b16 %v1524
        %v2937 = vunpack.c.h.b16 %v1524
        %v2938 = vunpack.c.l.b16 %v1525
        %v2939 = vunpack.c.h.b16 %v1525
        %v2940 = vunpack.c.l.b16 %v1526
        %v2941 = vunpack.c.h.b16 %v1526
        %v2942 = vunpack.c.l.b16 %v1527
        %v2943 = vunpack.c.h.b16 %v1527
        %v2944 = vunpack.c.l.b16 %v1528
        %v2945 = vunpack.c.h.b16 %v1528
        %v2946 = vunpack.c.l.b16 %v1529
        %v2947 = vunpack.c.h.b16 %v1529
        %v2948 = vunpack.c.l.b16 %v1530
        %v2949 = vunpack.c.h.b16 %v1530
        %v2950 = vunpack.c.l.b16 %v1531
        %v2951 = vunpack.c.h.b16 %v1531
        %v2952 = vunpack.c.l.b16 %v1532
        %v2953 = vunpack.c.h.b16 %v1532
        %v2954 = vunpack.c.l.b16 %v1533
        %v2955 = vunpack.c.h.b16 %v1533
        %v2956 = vunpack.c.l.b16 %v1534
        %v2957 = vunpack.c.h.b16 %v1534
        %v2958 = vunpack.c.l.b16 %v1535
        %v2959 = vunpack.c.h.b16 %v1535
        %v2960 = vunpack.c.l.b16 %v1536
        %v2961 = vunpack.c.h.b16 %v1536
        %v2962 = vunpack.c.l.b16 %v1537
        %v2963 = vunpack.c.h.b16 %v1537
        %v2964 = vunpack.c.l.b16 %v1538
        %v2965 = vunpack.c.h.b16 %v1538
        %v2966 = vunpack.c.l.b16 %v1539
        %v2967 = vunpack.c.h.b16 %v1539
        %v2968 = vunpack.c.l.b16 %v1540
        %v2969 = vunpack.c.h.b16 %v1540
        %v2970 = vunpack.c.l.b16 %v1541
        %v2971 = vunpack.c.h.b16 %v1541
        %v2972 = vunpack.c.l.b16 %v1542
        %v2973 = vunpack.c.h.b16 %v1542
        %v2974 = vunpack.c.l.b16 %v1543
        %v2975 = vunpack.c.h.b16 %v1543
        %v2976 = vunpack.c.l.b16 %v1544
        %v2977 = vunpack.c.h.b16 %v1544
        %v2978 = vunpack.c.l.b16 %v1545
        %v2979 = vunpack.c.h.b16 %v1545
        %v2980 = vunpack.c.l.b16 %v1546
        %v2981 = vunpack.c.h.b16 %v1546
        %v2982 = vunpack.c.l.b16 %v1547
        %v2983 = vunpack.c.h.b16 %v1547
        %v2984 = vunpack.c.l.b16 %v1548
        %v2985 = vunpack.c.h.b16 %v1548
        %v2986 = vunpack.c.l.b16 %v1549
        %v2987 = vunpack.c.h.b16 %v1549
        %v2988 = vunpack.c.l.b16 %v1550
        %v2989 = vunpack.c.h.b16 %v1550
        %v2990 = vunpack.c.l.b16 %v1551
        %v2991 = vunpack.c.h.b16 %v1551
        %v2992 = vunpack.c.l.b16 %v1552
        %v2993 = vunpack.c.h.b16 %v1552
        %v2994 = vunpack.c.l.b16 %v1553
        %v2995 = vunpack.c.h.b16 %v1553
        %v2996 = vunpack.c.l.b16 %v1554
        %v2997 = vunpack.c.h.b16 %v1554
        %v2998 = vunpack.c.l.b16 %v1555
        %v2999 = vunpack.c.h.b16 %v1555
        %v3000 = vunpack.c.l.b16 %v1556
        %v3001 = vunpack.c.h.b16 %v1556
        %v3002 = vunpack.c.l.b16 %v1557
        %v3003 = vunpack.c.h.b16 %v1557
        %v3004 = vunpack.c.l.b16 %v1558
        %v3005 = vunpack.c.h.b16 %v1558
        %v3006 = vunpack.c.l.b16 %v1559
        %v3007 = vunpack.c.h.b16 %v1559
        %v3008 = vunpack.c.l.b16 %v1560
        %v3009 = vunpack.c.h.b16 %v1560
        %v3010 = vunpack.c.l.b16 %v1561
        %v3011 = vunpack.c.h.b16 %v1561
        %v3012 = vunpack.c.l.b16 %v1562
        %v3013 = vunpack.c.h.b16 %v1562
        %v3014 = vunpack.c.l.b16 %v1563
        %v3015 = vunpack.c.h.b16 %v1563
        %v3016 = vunpack.c.l.b16 %v1564
        %v3017 = vunpack.c.h.b16 %v1564
        %v3018 = vunpack.c.l.b16 %v1565
        %v3019 = vunpack.c.h.b16 %v1565
        %v3020 = vunpack.c.l.b16 %v1566
        %v3021 = vunpack.c.h.b16 %v1566
        %v3022 = vunpack.c.l.b16 %v1567
        %v3023 = vunpack.c.h.b16 %v1567
        %v3024 = vunpack.c.l.b16 %v1568
        %v3025 = vunpack.c.h.b16 %v1568
        %v3026 = vunpack.c.l.b16 %v1569
        %v3027 = vunpack.c.h.b16 %v1569
        %v3028 = vunpack.c.l.b16 %v1570
        %v3029 = vunpack.c.h.b16 %v1570
        %v3030 = vunpack.c.l.b16 %v1571
        %v3031 = vunpack.c.h.b16 %v1571
        %v3032 = vunpack.c.l.b16 %v1572
        %v3033 = vunpack.c.h.b16 %v1572
        %v3034 = vunpack.c.l.b16 %v1573
        %v3035 = vunpack.c.h.b16 %v1573
        %v3036 = vunpack.c.l.b16 %v1574
        %v3037 = vunpack.c.h.b16 %v1574
        %v3038 = vunpack.c.l.b16 %v1575
        %v3039 = vunpack.c.h.b16 %v1575
        %v3040 = vunpack.c.l.b16 %v1576
        %v3041 = vunpack.c.h.b16 %v1576
        %v3042 = vunpack.c.l.b16 %v1577
        %v3043 = vunpack.c.h.b16 %v1577
        %v3044 = vunpack.c.l.b16 %v1578
        %v3045 = vunpack.c.h.b16 %v1578
        %v3046 = vunpack.c.l.b16 %v1579
        %v3047 = vunpack.c.h.b16 %v1579
        %v3048 = vunpack.c.l.b16 %v1580
        %v3049 = vunpack.c.h.b16 %v1580
        %v3050 = vunpack.c.l.b16 %v1581
        %v3051 = vunpack.c.h.b16 %v1581
        %v3052 = vunpack.c.l.b16 %v1582
        %v3053 = vunpack.c.h.b16 %v1582
        %v3054 = vunpack.c.l.b16 %v1583
        %v3055 = vunpack.c.h.b16 %v1583
        %v3056 = vunpack.c.l.b16 %v1584
        %v3057 = vunpack.c.h.b16 %v1584
        %v3058 = vunpack.c.l.b16 %v1585
        %v3059 = vunpack.c.h.b16 %v1585
        %v3060 = vunpack.c.l.b16 %v1586
        %v3061 = vunpack.c.h.b16 %v1586
        %v3062 = vunpack.c.l.b16 %v1587
        %v3063 = vunpack.c.h.b16 %v1587
        %v3064 = vunpack.c.l.b16 %v1588
        %v3065 = vunpack.c.h.b16 %v1588
        %v3066 = vunpack.c.l.b16 %v1589
        %v3067 = vunpack.c.h.b16 %v1589
        %v3068 = vunpack.c.l.b16 %v1590
        %v3069 = vunpack.c.h.b16 %v1590
        %v3070 = vunpack.c.l.b16 %v1591
        %v3071 = vunpack.c.h.b16 %v1591
        %v3072 = vunpack.c.l.b16 %v1592
        %v3073 = vunpack.c.h.b16 %v1592
        %v3074 = vunpack.c.l.b16 %v1593
        %v3075 = vunpack.c.h.b16 %v1593
        %v3076 = vunpack.c.l.b16 %v1594
        %v3077 = vunpack.c.h.b16 %v1594
        %v3078 = vunpack.c.l.b16 %v1595
        %v3079 = vunpack.c.h.b16 %v1595
        %v3080 = vunpack.c.l.b16 %v1596
        %v3081 = vunpack.c.h.b16 %v1596
        %v3082 = vunpack.c.l.b16 %v1597
        %v3083 = vunpack.c.h.b16 %v1597
        %v3084 = vunpack.c.l.b16 %v1598
        %v3085 = vunpack.c.h.b16 %v1598
        %v3086 = vunpack.c.l.b16 %v1599
        %v3087 = vunpack.c.h.b16 %v1599
        %v3088 = vunpack.c.l.b16 %v1600
        %v3089 = vunpack.c.h.b16 %v1600
        %v3090 = vunpack.c.l.b16 %v1601
        %v3091 = vunpack.c.h.b16 %v1601
        %v3092 = vunpack.c.l.b16 %v1602
        %v3093 = vunpack.c.h.b16 %v1602
        %v3094 = vunpack.c.l.b16 %v1603
        %v3095 = vunpack.c.h.b16 %v1603
        %v3096 = vunpack.c.l.b16 %v1604
        %v3097 = vunpack.c.h.b16 %v1604
        %v3098 = vunpack.c.l.b16 %v1605
        %v3099 = vunpack.c.h.b16 %v1605
        %v3100 = vunpack.c.l.b16 %v1606
        %v3101 = vunpack.c.h.b16 %v1606
        %v3102 = vunpack.c.l.b16 %v1607
        %v3103 = vunpack.c.h.b16 %v1607
        %v3104 = vunpack.c.l.b16 %v1608
        %v3105 = vunpack.c.h.b16 %v1608
        %v3106 = vunpack.c.l.b16 %v1609
        %v3107 = vunpack.c.h.b16 %v1609
        %v3108 = vunpack.c.l.b16 %v1610
        %v3109 = vunpack.c.h.b16 %v1610
        %v3110 = vunpack.c.l.b16 %v1611
        %v3111 = vunpack.c.h.b16 %v1611
        %v3112 = vunpack.c.l.b16 %v1612
        %v3113 = vunpack.c.h.b16 %v1612
        %v3114 = vunpack.c.l.b16 %v1613
        %v3115 = vunpack.c.h.b16 %v1613
        %v3116 = vunpack.c.l.b16 %v1614
        %v3117 = vunpack.c.h.b16 %v1614
        %v3118 = vunpack.c.l.b16 %v1615
        %v3119 = vunpack.c.h.b16 %v1615
        %v3120 = vunpack.c.l.b16 %v1616
        %v3121 = vunpack.c.h.b16 %v1616
        %v3122 = vunpack.c.l.b16 %v1617
        %v3123 = vunpack.c.h.b16 %v1617
        %v3124 = vunpack.c.l.b16 %v1618
        %v3125 = vunpack.c.h.b16 %v1618
        %v3126 = vunpack.c.l.b16 %v1619
        %v3127 = vunpack.c.h.b16 %v1619
        %v3128 = vunpack.c.l.b16 %v1620
        %v3129 = vunpack.c.h.b16 %v1620
        %v3130 = vunpack.c.l.b16 %v1621
        %v3131 = vunpack.c.h.b16 %v1621
        %v3132 = vunpack.c.l.b16 %v1622
        %v3133 = vunpack.c.h.b16 %v1622
        %v3134 = vunpack.c.l.b16 %v1623
        %v3135 = vunpack.c.h.b16 %v1623
        %v3136 = vunpack.c.l.b16 %v1624
        %v3137 = vunpack.c.h.b16 %v1624
        %v3138 = vunpack.c.l.b16 %v1625
        %v3139 = vunpack.c.h.b16 %v1625
        %v3140 = vunpack.c.l.b16 %v1626
        %v3141 = vunpack.c.h.b16 %v1626
        %v3142 = vunpack.c.l.b16 %v1627
        %v3143 = vunpack.c.h.b16 %v1627
        %v3144 = vunpack.c.l.b16 %v1628
        %v3145 = vunpack.c.h.b16 %v1628
        %v3146 = vunpack.c.l.b16 %v1629
        %v3147 = vunpack.c.h.b16 %v1629
        %v3148 = vunpack.c.l.b16 %v1630
        %v3149 = vunpack.c.h.b16 %v1630
        %v3150 = vunpack.c.l.b16 %v1631
        %v3151 = vunpack.c.h.b16 %v1631
        %v3152 = vunpack.c.l.b16 %v1632
        %v3153 = vunpack.c.h.b16 %v1632
        %v3154 = vunpack.c.l.b16 %v1633
        %v3155 = vunpack.c.h.b16 %v1633
        %v3156 = vunpack.c.l.b16 %v1634
        %v3157 = vunpack.c.h.b16 %v1634
        %v3158 = vunpack.c.l.b16 %v1635
        %v3159 = vunpack.c.h.b16 %v1635
        %v3160 = vunpack.c.l.b16 %v1636
        %v3161 = vunpack.c.h.b16 %v1636
        %v3162 = vunpack.c.l.b16 %v1637
        %v3163 = vunpack.c.h.b16 %v1637
        %v3164 = vunpack.c.l.b16 %v1638
        %v3165 = vunpack.c.h.b16 %v1638
        %v3166 = vunpack.c.l.b16 %v1639
        %v3167 = vunpack.c.h.b16 %v1639
        %v3168 = vunpack.c.l.b16 %v1640
        %v3169 = vunpack.c.h.b16 %v1640
        %v3170 = vunpack.c.l.b16 %v1641
        %v3171 = vunpack.c.h.b16 %v1641
        %v3172 = vunpack.c.l.b16 %v1642
        %v3173 = vunpack.c.h.b16 %v1642
        %v3174 = vunpack.c.l.b16 %v1643
        %v3175 = vunpack.c.h.b16 %v1643
        %v3176 = vunpack.c.l.b16 %v1644
        %v3177 = vunpack.c.h.b16 %v1644
        %v3178 = vunpack.c.l.b16 %v1645
        %v3179 = vunpack.c.h.b16 %v1645
        %v3180 = vunpack.c.l.b16 %v1646
        %v3181 = vunpack.c.h.b16 %v1646
        %v3182 = vunpack.c.l.b16 %v1647
        %v3183 = vunpack.c.h.b16 %v1647
        %v3184 = vunpack.c.l.b16 %v1648
        %v3185 = vunpack.c.h.b16 %v1648
        %v3186 = vunpack.c.l.b16 %v1649
        %v3187 = vunpack.c.h.b16 %v1649
        %v3188 = vunpack.c.l.b16 %v1650
        %v3189 = vunpack.c.h.b16 %v1650
        %v3190 = vunpack.c.l.b16 %v1651
        %v3191 = vunpack.c.h.b16 %v1651
        %v3192 = vunpack.c.l.b16 %v1652
        %v3193 = vunpack.c.h.b16 %v1652
        %v3194 = vunpack.c.l.b16 %v1653
        %v3195 = vunpack.c.h.b16 %v1653
        %v3196 = vunpack.c.l.b16 %v1654
        %v3197 = vunpack.c.h.b16 %v1654
        %v3198 = vunpack.c.l.b16 %v1655
        %v3199 = vunpack.c.h.b16 %v1655
        %v3200 = vunpack.c.l.b16 %v1656
        %v3201 = vunpack.c.h.b16 %v1656
        %v3202 = vunpack.c.l.b16 %v1657
        %v3203 = vunpack.c.h.b16 %v1657
        %v3204 = vunpack.c.l.b16 %v1658
        %v3205 = vunpack.c.h.b16 %v1658
        %v3206 = vunpack.c.l.b16 %v1659
        %v3207 = vunpack.c.h.b16 %v1659
        %v3208 = vunpack.c.l.b16 %v1660
        %v3209 = vunpack.c.h.b16 %v1660
        %v3210 = vunpack.c.l.b16 %v1661
        %v3211 = vunpack.c.h.b16 %v1661
        %v3212 = vunpack.c.l.b16 %v1662
        %v3213 = vunpack.c.h.b16 %v1662
        %v3214 = vunpack.c.l.b16 %v1663
        %v3215 = vunpack.c.h.b16 %v1663
        %v3216 = vunpack.c.l.b16 %v1664
        %v3217 = vunpack.c.h.b16 %v1664
        %v3218 = vunpack.c.l.b16 %v1665
        %v3219 = vunpack.c.h.b16 %v1665
        %v3220 = vunpack.c.l.b16 %v1666
        %v3221 = vunpack.c.h.b16 %v1666
        %v3222 = vunpack.c.l.b16 %v1667
        %v3223 = vunpack.c.h.b16 %v1667
        %v3224 = vunpack.c.l.b16 %v1668
        %v3225 = vunpack.c.h.b16 %v1668
        %v3226 = vunpack.c.l.b16 %v1669
        %v3227 = vunpack.c.h.b16 %v1669
        %v3228 = vunpack.c.l.b16 %v1670
        %v3229 = vunpack.c.h.b16 %v1670
        %v3230 = vunpack.c.l.b16 %v1671
        %v3231 = vunpack.c.h.b16 %v1671
        %v3232 = vunpack.c.l.b16 %v1672
        %v3233 = vunpack.c.h.b16 %v1672
        %v3234 = vunpack.c.l.b16 %v1673
        %v3235 = vunpack.c.h.b16 %v1673
        %v3236 = vunpack.c.l.b16 %v1674
        %v3237 = vunpack.c.h.b16 %v1674
        %v3238 = vunpack.c.l.b16 %v1675
        %v3239 = vunpack.c.h.b16 %v1675
        %v3240 = vunpack.c.l.b16 %v1676
        %v3241 = vunpack.c.h.b16 %v1676
        %v3242 = vunpack.c.l.b16 %v1677
        %v3243 = vunpack.c.h.b16 %v1677
        %v3244 = vunpack.c.l.b16 %v1678
        %v3245 = vunpack.c.h.b16 %v1678
        %v3246 = vunpack.c.l.b16 %v1679
        %v3247 = vunpack.c.h.b16 %v1679
        %v3248 = vunpack.c.l.b16 %v1680
        %v3249 = vunpack.c.h.b16 %v1680
        %v3250 = vunpack.c.l.b16 %v1681
        %v3251 = vunpack.c.h.b16 %v1681
        %v3252 = vunpack.c.l.b16 %v1682
        %v3253 = vunpack.c.h.b16 %v1682
        %v3254 = vunpack.c.l.b16 %v1683
        %v3255 = vunpack.c.h.b16 %v1683
        %v3256 = vunpack.c.l.b16 %v1684
        %v3257 = vunpack.c.h.b16 %v1684
        %v3258 = vunpack.c.l.b16 %v1685
        %v3259 = vunpack.c.h.b16 %v1685
        %v3260 = vunpack.c.l.b16 %v1686
        %v3261 = vunpack.c.h.b16 %v1686
        %v3262 = vunpack.c.l.b16 %v1687
        %v3263 = vunpack.c.h.b16 %v1687
        %v3264 = vunpack.c.l.b16 %v1688
        %v3265 = vunpack.c.h.b16 %v1688
        %v3266 = vunpack.c.l.b16 %v1689
        %v3267 = vunpack.c.h.b16 %v1689
        %v3268 = vunpack.c.l.b16 %v1690
        %v3269 = vunpack.c.h.b16 %v1690
        %v3270 = vunpack.c.l.b16 %v1691
        %v3271 = vunpack.c.h.b16 %v1691
        %v3272 = vunpack.c.l.b16 %v1692
        %v3273 = vunpack.c.h.b16 %v1692
        %v3274 = vunpack.c.l.b16 %v1693
        %v3275 = vunpack.c.h.b16 %v1693
        %v3276 = vunpack.c.l.b16 %v1694
        %v3277 = vunpack.c.h.b16 %v1694
        %v3278 = vunpack.c.l.b16 %v1695
        %v3279 = vunpack.c.h.b16 %v1695
        %v3280 = vunpack.c.l.b16 %v1696
        %v3281 = vunpack.c.h.b16 %v1696
        %v3282 = vunpack.c.l.b16 %v1697
        %v3283 = vunpack.c.h.b16 %v1697
        %v3284 = vunpack.c.l.b16 %v1698
        %v3285 = vunpack.c.h.b16 %v1698
        %v3286 = vunpack.c.l.b16 %v1699
        %v3287 = vunpack.c.h.b16 %v1699
        %v3288 = vunpack.c.l.b16 %v1700
        %v3289 = vunpack.c.h.b16 %v1700
        %v3290 = vunpack.c.l.b16 %v1701
        %v3291 = vunpack.c.h.b16 %v1701
        %v3292 = vunpack.c.l.b16 %v1702
        %v3293 = vunpack.c.h.b16 %v1702
        %v3294 = vunpack.c.l.b16 %v1703
        %v3295 = vunpack.c.h.b16 %v1703
        %v3296 = vunpack.c.l.b16 %v1704
        %v3297 = vunpack.c.h.b16 %v1704
        %v3298 = vunpack.c.l.b16 %v1705
        %v3299 = vunpack.c.h.b16 %v1705
        %v3300 = vunpack.c.l.b16 %v1706
        %v3301 = vunpack.c.h.b16 %v1706
        %v3302 = vunpack.c.l.b16 %v1707
        %v3303 = vunpack.c.h.b16 %v1707
        %v3304 = vunpack.c.l.b16 %v1708
        %v3305 = vunpack.c.h.b16 %v1708
        %v3306 = vunpack.c.l.b16 %v1709
        %v3307 = vunpack.c.h.b16 %v1709
        %v3308 = vunpack.c.l.b16 %v1710
        %v3309 = vunpack.c.h.b16 %v1710
        %v3310 = vunpack.c.l.b16 %v1711
        %v3311 = vunpack.c.h.b16 %v1711
        %v3312 = vunpack.c.l.b16 %v1712
        %v3313 = vunpack.c.h.b16 %v1712
        %v3314 = vunpack.c.l.b16 %v1713
        %v3315 = vunpack.c.h.b16 %v1713
        %v3316 = vunpack.c.l.b16 %v1714
        %v3317 = vunpack.c.h.b16 %v1714
        %v3318 = vunpack.c.l.b16 %v1715
        %v3319 = vunpack.c.h.b16 %v1715
        %v3320 = vunpack.c.l.b16 %v1716
        %v3321 = vunpack.c.h.b16 %v1716
        %v3322 = vunpack.c.l.b16 %v1717
        %v3323 = vunpack.c.h.b16 %v1717
        %v3324 = vunpack.c.l.b16 %v1718
        %v3325 = vunpack.c.h.b16 %v1718
        %v3326 = vunpack.c.l.b16 %v1719
        %v3327 = vunpack.c.h.b16 %v1719
        %v3328 = vunpack.c.l.b16 %v1720
        %v3329 = vunpack.c.h.b16 %v1720
        %v3330 = vunpack.c.l.b16 %v1721
        %v3331 = vunpack.c.h.b16 %v1721
        %v3332 = vunpack.c.l.b16 %v1722
        %v3333 = vunpack.c.h.b16 %v1722
        %v3334 = vunpack.c.l.b16 %v1723
        %v3335 = vunpack.c.h.b16 %v1723
        %v3336 = vunpack.c.l.b16 %v1724
        %v3337 = vunpack.c.h.b16 %v1724
        %v3338 = vunpack.c.l.b16 %v1725
        %v3339 = vunpack.c.h.b16 %v1725
        %v3340 = vunpack.c.l.b16 %v1726
        %v3341 = vunpack.c.h.b16 %v1726
        %v3342 = vunpack.c.l.b16 %v1727
        %v3343 = vunpack.c.h.b16 %v1727
        %v3344 = vunpack.c.l.b16 %v1728
        %v3345 = vunpack.c.h.b16 %v1728
        %v3346 = vunpack.c.l.b16 %v1729
        %v3347 = vunpack.c.h.b16 %v1729
        %v3348 = vunpack.c.l.b16 %v1730
        %v3349 = vunpack.c.h.b16 %v1730
        %v3350 = vunpack.c.l.b16 %v1731
        %v3351 = vunpack.c.h.b16 %v1731
        %v3352 = vunpack.c.l.b16 %v1732
        %v3353 = vunpack.c.h.b16 %v1732
        %v3354 = vunpack.c.l.b16 %v1733
        %v3355 = vunpack.c.h.b16 %v1733
        %v3356 = vunpack.c.l.b16 %v1734
        %v3357 = vunpack.c.h.b16 %v1734
        %v3358 = vunpack.c.l.b16 %v1735
        %v3359 = vunpack.c.h.b16 %v1735
        %v3360 = vunpack.c.l.b16 %v1736
        %v3361 = vunpack.c.h.b16 %v1736
        %v3362 = vunpack.c.l.b16 %v1737
        %v3363 = vunpack.c.h.b16 %v1737
        %v3364 = vunpack.c.l.b16 %v1738
        %v3365 = vunpack.c.h.b16 %v1738
        %v3366 = vunpack.c.l.b16 %v1739
        %v3367 = vunpack.c.h.b16 %v1739
        %v3368 = vunpack.c.l.b16 %v1740
        %v3369 = vunpack.c.h.b16 %v1740
        %v3370 = vunpack.c.l.b16 %v1741
        %v3371 = vunpack.c.h.b16 %v1741
        %v3372 = vunpack.c.l.b16 %v1742
        %v3373 = vunpack.c.h.b16 %v1742
        %v3374 = vunpack.c.l.b16 %v1743
        %v3375 = vunpack.c.h.b16 %v1743
        %v3376 = vunpack.c.l.b16 %v1744
        %v3377 = vunpack.c.h.b16 %v1744
        %v3378 = vunpack.c.l.b16 %v1745
        %v3379 = vunpack.c.h.b16 %v1745
        %v3380 = vunpack.c.l.b16 %v1746
        %v3381 = vunpack.c.h.b16 %v1746
        %v3382 = vunpack.c.l.b16 %v1747
        %v3383 = vunpack.c.h.b16 %v1747
        %v3384 = vunpack.c.l.b16 %v1748
        %v3385 = vunpack.c.h.b16 %v1748
        %v3386 = vunpack.c.l.b16 %v1749
        %v3387 = vunpack.c.h.b16 %v1749
        %v3388 = vunpack.c.l.b16 %v1750
        %v3389 = vunpack.c.h.b16 %v1750
        %v3390 = vunpack.c.l.b16 %v1751
        %v3391 = vunpack.c.h.b16 %v1751
        %v3392 = vunpack.c.l.b16 %v1752
        %v3393 = vunpack.c.h.b16 %v1752
        %v3394 = vunpack.c.l.b16 %v1753
        %v3395 = vunpack.c.h.b16 %v1753
        %v3396 = vunpack.c.l.b16 %v1754
        %v3397 = vunpack.c.h.b16 %v1754
        %v3398 = vunpack.c.l.b16 %v1755
        %v3399 = vunpack.c.h.b16 %v1755
        %v3400 = vunpack.c.l.b16 %v1756
        %v3401 = vunpack.c.h.b16 %v1756
        %v3402 = vunpack.c.l.b16 %v1757
        %v3403 = vunpack.c.h.b16 %v1757
        %v3404 = vunpack.c.l.b16 %v1758
        %v3405 = vunpack.c.h.b16 %v1758
        %v3406 = vunpack.c.l.b16 %v1759
        %v3407 = vunpack.c.h.b16 %v1759
        %v3408 = vunpack.c.l.b16 %v1760
        %v3409 = vunpack.c.h.b16 %v1760
        %v3410 = vunpack.c.l.b16 %v1761
        %v3411 = vunpack.c.h.b16 %v1761
        %v3412 = vunpack.c.l.b16 %v1762
        %v3413 = vunpack.c.h.b16 %v1762
        %v3414 = vunpack.c.l.b16 %v1763
        %v3415 = vunpack.c.h.b16 %v1763
        %v3416 = vunpack.c.l.b16 %v1764
        %v3417 = vunpack.c.h.b16 %v1764
        %v3418 = vunpack.c.l.b16 %v1765
        %v3419 = vunpack.c.h.b16 %v1765
        %v3420 = vunpack.c.l.b16 %v1766
        %v3421 = vunpack.c.h.b16 %v1766
        %v3422 = vunpack.c.l.b16 %v1767
        %v3423 = vunpack.c.h.b16 %v1767
        %v3424 = vunpack.c.l.b16 %v1768
        %v3425 = vunpack.c.h.b16 %v1768
        %v3426 = vunpack.c.l.b16 %v1769
        %v3427 = vunpack.c.h.b16 %v1769
        %v3428 = vunpack.c.l.b16 %v1770
        %v3429 = vunpack.c.h.b16 %v1770
        %v3430 = vunpack.c.l.b16 %v1771
        %v3431 = vunpack.c.h.b16 %v1771
        %v3432 = vunpack.c.l.b16 %v1772
        %v3433 = vunpack.c.h.b16 %v1772
        %v3434 = vunpack.c.l.b16 %v1773
        %v3435 = vunpack.c.h.b16 %v1773
        %v3436 = vunpack.c.l.b16 %v1774
        %v3437 = vunpack.c.h.b16 %v1774
        %v3438 = vunpack.c.l.b16 %v1775
        %v3439 = vunpack.c.h.b16 %v1775
        %v3440 = vunpack.c.l.b16 %v1776
        %v3441 = vunpack.c.h.b16 %v1776
        %v3442 = vunpack.c.l.b16 %v1777
        %v3443 = vunpack.c.h.b16 %v1777
        %v3444 = vunpack.c.l.b16 %v1778
        %v3445 = vunpack.c.h.b16 %v1778
        %v3446 = vunpack.c.l.b16 %v1779
        %v3447 = vunpack.c.h.b16 %v1779
        %v3448 = vunpack.c.l.b16 %v1780
        %v3449 = vunpack.c.h.b16 %v1780
        %v3450 = vunpack.c.l.b16 %v1781
        %v3451 = vunpack.c.h.b16 %v1781
        %v3452 = vunpack.c.l.b16 %v1782
        %v3453 = vunpack.c.h.b16 %v1782
        %v3454 = vunpack.c.l.b16 %v1783
        %v3455 = vunpack.c.h.b16 %v1783
        %v3456 = vunpack.c.l.b16 %v1784
        %v3457 = vunpack.c.h.b16 %v1784
        %v3458 = vunpack.c.l.b16 %v1785
        %v3459 = vunpack.c.h.b16 %v1785
        %v3460 = vunpack.c.l.b16 %v1786
        %v3461 = vunpack.c.h.b16 %v1786
        %v3462 = vunpack.c.l.b16 %v1787
        %v3463 = vunpack.c.h.b16 %v1787
        %v3464 = vunpack.c.l.b16 %v1788
        %v3465 = vunpack.c.h.b16 %v1788
        %v3466 = vunpack.c.l.b16 %v1789
        %v3467 = vunpack.c.h.b16 %v1789
        %v3468 = vunpack.c.l.b16 %v1790
        %v3469 = vunpack.c.h.b16 %v1790
        %v3470 = vunpack.c.l.b16 %v1791
        %v3471 = vunpack.c.h.b16 %v1791
        %v3472 = vunpack.c.l.b16 %v1792
        %v3473 = vunpack.c.h.b16 %v1792
        %v3474 = vunpack.c.l.b16 %v1793
        %v3475 = vunpack.c.h.b16 %v1793
        %v3476 = vunpack.c.l.b16 %v1794
        %v3477 = vunpack.c.h.b16 %v1794
        %v3478 = vunpack.c.l.b16 %v1795
        %v3479 = vunpack.c.h.b16 %v1795
        %v3480 = vunpack.c.l.b16 %v1796
        %v3481 = vunpack.c.h.b16 %v1796
        %v3482 = vunpack.c.l.b16 %v1797
        %v3483 = vunpack.c.h.b16 %v1797
        %v3484 = vunpack.c.l.b16 %v1798
        %v3485 = vunpack.c.h.b16 %v1798
        %v3486 = vunpack.c.l.b16 %v1799
        %v3487 = vunpack.c.h.b16 %v1799
        %v3488 = vunpack.c.l.b16 %v1800
        %v3489 = vunpack.c.h.b16 %v1800
        %v3490 = vunpack.c.l.b16 %v1801
        %v3491 = vunpack.c.h.b16 %v1801
        %v3492 = vunpack.c.l.b16 %v1802
        %v3493 = vunpack.c.h.b16 %v1802
        %v3494 = vunpack.c.l.b16 %v1803
        %v3495 = vunpack.c.h.b16 %v1803
        %v3496 = vunpack.c.l.b16 %v1804
        %v3497 = vunpack.c.h.b16 %v1804
        %v3498 = vunpack.c.l.b16 %v1805
        %v3499 = vunpack.c.h.b16 %v1805
        %v3500 = vunpack.c.l.b16 %v1806
        %v3501 = vunpack.c.h.b16 %v1806
        %v3502 = vunpack.c.l.b16 %v1807
        %v3503 = vunpack.c.h.b16 %v1807
        %v3504 = vunpack.c.l.b16 %v1808
        %v3505 = vunpack.c.h.b16 %v1808
        %v3506 = vunpack.c.l.b16 %v1809
        %v3507 = vunpack.c.h.b16 %v1809
        %v3508 = vunpack.c.l.b16 %v1810
        %v3509 = vunpack.c.h.b16 %v1810
        %v3510 = vunpack.c.l.b16 %v1811
        %v3511 = vunpack.c.h.b16 %v1811
        %v3512 = vunpack.c.l.b16 %v1812
        %v3513 = vunpack.c.h.b16 %v1812
        %v3514 = vunpack.c.l.b16 %v1813
        %v3515 = vunpack.c.h.b16 %v1813
        %v3516 = vunpack.c.l.b16 %v1814
        %v3517 = vunpack.c.h.b16 %v1814
        %v3518 = vunpack.c.l.b16 %v1815
        %v3519 = vunpack.c.h.b16 %v1815
        %v3520 = vunpack.c.l.b16 %v1816
        %v3521 = vunpack.c.h.b16 %v1816
        %v3522 = vunpack.c.l.b16 %v1817
        %v3523 = vunpack.c.h.b16 %v1817
        %v3524 = vunpack.c.l.b16 %v1818
        %v3525 = vunpack.c.h.b16 %v1818
        %v3526 = vunpack.c.l.b16 %v1819
        %v3527 = vunpack.c.h.b16 %v1819
        %v3528 = vunpack.c.l.b16 %v1820
        %v3529 = vunpack.c.h.b16 %v1820
        %v3530 = vunpack.c.l.b16 %v1821
        %v3531 = vunpack.c.h.b16 %v1821
        %v3532 = vunpack.c.l.b16 %v1822
        %v3533 = vunpack.c.h.b16 %v1822
        %v3534 = vunpack.c.l.b16 %v1823
        %v3535 = vunpack.c.h.b16 %v1823
        %v3536 = vunpack.c.l.b16 %v1824
        %v3537 = vunpack.c.h.b16 %v1824
        %v3538 = vunpack.c.l.b16 %v1825
        %v3539 = vunpack.c.h.b16 %v1825
        %v3540 = vunpack.c.l.b16 %v1826
        %v3541 = vunpack.c.h.b16 %v1826
        %v3542 = vunpack.c.l.b16 %v1827
        %v3543 = vunpack.c.h.b16 %v1827
        %v3544 = vunpack.c.l.b16 %v1828
        %v3545 = vunpack.c.h.b16 %v1828
        %v3546 = vunpack.c.l.b16 %v1829
        %v3547 = vunpack.c.h.b16 %v1829
        %v3548 = vunpack.c.l.b16 %v1830
        %v3549 = vunpack.c.h.b16 %v1830
        %v3550 = vunpack.c.l.b16 %v1831
        %v3551 = vunpack.c.h.b16 %v1831
        %v3552 = vunpack.c.l.b16 %v1832
        %v3553 = vunpack.c.h.b16 %v1832
        %v3554 = vunpack.c.l.b16 %v1833
        %v3555 = vunpack.c.h.b16 %v1833
        %v3556 = vunpack.c.l.b16 %v1834
        %v3557 = vunpack.c.h.b16 %v1834
        %v3558 = vunpack.c.l.b16 %v1835
        %v3559 = vunpack.c.h.b16 %v1835
        %v3560 = vunpack.c.l.b16 %v1836
        %v3561 = vunpack.c.h.b16 %v1836
        %v3562 = vunpack.c.l.b16 %v1837
        %v3563 = vunpack.c.h.b16 %v1837
        %v3564 = vunpack.c.l.b16 %v1838
        %v3565 = vunpack.c.h.b16 %v1838
        %v3566 = vunpack.c.l.b16 %v1839
        %v3567 = vunpack.c.h.b16 %v1839
        %v3568 = vunpack.c.l.b16 %v1840
        %v3569 = vunpack.c.h.b16 %v1840
        %v3570 = vunpack.c.l.b16 %v1841
        %v3571 = vunpack.c.h.b16 %v1841
        %v3572 = vunpack.c.l.b16 %v1842
        %v3573 = vunpack.c.h.b16 %v1842
        %v3574 = vunpack.c.l.b16 %v1843
        %v3575 = vunpack.c.h.b16 %v1843
        %v3576 = vunpack.c.l.b16 %v1844
        %v3577 = vunpack.c.h.b16 %v1844
        %v3578 = vunpack.c.l.b16 %v1845
        %v3579 = vunpack.c.h.b16 %v1845
        %v3580 = vunpack.c.l.b16 %v1846
        %v3581 = vunpack.c.h.b16 %v1846
        %v3582 = vunpack.c.l.b16 %v1847
        %v3583 = vunpack.c.h.b16 %v1847
        %v3584 = vunpack.c.l.b16 %v1848
        %v3585 = vunpack.c.h.b16 %v1848
        %v3586 = vunpack.c.l.b16 %v1849
        %v3587 = vunpack.c.h.b16 %v1849
        %v3588 = vunpack.c.l.b16 %v1850
        %v3589 = vunpack.c.h.b16 %v1850
        %v3590 = vunpack.c.l.b16 %v1851
        %v3591 = vunpack.c.h.b16 %v1851
        %v3592 = vunpack.c.l.b16 %v1852
        %v3593 = vunpack.c.h.b16 %v1852
        %v3594 = vunpack.c.l.b16 %v1853
        %v3595 = vunpack.c.h.b16 %v1853
        %v3596 = vunpack.c.l.b16 %v1854
        %v3597 = vunpack.c.h.b16 %v1854
        %v3598 = vunpack.c.l.b16 %v1855
        %v3599 = vunpack.c.h.b16 %v1855
        %v3600 = vunpack.c.l.b16 %v1856
        %v3601 = vunpack.c.h.b16 %v1856
        %v3602 = vunpack.c.l.b16 %v1857
        %v3603 = vunpack.c.h.b16 %v1857
        %v3604 = vunpack.c.l.b16 %v1858
        %v3605 = vunpack.c.h.b16 %v1858
        %v3606 = vunpack.c.l.b16 %v1859
        %v3607 = vunpack.c.h.b16 %v1859
        %v3608 = vunpack.c.l.b16 %v1860
        %v3609 = vunpack.c.h.b16 %v1860
        %v3610 = vunpack.c.l.b16 %v1861
        %v3611 = vunpack.c.h.b16 %v1861
        %v3612 = vunpack.c.l.b16 %v1862
        %v3613 = vunpack.c.h.b16 %v1862
        %v3614 = vunpack.c.l.b16 %v1863
        %v3615 = vunpack.c.h.b16 %v1863
        %v3616 = vunpack.c.l.b16 %v1864
        %v3617 = vunpack.c.h.b16 %v1864
        %v3618 = vunpack.c.l.b16 %v1865
        %v3619 = vunpack.c.h.b16 %v1865
        %v3620 = vunpack.c.l.b16 %v1866
        %v3621 = vunpack.c.h.b16 %v1866
        %v3622 = vunpack.c.l.b16 %v1867
        %v3623 = vunpack.c.h.b16 %v1867
        %v3624 = vunpack.c.l.b16 %v1868
        %v3625 = vunpack.c.h.b16 %v1868
        %v3626 = vunpack.c.l.b16 %v1869
        %v3627 = vunpack.c.h.b16 %v1869
        %v3628 = vunpack.c.l.b16 %v1870
        %v3629 = vunpack.c.h.b16 %v1870
        %v3630 = vunpack.c.l.b16 %v1871
        %v3631 = vunpack.c.h.b16 %v1871
        %v3632 = vunpack.c.l.b16 %v1872
        %v3633 = vunpack.c.h.b16 %v1872
        %v3634 = vunpack.c.l.b16 %v1873
        %v3635 = vunpack.c.h.b16 %v1873
        %v3636 = vunpack.c.l.b16 %v1874
        %v3637 = vunpack.c.h.b16 %v1874
        %v3638 = vunpack.c.l.b16 %v1875
        %v3639 = vunpack.c.h.b16 %v1875
        %v3640 = vunpack.c.l.b16 %v1876
        %v3641 = vunpack.c.h.b16 %v1876
        %v3642 = vunpack.c.l.b16 %v1877
        %v3643 = vunpack.c.h.b16 %v1877
        %v3644 = vunpack.c.l.b16 %v1878
        %v3645 = vunpack.c.h.b16 %v1878
        %v3646 = vunpack.c.l.b16 %v1879
        %v3647 = vunpack.c.h.b16 %v1879
        %v3648 = vunpack.c.l.b16 %v1880
        %v3649 = vunpack.c.h.b16 %v1880
        %v3650 = vunpack.c.l.b16 %v1881
        %v3651 = vunpack.c.h.b16 %v1881
        %v3652 = vunpack.c.l.b16 %v1882
        %v3653 = vunpack.c.h.b16 %v1882
        %v3654 = vunpack.c.l.b16 %v1883
        %v3655 = vunpack.c.h.b16 %v1883
        %v3656 = vunpack.c.l.b16 %v1884
        %v3657 = vunpack.c.h.b16 %v1884
        %v3658 = vunpack.c.l.b16 %v1885
        %v3659 = vunpack.c.h.b16 %v1885
        %v3660 = vunpack.c.l.b16 %v1886
        %v3661 = vunpack.c.h.b16 %v1886
        %v3662 = vunpack.c.l.b16 %v1887
        %v3663 = vunpack.c.h.b16 %v1887
        %v3664 = vunpack.c.l.b16 %v1888
        %v3665 = vunpack.c.h.b16 %v1888
        %v3666 = vunpack.c.l.b16 %v1889
        %v3667 = vunpack.c.h.b16 %v1889
        %v3668 = vunpack.c.l.b16 %v1890
        %v3669 = vunpack.c.h.b16 %v1890
        %v3670 = vunpack.c.l.b16 %v1891
        %v3671 = vunpack.c.h.b16 %v1891
        %v3672 = vunpack.c.l.b16 %v1892
        %v3673 = vunpack.c.h.b16 %v1892
        %v3674 = vunpack.c.l.b16 %v1893
        %v3675 = vunpack.c.h.b16 %v1893
        %v3676 = vunpack.c.l.b16 %v1894
        %v3677 = vunpack.c.h.b16 %v1894
        %v3678 = vunpack.c.l.b16 %v1895
        %v3679 = vunpack.c.h.b16 %v1895
        %v3680 = vunpack.c.l.b16 %v1896
        %v3681 = vunpack.c.h.b16 %v1896
        %v3682 = vunpack.c.l.b16 %v1897
        %v3683 = vunpack.c.h.b16 %v1897
        %v3684 = vunpack.c.l.b16 %v1898
        %v3685 = vunpack.c.h.b16 %v1898
        %v3686 = vunpack.c.l.b16 %v1899
        %v3687 = vunpack.c.h.b16 %v1899
        %v3688 = vunpack.c.l.b16 %v1900
        %v3689 = vunpack.c.h.b16 %v1900
        %v3690 = vunpack.c.l.b16 %v1901
        %v3691 = vunpack.c.h.b16 %v1901
        %v3692 = vunpack.c.l.b16 %v1902
        %v3693 = vunpack.c.h.b16 %v1902
        %v3694 = vunpack.c.l.b16 %v1903
        %v3695 = vunpack.c.h.b16 %v1903
        %v3696 = vunpack.c.l.b16 %v1904
        %v3697 = vunpack.c.h.b16 %v1904
        %v3698 = vunpack.c.l.b16 %v1905
        %v3699 = vunpack.c.h.b16 %v1905
        %v3700 = vunpack.c.l.b16 %v1906
        %v3701 = vunpack.c.h.b16 %v1906
        %v3702 = vunpack.c.l.b16 %v1907
        %v3703 = vunpack.c.h.b16 %v1907
        %v3704 = vunpack.c.l.b16 %v1908
        %v3705 = vunpack.c.h.b16 %v1908
        %v3706 = vunpack.c.l.b16 %v1909
        %v3707 = vunpack.c.h.b16 %v1909
        %v3708 = vunpack.c.l.b16 %v1910
        %v3709 = vunpack.c.h.b16 %v1910
        %v3710 = vunpack.c.l.b16 %v1911
        %v3711 = vunpack.c.h.b16 %v1911
        %v3712 = vunpack.c.l.b16 %v1912
        %v3713 = vunpack.c.h.b16 %v1912
        %v3714 = vunpack.c.l.b16 %v1913
        %v3715 = vunpack.c.h.b16 %v1913
        %v3716 = vunpack.c.l.b16 %v1914
        %v3717 = vunpack.c.h.b16 %v1914
        %v3718 = vunpack.c.l.b16 %v1915
        %v3719 = vunpack.c.h.b16 %v1915
        %v3720 = vunpack.c.l.b16 %v1916
        %v3721 = vunpack.c.h.b16 %v1916
        %v3722 = vunpack.c.l.b16 %v1917
        %v3723 = vunpack.c.h.b16 %v1917
        %v3724 = vunpack.c.l.b16 %v1918
        %v3725 = vunpack.c.h.b16 %v1918
        %v3726 = vunpack.c.l.b16 %v1919
        %v3727 = vunpack.c.h.b16 %v1919
        %v3728 = vunpack.c.l.b16 %v1920
        %v3729 = vunpack.c.h.b16 %v1920
        %v3730 = vunpack.c.l.b16 %v1921
        %v3731 = vunpack.c.h.b16 %v1921
        %v3732 = vunpack.c.l.b16 %v1922
        %v3733 = vunpack.c.h.b16 %v1922
        %v3734 = vunpack.c.l.b16 %v1923
        %v3735 = vunpack.c.h.b16 %v1923
        %v3736 = vunpack.c.l.b16 %v1924
        %v3737 = vunpack.c.h.b16 %v1924
        %v3738 = vunpack.c.l.b16 %v1925
        %v3739 = vunpack.c.h.b16 %v1925
        %v3740 = vunpack.c.l.b16 %v1926
        %v3741 = vunpack.c.h.b16 %v1926
        %v3742 = vunpack.c.l.b16 %v1927
        %v3743 = vunpack.c.h.b16 %v1927
        %v3744 = vunpack.c.l.b16 %v1928
        %v3745 = vunpack.c.h.b16 %v1928
        %v3746 = vunpack.c.l.b16 %v1929
        %v3747 = vunpack.c.h.b16 %v1929
        %v3748 = vunpack.c.l.b16 %v1930
        %v3749 = vunpack.c.h.b16 %v1930
        %v3750 = vunpack.c.l.b16 %v1931
        %v3751 = vunpack.c.h.b16 %v1931
        %v3752 = vunpack.c.l.b16 %v1932
        %v3753 = vunpack.c.h.b16 %v1932
        %v3754 = vunpack.c.l.b16 %v1933
        %v3755 = vunpack.c.h.b16 %v1933
        %v3756 = vunpack.c.l.b16 %v1934
        %v3757 = vunpack.c.h.b16 %v1934
        %v3758 = vunpack.c.l.b16 %v1935
        %v3759 = vunpack.c.h.b16 %v1935
        %v3760 = vunpack.c.l.b16 %v1936
        %v3761 = vunpack.c.h.b16 %v1936
        %v3762 = vunpack.c.l.b16 %v1937
        %v3763 = vunpack.c.h.b16 %v1937
        %v3764 = vunpack.c.l.b16 %v1938
        %v3765 = vunpack.c.h.b16 %v1938
        %v3766 = vunpack.c.l.b16 %v1939
        %v3767 = vunpack.c.h.b16 %v1939
        %v3768 = vunpack.c.l.b16 %v1940
        %v3769 = vunpack.c.h.b16 %v1940
        %v3770 = vunpack.c.l.b16 %v1941
        %v3771 = vunpack.c.h.b16 %v1941
        %v3772 = vunpack.c.l.b16 %v1942
        %v3773 = vunpack.c.h.b16 %v1942
        %v3774 = vunpack.c.l.b16 %v1943
        %v3775 = vunpack.c.h.b16 %v1943
        %v3776 = vunpack.c.l.b16 %v1944
        %v3777 = vunpack.c.h.b16 %v1944
        %v3778 = vunpack.c.l.b16 %v1945
        %v3779 = vunpack.c.h.b16 %v1945
        %v3780 = vunpack.c.l.b16 %v1946
        %v3781 = vunpack.c.h.b16 %v1946
        %v3782 = vunpack.c.l.b16 %v1947
        %v3783 = vunpack.c.h.b16 %v1947
        %v3784 = vunpack.c.l.b16 %v1948
        %v3785 = vunpack.c.h.b16 %v1948
        %v3786 = vunpack.c.l.b16 %v1949
        %v3787 = vunpack.c.h.b16 %v1949
        %v3788 = vunpack.c.l.b16 %v1950
        %v3789 = vunpack.c.h.b16 %v1950
        %v3790 = vunpack.c.l.b16 %v1951
        %v3791 = vunpack.c.h.b16 %v1951
        %v3792 = vunpack.c.l.b16 %v1952
        %v3793 = vunpack.c.h.b16 %v1952
        %v3794 = vunpack.c.l.b16 %v1953
        %v3795 = vunpack.c.h.b16 %v1953
        %v3796 = vunpack.c.l.b16 %v1954
        %v3797 = vunpack.c.h.b16 %v1954
        %v3798 = vunpack.c.l.b16 %v1955
        %v3799 = vunpack.c.h.b16 %v1955
        %v3800 = vunpack.c.l.b16 %v1956
        %v3801 = vunpack.c.h.b16 %v1956
        %v3802 = vunpack.c.l.b16 %v1957
        %v3803 = vunpack.c.h.b16 %v1957
        %v3804 = vunpack.c.l.b16 %v1958
        %v3805 = vunpack.c.h.b16 %v1958
        %v3806 = vunpack.c.l.b16 %v1959
        %v3807 = vunpack.c.h.b16 %v1959
        %v3808 = vunpack.c.l.b16 %v1960
        %v3809 = vunpack.c.h.b16 %v1960
        %v3810 = vunpack.c.l.b16 %v1961
        %v3811 = vunpack.c.h.b16 %v1961
        %v3812 = vunpack.c.l.b16 %v1962
        %v3813 = vunpack.c.h.b16 %v1962
        %v3814 = vunpack.c.l.b16 %v1963
        %v3815 = vunpack.c.h.b16 %v1963
        %v3816 = vunpack.c.l.b16 %v1964
        %v3817 = vunpack.c.h.b16 %v1964
        %v3818 = vunpack.c.l.b16 %v1965
        %v3819 = vunpack.c.h.b16 %v1965
        %v3820 = vunpack.c.l.b16 %v1966
        %v3821 = vunpack.c.h.b16 %v1966
        %v3822 = vunpack.c.l.b16 %v1967
        %v3823 = vunpack.c.h.b16 %v1967
        %v3824 = vunpack.c.l.b16 %v1968
        %v3825 = vunpack.c.h.b16 %v1968
        %v3826 = vunpack.c.l.b16 %v1969
        %v3827 = vunpack.c.h.b16 %v1969
        %v3828 = vunpack.c.l.b16 %v1970
        %v3829 = vunpack.c.h.b16 %v1970
        %v3830 = vunpack.c.l.b16 %v1971
        %v3831 = vunpack.c.h.b16 %v1971
        %v3832 = vunpack.c.l.b16 %v1972
        %v3833 = vunpack.c.h.b16 %v1972
        %v3834 = vunpack.c.l.b16 %v1973
        %v3835 = vunpack.c.h.b16 %v1973
        %v3836 = vunpack.c.l.b16 %v1974
        %v3837 = vunpack.c.h.b16 %v1974
        %v3838 = vunpack.c.l.b16 %v1975
        %v3839 = vunpack.c.h.b16 %v1975
        %v3840 = vunpack.c.l.b16 %v1976
        %v3841 = vunpack.c.h.b16 %v1976
        %v3842 = vunpack.c.l.b16 %v1977
        %v3843 = vunpack.c.h.b16 %v1977
        %v3844 = vunpack.c.l.b16 %v1978
        %v3845 = vunpack.c.h.b16 %v1978
        %v3846 = vunpack.c.l.b16 %v1979
        %v3847 = vunpack.c.h.b16 %v1979
        %v3848 = vunpack.c.l.b16 %v1980
        %v3849 = vunpack.c.h.b16 %v1980
        %v3850 = vunpack.c.l.b16 %v1981
        %v3851 = vunpack.c.h.b16 %v1981
        %v3852 = vunpack.c.l.b16 %v1982
        %v3853 = vunpack.c.h.b16 %v1982
        %v3854 = vunpack.c.l.b16 %v1983
        %v3855 = vunpack.c.h.b16 %v1983
        %v3856 = vunpack.c.l.b16 %v1984
        %v3857 = vunpack.c.h.b16 %v1984
        %v3858 = vunpack.c.l.b16 %v1985
        %v3859 = vunpack.c.h.b16 %v1985
        %v3860 = vunpack.c.l.b16 %v1986
        %v3861 = vunpack.c.h.b16 %v1986
        %v3862 = vunpack.c.l.b16 %v1987
        %v3863 = vunpack.c.h.b16 %v1987
        %v3864 = vunpack.c.l.b16 %v1988
        %v3865 = vunpack.c.h.b16 %v1988
        %v3866 = vunpack.c.l.b16 %v1989
        %v3867 = vunpack.c.h.b16 %v1989
        %v3868 = vunpack.c.l.b16 %v1990
        %v3869 = vunpack.c.h.b16 %v1990
        %v3870 = vunpack.c.l.b16 %v1991
        %v3871 = vunpack.c.h.b16 %v1991
        %v3872 = vunpack.c.l.b16 %v1992
        %v3873 = vunpack.c.h.b16 %v1992
        %v3874 = vunpack.c.l.b16 %v1993
        %v3875 = vunpack.c.h.b16 %v1993
        %v3876 = vunpack.c.l.b16 %v1994
        %v3877 = vunpack.c.h.b16 %v1994
        %v3878 = vunpack.c.l.b16 %v1995
        %v3879 = vunpack.c.h.b16 %v1995
        %v3880 = vunpack.c.l.b16 %v1996
        %v3881 = vunpack.c.h.b16 %v1996
        %v3882 = vunpack.c.l.b16 %v1997
        %v3883 = vunpack.c.h.b16 %v1997
        %v3884 = vunpack.c.l.b16 %v1998
        %v3885 = vunpack.c.h.b16 %v1998
        %v3886 = vunpack.c.l.b16 %v1999
        %v3887 = vunpack.c.h.b16 %v1999
        %v3888 = vunpack.c.l.b16 %v2000
        %v3889 = vunpack.c.h.b16 %v2000
        %v3890 = vunpack.c.l.b16 %v2001
        %v3891 = vunpack.c.h.b16 %v2001
        %v3892 = vunpack.c.l.b16 %v2002
        %v3893 = vunpack.c.h.b16 %v2002
        %v3894 = vunpack.c.l.b16 %v2003
        %v3895 = vunpack.c.h.b16 %v2003
        %v3896 = vunpack.c.l.b16 %v2004
        %v3897 = vunpack.c.h.b16 %v2004
        %v3898 = vunpack.c.l.b16 %v2005
        %v3899 = vunpack.c.h.b16 %v2005
        %v3900 = vunpack.c.l.b16 %v2006
        %v3901 = vunpack.c.h.b16 %v2006
        %v3902 = vunpack.c.l.b16 %v2007
        %v3903 = vunpack.c.h.b16 %v2007
        %v3904 = vunpack.c.l.b16 %v2008
        %v3905 = vunpack.c.h.b16 %v2008
        %v3906 = vunpack.c.l.b16 %v2009
        %v3907 = vunpack.c.h.b16 %v2009
        %v3908 = vunpack.c.l.b16 %v2010
        %v3909 = vunpack.c.h.b16 %v2010
        %v3910 = vunpack.c.l.b16 %v2011
        %v3911 = vunpack.c.h.b16 %v2011
        %v3912 = vunpack.c.l.b16 %v2012
        %v3913 = vunpack.c.h.b16 %v2012
        %v3914 = vunpack.c.l.b16 %v2013
        %v3915 = vunpack.c.h.b16 %v2013
        %v3916 = vunpack.c.l.b16 %v2014
        %v3917 = vunpack.c.h.b16 %v2014
        %v3918 = vunpack.c.l.b16 %v2015
        %v3919 = vunpack.c.h.b16 %v2015
        %v3920 = vunpack.c.l.b16 %v2016
        %v3921 = vunpack.c.h.b16 %v2016
        %v3922 = vunpack.c.l.b16 %v2017
        %v3923 = vunpack.c.h.b16 %v2017
        %v3924 = vunpack.c.l.b16 %v2018
        %v3925 = vunpack.c.h.b16 %v2018
        %v3926 = vunpack.c.l.b16 %v2019
        %v3927 = vunpack.c.h.b16 %v2019
        %v3928 = vunpack.c.l.b16 %v2020
        %v3929 = vunpack.c.h.b16 %v2020
        %v3930 = vunpack.c.l.b16 %v2021
        %v3931 = vunpack.c.h.b16 %v2021
        %v3932 = vunpack.c.l.b16 %v2022
        %v3933 = vunpack.c.h.b16 %v2022
        %v3934 = vunpack.c.l.b16 %v2023
        %v3935 = vunpack.c.h.b16 %v2023
        %v3936 = vunpack.c.l.b16 %v2024
        %v3937 = vunpack.c.h.b16 %v2024
        %v3938 = vunpack.c.l.b16 %v2025
        %v3939 = vunpack.c.h.b16 %v2025
        %v3940 = vunpack.c.l.b16 %v2026
        %v3941 = vunpack.c.h.b16 %v2026
        %v3942 = vunpack.c.l.b16 %v2027
        %v3943 = vunpack.c.h.b16 %v2027
        %v3944 = vunpack.c.l.b16 %v2028
        %v3945 = vunpack.c.h.b16 %v2028
        %v3946 = vunpack.c.l.b16 %v2029
        %v3947 = vunpack.c.h.b16 %v2029
        %v3948 = vunpack.c.l.b16 %v2030
        %v3949 = vunpack.c.h.b16 %v2030
        %v3950 = vunpack.c.l.b16 %v2031
        %v3951 = vunpack.c.h.b16 %v2031
        %v3952 = vunpack.c.l.b16 %v2032
        %v3953 = vunpack.c.h.b16 %v2032
        %v3954 = vunpack.c.l.b16 %v2033
        %v3955 = vunpack.c.h.b16 %v2033
        %v3956 = vunpack.c.l.b16 %v2034
        %v3957 = vunpack.c.h.b16 %v2034
        %v3958 = vunpack.c.l.b16 %v2035
        %v3959 = vunpack.c.h.b16 %v2035
        %v3960 = vunpack.c.l.b16 %v2036
        %v3961 = vunpack.c.h.b16 %v2036
        %v3962 = vunpack.c.l.b16 %v2037
        %v3963 = vunpack.c.h.b16 %v2037
        %v3964 = vunpack.c.l.b16 %v2038
        %v3965 = vunpack.c.h.b16 %v2038
        %v3966 = vunpack.c.l.b16 %v2039
        %v3967 = vunpack.c.h.b16 %v2039
        %v3968 = vunpack.c.l.b16 %v2040
        %v3969 = vunpack.c.h.b16 %v2040
        %v3970 = vunpack.c.l.b16 %v2041
        %v3971 = vunpack.c.h.b16 %v2041
        %v3972 = vunpack.c.l.b16 %v2042
        %v3973 = vunpack.c.h.b16 %v2042
        %v3974 = vunpack.c.l.b16 %v2043
        %v3975 = vunpack.c.h.b16 %v2043
        %v3976 = vunpack.c.l.b16 %v2044
        %v3977 = vunpack.c.h.b16 %v2044
        %v3978 = vunpack.c.l.b16 %v2045
        %v3979 = vunpack.c.h.b16 %v2045
        %v3980 = vunpack.c.l.b16 %v2046
        %v3981 = vunpack.c.h.b16 %v2046
        %v3982 = vunpack.c.l.b16 %v2047
        %v3983 = vunpack.c.h.b16 %v2047
        %v3984 = vunpack.c.l.b16 %v2048
        %v3985 = vunpack.c.h.b16 %v2048
        %v3986 = vunpack.c.l.b16 %v2049
        %v3987 = vunpack.c.h.b16 %v2049
        %v3988 = vunpack.c.l.b16 %v2050
        %v3989 = vunpack.c.h.b16 %v2050
        %v3990 = vunpack.c.l.b16 %v2051
        %v3991 = vunpack.c.h.b16 %v2051
        %v3992 = vunpack.c.l.b16 %v2052
        %v3993 = vunpack.c.h.b16 %v2052
        %v3994 = vunpack.c.l.b16 %v2053
        %v3995 = vunpack.c.h.b16 %v2053
        %v3996 = vpack.c.b16 %v2720, %v2716
        %v3997 = vpack.c.b16 %v2721, %v2717
        %v3998 = vpack.c.b16 %v2722, %v2718
        %v3999 = vpack.c.b16 %v2723, %v2719
        %v4000 = vpack.c.b16 %v2728, %v2724
        %v4001 = vpack.c.b16 %v2729, %v2725
        %v4002 = vpack.c.b16 %v2730, %v2726
        %v4003 = vpack.c.b16 %v2731, %v2727
        %v4004 = vpack.c.b16 %v2736, %v2732
        %v4005 = vpack.c.b16 %v2737, %v2733
        %v4006 = vpack.c.b16 %v2738, %v2734
        %v4007 = vpack.c.b16 %v2739, %v2735
        %v4008 = vpack.c.b16 %v2744, %v2740
        %v4009 = vpack.c.b16 %v2745, %v2741
        %v4010 = vpack.c.b16 %v2746, %v2742
        %v4011 = vpack.c.b16 %v2747, %v2743
        %v4012 = vpack.c.b16 %v2752, %v2748
        %v4013 = vpack.c.b16 %v2753, %v2749
        %v4014 = vpack.c.b16 %v2754, %v2750
        %v4015 = vpack.c.b16 %v2755, %v2751
        %v4016 = vpack.c.b16 %v2760, %v2756
        %v4017 = vpack.c.b16 %v2761, %v2757
        %v4018 = vpack.c.b16 %v2762, %v2758
        %v4019 = vpack.c.b16 %v2763, %v2759
        %v4020 = vpack.c.b16 %v2768, %v2764
        %v4021 = vpack.c.b16 %v2769, %v2765
        %v4022 = vpack.c.b16 %v2770, %v2766
        %v4023 = vpack.c.b16 %v2771, %v2767
        %v4024 = vpack.c.b16 %v2776, %v2772
        %v4025 = vpack.c.b16 %v2777, %v2773
        %v4026 = vpack.c.b16 %v2778, %v2774
        %v4027 = vpack.c.b16 %v2779, %v2775
        %v4028 = vpack.c.b16 %v2784, %v2780
        %v4029 = vpack.c.b16 %v2785, %v2781
        %v4030 = vpack.c.b16 %v2786, %v2782
        %v4031 = vpack.c.b16 %v2787, %v2783
        %v4032 = vpack.c.b16 %v2792, %v2788
        %v4033 = vpack.c.b16 %v2793, %v2789
        %v4034 = vpack.c.b16 %v2794, %v2790
        %v4035 = vpack.c.b16 %v2795, %v2791
        %v4036 = vpack.c.b16 %v2800, %v2796
        %v4037 = vpack.c.b16 %v2801, %v2797
        %v4038 = vpack.c.b16 %v2802, %v2798
        %v4039 = vpack.c.b16 %v2803, %v2799
        %v4040 = vpack.c.b16 %v2808, %v2804
        %v4041 = vpack.c.b16 %v2809, %v2805
        %v4042 = vpack.c.b16 %v2810, %v2806
        %v4043 = vpack.c.b16 %v2811, %v2807
        %v4044 = vpack.c.b16 %v2816, %v2812
        %v4045 = vpack.c.b16 %v2817, %v2813
        %v4046 = vpack.c.b16 %v2818, %v2814
        %v4047 = vpack.c.b16 %v2819, %v2815
        %v4048 = vpack.c.b16 %v2824, %v2820
        %v4049 = vpack.c.b16 %v2825, %v2821
        %v4050 = vpack.c.b16 %v2826, %v2822
        %v4051 = vpack.c.b16 %v2827, %v2823
        %v4052 = vpack.c.b16 %v2832, %v2828
        %v4053 = vpack.c.b16 %v2833, %v2829
        %v4054 = vpack.c.b16 %v2834, %v2830
        %v4055 = vpack.c.b16 %v2835, %v2831
        %v4056 = vpack.c.b16 %v2840, %v2836
        %v4057 = vpack.c.b16 %v2841, %v2837
        %v4058 = vpack.c.b16 %v2842, %v2838
        %v4059 = vpack.c.b16 %v2843, %v2839
        %v4060 = vpack.c.b16 %v2848, %v2844
        %v4061 = vpack.c.b16 %v2849, %v2845
        %v4062 = vpack.c.b16 %v2850, %v2846
        %v4063 = vpack.c.b16 %v2851, %v2847
        %v4064 = vpack.c.b16 %v2856, %v2852
        %v4065 = vpack.c.b16 %v2857, %v2853
        %v4066 = vpack.c.b16 %v2858, %v2854
        %v4067 = vpack.c.b16 %v2859, %v2855
        %v4068 = vpack.c.b16 %v2864, %v2860
        %v4069 = vpack.c.b16 %v2865, %v2861
        %v4070 = vpack.c.b16 %v2866, %v2862
        %v4071 = vpack.c.b16 %v2867, %v2863
        %v4072 = vpack.c.b16 %v2872, %v2868
        %v4073 = vpack.c.b16 %v2873, %v2869
        %v4074 = vpack.c.b16 %v2874, %v2870
        %v4075 = vpack.c.b16 %v2875, %v2871
        %v4076 = vpack.c.b16 %v2880, %v2876
        %v4077 = vpack.c.b16 %v2881, %v2877
        %v4078 = vpack.c.b16 %v2882, %v2878
        %v4079 = vpack.c.b16 %v2883, %v2879
        %v4080 = vpack.c.b16 %v2888, %v2884
        %v4081 = vpack.c.b16 %v2889, %v2885
        %v4082 = vpack.c.b16 %v2890, %v2886
        %v4083 = vpack.c.b16 %v2891, %v2887
        %v4084 = vpack.c.b16 %v2896, %v2892
        %v4085 = vpack.c.b16 %v2897, %v2893
        %v4086 = vpack.c.b16 %v2898, %v2894
        %v4087 = vpack.c.b16 %v2899, %v2895
        %v4088 = vpack.c.b16 %v2904, %v2900
        %v4089 = vpack.c.b16 %v2905, %v2901
        %v4090 = vpack.c.b16 %v2906, %v2902
        %v4091 = vpack.c.b16 %v2907, %v2903
        %v4092 = vpack.c.b16 %v2912, %v2908
        %v4093 = vpack.c.b16 %v2913, %v2909
        %v4094 = vpack.c.b16 %v2914, %v2910
        %v4095 = vpack.c.b16 %v2915, %v2911
        %v4096 = vpack.c.b16 %v2920, %v2916
        %v4097 = vpack.c.b16 %v2921, %v2917
        %v4098 = vpack.c.b16 %v2922, %v2918
        %v4099 = vpack.c.b16 %v2923, %v2919
        %v4100 = vpack.c.b16 %v2928, %v2924
        %v4101 = vpack.c.b16 %v2929, %v2925
        %v4102 = vpack.c.b16 %v2930, %v2926
        %v4103 = vpack.c.b16 %v2931, %v2927
        %v4104 = vpack.c.b16 %v2936, %v2932
        %v4105 = vpack.c.b16 %v2937, %v2933
        %v4106 = vpack.c.b16 %v2938, %v2934
        %v4107 = vpack.c.b16 %v2939, %v2935
        %v4108 = vpack.c.b16 %v2944, %v2940
        %v4109 = vpack.c.b16 %v2945, %v2941
        %v4110 = vpack.c.b16 %v2946, %v2942
        %v4111 = vpack.c.b16 %v2947, %v2943
        %v4112 = vpack.c.b16 %v2952, %v2948
        %v4113 = vpack.c.b16 %v2953, %v2949
        %v4114 = vpack.c.b16 %v2954, %v2950
        %v4115 = vpack.c.b16 %v2955, %v2951
        %v4116 = vpack.c.b16 %v2960, %v2956
        %v4117 = vpack.c.b16 %v2961, %v2957
        %v4118 = vpack.c.b16 %v2962, %v2958
        %v4119 = vpack.c.b16 %v2963, %v2959
        %v4120 = vpack.c.b16 %v2968, %v2964
        %v4121 = vpack.c.b16 %v2969, %v2965
        %v4122 = vpack.c.b16 %v2970, %v2966
        %v4123 = vpack.c.b16 %v2971, %v2967
        %v4124 = vpack.c.b16 %v2976, %v2972
        %v4125 = vpack.c.b16 %v2977, %v2973
        %v4126 = vpack.c.b16 %v2978, %v2974
        %v4127 = vpack.c.b16 %v2979, %v2975
        %v4128 = vpack.c.b16 %v2984, %v2980
        %v4129 = vpack.c.b16 %v2985, %v2981
        %v4130 = vpack.c.b16 %v2986, %v2982
        %v4131 = vpack.c.b16 %v2987, %v2983
        %v4132 = vpack.c.b16 %v2992, %v2988
        %v4133 = vpack.c.b16 %v2993, %v2989
        %v4134 = vpack.c.b16 %v2994, %v2990
        %v4135 = vpack.c.b16 %v2995, %v2991
        %v4136 = vpack.c.b16 %v3000, %v2996
        %v4137 = vpack.c.b16 %v3001, %v2997
        %v4138 = vpack.c.b16 %v3002, %v2998
        %v4139 = vpack.c.b16 %v3003, %v2999
        %v4140 = vpack.c.b16 %v3008, %v3004
        %v4141 = vpack.c.b16 %v3009, %v3005
        %v4142 = vpack.c.b16 %v3010, %v3006
        %v4143 = vpack.c.b16 %v3011, %v3007
        %v4144 = vpack.c.b16 %v3016, %v3012
        %v4145 = vpack.c.b16 %v3017, %v3013
        %v4146 = vpack.c.b16 %v3018, %v3014
        %v4147 = vpack.c.b16 %v3019, %v3015
        %v4148 = vpack.c.b16 %v3024, %v3020
        %v4149 = vpack.c.b16 %v3025, %v3021
        %v4150 = vpack.c.b16 %v3026, %v3022
        %v4151 = vpack.c.b16 %v3027, %v3023
        %v4152 = vpack.c.b16 %v3032, %v3028
        %v4153 = vpack.c.b16 %v3033, %v3029
        %v4154 = vpack.c.b16 %v3034, %v3030
        %v4155 = vpack.c.b16 %v3035, %v3031
        %v4156 = vpack.c.b16 %v3040, %v3036
        %v4157 = vpack.c.b16 %v3041, %v3037
        %v4158 = vpack.c.b16 %v3042, %v3038
        %v4159 = vpack.c.b16 %v3043, %v3039
        %v4160 = vpack.c.b16 %v3048, %v3044
        %v4161 = vpack.c.b16 %v3049, %v3045
        %v4162 = vpack.c.b16 %v3050, %v3046
        %v4163 = vpack.c.b16 %v3051, %v3047
        %v4164 = vpack.c.b16 %v3056, %v3052
        %v4165 = vpack.c.b16 %v3057, %v3053
        %v4166 = vpack.c.b16 %v3058, %v3054
        %v4167 = vpack.c.b16 %v3059, %v3055
        %v4168 = vpack.c.b16 %v3064, %v3060
        %v4169 = vpack.c.b16 %v3065, %v3061
        %v4170 = vpack.c.b16 %v3066, %v3062
        %v4171 = vpack.c.b16 %v3067, %v3063
        %v4172 = vpack.c.b16 %v3072, %v3068
        %v4173 = vpack.c.b16 %v3073, %v3069
        %v4174 = vpack.c.b16 %v3074, %v3070
        %v4175 = vpack.c.b16 %v3075, %v3071
        %v4176 = vpack.c.b16 %v3080, %v3076
        %v4177 = vpack.c.b16 %v3081, %v3077
        %v4178 = vpack.c.b16 %v3082, %v3078
        %v4179 = vpack.c.b16 %v3083, %v3079
        %v4180 = vpack.c.b16 %v3088, %v3084
        %v4181 = vpack.c.b16 %v3089, %v3085
        %v4182 = vpack.c.b16 %v3090, %v3086
        %v4183 = vpack.c.b16 %v3091, %v3087
        %v4184 = vpack.c.b16 %v3096, %v3092
        %v4185 = vpack.c.b16 %v3097, %v3093
        %v4186 = vpack.c.b16 %v3098, %v3094
        %v4187 = vpack.c.b16 %v3099, %v3095
        %v4188 = vpack.c.b16 %v3104, %v3100
        %v4189 = vpack.c.b16 %v3105, %v3101
        %v4190 = vpack.c.b16 %v3106, %v3102
        %v4191 = vpack.c.b16 %v3107, %v3103
        %v4192 = vpack.c.b16 %v3112, %v3108
        %v4193 = vpack.c.b16 %v3113, %v3109
        %v4194 = vpack.c.b16 %v3114, %v3110
        %v4195 = vpack.c.b16 %v3115, %v3111
        %v4196 = vpack.c.b16 %v3120, %v3116
        %v4197 = vpack.c.b16 %v3121, %v3117
        %v4198 = vpack.c.b16 %v3122, %v3118
        %v4199 = vpack.c.b16 %v3123, %v3119
        %v4200 = vpack.c.b16 %v3128, %v3124
        %v4201 = vpack.c.b16 %v3129, %v3125
        %v4202 = vpack.c.b16 %v3130, %v3126
        %v4203 = vpack.c.b16 %v3131, %v3127
        %v4204 = vpack.c.b16 %v3136, %v3132
        %v4205 = vpack.c.b16 %v3137, %v3133
        %v4206 = vpack.c.b16 %v3138, %v3134
        %v4207 = vpack.c.b16 %v3139, %v3135
        %v4208 = vpack.c.b16 %v3144, %v3140
        %v4209 = vpack.c.b16 %v3145, %v3141
        %v4210 = vpack.c.b16 %v3146, %v3142
        %v4211 = vpack.c.b16 %v3147, %v3143
        %v4212 = vpack.c.b16 %v3152, %v3148
        %v4213 = vpack.c.b16 %v3153, %v3149
        %v4214 = vpack.c.b16 %v3154, %v3150
        %v4215 = vpack.c.b16 %v3155, %v3151
        %v4216 = vpack.c.b16 %v3160, %v3156
        %v4217 = vpack.c.b16 %v3161, %v3157
        %v4218 = vpack.c.b16 %v3162, %v3158
        %v4219 = vpack.c.b16 %v3163, %v3159
        %v4220 = vpack.c.b16 %v3168, %v3164
        %v4221 = vpack.c.b16 %v3169, %v3165
        %v4222 = vpack.c.b16 %v3170, %v3166
        %v4223 = vpack.c.b16 %v3171, %v3167
        %v4224 = vpack.c.b16 %v3176, %v3172
        %v4225 = vpack.c.b16 %v3177, %v3173
        %v4226 = vpack.c.b16 %v3178, %v3174
        %v4227 = vpack.c.b16 %v3179, %v3175
        %v4228 = vpack.c.b16 %v3184, %v3180
        %v4229 = vpack.c.b16 %v3185, %v3181
        %v4230 = vpack.c.b16 %v3186, %v3182
        %v4231 = vpack.c.b16 %v3187, %v3183
        %v4232 = vpack.c.b16 %v3192, %v3188
        %v4233 = vpack.c.b16 %v3193, %v3189
        %v4234 = vpack.c.b16 %v3194, %v3190
        %v4235 = vpack.c.b16 %v3195, %v3191
        %v4236 = vpack.c.b16 %v3200, %v3196
        %v4237 = vpack.c.b16 %v3201, %v3197
        %v4238 = vpack.c.b16 %v3202, %v3198
        %v4239 = vpack.c.b16 %v3203, %v3199
        %v4240 = vpack.c.b16 %v3208, %v3204
        %v4241 = vpack.c.b16 %v3209, %v3205
        %v4242 = vpack.c.b16 %v3210, %v3206
        %v4243 = vpack.c.b16 %v3211, %v3207
        %v4244 = vpack.c.b16 %v3216, %v3212
        %v4245 = vpack.c.b16 %v3217, %v3213
        %v4246 = vpack.c.b16 %v3218, %v3214
        %v4247 = vpack.c.b16 %v3219, %v3215
        %v4248 = vpack.c.b16 %v3224, %v3220
        %v4249 = vpack.c.b16 %v3225, %v3221
        %v4250 = vpack.c.b16 %v3226, %v3222
        %v4251 = vpack.c.b16 %v3227, %v3223
        %v4252 = vpack.c.b16 %v3232, %v3228
        %v4253 = vpack.c.b16 %v3233, %v3229
        %v4254 = vpack.c.b16 %v3234, %v3230
        %v4255 = vpack.c.b16 %v3235, %v3231
        %v4256 = vpack.c.b16 %v3240, %v3236
        %v4257 = vpack.c.b16 %v3241, %v3237
        %v4258 = vpack.c.b16 %v3242, %v3238
        %v4259 = vpack.c.b16 %v3243, %v3239
        %v4260 = vpack.c.b16 %v3248, %v3244
        %v4261 = vpack.c.b16 %v3249, %v3245
        %v4262 = vpack.c.b16 %v3250, %v3246
        %v4263 = vpack.c.b16 %v3251, %v3247
        %v4264 = vpack.c.b16 %v3256, %v3252
        %v4265 = vpack.c.b16 %v3257, %v3253
        %v4266 = vpack.c.b16 %v3258, %v3254
        %v4267 = vpack.c.b16 %v3259, %v3255
        %v4268 = vpack.c.b16 %v3264, %v3260
        %v4269 = vpack.c.b16 %v3265, %v3261
        %v4270 = vpack.c.b16 %v3266, %v3262
        %v4271 = vpack.c.b16 %v3267, %v3263
        %v4272 = vpack.c.b16 %v3272, %v3268
        %v4273 = vpack.c.b16 %v3273, %v3269
        %v4274 = vpack.c.b16 %v3274, %v3270
        %v4275 = vpack.c.b16 %v3275, %v3271
        %v4276 = vpack.c.b16 %v3280, %v3276
        %v4277 = vpack.c.b16 %v3281, %v3277
        %v4278 = vpack.c.b16 %v3282, %v3278
        %v4279 = vpack.c.b16 %v3283, %v3279
        %v4280 = vpack.c.b16 %v3288, %v3284
        %v4281 = vpack.c.b16 %v3289, %v3285
        %v4282 = vpack.c.b16 %v3290, %v3286
        %v4283 = vpack.c.b16 %v3291, %v3287
        %v4284 = vpack.c.b16 %v3296, %v3292
        %v4285 = vpack.c.b16 %v3297, %v3293
        %v4286 = vpack.c.b16 %v3298, %v3294
        %v4287 = vpack.c.b16 %v3299, %v3295
        %v4288 = vpack.c.b16 %v3304, %v3300
        %v4289 = vpack.c.b16 %v3305, %v3301
        %v4290 = vpack.c.b16 %v3306, %v3302
        %v4291 = vpack.c.b16 %v3307, %v3303
        %v4292 = vpack.c.b16 %v3312, %v3308
        %v4293 = vpack.c.b16 %v3313, %v3309
        %v4294 = vpack.c.b16 %v3314, %v3310
        %v4295 = vpack.c.b16 %v3315, %v3311
        %v4296 = vpack.c.b16 %v3320, %v3316
        %v4297 = vpack.c.b16 %v3321, %v3317
        %v4298 = vpack.c.b16 %v3322, %v3318
        %v4299 = vpack.c.b16 %v3323, %v3319
        %v4300 = vpack.c.b16 %v3328, %v3324
        %v4301 = vpack.c.b16 %v3329, %v3325
        %v4302 = vpack.c.b16 %v3330, %v3326
        %v4303 = vpack.c.b16 %v3331, %v3327
        %v4304 = vpack.c.b16 %v3336, %v3332
        %v4305 = vpack.c.b16 %v3337, %v3333
        %v4306 = vpack.c.b16 %v3338, %v3334
        %v4307 = vpack.c.b16 %v3339, %v3335
        %v4308 = vpack.c.b16 %v3344, %v3340
        %v4309 = vpack.c.b16 %v3345, %v3341
        %v4310 = vpack.c.b16 %v3346, %v3342
        %v4311 = vpack.c.b16 %v3347, %v3343
        %v4312 = vpack.c.b16 %v3352, %v3348
        %v4313 = vpack.c.b16 %v3353, %v3349
        %v4314 = vpack.c.b16 %v3354, %v3350
        %v4315 = vpack.c.b16 %v3355, %v3351
        %v4316 = vpack.c.b16 %v3360, %v3356
        %v4317 = vpack.c.b16 %v3361, %v3357
        %v4318 = vpack.c.b16 %v3362, %v3358
        %v4319 = vpack.c.b16 %v3363, %v3359
        %v4320 = vpack.c.b16 %v3368, %v3364
        %v4321 = vpack.c.b16 %v3369, %v3365
        %v4322 = vpack.c.b16 %v3370, %v3366
        %v4323 = vpack.c.b16 %v3371, %v3367
        %v4324 = vpack.c.b16 %v3376, %v3372
        %v4325 = vpack.c.b16 %v3377, %v3373
        %v4326 = vpack.c.b16 %v3378, %v3374
        %v4327 = vpack.c.b16 %v3379, %v3375
        %v4328 = vpack.c.b16 %v3384, %v3380
        %v4329 = vpack.c.b16 %v3385, %v3381
        %v4330 = vpack.c.b16 %v3386, %v3382
        %v4331 = vpack.c.b16 %v3387, %v3383
        %v4332 = vpack.c.b16 %v3392, %v3388
        %v4333 = vpack.c.b16 %v3393, %v3389
        %v4334 = vpack.c.b16 %v3394, %v3390
        %v4335 = vpack.c.b16 %v3395, %v3391
        %v4336 = vpack.c.b16 %v3400, %v3396
        %v4337 = vpack.c.b16 %v3401, %v3397
        %v4338 = vpack.c.b16 %v3402, %v3398
        %v4339 = vpack.c.b16 %v3403, %v3399
        %v4340 = vpack.c.b16 %v3408, %v3404
        %v4341 = vpack.c.b16 %v3409, %v3405
        %v4342 = vpack.c.b16 %v3410, %v3406
        %v4343 = vpack.c.b16 %v3411, %v3407
        %v4344 = vpack.c.b16 %v3416, %v3412
        %v4345 = vpack.c.b16 %v3417, %v3413
        %v4346 = vpack.c.b16 %v3418, %v3414
        %v4347 = vpack.c.b16 %v3419, %v3415
        %v4348 = vpack.c.b16 %v3424, %v3420
        %v4349 = vpack.c.b16 %v3425, %v3421
        %v4350 = vpack.c.b16 %v3426, %v3422
        %v4351 = vpack.c.b16 %v3427, %v3423
        %v4352 = vpack.c.b16 %v3432, %v3428
        %v4353 = vpack.c.b16 %v3433, %v3429
        %v4354 = vpack.c.b16 %v3434, %v3430
        %v4355 = vpack.c.b16 %v3435, %v3431
        %v4356 = vpack.c.b16 %v3440, %v3436
        %v4357 = vpack.c.b16 %v3441, %v3437
        %v4358 = vpack.c.b16 %v3442, %v3438
        %v4359 = vpack.c.b16 %v3443, %v3439
        %v4360 = vpack.c.b16 %v3448, %v3444
        %v4361 = vpack.c.b16 %v3449, %v3445
        %v4362 = vpack.c.b16 %v3450, %v3446
        %v4363 = vpack.c.b16 %v3451, %v3447
        %v4364 = vpack.c.b16 %v3456, %v3452
        %v4365 = vpack.c.b16 %v3457, %v3453
        %v4366 = vpack.c.b16 %v3458, %v3454
        %v4367 = vpack.c.b16 %v3459, %v3455
        %v4368 = vpack.c.b16 %v3464, %v3460
        %v4369 = vpack.c.b16 %v3465, %v3461
        %v4370 = vpack.c.b16 %v3466, %v3462
        %v4371 = vpack.c.b16 %v3467, %v3463
        %v4372 = vpack.c.b16 %v3472, %v3468
        %v4373 = vpack.c.b16 %v3473, %v3469
        %v4374 = vpack.c.b16 %v3474, %v3470
        %v4375 = vpack.c.b16 %v3475, %v3471
        %v4376 = vpack.c.b16 %v3480, %v3476
        %v4377 = vpack.c.b16 %v3481, %v3477
        %v4378 = vpack.c.b16 %v3482, %v3478
        %v4379 = vpack.c.b16 %v3483, %v3479
        %v4380 = vpack.c.b16 %v3488, %v3484
        %v4381 = vpack.c.b16 %v3489, %v3485
        %v4382 = vpack.c.b16 %v3490, %v3486
        %v4383 = vpack.c.b16 %v3491, %v3487
        %v4384 = vpack.c.b16 %v3496, %v3492
        %v4385 = vpack.c.b16 %v3497, %v3493
        %v4386 = vpack.c.b16 %v3498, %v3494
        %v4387 = vpack.c.b16 %v3499, %v3495
        %v4388 = vpack.c.b16 %v3504, %v3500
        %v4389 = vpack.c.b16 %v3505, %v3501
        %v4390 = vpack.c.b16 %v3506, %v3502
        %v4391 = vpack.c.b16 %v3507, %v3503
        %v4392 = vpack.c.b16 %v3512, %v3508
        %v4393 = vpack.c.b16 %v3513, %v3509
        %v4394 = vpack.c.b16 %v3514, %v3510
        %v4395 = vpack.c.b16 %v3515, %v3511
        %v4396 = vpack.c.b16 %v3520, %v3516
        %v4397 = vpack.c.b16 %v3521, %v3517
        %v4398 = vpack.c.b16 %v3522, %v3518
        %v4399 = vpack.c.b16 %v3523, %v3519
        %v4400 = vpack.c.b16 %v3528, %v3524
        %v4401 = vpack.c.b16 %v3529, %v3525
        %v4402 = vpack.c.b16 %v3530, %v3526
        %v4403 = vpack.c.b16 %v3531, %v3527
        %v4404 = vpack.c.b16 %v3536, %v3532
        %v4405 = vpack.c.b16 %v3537, %v3533
        %v4406 = vpack.c.b16 %v3538, %v3534
        %v4407 = vpack.c.b16 %v3539, %v3535
        %v4408 = vpack.c.b16 %v3544, %v3540
        %v4409 = vpack.c.b16 %v3545, %v3541
        %v4410 = vpack.c.b16 %v3546, %v3542
        %v4411 = vpack.c.b16 %v3547, %v3543
        %v4412 = vpack.c.b16 %v3552, %v3548
        %v4413 = vpack.c.b16 %v3553, %v3549
        %v4414 = vpack.c.b16 %v3554, %v3550
        %v4415 = vpack.c.b16 %v3555, %v3551
        %v4416 = vpack.c.b16 %v3560, %v3556
        %v4417 = vpack.c.b16 %v3561, %v3557
        %v4418 = vpack.c.b16 %v3562, %v3558
        %v4419 = vpack.c.b16 %v3563, %v3559
        %v4420 = vpack.c.b16 %v3568, %v3564
        %v4421 = vpack.c.b16 %v3569, %v3565
        %v4422 = vpack.c.b16 %v3570, %v3566
        %v4423 = vpack.c.b16 %v3571, %v3567
        %v4424 = vpack.c.b16 %v3576, %v3572
        %v4425 = vpack.c.b16 %v3577, %v3573
        %v4426 = vpack.c.b16 %v3578, %v3574
        %v4427 = vpack.c.b16 %v3579, %v3575
        %v4428 = vpack.c.b16 %v3584, %v3580
        %v4429 = vpack.c.b16 %v3585, %v3581
        %v4430 = vpack.c.b16 %v3586, %v3582
        %v4431 = vpack.c.b16 %v3587, %v3583
        %v4432 = vpack.c.b16 %v3592, %v3588
        %v4433 = vpack.c.b16 %v3593, %v3589
        %v4434 = vpack.c.b16 %v3594, %v3590
        %v4435 = vpack.c.b16 %v3595, %v3591
        %v4436 = vpack.c.b16 %v3600, %v3596
        %v4437 = vpack.c.b16 %v3601, %v3597
        %v4438 = vpack.c.b16 %v3602, %v3598
        %v4439 = vpack.c.b16 %v3603, %v3599
        %v4440 = vpack.c.b16 %v3608, %v3604
        %v4441 = vpack.c.b16 %v3609, %v3605
        %v4442 = vpack.c.b16 %v3610, %v3606
        %v4443 = vpack.c.b16 %v3611, %v3607
        %v4444 = vpack.c.b16 %v3616, %v3612
        %v4445 = vpack.c.b16 %v3617, %v3613
        %v4446 = vpack.c.b16 %v3618, %v3614
        %v4447 = vpack.c.b16 %v3619, %v3615
        %v4448 = vpack.c.b16 %v3624, %v3620
        %v4449 = vpack.c.b16 %v3625, %v3621
        %v4450 = vpack.c.b16 %v3626, %v3622
        %v4451 = vpack.c.b16 %v3627, %v3623
        %v4452 = vpack.c.b16 %v3632, %v3628
        %v4453 = vpack.c.b16 %v3633, %v3629
        %v4454 = vpack.c.b16 %v3634, %v3630
        %v4455 = vpack.c.b16 %v3635, %v3631
        %v4456 = vpack.c.b16 %v3640, %v3636
        %v4457 = vpack.c.b16 %v3641, %v3637
        %v4458 = vpack.c.b16 %v3642, %v3638
        %v4459 = vpack.c.b16 %v3643, %v3639
        %v4460 = vpack.c.b16 %v3648, %v3644
        %v4461 = vpack.c.b16 %v3649, %v3645
        %v4462 = vpack.c.b16 %v3650, %v3646
        %v4463 = vpack.c.b16 %v3651, %v3647
        %v4464 = vpack.c.b16 %v3656, %v3652
        %v4465 = vpack.c.b16 %v3657, %v3653
        %v4466 = vpack.c.b16 %v3658, %v3654
        %v4467 = vpack.c.b16 %v3659, %v3655
        %v4468 = vpack.c.b16 %v3664, %v3660
        %v4469 = vpack.c.b16 %v3665, %v3661
        %v4470 = vpack.c.b16 %v3666, %v3662
        %v4471 = vpack.c.b16 %v3667, %v3663
        %v4472 = vpack.c.b16 %v3672, %v3668
        %v4473 = vpack.c.b16 %v3673, %v3669
        %v4474 = vpack.c.b16 %v3674, %v3670
        %v4475 = vpack.c.b16 %v3675, %v3671
        %v4476 = vpack.c.b16 %v3680, %v3676
        %v4477 = vpack.c.b16 %v3681, %v3677
        %v4478 = vpack.c.b16 %v3682, %v3678
        %v4479 = vpack.c.b16 %v3683, %v3679
        %v4480 = vpack.c.b16 %v3688, %v3684
        %v4481 = vpack.c.b16 %v3689, %v3685
        %v4482 = vpack.c.b16 %v3690, %v3686
        %v4483 = vpack.c.b16 %v3691, %v3687
        %v4484 = vpack.c.b16 %v3696, %v3692
        %v4485 = vpack.c.b16 %v3697, %v3693
        %v4486 = vpack.c.b16 %v3698, %v3694
        %v4487 = vpack.c.b16 %v3699, %v3695
        %v4488 = vpack.c.b16 %v3704, %v3700
        %v4489 = vpack.c.b16 %v3705, %v3701
        %v4490 = vpack.c.b16 %v3706, %v3702
        %v4491 = vpack.c.b16 %v3707, %v3703
        %v4492 = vpack.c.b16 %v3712, %v3708
        %v4493 = vpack.c.b16 %v3713, %v3709
        %v4494 = vpack.c.b16 %v3714, %v3710
        %v4495 = vpack.c.b16 %v3715, %v3711
        %v4496 = vpack.c.b16 %v3720, %v3716
        %v4497 = vpack.c.b16 %v3721, %v3717
        %v4498 = vpack.c.b16 %v3722, %v3718
        %v4499 = vpack.c.b16 %v3723, %v3719
        %v4500 = vpack.c.b16 %v3728, %v3724
        %v4501 = vpack.c.b16 %v3729, %v3725
        %v4502 = vpack.c.b16 %v3730, %v3726
        %v4503 = vpack.c.b16 %v3731, %v3727
        %v4504 = vpack.c.b16 %v3736, %v3732
        %v4505 = vpack.c.b16 %v3737, %v3733
        %v4506 = vpack.c.b16 %v3738, %v3734
        %v4507 = vpack.c.b16 %v3739, %v3735
        %v4508 = vpack.c.b16 %v3744, %v3740
        %v4509 = vpack.c.b16 %v3745, %v3741
        %v4510 = vpack.c.b16 %v3746, %v3742
        %v4511 = vpack.c.b16 %v3747, %v3743
        %v4512 = vpack.c.b16 %v3752, %v3748
        %v4513 = vpack.c.b16 %v3753, %v3749
        %v4514 = vpack.c.b16 %v3754, %v3750
        %v4515 = vpack.c.b16 %v3755, %v3751
        %v4516 = vpack.c.b16 %v3760, %v3756
        %v4517 = vpack.c.b16 %v3761, %v3757
        %v4518 = vpack.c.b16 %v3762, %v3758
        %v4519 = vpack.c.b16 %v3763, %v3759
        %v4520 = vpack.c.b16 %v3768, %v3764
        %v4521 = vpack.c.b16 %v3769, %v3765
        %v4522 = vpack.c.b16 %v3770, %v3766
        %v4523 = vpack.c.b16 %v3771, %v3767
        %v4524 = vpack.c.b16 %v3776, %v3772
        %v4525 = vpack.c.b16 %v3777, %v3773
        %v4526 = vpack.c.b16 %v3778, %v3774
        %v4527 = vpack.c.b16 %v3779, %v3775
        %v4528 = vpack.c.b16 %v3784, %v3780
        %v4529 = vpack.c.b16 %v3785, %v3781
        %v4530 = vpack.c.b16 %v3786, %v3782
        %v4531 = vpack.c.b16 %v3787, %v3783
        %v4532 = vpack.c.b16 %v3792, %v3788
        %v4533 = vpack.c.b16 %v3793, %v3789
        %v4534 = vpack.c.b16 %v3794, %v3790
        %v4535 = vpack.c.b16 %v3795, %v3791
        %v4536 = vpack.c.b16 %v3800, %v3796
        %v4537 = vpack.c.b16 %v3801, %v3797
        %v4538 = vpack.c.b16 %v3802, %v3798
        %v4539 = vpack.c.b16 %v3803, %v3799
        %v4540 = vpack.c.b16 %v3808, %v3804
        %v4541 = vpack.c.b16 %v3809, %v3805
        %v4542 = vpack.c.b16 %v3810, %v3806
        %v4543 = vpack.c.b16 %v3811, %v3807
        %v4544 = vpack.c.b16 %v3816, %v3812
        %v4545 = vpack.c.b16 %v3817, %v3813
        %v4546 = vpack.c.b16 %v3818, %v3814
        %v4547 = vpack.c.b16 %v3819, %v3815
        %v4548 = vpack.c.b16 %v3824, %v3820
        %v4549 = vpack.c.b16 %v3825, %v3821
        %v4550 = vpack.c.b16 %v3826, %v3822
        %v4551 = vpack.c.b16 %v3827, %v3823
        %v4552 = vpack.c.b16 %v3832, %v3828
        %v4553 = vpack.c.b16 %v3833, %v3829
        %v4554 = vpack.c.b16 %v3834, %v3830
        %v4555 = vpack.c.b16 %v3835, %v3831
        %v4556 = vpack.c.b16 %v3840, %v3836
        %v4557 = vpack.c.b16 %v3841, %v3837
        %v4558 = vpack.c.b16 %v3842, %v3838
        %v4559 = vpack.c.b16 %v3843, %v3839
        %v4560 = vpack.c.b16 %v3848, %v3844
        %v4561 = vpack.c.b16 %v3849, %v3845
        %v4562 = vpack.c.b16 %v3850, %v3846
        %v4563 = vpack.c.b16 %v3851, %v3847
        %v4564 = vpack.c.b16 %v3856, %v3852
        %v4565 = vpack.c.b16 %v3857, %v3853
        %v4566 = vpack.c.b16 %v3858, %v3854
        %v4567 = vpack.c.b16 %v3859, %v3855
        %v4568 = vpack.c.b16 %v3864, %v3860
        %v4569 = vpack.c.b16 %v3865, %v3861
        %v4570 = vpack.c.b16 %v3866, %v3862
        %v4571 = vpack.c.b16 %v3867, %v3863
        %v4572 = vpack.c.b16 %v3872, %v3868
        %v4573 = vpack.c.b16 %v3873, %v3869
        %v4574 = vpack.c.b16 %v3874, %v3870
        %v4575 = vpack.c.b16 %v3875, %v3871
        %v4576 = vpack.c.b16 %v3880, %v3876
        %v4577 = vpack.c.b16 %v3881, %v3877
        %v4578 = vpack.c.b16 %v3882, %v3878
        %v4579 = vpack.c.b16 %v3883, %v3879
        %v4580 = vpack.c.b16 %v3888, %v3884
        %v4581 = vpack.c.b16 %v3889, %v3885
        %v4582 = vpack.c.b16 %v3890, %v3886
        %v4583 = vpack.c.b16 %v3891, %v3887
        %v4584 = vpack.c.b16 %v3896, %v3892
        %v4585 = vpack.c.b16 %v3897, %v3893
        %v4586 = vpack.c.b16 %v3898, %v3894
        %v4587 = vpack.c.b16 %v3899, %v3895
        %v4588 = vpack.c.b16 %v3904, %v3900
        %v4589 = vpack.c.b16 %v3905, %v3901
        %v4590 = vpack.c.b16 %v3906, %v3902
        %v4591 = vpack.c.b16 %v3907, %v3903
        %v4592 = vpack.c.b16 %v3912, %v3908
        %v4593 = vpack.c.b16 %v3913, %v3909
        %v4594 = vpack.c.b16 %v3914, %v3910
        %v4595 = vpack.c.b16 %v3915, %v3911
        %v4596 = vpack.c.b16 %v3920, %v3916
        %v4597 = vpack.c.b16 %v3921, %v3917
        %v4598 = vpack.c.b16 %v3922, %v3918
        %v4599 = vpack.c.b16 %v3923, %v3919
        %v4600 = vpack.c.b16 %v3928, %v3924
        %v4601 = vpack.c.b16 %v3929, %v3925
        %v4602 = vpack.c.b16 %v3930, %v3926
        %v4603 = vpack.c.b16 %v3931, %v3927
        %v4604 = vpack.c.b16 %v3936, %v3932
        %v4605 = vpack.c.b16 %v3937, %v3933
        %v4606 = vpack.c.b16 %v3938, %v3934
        %v4607 = vpack.c.b16 %v3939, %v3935
        %v4608 = vpack.c.b16 %v3944, %v3940
        %v4609 = vpack.c.b16 %v3945, %v3941
        %v4610 = vpack.c.b16 %v3946, %v3942
        %v4611 = vpack.c.b16 %v3947, %v3943
        %v4612 = vpack.c.b16 %v3952, %v3948
        %v4613 = vpack.c.b16 %v3953, %v3949
        %v4614 = vpack.c.b16 %v3954, %v3950
        %v4615 = vpack.c.b16 %v3955, %v3951
        %v4616 = vpack.c.b16 %v3960, %v3956
        %v4617 = vpack.c.b16 %v3961, %v3957
        %v4618 = vpack.c.b16 %v3962, %v3958
        %v4619 = vpack.c.b16 %v3963, %v3959
        %v4620 = vpack.c.b16 %v3968, %v3964
        %v4621 = vpack.c.b16 %v3969, %v3965
        %v4622 = vpack.c.b16 %v3970, %v3966
        %v4623 = vpack.c.b16 %v3971, %v3967
        %v4624 = vpack.c.b16 %v3976, %v3972
        %v4625 = vpack.c.b16 %v3977, %v3973
        %v4626 = vpack.c.b16 %v3978, %v3974
        %v4627 = vpack.c.b16 %v3979, %v3975
        %v4628 = vpack.c.b16 %v3984, %v3980
        %v4629 = vpack.c.b16 %v3985, %v3981
        %v4630 = vpack.c.b16 %v3986, %v3982
        %v4631 = vpack.c.b16 %v3987, %v3983
        %v4632 = vpack.c.b16 %v3992, %v3988
        %v4633 = vpack.c.b16 %v3993, %v3989
        %v4634 = vpack.c.b16 %v3994, %v3990
        %v4635 = vpack.c.b16 %v3995, %v3991
        %5276 = vmatprep.subr.bf16.mxu0 %v3997
        %5277 = vmatpush1.bf16.msra.mxu0 %v3996
        %5278 = vmatprep.subr.bf16.mxu0 %v4001
        %5279 = vmatpush1.bf16.msra.mxu0 %v4000
        %5280 = vmatprep.subr.bf16.mxu0 %v4005
        %5281 = vmatpush1.bf16.msra.mxu0 %v4004
        %5282 = vmatprep.subr.bf16.mxu0 %v4009
        %5283 = vmatpush1.bf16.msra.mxu0 %v4008
        %5284 = vmatprep.subr.bf16.mxu0 %v4013
        %5285 = vmatpush1.bf16.msra.mxu0 %v4012
        %5286 = vmatprep.subr.bf16.mxu0 %v4017
        %5287 = vmatpush1.bf16.msra.mxu0 %v4016
        %5288 = vmatprep.subr.bf16.mxu0 %v4021
        %5289 = vmatpush1.bf16.msra.mxu0 %v4020
        %5290 = vmatprep.subr.bf16.mxu0 %v4025
        %5291 = vmatpush1.bf16.msra.mxu0 %v4024
        %5292 = vmatprep.subr.bf16.mxu0 %v4029
        %5293 = vmatpush1.bf16.msra.mxu0 %v4028
        %5294 = vmatprep.subr.bf16.mxu0 %v4033
        %5295 = vmatpush1.bf16.msra.mxu0 %v4032
        %5296 = vmatprep.subr.bf16.mxu0 %v4037
        %5297 = vmatpush1.bf16.msra.mxu0 %v4036
        %5298 = vmatprep.subr.bf16.mxu0 %v4041
        %5299 = vmatpush1.bf16.msra.mxu0 %v4040
        %5300 = vmatprep.subr.bf16.mxu0 %v4045
        %5301 = vmatpush1.bf16.msra.mxu0 %v4044
        %5302 = vmatprep.subr.bf16.mxu0 %v4049
        %5303 = vmatpush1.bf16.msra.mxu0 %v4048
        %5304 = vmatprep.subr.bf16.mxu0 %v4053
        %5305 = vmatpush1.bf16.msra.mxu0 %v4052
        %5306 = vmatprep.subr.bf16.mxu0 %v4057
        %5307 = vmatpush1.bf16.msra.mxu0 %v4056
        %5308 = vmatprep.mubr.bf16.mxu0 %v1095
        %5309 = vmatmul.mubr.bf16.gmra.mrb[0].mxu0 %v1094
        %v5310 = vpop.f32.mrb[0].mxu0
        %v5311 = vadd.f32 %v2059, %v5310
        %v5312 = vpop.f32.mrb[0].mxu0
        %v5313 = vadd.f32 %v2063, %v5312
        %v5314 = vpop.f32.mrb[0].mxu0
        %v5315 = vadd.f32 %v2059, %v5314
        %v5316 = vpop.f32.mrb[0].mxu0
        %v5317 = vadd.f32 %v2063, %v5316
        %5318 = vmatprep.mubr.bf16.mxu0 %v1115
        %5319 = vmatmul.mubr.bf16.gmra.mrb[0].mxu0 %v1114
        %v5320 = vpop.f32.mrb[0].mxu0
        %v5321 = vadd.f32 %v2059, %v5320
        %v5322 = vpop.f32.mrb[0].mxu0
        %v5323 = vadd.f32 %v2063, %v5322
        %v5324 = vpop.f32.mrb[0].mxu0
        %v5325 = vadd.f32 %v2059, %v5324
        %v5326 = vpop.f32.mrb[0].mxu0
        %v5327 = vadd.f32 %v2063, %v5326
        %5328 = vmatprep.mubr.bf16.mxu0 %v1135
        %5329 = vmatmul.mubr.bf16.gmra.mrb[0].mxu0 %v1134
        %v5330 = vpop.f32.mrb[0].mxu0
        %v5331 = vadd.f32 %v2059, %v5330
        %v5332 = vpop.f32.mrb[0].mxu0
        %v5333 = vadd.f32 %v2063, %v5332
        %v5334 = vpop.f32.mrb[0].mxu0
        %v5335 = vadd.f32 %v2059, %v5334
        %v5336 = vpop.f32.mrb[0].mxu0
        %v5337 = vadd.f32 %v2063, %v5336
        %5338 = vmatprep.mubr.bf16.mxu0 %v1155
        %5339 = vmatmul.mubr.bf16.gmra.mrb[0].mxu0 %v1154
        %v5340 = vpop.f32.mrb[0].mxu0
        %v5341 = vadd.f32 %v2059, %v5340
        %v5342 = vpop.f32.mrb[0].mxu0
        %v5343 = vadd.f32 %v2063, %v5342
        %v5344 = vpop.f32.mrb[0].mxu0
        %v5345 = vadd.f32 %v2059, %v5344
        %v5346 = vpop.f32.mrb[0].mxu0
        %v5347 = vadd.f32 %v2063, %v5346
        %5348 = vmatprep.mubr.bf16.mxu0 %v1175
        %5349 = vmatmul.mubr.bf16.gmra.mrb[0].mxu0 %v1174
        %v5350 = vpop.f32.mrb[0].mxu0
        %v5351 = vadd.f32 %v2059, %v5350
        %v5352 = vpop.f32.mrb[0].mxu0
        %v5353 = vadd.f32 %v2063, %v5352
        %v5354 = vpop.f32.mrb[0].mxu0
        %v5355 = vadd.f32 %v2059, %v5354
        %v5356 = vpop.f32.mrb[0].mxu0
        %v5357 = vadd.f32 %v2063, %v5356
        %5358 = vmatprep.mubr.bf16.mxu0 %v1195
        %5359 = vmatmul.mubr.bf16.gmra.mrb[0].mxu0 %v1194
        %v5360 = vpop.f32.mrb[0].mxu0
        %v5361 = vadd.f32 %v2059, %v5360
        %v5362 = vpop.f32.mrb[0].mxu0
        %v5363 = vadd.f32 %v2063, %v5362
        %v5364 = vpop.f32.mrb[0].mxu0
        %v5365 = vadd.f32 %v2059, %v5364
        %v5366 = vpop.f32.mrb[0].mxu0
        %v5367 = vadd.f32 %v2063, %v5366
        %5368 = vmatprep.mubr.bf16.mxu0 %v1215
        %5369 = vmatmul.mubr.bf16.gmra.mrb[0].mxu0 %v1214
        %v5370 = vpop.f32.mrb[0].mxu0
        %v5371 = vadd.f32 %v2059, %v5370
        %v5372 = vpop.f32.mrb[0].mxu0
        %v5373 = vadd.f32 %v2063, %v5372
        %v5374 = vpop.f32.mrb[0].mxu0
        %v5375 = vadd.f32 %v2059, %v5374
        %v5376 = vpop.f32.mrb[0].mxu0
        %v5377 = vadd.f32 %v2063, %v5376
        %5378 = vmatprep.mubr.bf16.mxu0 %v1235
        %5379 = vmatmul.mubr.bf16.gmra.mrb[0].mxu0 %v1234
        %v5380 = vpop.f32.mrb[0].mxu0
        %v5381 = vadd.f32 %v2059, %v5380
        %v5382 = vpop.f32.mrb[0].mxu0
        %v5383 = vadd.f32 %v2063, %v5382
        %v5384 = vpop.f32.mrb[0].mxu0
        %v5385 = vadd.f32 %v2059, %v5384
        %v5386 = vpop.f32.mrb[0].mxu0
        %v5387 = vadd.f32 %v2063, %v5386
        %5388 = vmatprep.mubr.bf16.mxu0 %v1255
        %5389 = vmatmul.mubr.bf16.gmra.mrb[0].mxu0 %v1254
        %v5390 = vpop.f32.mrb[0].mxu0
        %v5391 = vadd.f32 %v2059, %v5390
        %v5392 = vpop.f32.mrb[0].mxu0
        %v5393 = vadd.f32 %v2063, %v5392
        %v5394 = vpop.f32.mrb[0].mxu0
        %v5395 = vadd.f32 %v2059, %v5394
        %v5396 = vpop.f32.mrb[0].mxu0
        %v5397 = vadd.f32 %v2063, %v5396
        %5398 = vmatprep.mubr.bf16.mxu0 %v1275
        %5399 = vmatmul.mubr.bf16.gmra.mrb[0].mxu0 %v1274
        %v5400 = vpop.f32.mrb[0].mxu0
        %v5401 = vadd.f32 %v2059, %v5400
        %v5402 = vpop.f32.mrb[0].mxu0
        %v5403 = vadd.f32 %v2063, %v5402
        %v5404 = vpop.f32.mrb[0].mxu0
        %v5405 = vadd.f32 %v2059, %v5404
        %v5406 = vpop.f32.mrb[0].mxu0
        %v5407 = vadd.f32 %v2063, %v5406
        %5408 = vmatprep.mubr.bf16.mxu0 %v1295
        %5409 = vmatmul.mubr.bf16.gmra.mrb[0].mxu0 %v1294
        %v5410 = vpop.f32.mrb[0].mxu0
        %v5411 = vadd.f32 %v2059, %v5410
        %v5412 = vpop.f32.mrb[0].mxu0
        %v5413 = vadd.f32 %v2063, %v5412
        %v5414 = vpop.f32.mrb[0].mxu0
        %v5415 = vadd.f32 %v2059, %v5414
        %v5416 = vpop.f32.mrb[0].mxu0
        %v5417 = vadd.f32 %v2063, %v5416
        %5418 = vmatprep.mubr.bf16.mxu0 %v1315
        %5419 = vmatmul.mubr.bf16.gmra.mrb[0].mxu0 %v1314
        %v5420 = vpop.f32.mrb[0].mxu0
        %v5421 = vadd.f32 %v2059, %v5420
        %v5422 = vpop.f32.mrb[0].mxu0
        %v5423 = vadd.f32 %v2063, %v5422
        %v5424 = vpop.f32.mrb[0].mxu0
        %v5425 = vadd.f32 %v2059, %v5424
        %v5426 = vpop.f32.mrb[0].mxu0
        %v5427 = vadd.f32 %v2063, %v5426
        %5428 = vmatprep.mubr.bf16.mxu0 %v1335
        %5429 = vmatmul.mubr.bf16.gmra.mrb[0].mxu0 %v1334
        %v5430 = vpop.f32.mrb[0].mxu0
        %v5431 = vadd.f32 %v2059, %v5430
        %v5432 = vpop.f32.mrb[0].mxu0
        %v5433 = vadd.f32 %v2063, %v5432
        %v5434 = vpop.f32.mrb[0].mxu0
        %v5435 = vadd.f32 %v2059, %v5434
        %v5436 = vpop.f32.mrb[0].mxu0
        %v5437 = vadd.f32 %v2063, %v5436
        %5438 = vmatprep.mubr.bf16.mxu0 %v1355
        %5439 = vmatmul.mubr.bf16.gmra.mrb[0].mxu0 %v1354
        %v5440 = vpop.f32.mrb[0].mxu0
        %v5441 = vadd.f32 %v2059, %v5440
        %v5442 = vpop.f32.mrb[0].mxu0
        %v5443 = vadd.f32 %v2063, %v5442
        %v5444 = vpop.f32.mrb[0].mxu0
        %v5445 = vadd.f32 %v2059, %v5444
        %v5446 = vpop.f32.mrb[0].mxu0
        %v5447 = vadd.f32 %v2063, %v5446
        %5448 = vmatprep.mubr.bf16.mxu0 %v1375
        %5449 = vmatmul.mubr.bf16.gmra.mrb[0].mxu0 %v1374
        %v5450 = vpop.f32.mrb[0].mxu0
        %v5451 = vadd.f32 %v2059, %v5450
        %v5452 = vpop.f32.mrb[0].mxu0
        %v5453 = vadd.f32 %v2063, %v5452
        %v5454 = vpop.f32.mrb[0].mxu0
        %v5455 = vadd.f32 %v2059, %v5454
        %v5456 = vpop.f32.mrb[0].mxu0
        %v5457 = vadd.f32 %v2063, %v5456
        %5458 = vmatprep.mubr.bf16.mxu0 %v1395
        %5459 = vmatmul.mubr.bf16.gmra.mrb[0].mxu0 %v1394
        %v5460 = vpop.f32.mrb[0].mxu0
        %v5461 = vadd.f32 %v2059, %v5460
        %v5462 = vpop.f32.mrb[0].mxu0
        %v5463 = vadd.f32 %v2063, %v5462
        %v5464 = vpop.f32.mrb[0].mxu0
        %v5465 = vadd.f32 %v2059, %v5464
        %v5466 = vpop.f32.mrb[0].mxu0
        %v5467 = vadd.f32 %v2063, %v5466
        %5468 = vdwg.mxu0
        %5469 = vmatprep.subr.bf16.mxu0 %v4061
        %5470 = vmatpush1.bf16.msra.mxu0 %v4060
        %5471 = vmatprep.subr.bf16.mxu0 %v4065
        %5472 = vmatpush1.bf16.msra.mxu0 %v4064
        %5473 = vmatprep.subr.bf16.mxu0 %v4069
        %5474 = vmatpush1.bf16.msra.mxu0 %v4068
        %5475 = vmatprep.subr.bf16.mxu0 %v4073
        %5476 = vmatpush1.bf16.msra.mxu0 %v4072
        %5477 = vmatprep.subr.bf16.mxu0 %v4077
        %5478 = vmatpush1.bf16.msra.mxu0 %v4076
        %5479 = vmatprep.subr.bf16.mxu0 %v4081
        %5480 = vmatpush1.bf16.msra.mxu0 %v4080
        %5481 = vmatprep.subr.bf16.mxu0 %v4085
        %5482 = vmatpush1.bf16.msra.mxu0 %v4084
        %5483 = vmatprep.subr.bf16.mxu0 %v4089
        %5484 = vmatpush1.bf16.msra.mxu0 %v4088
        %5485 = vmatprep.subr.bf16.mxu0 %v4093
        %5486 = vmatpush1.bf16.msra.mxu0 %v4092
        %5487 = vmatprep.subr.bf16.mxu0 %v4097
        %5488 = vmatpush1.bf16.msra.mxu0 %v4096
        %5489 = vmatprep.subr.bf16.mxu0 %v4101
        %5490 = vmatpush1.bf16.msra.mxu0 %v4100
        %5491 = vmatprep.subr.bf16.mxu0 %v4105
        %5492 = vmatpush1.bf16.msra.mxu0 %v4104
        %5493 = vmatprep.subr.bf16.mxu0 %v4109
        %5494 = vmatpush1.bf16.msra.mxu0 %v4108
        %5495 = vmatprep.subr.bf16.mxu0 %v4113
        %5496 = vmatpush1.bf16.msra.mxu0 %v4112
        %5497 = vmatprep.subr.bf16.mxu0 %v4117
        %5498 = vmatpush1.bf16.msra.mxu0 %v4116
        %5499 = vmatprep.subr.bf16.mxu0 %v4121
        %5500 = vmatpush1.bf16.msra.mxu0 %v4120
        %5501 = vmatprep.mubr.bf16.mxu0 %v1097
        %5502 = vmatmul.mubr.bf16.gmra.mrb[0].mxu0 %v1096
        %v5503 = vpop.f32.mrb[0].mxu0
        %v5504 = vadd.f32 %v5311, %v5503
        %v5505 = vpop.f32.mrb[0].mxu0
        %v5506 = vadd.f32 %v5313, %v5505
        %v5507 = vpop.f32.mrb[0].mxu0
        %v5508 = vadd.f32 %v5315, %v5507
        %v5509 = vpop.f32.mrb[0].mxu0
        %v5510 = vadd.f32 %v5317, %v5509
        %5511 = vmatprep.mubr.bf16.mxu0 %v1117
        %5512 = vmatmul.mubr.bf16.gmra.mrb[0].mxu0 %v1116
        %v5513 = vpop.f32.mrb[0].mxu0
        %v5514 = vadd.f32 %v5321, %v5513
        %v5515 = vpop.f32.mrb[0].mxu0
        %v5516 = vadd.f32 %v5323, %v5515
        %v5517 = vpop.f32.mrb[0].mxu0
        %v5518 = vadd.f32 %v5325, %v5517
        %v5519 = vpop.f32.mrb[0].mxu0
        %v5520 = vadd.f32 %v5327, %v5519
        %5521 = vmatprep.mubr.bf16.mxu0 %v1137
        %5522 = vmatmul.mubr.bf16.gmra.mrb[0].mxu0 %v1136
        %v5523 = vpop.f32.mrb[0].mxu0
        %v5524 = vadd.f32 %v5331, %v5523
        %v5525 = vpop.f32.mrb[0].mxu0
        %v5526 = vadd.f32 %v5333, %v5525
        %v5527 = vpop.f32.mrb[0].mxu0
        %v5528 = vadd.f32 %v5335, %v5527
        %v5529 = vpop.f32.mrb[0].mxu0
        %v5530 = vadd.f32 %v5337, %v5529
        %5531 = vmatprep.mubr.bf16.mxu0 %v1157
        %5532 = vmatmul.mubr.bf16.gmra.mrb[0].mxu0 %v1156
        %v5533 = vpop.f32.mrb[0].mxu0
        %v5534 = vadd.f32 %v5341, %v5533
        %v5535 = vpop.f32.mrb[0].mxu0
        %v5536 = vadd.f32 %v5343, %v5535
        %v5537 = vpop.f32.mrb[0].mxu0
        %v5538 = vadd.f32 %v5345, %v5537
        %v5539 = vpop.f32.mrb[0].mxu0
        %v5540 = vadd.f32 %v5347, %v5539
        %5541 = vmatprep.mubr.bf16.mxu0 %v1177
        %5542 = vmatmul.mubr.bf16.gmra.mrb[0].mxu0 %v1176
        %v5543 = vpop.f32.mrb[0].mxu0
        %v5544 = vadd.f32 %v5351, %v5543
        %v5545 = vpop.f32.mrb[0].mxu0
        %v5546 = vadd.f32 %v5353, %v5545
        %v5547 = vpop.f32.mrb[0].mxu0
        %v5548 = vadd.f32 %v5355, %v5547
        %v5549 = vpop.f32.mrb[0].mxu0
        %v5550 = vadd.f32 %v5357, %v5549
        %5551 = vmatprep.mubr.bf16.mxu0 %v1197
        %5552 = vmatmul.mubr.bf16.gmra.mrb[0].mxu0 %v1196
        %v5553 = vpop.f32.mrb[0].mxu0
        %v5554 = vadd.f32 %v5361, %v5553
        %v5555 = vpop.f32.mrb[0].mxu0
        %v5556 = vadd.f32 %v5363, %v5555
        %v5557 = vpop.f32.mrb[0].mxu0
        %v5558 = vadd.f32 %v5365, %v5557
        %v5559 = vpop.f32.mrb[0].mxu0
        %v5560 = vadd.f32 %v5367, %v5559
        %5561 = vmatprep.mubr.bf16.mxu0 %v1217
        %5562 = vmatmul.mubr.bf16.gmra.mrb[0].mxu0 %v1216
        %v5563 = vpop.f32.mrb[0].mxu0
        %v5564 = vadd.f32 %v5371, %v5563
        %v5565 = vpop.f32.mrb[0].mxu0
        %v5566 = vadd.f32 %v5373, %v5565
        %v5567 = vpop.f32.mrb[0].mxu0
        %v5568 = vadd.f32 %v5375, %v5567
        %v5569 = vpop.f32.mrb[0].mxu0
        %v5570 = vadd.f32 %v5377, %v5569
        %5571 = vmatprep.mubr.bf16.mxu0 %v1237
        %5572 = vmatmul.mubr.bf16.gmra.mrb[0].mxu0 %v1236
        %v5573 = vpop.f32.mrb[0].mxu0
        %v5574 = vadd.f32 %v5381, %v5573
        %v5575 = vpop.f32.mrb[0].mxu0
        %v5576 = vadd.f32 %v5383, %v5575
        %v5577 = vpop.f32.mrb[0].mxu0
        %v5578 = vadd.f32 %v5385, %v5577
        %v5579 = vpop.f32.mrb[0].mxu0
        %v5580 = vadd.f32 %v5387, %v5579
        %5581 = vmatprep.mubr.bf16.mxu0 %v1257
        %5582 = vmatmul.mubr.bf16.gmra.mrb[0].mxu0 %v1256
        %v5583 = vpop.f32.mrb[0].mxu0
        %v5584 = vadd.f32 %v5391, %v5583
        %v5585 = vpop.f32.mrb[0].mxu0
        %v5586 = vadd.f32 %v5393, %v5585
        %v5587 = vpop.f32.mrb[0].mxu0
        %v5588 = vadd.f32 %v5395, %v5587
        %v5589 = vpop.f32.mrb[0].mxu0
        %v5590 = vadd.f32 %v5397, %v5589
        %5591 = vmatprep.mubr.bf16.mxu0 %v1277
        %5592 = vmatmul.mubr.bf16.gmra.mrb[0].mxu0 %v1276
        %v5593 = vpop.f32.mrb[0].mxu0
        %v5594 = vadd.f32 %v5401, %v5593
        %v5595 = vpop.f32.mrb[0].mxu0
        %v5596 = vadd.f32 %v5403, %v5595
        %v5597 = vpop.f32.mrb[0].mxu0
        %v5598 = vadd.f32 %v5405, %v5597
        %v5599 = vpop.f32.mrb[0].mxu0
        %v5600 = vadd.f32 %v5407, %v5599
        %5601 = vmatprep.mubr.bf16.mxu0 %v1297
        %5602 = vmatmul.mubr.bf16.gmra.mrb[0].mxu0 %v1296
        %v5603 = vpop.f32.mrb[0].mxu0
        %v5604 = vadd.f32 %v5411, %v5603
        %v5605 = vpop.f32.mrb[0].mxu0
        %v5606 = vadd.f32 %v5413, %v5605
        %v5607 = vpop.f32.mrb[0].mxu0
        %v5608 = vadd.f32 %v5415, %v5607
        %v5609 = vpop.f32.mrb[0].mxu0
        %v5610 = vadd.f32 %v5417, %v5609
        %5611 = vmatprep.mubr.bf16.mxu0 %v1317
        %5612 = vmatmul.mubr.bf16.gmra.mrb[0].mxu0 %v1316
        %v5613 = vpop.f32.mrb[0].mxu0
        %v5614 = vadd.f32 %v5421, %v5613
        %v5615 = vpop.f32.mrb[0].mxu0
        %v5616 = vadd.f32 %v5423, %v5615
        %v5617 = vpop.f32.mrb[0].mxu0
        %v5618 = vadd.f32 %v5425, %v5617
        %v5619 = vpop.f32.mrb[0].mxu0
        %v5620 = vadd.f32 %v5427, %v5619
        %5621 = vmatprep.mubr.bf16.mxu0 %v1337
        %5622 = vmatmul.mubr.bf16.gmra.mrb[0].mxu0 %v1336
        %v5623 = vpop.f32.mrb[0].mxu0
        %v5624 = vadd.f32 %v5431, %v5623
        %v5625 = vpop.f32.mrb[0].mxu0
        %v5626 = vadd.f32 %v5433, %v5625
        %v5627 = vpop.f32.mrb[0].mxu0
        %v5628 = vadd.f32 %v5435, %v5627
        %v5629 = vpop.f32.mrb[0].mxu0
        %v5630 = vadd.f32 %v5437, %v5629
        %5631 = vmatprep.mubr.bf16.mxu0 %v1357
        %5632 = vmatmul.mubr.bf16.gmra.mrb[0].mxu0 %v1356
        %v5633 = vpop.f32.mrb[0].mxu0
        %v5634 = vadd.f32 %v5441, %v5633
        %v5635 = vpop.f32.mrb[0].mxu0
        %v5636 = vadd.f32 %v5443, %v5635
        %v5637 = vpop.f32.mrb[0].mxu0
        %v5638 = vadd.f32 %v5445, %v5637
        %v5639 = vpop.f32.mrb[0].mxu0
        %v5640 = vadd.f32 %v5447, %v5639
        %5641 = vmatprep.mubr.bf16.mxu0 %v1377
        %5642 = vmatmul.mubr.bf16.gmra.mrb[0].mxu0 %v1376
        %v5643 = vpop.f32.mrb[0].mxu0
        %v5644 = vadd.f32 %v5451, %v5643
        %v5645 = vpop.f32.mrb[0].mxu0
        %v5646 = vadd.f32 %v5453, %v5645
        %v5647 = vpop.f32.mrb[0].mxu0
        %v5648 = vadd.f32 %v5455, %v5647
        %v5649 = vpop.f32.mrb[0].mxu0
        %v5650 = vadd.f32 %v5457, %v5649
        %5651 = vmatprep.mubr.bf16.mxu0 %v1397
        %5652 = vmatmul.mubr.bf16.gmra.mrb[0].mxu0 %v1396
        %v5653 = vpop.f32.mrb[0].mxu0
        %v5654 = vadd.f32 %v5461, %v5653
        %v5655 = vpop.f32.mrb[0].mxu0
        %v5656 = vadd.f32 %v5463, %v5655
        %v5657 = vpop.f32.mrb[0].mxu0
        %v5658 = vadd.f32 %v5465, %v5657
        %v5659 = vpop.f32.mrb[0].mxu0
        %v5660 = vadd.f32 %v5467, %v5659
        %5661 = vdwg.mxu0
        %5662 = vmatprep.subr.bf16.mxu0 %v4125
        %5663 = vmatpush1.bf16.msra.mxu0 %v4124
        %5664 = vmatprep.subr.bf16.mxu0 %v4129
        %5665 = vmatpush1.bf16.msra.mxu0 %v4128
        %5666 = vmatprep.subr.bf16.mxu0 %v4133
        %5667 = vmatpush1.bf16.msra.mxu0 %v4132
        %5668 = vmatprep.subr.bf16.mxu0 %v4137
        %5669 = vmatpush1.bf16.msra.mxu0 %v4136
        %5670 = vmatprep.subr.bf16.mxu0 %v4141
        %5671 = vmatpush1.bf16.msra.mxu0 %v4140
        %5672 = vmatprep.subr.bf16.mxu0 %v4145
        %5673 = vmatpush1.bf16.msra.mxu0 %v4144
        %5674 = vmatprep.subr.bf16.mxu0 %v4149
        %5675 = vmatpush1.bf16.msra.mxu0 %v4148
        %5676 = vmatprep.subr.bf16.mxu0 %v4153
        %5677 = vmatpush1.bf16.msra.mxu0 %v4152
        %5678 = vmatprep.subr.bf16.mxu0 %v4157
        %5679 = vmatpush1.bf16.msra.mxu0 %v4156
        %5680 = vmatprep.subr.bf16.mxu0 %v4161
        %5681 = vmatpush1.bf16.msra.mxu0 %v4160
        %5682 = vmatprep.subr.bf16.mxu0 %v4165
        %5683 = vmatpush1.bf16.msra.mxu0 %v4164
        %5684 = vmatprep.subr.bf16.mxu0 %v4169
        %5685 = vmatpush1.bf16.msra.mxu0 %v4168
        %5686 = vmatprep.subr.bf16.mxu0 %v4173
        %5687 = vmatpush1.bf16.msra.mxu0 %v4172
        %5688 = vmatprep.subr.bf16.mxu0 %v4177
        %5689 = vmatpush1.bf16.msra.mxu0 %v4176
        %5690 = vmatprep.subr.bf16.mxu0 %v4181
        %5691 = vmatpush1.bf16.msra.mxu0 %v4180
        %5692 = vmatprep.subr.bf16.mxu0 %v4185
        %5693 = vmatpush1.bf16.msra.mxu0 %v4184
        %5694 = vmatprep.mubr.bf16.mxu0 %v1099
        %5695 = vmatmul.mubr.bf16.gmra.mrb[0].mxu0 %v1098
        %v5696 = vpop.f32.mrb[0].mxu0
        %v5697 = vadd.f32 %v5504, %v5696
        %v5698 = vpop.f32.mrb[0].mxu0
        %v5699 = vadd.f32 %v5506, %v5698
        %v5700 = vpop.f32.mrb[0].mxu0
        %v5701 = vadd.f32 %v5508, %v5700
        %v5702 = vpop.f32.mrb[0].mxu0
        %v5703 = vadd.f32 %v5510, %v5702
        %5704 = vmatprep.mubr.bf16.mxu0 %v1119
        %5705 = vmatmul.mubr.bf16.gmra.mrb[0].mxu0 %v1118
        %v5706 = vpop.f32.mrb[0].mxu0
        %v5707 = vadd.f32 %v5514, %v5706
        %v5708 = vpop.f32.mrb[0].mxu0
        %v5709 = vadd.f32 %v5516, %v5708
        %v5710 = vpop.f32.mrb[0].mxu0
        %v5711 = vadd.f32 %v5518, %v5710
        %v5712 = vpop.f32.mrb[0].mxu0
        %v5713 = vadd.f32 %v5520, %v5712
        %5714 = vmatprep.mubr.bf16.mxu0 %v1139
        %5715 = vmatmul.mubr.bf16.gmra.mrb[0].mxu0 %v1138
        %v5716 = vpop.f32.mrb[0].mxu0
        %v5717 = vadd.f32 %v5524, %v5716
        %v5718 = vpop.f32.mrb[0].mxu0
        %v5719 = vadd.f32 %v5526, %v5718
        %v5720 = vpop.f32.mrb[0].mxu0
        %v5721 = vadd.f32 %v5528, %v5720
        %v5722 = vpop.f32.mrb[0].mxu0
        %v5723 = vadd.f32 %v5530, %v5722
        %5724 = vmatprep.mubr.bf16.mxu0 %v1159
        %5725 = vmatmul.mubr.bf16.gmra.mrb[0].mxu0 %v1158
        %v5726 = vpop.f32.mrb[0].mxu0
        %v5727 = vadd.f32 %v5534, %v5726
        %v5728 = vpop.f32.mrb[0].mxu0
        %v5729 = vadd.f32 %v5536, %v5728
        %v5730 = vpop.f32.mrb[0].mxu0
        %v5731 = vadd.f32 %v5538, %v5730
        %v5732 = vpop.f32.mrb[0].mxu0
        %v5733 = vadd.f32 %v5540, %v5732
        %5734 = vmatprep.mubr.bf16.mxu0 %v1179
        %5735 = vmatmul.mubr.bf16.gmra.mrb[0].mxu0 %v1178
        %v5736 = vpop.f32.mrb[0].mxu0
        %v5737 = vadd.f32 %v5544, %v5736
        %v5738 = vpop.f32.mrb[0].mxu0
        %v5739 = vadd.f32 %v5546, %v5738
        %v5740 = vpop.f32.mrb[0].mxu0
        %v5741 = vadd.f32 %v5548, %v5740
        %v5742 = vpop.f32.mrb[0].mxu0
        %v5743 = vadd.f32 %v5550, %v5742
        %5744 = vmatprep.mubr.bf16.mxu0 %v1199
        %5745 = vmatmul.mubr.bf16.gmra.mrb[0].mxu0 %v1198
        %v5746 = vpop.f32.mrb[0].mxu0
        %v5747 = vadd.f32 %v5554, %v5746
        %v5748 = vpop.f32.mrb[0].mxu0
        %v5749 = vadd.f32 %v5556, %v5748
        %v5750 = vpop.f32.mrb[0].mxu0
        %v5751 = vadd.f32 %v5558, %v5750
        %v5752 = vpop.f32.mrb[0].mxu0
        %v5753 = vadd.f32 %v5560, %v5752
        %5754 = vmatprep.mubr.bf16.mxu0 %v1219
        %5755 = vmatmul.mubr.bf16.gmra.mrb[0].mxu0 %v1218
        %v5756 = vpop.f32.mrb[0].mxu0
        %v5757 = vadd.f32 %v5564, %v5756
        %v5758 = vpop.f32.mrb[0].mxu0
        %v5759 = vadd.f32 %v5566, %v5758
        %v5760 = vpop.f32.mrb[0].mxu0
        %v5761 = vadd.f32 %v5568, %v5760
        %v5762 = vpop.f32.mrb[0].mxu0
        %v5763 = vadd.f32 %v5570, %v5762
        %5764 = vmatprep.mubr.bf16.mxu0 %v1239
        %5765 = vmatmul.mubr.bf16.gmra.mrb[0].mxu0 %v1238
        %v5766 = vpop.f32.mrb[0].mxu0
        %v5767 = vadd.f32 %v5574, %v5766
        %v5768 = vpop.f32.mrb[0].mxu0
        %v5769 = vadd.f32 %v5576, %v5768
        %v5770 = vpop.f32.mrb[0].mxu0
        %v5771 = vadd.f32 %v5578, %v5770
        %v5772 = vpop.f32.mrb[0].mxu0
        %v5773 = vadd.f32 %v5580, %v5772
        %5774 = vmatprep.mubr.bf16.mxu0 %v1259
        %5775 = vmatmul.mubr.bf16.gmra.mrb[0].mxu0 %v1258
        %v5776 = vpop.f32.mrb[0].mxu0
        %v5777 = vadd.f32 %v5584, %v5776
        %v5778 = vpop.f32.mrb[0].mxu0
        %v5779 = vadd.f32 %v5586, %v5778
        %v5780 = vpop.f32.mrb[0].mxu0
        %v5781 = vadd.f32 %v5588, %v5780
        %v5782 = vpop.f32.mrb[0].mxu0
        %v5783 = vadd.f32 %v5590, %v5782
        %5784 = vmatprep.mubr.bf16.mxu0 %v1279
        %5785 = vmatmul.mubr.bf16.gmra.mrb[0].mxu0 %v1278
        %v5786 = vpop.f32.mrb[0].mxu0
        %v5787 = vadd.f32 %v5594, %v5786
        %v5788 = vpop.f32.mrb[0].mxu0
        %v5789 = vadd.f32 %v5596, %v5788
        %v5790 = vpop.f32.mrb[0].mxu0
        %v5791 = vadd.f32 %v5598, %v5790
        %v5792 = vpop.f32.mrb[0].mxu0
        %v5793 = vadd.f32 %v5600, %v5792
        %5794 = vmatprep.mubr.bf16.mxu0 %v1299
        %5795 = vmatmul.mubr.bf16.gmra.mrb[0].mxu0 %v1298
        %v5796 = vpop.f32.mrb[0].mxu0
        %v5797 = vadd.f32 %v5604, %v5796
        %v5798 = vpop.f32.mrb[0].mxu0
        %v5799 = vadd.f32 %v5606, %v5798
        %v5800 = vpop.f32.mrb[0].mxu0
        %v5801 = vadd.f32 %v5608, %v5800
        %v5802 = vpop.f32.mrb[0].mxu0
        %v5803 = vadd.f32 %v5610, %v5802
        %5804 = vmatprep.mubr.bf16.mxu0 %v1319
        %5805 = vmatmul.mubr.bf16.gmra.mrb[0].mxu0 %v1318
        %v5806 = vpop.f32.mrb[0].mxu0
        %v5807 = vadd.f32 %v5614, %v5806
        %v5808 = vpop.f32.mrb[0].mxu0
        %v5809 = vadd.f32 %v5616, %v5808
        %v5810 = vpop.f32.mrb[0].mxu0
        %v5811 = vadd.f32 %v5618, %v5810
        %v5812 = vpop.f32.mrb[0].mxu0
        %v5813 = vadd.f32 %v5620, %v5812
        %5814 = vmatprep.mubr.bf16.mxu0 %v1339
        %5815 = vmatmul.mubr.bf16.gmra.mrb[0].mxu0 %v1338
        %v5816 = vpop.f32.mrb[0].mxu0
        %v5817 = vadd.f32 %v5624, %v5816
        %v5818 = vpop.f32.mrb[0].mxu0
        %v5819 = vadd.f32 %v5626, %v5818
        %v5820 = vpop.f32.mrb[0].mxu0
        %v5821 = vadd.f32 %v5628, %v5820
        %v5822 = vpop.f32.mrb[0].mxu0
        %v5823 = vadd.f32 %v5630, %v5822
        %5824 = vmatprep.mubr.bf16.mxu0 %v1359
        %5825 = vmatmul.mubr.bf16.gmra.mrb[0].mxu0 %v1358
        %v5826 = vpop.f32.mrb[0].mxu0
        %v5827 = vadd.f32 %v5634, %v5826
        %v5828 = vpop.f32.mrb[0].mxu0
        %v5829 = vadd.f32 %v5636, %v5828
        %v5830 = vpop.f32.mrb[0].mxu0
        %v5831 = vadd.f32 %v5638, %v5830
        %v5832 = vpop.f32.mrb[0].mxu0
        %v5833 = vadd.f32 %v5640, %v5832
        %5834 = vmatprep.mubr.bf16.mxu0 %v1379
        %5835 = vmatmul.mubr.bf16.gmra.mrb[0].mxu0 %v1378
        %v5836 = vpop.f32.mrb[0].mxu0
        %v5837 = vadd.f32 %v5644, %v5836
        %v5838 = vpop.f32.mrb[0].mxu0
        %v5839 = vadd.f32 %v5646, %v5838
        %v5840 = vpop.f32.mrb[0].mxu0
        %v5841 = vadd.f32 %v5648, %v5840
        %v5842 = vpop.f32.mrb[0].mxu0
        %v5843 = vadd.f32 %v5650, %v5842
        %5844 = vmatprep.mubr.bf16.mxu0 %v1399
        %5845 = vmatmul.mubr.bf16.gmra.mrb[0].mxu0 %v1398
        %v5846 = vpop.f32.mrb[0].mxu0
        %v5847 = vadd.f32 %v5654, %v5846
        %v5848 = vpop.f32.mrb[0].mxu0
        %v5849 = vadd.f32 %v5656, %v5848
        %v5850 = vpop.f32.mrb[0].mxu0
        %v5851 = vadd.f32 %v5658, %v5850
        %v5852 = vpop.f32.mrb[0].mxu0
        %v5853 = vadd.f32 %v5660, %v5852
        %5854 = vdwg.mxu0
        %5855 = vmatprep.subr.bf16.mxu0 %v4189
        %5856 = vmatpush1.bf16.msra.mxu0 %v4188
        %5857 = vmatprep.subr.bf16.mxu0 %v4193
        %5858 = vmatpush1.bf16.msra.mxu0 %v4192
        %5859 = vmatprep.subr.bf16.mxu0 %v4197
        %5860 = vmatpush1.bf16.msra.mxu0 %v4196
        %5861 = vmatprep.subr.bf16.mxu0 %v4201
        %5862 = vmatpush1.bf16.msra.mxu0 %v4200
        %5863 = vmatprep.subr.bf16.mxu0 %v4205
        %5864 = vmatpush1.bf16.msra.mxu0 %v4204
        %5865 = vmatprep.subr.bf16.mxu0 %v4209
        %5866 = vmatpush1.bf16.msra.mxu0 %v4208
        %5867 = vmatprep.subr.bf16.mxu0 %v4213
        %5868 = vmatpush1.bf16.msra.mxu0 %v4212
        %5869 = vmatprep.subr.bf16.mxu0 %v4217
        %5870 = vmatpush1.bf16.msra.mxu0 %v4216
        %5871 = vmatprep.subr.bf16.mxu0 %v4221
        %5872 = vmatpush1.bf16.msra.mxu0 %v4220
        %5873 = vmatprep.subr.bf16.mxu0 %v4225
        %5874 = vmatpush1.bf16.msra.mxu0 %v4224
        %5875 = vmatprep.subr.bf16.mxu0 %v4229
        %5876 = vmatpush1.bf16.msra.mxu0 %v4228
        %5877 = vmatprep.subr.bf16.mxu0 %v4233
        %5878 = vmatpush1.bf16.msra.mxu0 %v4232
        %5879 = vmatprep.subr.bf16.mxu0 %v4237
        %5880 = vmatpush1.bf16.msra.mxu0 %v4236
        %5881 = vmatprep.subr.bf16.mxu0 %v4241
        %5882 = vmatpush1.bf16.msra.mxu0 %v4240
        %5883 = vmatprep.subr.bf16.mxu0 %v4245
        %5884 = vmatpush1.bf16.msra.mxu0 %v4244
        %5885 = vmatprep.subr.bf16.mxu0 %v4249
        %5886 = vmatpush1.bf16.msra.mxu0 %v4248
        %5887 = vmatprep.mubr.bf16.mxu0 %v1101
        %5888 = vmatmul.mubr.bf16.gmra.mrb[0].mxu0 %v1100
        %v5889 = vpop.f32.mrb[0].mxu0
        %v5890 = vadd.f32 %v5697, %v5889
        %v5891 = vpop.f32.mrb[0].mxu0
        %v5892 = vadd.f32 %v5699, %v5891
        %v5893 = vpop.f32.mrb[0].mxu0
        %v5894 = vadd.f32 %v5701, %v5893
        %v5895 = vpop.f32.mrb[0].mxu0
        %v5896 = vadd.f32 %v5703, %v5895
        %5897 = vmatprep.mubr.bf16.mxu0 %v1121
        %5898 = vmatmul.mubr.bf16.gmra.mrb[0].mxu0 %v1120
        %v5899 = vpop.f32.mrb[0].mxu0
        %v5900 = vadd.f32 %v5707, %v5899
        %v5901 = vpop.f32.mrb[0].mxu0
        %v5902 = vadd.f32 %v5709, %v5901
        %v5903 = vpop.f32.mrb[0].mxu0
        %v5904 = vadd.f32 %v5711, %v5903
        %v5905 = vpop.f32.mrb[0].mxu0
        %v5906 = vadd.f32 %v5713, %v5905
        %5907 = vmatprep.mubr.bf16.mxu0 %v1141
        %5908 = vmatmul.mubr.bf16.gmra.mrb[0].mxu0 %v1140
        %v5909 = vpop.f32.mrb[0].mxu0
        %v5910 = vadd.f32 %v5717, %v5909
        %v5911 = vpop.f32.mrb[0].mxu0
        %v5912 = vadd.f32 %v5719, %v5911
        %v5913 = vpop.f32.mrb[0].mxu0
        %v5914 = vadd.f32 %v5721, %v5913
        %v5915 = vpop.f32.mrb[0].mxu0
        %v5916 = vadd.f32 %v5723, %v5915
        %5917 = vmatprep.mubr.bf16.mxu0 %v1161
        %5918 = vmatmul.mubr.bf16.gmra.mrb[0].mxu0 %v1160
        %v5919 = vpop.f32.mrb[0].mxu0
        %v5920 = vadd.f32 %v5727, %v5919
        %v5921 = vpop.f32.mrb[0].mxu0
        %v5922 = vadd.f32 %v5729, %v5921
        %v5923 = vpop.f32.mrb[0].mxu0
        %v5924 = vadd.f32 %v5731, %v5923
        %v5925 = vpop.f32.mrb[0].mxu0
        %v5926 = vadd.f32 %v5733, %v5925
        %5927 = vmatprep.mubr.bf16.mxu0 %v1181
        %5928 = vmatmul.mubr.bf16.gmra.mrb[0].mxu0 %v1180
        %v5929 = vpop.f32.mrb[0].mxu0
        %v5930 = vadd.f32 %v5737, %v5929
        %v5931 = vpop.f32.mrb[0].mxu0
        %v5932 = vadd.f32 %v5739, %v5931
        %v5933 = vpop.f32.mrb[0].mxu0
        %v5934 = vadd.f32 %v5741, %v5933
        %v5935 = vpop.f32.mrb[0].mxu0
        %v5936 = vadd.f32 %v5743, %v5935
        %5937 = vmatprep.mubr.bf16.mxu0 %v1201
        %5938 = vmatmul.mubr.bf16.gmra.mrb[0].mxu0 %v1200
        %v5939 = vpop.f32.mrb[0].mxu0
        %v5940 = vadd.f32 %v5747, %v5939
        %v5941 = vpop.f32.mrb[0].mxu0
        %v5942 = vadd.f32 %v5749, %v5941
        %v5943 = vpop.f32.mrb[0].mxu0
        %v5944 = vadd.f32 %v5751, %v5943
        %v5945 = vpop.f32.mrb[0].mxu0
        %v5946 = vadd.f32 %v5753, %v5945
        %5947 = vmatprep.mubr.bf16.mxu0 %v1221
        %5948 = vmatmul.mubr.bf16.gmra.mrb[0].mxu0 %v1220
        %v5949 = vpop.f32.mrb[0].mxu0
        %v5950 = vadd.f32 %v5757, %v5949
        %v5951 = vpop.f32.mrb[0].mxu0
        %v5952 = vadd.f32 %v5759, %v5951
        %v5953 = vpop.f32.mrb[0].mxu0
        %v5954 = vadd.f32 %v5761, %v5953
        %v5955 = vpop.f32.mrb[0].mxu0
        %v5956 = vadd.f32 %v5763, %v5955
        %5957 = vmatprep.mubr.bf16.mxu0 %v1241
        %5958 = vmatmul.mubr.bf16.gmra.mrb[0].mxu0 %v1240
        %v5959 = vpop.f32.mrb[0].mxu0
        %v5960 = vadd.f32 %v5767, %v5959
        %v5961 = vpop.f32.mrb[0].mxu0
        %v5962 = vadd.f32 %v5769, %v5961
        %v5963 = vpop.f32.mrb[0].mxu0
        %v5964 = vadd.f32 %v5771, %v5963
        %v5965 = vpop.f32.mrb[0].mxu0
        %v5966 = vadd.f32 %v5773, %v5965
        %5967 = vmatprep.mubr.bf16.mxu0 %v1261
        %5968 = vmatmul.mubr.bf16.gmra.mrb[0].mxu0 %v1260
        %v5969 = vpop.f32.mrb[0].mxu0
        %v5970 = vadd.f32 %v5777, %v5969
        %v5971 = vpop.f32.mrb[0].mxu0
        %v5972 = vadd.f32 %v5779, %v5971
        %v5973 = vpop.f32.mrb[0].mxu0
        %v5974 = vadd.f32 %v5781, %v5973
        %v5975 = vpop.f32.mrb[0].mxu0
        %v5976 = vadd.f32 %v5783, %v5975
        %5977 = vmatprep.mubr.bf16.mxu0 %v1281
        %5978 = vmatmul.mubr.bf16.gmra.mrb[0].mxu0 %v1280
        %v5979 = vpop.f32.mrb[0].mxu0
        %v5980 = vadd.f32 %v5787, %v5979
        %v5981 = vpop.f32.mrb[0].mxu0
        %v5982 = vadd.f32 %v5789, %v5981
        %v5983 = vpop.f32.mrb[0].mxu0
        %v5984 = vadd.f32 %v5791, %v5983
        %v5985 = vpop.f32.mrb[0].mxu0
        %v5986 = vadd.f32 %v5793, %v5985
        %5987 = vmatprep.mubr.bf16.mxu0 %v1301
        %5988 = vmatmul.mubr.bf16.gmra.mrb[0].mxu0 %v1300
        %v5989 = vpop.f32.mrb[0].mxu0
        %v5990 = vadd.f32 %v5797, %v5989
        %v5991 = vpop.f32.mrb[0].mxu0
        %v5992 = vadd.f32 %v5799, %v5991
        %v5993 = vpop.f32.mrb[0].mxu0
        %v5994 = vadd.f32 %v5801, %v5993
        %v5995 = vpop.f32.mrb[0].mxu0
        %v5996 = vadd.f32 %v5803, %v5995
        %5997 = vmatprep.mubr.bf16.mxu0 %v1321
        %5998 = vmatmul.mubr.bf16.gmra.mrb[0].mxu0 %v1320
        %v5999 = vpop.f32.mrb[0].mxu0
        %v6000 = vadd.f32 %v5807, %v5999
        %v6001 = vpop.f32.mrb[0].mxu0
        %v6002 = vadd.f32 %v5809, %v6001
        %v6003 = vpop.f32.mrb[0].mxu0
        %v6004 = vadd.f32 %v5811, %v6003
        %v6005 = vpop.f32.mrb[0].mxu0
        %v6006 = vadd.f32 %v5813, %v6005
        %6007 = vmatprep.mubr.bf16.mxu0 %v1341
        %6008 = vmatmul.mubr.bf16.gmra.mrb[0].mxu0 %v1340
        %v6009 = vpop.f32.mrb[0].mxu0
        %v6010 = vadd.f32 %v5817, %v6009
        %v6011 = vpop.f32.mrb[0].mxu0
        %v6012 = vadd.f32 %v5819, %v6011
        %v6013 = vpop.f32.mrb[0].mxu0
        %v6014 = vadd.f32 %v5821, %v6013
        %v6015 = vpop.f32.mrb[0].mxu0
        %v6016 = vadd.f32 %v5823, %v6015
        %6017 = vmatprep.mubr.bf16.mxu0 %v1361
        %6018 = vmatmul.mubr.bf16.gmra.mrb[0].mxu0 %v1360
        %v6019 = vpop.f32.mrb[0].mxu0
        %v6020 = vadd.f32 %v5827, %v6019
        %v6021 = vpop.f32.mrb[0].mxu0
        %v6022 = vadd.f32 %v5829, %v6021
        %v6023 = vpop.f32.mrb[0].mxu0
        %v6024 = vadd.f32 %v5831, %v6023
        %v6025 = vpop.f32.mrb[0].mxu0
        %v6026 = vadd.f32 %v5833, %v6025
        %6027 = vmatprep.mubr.bf16.mxu0 %v1381
        %6028 = vmatmul.mubr.bf16.gmra.mrb[0].mxu0 %v1380
        %v6029 = vpop.f32.mrb[0].mxu0
        %v6030 = vadd.f32 %v5837, %v6029
        %v6031 = vpop.f32.mrb[0].mxu0
        %v6032 = vadd.f32 %v5839, %v6031
        %v6033 = vpop.f32.mrb[0].mxu0
        %v6034 = vadd.f32 %v5841, %v6033
        %v6035 = vpop.f32.mrb[0].mxu0
        %v6036 = vadd.f32 %v5843, %v6035
        %6037 = vmatprep.mubr.bf16.mxu0 %v1401
        %6038 = vmatmul.mubr.bf16.gmra.mrb[0].mxu0 %v1400
        %v6039 = vpop.f32.mrb[0].mxu0
        %v6040 = vadd.f32 %v5847, %v6039
        %v6041 = vpop.f32.mrb[0].mxu0
        %v6042 = vadd.f32 %v5849, %v6041
        %v6043 = vpop.f32.mrb[0].mxu0
        %v6044 = vadd.f32 %v5851, %v6043
        %v6045 = vpop.f32.mrb[0].mxu0
        %v6046 = vadd.f32 %v5853, %v6045
        %6047 = vdwg.mxu0
        %6048 = vmatprep.subr.bf16.mxu0 %v4253
        %6049 = vmatpush1.bf16.msra.mxu0 %v4252
        %6050 = vmatprep.subr.bf16.mxu0 %v4257
        %6051 = vmatpush1.bf16.msra.mxu0 %v4256
        %6052 = vmatprep.subr.bf16.mxu0 %v4261
        %6053 = vmatpush1.bf16.msra.mxu0 %v4260
        %6054 = vmatprep.subr.bf16.mxu0 %v4265
        %6055 = vmatpush1.bf16.msra.mxu0 %v4264
        %6056 = vmatprep.subr.bf16.mxu0 %v4269
        %6057 = vmatpush1.bf16.msra.mxu0 %v4268
        %6058 = vmatprep.subr.bf16.mxu0 %v4273
        %6059 = vmatpush1.bf16.msra.mxu0 %v4272
        %6060 = vmatprep.subr.bf16.mxu0 %v4277
        %6061 = vmatpush1.bf16.msra.mxu0 %v4276
        %6062 = vmatprep.subr.bf16.mxu0 %v4281
        %6063 = vmatpush1.bf16.msra.mxu0 %v4280
        %6064 = vmatprep.subr.bf16.mxu0 %v4285
        %6065 = vmatpush1.bf16.msra.mxu0 %v4284
        %6066 = vmatprep.subr.bf16.mxu0 %v4289
        %6067 = vmatpush1.bf16.msra.mxu0 %v4288
        %6068 = vmatprep.subr.bf16.mxu0 %v4293
        %6069 = vmatpush1.bf16.msra.mxu0 %v4292
        %6070 = vmatprep.subr.bf16.mxu0 %v4297
        %6071 = vmatpush1.bf16.msra.mxu0 %v4296
        %6072 = vmatprep.subr.bf16.mxu0 %v4301
        %6073 = vmatpush1.bf16.msra.mxu0 %v4300
        %6074 = vmatprep.subr.bf16.mxu0 %v4305
        %6075 = vmatpush1.bf16.msra.mxu0 %v4304
        %6076 = vmatprep.subr.bf16.mxu0 %v4309
        %6077 = vmatpush1.bf16.msra.mxu0 %v4308
        %6078 = vmatprep.subr.bf16.mxu0 %v4313
        %6079 = vmatpush1.bf16.msra.mxu0 %v4312
        %6080 = vmatprep.mubr.bf16.mxu0 %v1103
        %6081 = vmatmul.mubr.bf16.gmra.mrb[0].mxu0 %v1102
        %v6082 = vpop.f32.mrb[0].mxu0
        %v6083 = vadd.f32 %v5890, %v6082
        %v6084 = vpop.f32.mrb[0].mxu0
        %v6085 = vadd.f32 %v5892, %v6084
        %v6086 = vpop.f32.mrb[0].mxu0
        %v6087 = vadd.f32 %v5894, %v6086
        %v6088 = vpop.f32.mrb[0].mxu0
        %v6089 = vadd.f32 %v5896, %v6088
        %6090 = vmatprep.mubr.bf16.mxu0 %v1123
        %6091 = vmatmul.mubr.bf16.gmra.mrb[0].mxu0 %v1122
        %v6092 = vpop.f32.mrb[0].mxu0
        %v6093 = vadd.f32 %v5900, %v6092
        %v6094 = vpop.f32.mrb[0].mxu0
        %v6095 = vadd.f32 %v5902, %v6094
        %v6096 = vpop.f32.mrb[0].mxu0
        %v6097 = vadd.f32 %v5904, %v6096
        %v6098 = vpop.f32.mrb[0].mxu0
        %v6099 = vadd.f32 %v5906, %v6098
        %6100 = vmatprep.mubr.bf16.mxu0 %v1143
        %6101 = vmatmul.mubr.bf16.gmra.mrb[0].mxu0 %v1142
        %v6102 = vpop.f32.mrb[0].mxu0
        %v6103 = vadd.f32 %v5910, %v6102
        %v6104 = vpop.f32.mrb[0].mxu0
        %v6105 = vadd.f32 %v5912, %v6104
        %v6106 = vpop.f32.mrb[0].mxu0
        %v6107 = vadd.f32 %v5914, %v6106
        %v6108 = vpop.f32.mrb[0].mxu0
        %v6109 = vadd.f32 %v5916, %v6108
        %6110 = vmatprep.mubr.bf16.mxu0 %v1163
        %6111 = vmatmul.mubr.bf16.gmra.mrb[0].mxu0 %v1162
        %v6112 = vpop.f32.mrb[0].mxu0
        %v6113 = vadd.f32 %v5920, %v6112
        %v6114 = vpop.f32.mrb[0].mxu0
        %v6115 = vadd.f32 %v5922, %v6114
        %v6116 = vpop.f32.mrb[0].mxu0
        %v6117 = vadd.f32 %v5924, %v6116
        %v6118 = vpop.f32.mrb[0].mxu0
        %v6119 = vadd.f32 %v5926, %v6118
        %6120 = vmatprep.mubr.bf16.mxu0 %v1183
        %6121 = vmatmul.mubr.bf16.gmra.mrb[0].mxu0 %v1182
        %v6122 = vpop.f32.mrb[0].mxu0
        %v6123 = vadd.f32 %v5930, %v6122
        %v6124 = vpop.f32.mrb[0].mxu0
        %v6125 = vadd.f32 %v5932, %v6124
        %v6126 = vpop.f32.mrb[0].mxu0
        %v6127 = vadd.f32 %v5934, %v6126
        %v6128 = vpop.f32.mrb[0].mxu0
        %v6129 = vadd.f32 %v5936, %v6128
        %6130 = vmatprep.mubr.bf16.mxu0 %v1203
        %6131 = vmatmul.mubr.bf16.gmra.mrb[0].mxu0 %v1202
        %v6132 = vpop.f32.mrb[0].mxu0
        %v6133 = vadd.f32 %v5940, %v6132
        %v6134 = vpop.f32.mrb[0].mxu0
        %v6135 = vadd.f32 %v5942, %v6134
        %v6136 = vpop.f32.mrb[0].mxu0
        %v6137 = vadd.f32 %v5944, %v6136
        %v6138 = vpop.f32.mrb[0].mxu0
        %v6139 = vadd.f32 %v5946, %v6138
        %6140 = vmatprep.mubr.bf16.mxu0 %v1223
        %6141 = vmatmul.mubr.bf16.gmra.mrb[0].mxu0 %v1222
        %v6142 = vpop.f32.mrb[0].mxu0
        %v6143 = vadd.f32 %v5950, %v6142
        %v6144 = vpop.f32.mrb[0].mxu0
        %v6145 = vadd.f32 %v5952, %v6144
        %v6146 = vpop.f32.mrb[0].mxu0
        %v6147 = vadd.f32 %v5954, %v6146
        %v6148 = vpop.f32.mrb[0].mxu0
        %v6149 = vadd.f32 %v5956, %v6148
        %6150 = vmatprep.mubr.bf16.mxu0 %v1243
        %6151 = vmatmul.mubr.bf16.gmra.mrb[0].mxu0 %v1242
        %v6152 = vpop.f32.mrb[0].mxu0
        %v6153 = vadd.f32 %v5960, %v6152
        %v6154 = vpop.f32.mrb[0].mxu0
        %v6155 = vadd.f32 %v5962, %v6154
        %v6156 = vpop.f32.mrb[0].mxu0
        %v6157 = vadd.f32 %v5964, %v6156
        %v6158 = vpop.f32.mrb[0].mxu0
        %v6159 = vadd.f32 %v5966, %v6158
        %6160 = vmatprep.mubr.bf16.mxu0 %v1263
        %6161 = vmatmul.mubr.bf16.gmra.mrb[0].mxu0 %v1262
        %v6162 = vpop.f32.mrb[0].mxu0
        %v6163 = vadd.f32 %v5970, %v6162
        %v6164 = vpop.f32.mrb[0].mxu0
        %v6165 = vadd.f32 %v5972, %v6164
        %v6166 = vpop.f32.mrb[0].mxu0
        %v6167 = vadd.f32 %v5974, %v6166
        %v6168 = vpop.f32.mrb[0].mxu0
        %v6169 = vadd.f32 %v5976, %v6168
        %6170 = vmatprep.mubr.bf16.mxu0 %v1283
        %6171 = vmatmul.mubr.bf16.gmra.mrb[0].mxu0 %v1282
        %v6172 = vpop.f32.mrb[0].mxu0
        %v6173 = vadd.f32 %v5980, %v6172
        %v6174 = vpop.f32.mrb[0].mxu0
        %v6175 = vadd.f32 %v5982, %v6174
        %v6176 = vpop.f32.mrb[0].mxu0
        %v6177 = vadd.f32 %v5984, %v6176
        %v6178 = vpop.f32.mrb[0].mxu0
        %v6179 = vadd.f32 %v5986, %v6178
        %6180 = vmatprep.mubr.bf16.mxu0 %v1303
        %6181 = vmatmul.mubr.bf16.gmra.mrb[0].mxu0 %v1302
        %v6182 = vpop.f32.mrb[0].mxu0
        %v6183 = vadd.f32 %v5990, %v6182
        %v6184 = vpop.f32.mrb[0].mxu0
        %v6185 = vadd.f32 %v5992, %v6184
        %v6186 = vpop.f32.mrb[0].mxu0
        %v6187 = vadd.f32 %v5994, %v6186
        %v6188 = vpop.f32.mrb[0].mxu0
        %v6189 = vadd.f32 %v5996, %v6188
        %6190 = vmatprep.mubr.bf16.mxu0 %v1323
        %6191 = vmatmul.mubr.bf16.gmra.mrb[0].mxu0 %v1322
        %v6192 = vpop.f32.mrb[0].mxu0
        %v6193 = vadd.f32 %v6000, %v6192
        %v6194 = vpop.f32.mrb[0].mxu0
        %v6195 = vadd.f32 %v6002, %v6194
        %v6196 = vpop.f32.mrb[0].mxu0
        %v6197 = vadd.f32 %v6004, %v6196
        %v6198 = vpop.f32.mrb[0].mxu0
        %v6199 = vadd.f32 %v6006, %v6198
        %6200 = vmatprep.mubr.bf16.mxu0 %v1343
        %6201 = vmatmul.mubr.bf16.gmra.mrb[0].mxu0 %v1342
        %v6202 = vpop.f32.mrb[0].mxu0
        %v6203 = vadd.f32 %v6010, %v6202
        %v6204 = vpop.f32.mrb[0].mxu0
        %v6205 = vadd.f32 %v6012, %v6204
        %v6206 = vpop.f32.mrb[0].mxu0
        %v6207 = vadd.f32 %v6014, %v6206
        %v6208 = vpop.f32.mrb[0].mxu0
        %v6209 = vadd.f32 %v6016, %v6208
        %6210 = vmatprep.mubr.bf16.mxu0 %v1363
        %6211 = vmatmul.mubr.bf16.gmra.mrb[0].mxu0 %v1362
        %v6212 = vpop.f32.mrb[0].mxu0
        %v6213 = vadd.f32 %v6020, %v6212
        %v6214 = vpop.f32.mrb[0].mxu0
        %v6215 = vadd.f32 %v6022, %v6214
        %v6216 = vpop.f32.mrb[0].mxu0
        %v6217 = vadd.f32 %v6024, %v6216
        %v6218 = vpop.f32.mrb[0].mxu0
        %v6219 = vadd.f32 %v6026, %v6218
        %6220 = vmatprep.mubr.bf16.mxu0 %v1383
        %6221 = vmatmul.mubr.bf16.gmra.mrb[0].mxu0 %v1382
        %v6222 = vpop.f32.mrb[0].mxu0
        %v6223 = vadd.f32 %v6030, %v6222
        %v6224 = vpop.f32.mrb[0].mxu0
        %v6225 = vadd.f32 %v6032, %v6224
        %v6226 = vpop.f32.mrb[0].mxu0
        %v6227 = vadd.f32 %v6034, %v6226
        %v6228 = vpop.f32.mrb[0].mxu0
        %v6229 = vadd.f32 %v6036, %v6228
        %6230 = vmatprep.mubr.bf16.mxu0 %v1403
        %6231 = vmatmul.mubr.bf16.gmra.mrb[0].mxu0 %v1402
        %v6232 = vpop.f32.mrb[0].mxu0
        %v6233 = vadd.f32 %v6040, %v6232
        %v6234 = vpop.f32.mrb[0].mxu0
        %v6235 = vadd.f32 %v6042, %v6234
        %v6236 = vpop.f32.mrb[0].mxu0
        %v6237 = vadd.f32 %v6044, %v6236
        %v6238 = vpop.f32.mrb[0].mxu0
        %v6239 = vadd.f32 %v6046, %v6238
        %6240 = vdwg.mxu0
        %6241 = vmatprep.subr.bf16.mxu0 %v4317
        %6242 = vmatpush1.bf16.msra.mxu0 %v4316
        %6243 = vmatprep.subr.bf16.mxu0 %v4321
        %6244 = vmatpush1.bf16.msra.mxu0 %v4320
        %6245 = vmatprep.subr.bf16.mxu0 %v4325
        %6246 = vmatpush1.bf16.msra.mxu0 %v4324
        %6247 = vmatprep.subr.bf16.mxu0 %v4329
        %6248 = vmatpush1.bf16.msra.mxu0 %v4328
        %6249 = vmatprep.subr.bf16.mxu0 %v4333
        %6250 = vmatpush1.bf16.msra.mxu0 %v4332
        %6251 = vmatprep.subr.bf16.mxu0 %v4337
        %6252 = vmatpush1.bf16.msra.mxu0 %v4336
        %6253 = vmatprep.subr.bf16.mxu0 %v4341
        %6254 = vmatpush1.bf16.msra.mxu0 %v4340
        %6255 = vmatprep.subr.bf16.mxu0 %v4345
        %6256 = vmatpush1.bf16.msra.mxu0 %v4344
        %6257 = vmatprep.subr.bf16.mxu0 %v4349
        %6258 = vmatpush1.bf16.msra.mxu0 %v4348
        %6259 = vmatprep.subr.bf16.mxu0 %v4353
        %6260 = vmatpush1.bf16.msra.mxu0 %v4352
        %6261 = vmatprep.subr.bf16.mxu0 %v4357
        %6262 = vmatpush1.bf16.msra.mxu0 %v4356
        %6263 = vmatprep.subr.bf16.mxu0 %v4361
        %6264 = vmatpush1.bf16.msra.mxu0 %v4360
        %6265 = vmatprep.subr.bf16.mxu0 %v4365
        %6266 = vmatpush1.bf16.msra.mxu0 %v4364
        %6267 = vmatprep.subr.bf16.mxu0 %v4369
        %6268 = vmatpush1.bf16.msra.mxu0 %v4368
        %6269 = vmatprep.subr.bf16.mxu0 %v4373
        %6270 = vmatpush1.bf16.msra.mxu0 %v4372
        %6271 = vmatprep.subr.bf16.mxu0 %v4377
        %6272 = vmatpush1.bf16.msra.mxu0 %v4376
        %6273 = vmatprep.mubr.bf16.mxu0 %v1105
        %6274 = vmatmul.mubr.bf16.gmra.mrb[0].mxu0 %v1104
        %v6275 = vpop.f32.mrb[0].mxu0
        %v6276 = vadd.f32 %v6083, %v6275
        %v6277 = vpop.f32.mrb[0].mxu0
        %v6278 = vadd.f32 %v6085, %v6277
        %v6279 = vpop.f32.mrb[0].mxu0
        %v6280 = vadd.f32 %v6087, %v6279
        %v6281 = vpop.f32.mrb[0].mxu0
        %v6282 = vadd.f32 %v6089, %v6281
        %6283 = vmatprep.mubr.bf16.mxu0 %v1125
        %6284 = vmatmul.mubr.bf16.gmra.mrb[0].mxu0 %v1124
        %v6285 = vpop.f32.mrb[0].mxu0
        %v6286 = vadd.f32 %v6093, %v6285
        %v6287 = vpop.f32.mrb[0].mxu0
        %v6288 = vadd.f32 %v6095, %v6287
        %v6289 = vpop.f32.mrb[0].mxu0
        %v6290 = vadd.f32 %v6097, %v6289
        %v6291 = vpop.f32.mrb[0].mxu0
        %v6292 = vadd.f32 %v6099, %v6291
        %6293 = vmatprep.mubr.bf16.mxu0 %v1145
        %6294 = vmatmul.mubr.bf16.gmra.mrb[0].mxu0 %v1144
        %v6295 = vpop.f32.mrb[0].mxu0
        %v6296 = vadd.f32 %v6103, %v6295
        %v6297 = vpop.f32.mrb[0].mxu0
        %v6298 = vadd.f32 %v6105, %v6297
        %v6299 = vpop.f32.mrb[0].mxu0
        %v6300 = vadd.f32 %v6107, %v6299
        %v6301 = vpop.f32.mrb[0].mxu0
        %v6302 = vadd.f32 %v6109, %v6301
        %6303 = vmatprep.mubr.bf16.mxu0 %v1165
        %6304 = vmatmul.mubr.bf16.gmra.mrb[0].mxu0 %v1164
        %v6305 = vpop.f32.mrb[0].mxu0
        %v6306 = vadd.f32 %v6113, %v6305
        %v6307 = vpop.f32.mrb[0].mxu0
        %v6308 = vadd.f32 %v6115, %v6307
        %v6309 = vpop.f32.mrb[0].mxu0
        %v6310 = vadd.f32 %v6117, %v6309
        %v6311 = vpop.f32.mrb[0].mxu0
        %v6312 = vadd.f32 %v6119, %v6311
        %6313 = vmatprep.mubr.bf16.mxu0 %v1185
        %6314 = vmatmul.mubr.bf16.gmra.mrb[0].mxu0 %v1184
        %v6315 = vpop.f32.mrb[0].mxu0
        %v6316 = vadd.f32 %v6123, %v6315
        %v6317 = vpop.f32.mrb[0].mxu0
        %v6318 = vadd.f32 %v6125, %v6317
        %v6319 = vpop.f32.mrb[0].mxu0
        %v6320 = vadd.f32 %v6127, %v6319
        %v6321 = vpop.f32.mrb[0].mxu0
        %v6322 = vadd.f32 %v6129, %v6321
        %6323 = vmatprep.mubr.bf16.mxu0 %v1205
        %6324 = vmatmul.mubr.bf16.gmra.mrb[0].mxu0 %v1204
        %v6325 = vpop.f32.mrb[0].mxu0
        %v6326 = vadd.f32 %v6133, %v6325
        %v6327 = vpop.f32.mrb[0].mxu0
        %v6328 = vadd.f32 %v6135, %v6327
        %v6329 = vpop.f32.mrb[0].mxu0
        %v6330 = vadd.f32 %v6137, %v6329
        %v6331 = vpop.f32.mrb[0].mxu0
        %v6332 = vadd.f32 %v6139, %v6331
        %6333 = vmatprep.mubr.bf16.mxu0 %v1225
        %6334 = vmatmul.mubr.bf16.gmra.mrb[0].mxu0 %v1224
        %v6335 = vpop.f32.mrb[0].mxu0
        %v6336 = vadd.f32 %v6143, %v6335
        %v6337 = vpop.f32.mrb[0].mxu0
        %v6338 = vadd.f32 %v6145, %v6337
        %v6339 = vpop.f32.mrb[0].mxu0
        %v6340 = vadd.f32 %v6147, %v6339
        %v6341 = vpop.f32.mrb[0].mxu0
        %v6342 = vadd.f32 %v6149, %v6341
        %6343 = vmatprep.mubr.bf16.mxu0 %v1245
        %6344 = vmatmul.mubr.bf16.gmra.mrb[0].mxu0 %v1244
        %v6345 = vpop.f32.mrb[0].mxu0
        %v6346 = vadd.f32 %v6153, %v6345
        %v6347 = vpop.f32.mrb[0].mxu0
        %v6348 = vadd.f32 %v6155, %v6347
        %v6349 = vpop.f32.mrb[0].mxu0
        %v6350 = vadd.f32 %v6157, %v6349
        %v6351 = vpop.f32.mrb[0].mxu0
        %v6352 = vadd.f32 %v6159, %v6351
        %6353 = vmatprep.mubr.bf16.mxu0 %v1265
        %6354 = vmatmul.mubr.bf16.gmra.mrb[0].mxu0 %v1264
        %v6355 = vpop.f32.mrb[0].mxu0
        %v6356 = vadd.f32 %v6163, %v6355
        %v6357 = vpop.f32.mrb[0].mxu0
        %v6358 = vadd.f32 %v6165, %v6357
        %v6359 = vpop.f32.mrb[0].mxu0
        %v6360 = vadd.f32 %v6167, %v6359
        %v6361 = vpop.f32.mrb[0].mxu0
        %v6362 = vadd.f32 %v6169, %v6361
        %6363 = vmatprep.mubr.bf16.mxu0 %v1285
        %6364 = vmatmul.mubr.bf16.gmra.mrb[0].mxu0 %v1284
        %v6365 = vpop.f32.mrb[0].mxu0
        %v6366 = vadd.f32 %v6173, %v6365
        %v6367 = vpop.f32.mrb[0].mxu0
        %v6368 = vadd.f32 %v6175, %v6367
        %v6369 = vpop.f32.mrb[0].mxu0
        %v6370 = vadd.f32 %v6177, %v6369
        %v6371 = vpop.f32.mrb[0].mxu0
        %v6372 = vadd.f32 %v6179, %v6371
        %6373 = vmatprep.mubr.bf16.mxu0 %v1305
        %6374 = vmatmul.mubr.bf16.gmra.mrb[0].mxu0 %v1304
        %v6375 = vpop.f32.mrb[0].mxu0
        %v6376 = vadd.f32 %v6183, %v6375
        %v6377 = vpop.f32.mrb[0].mxu0
        %v6378 = vadd.f32 %v6185, %v6377
        %v6379 = vpop.f32.mrb[0].mxu0
        %v6380 = vadd.f32 %v6187, %v6379
        %v6381 = vpop.f32.mrb[0].mxu0
        %v6382 = vadd.f32 %v6189, %v6381
        %6383 = vmatprep.mubr.bf16.mxu0 %v1325
        %6384 = vmatmul.mubr.bf16.gmra.mrb[0].mxu0 %v1324
        %v6385 = vpop.f32.mrb[0].mxu0
        %v6386 = vadd.f32 %v6193, %v6385
        %v6387 = vpop.f32.mrb[0].mxu0
        %v6388 = vadd.f32 %v6195, %v6387
        %v6389 = vpop.f32.mrb[0].mxu0
        %v6390 = vadd.f32 %v6197, %v6389
        %v6391 = vpop.f32.mrb[0].mxu0
        %v6392 = vadd.f32 %v6199, %v6391
        %6393 = vmatprep.mubr.bf16.mxu0 %v1345
        %6394 = vmatmul.mubr.bf16.gmra.mrb[0].mxu0 %v1344
        %v6395 = vpop.f32.mrb[0].mxu0
        %v6396 = vadd.f32 %v6203, %v6395
        %v6397 = vpop.f32.mrb[0].mxu0
        %v6398 = vadd.f32 %v6205, %v6397
        %v6399 = vpop.f32.mrb[0].mxu0
        %v6400 = vadd.f32 %v6207, %v6399
        %v6401 = vpop.f32.mrb[0].mxu0
        %v6402 = vadd.f32 %v6209, %v6401
        %6403 = vmatprep.mubr.bf16.mxu0 %v1365
        %6404 = vmatmul.mubr.bf16.gmra.mrb[0].mxu0 %v1364
        %v6405 = vpop.f32.mrb[0].mxu0
        %v6406 = vadd.f32 %v6213, %v6405
        %v6407 = vpop.f32.mrb[0].mxu0
        %v6408 = vadd.f32 %v6215, %v6407
        %v6409 = vpop.f32.mrb[0].mxu0
        %v6410 = vadd.f32 %v6217, %v6409
        %v6411 = vpop.f32.mrb[0].mxu0
        %v6412 = vadd.f32 %v6219, %v6411
        %6413 = vmatprep.mubr.bf16.mxu0 %v1385
        %6414 = vmatmul.mubr.bf16.gmra.mrb[0].mxu0 %v1384
        %v6415 = vpop.f32.mrb[0].mxu0
        %v6416 = vadd.f32 %v6223, %v6415
        %v6417 = vpop.f32.mrb[0].mxu0
        %v6418 = vadd.f32 %v6225, %v6417
        %v6419 = vpop.f32.mrb[0].mxu0
        %v6420 = vadd.f32 %v6227, %v6419
        %v6421 = vpop.f32.mrb[0].mxu0
        %v6422 = vadd.f32 %v6229, %v6421
        %6423 = vmatprep.mubr.bf16.mxu0 %v1405
        %6424 = vmatmul.mubr.bf16.gmra.mrb[0].mxu0 %v1404
        %v6425 = vpop.f32.mrb[0].mxu0
        %v6426 = vadd.f32 %v6233, %v6425
        %v6427 = vpop.f32.mrb[0].mxu0
        %v6428 = vadd.f32 %v6235, %v6427
        %v6429 = vpop.f32.mrb[0].mxu0
        %v6430 = vadd.f32 %v6237, %v6429
        %v6431 = vpop.f32.mrb[0].mxu0
        %v6432 = vadd.f32 %v6239, %v6431
        %6433 = vdwg.mxu0
        %6434 = vmatprep.subr.bf16.mxu0 %v4381
        %6435 = vmatpush1.bf16.msra.mxu0 %v4380
        %6436 = vmatprep.subr.bf16.mxu0 %v4385
        %6437 = vmatpush1.bf16.msra.mxu0 %v4384
        %6438 = vmatprep.subr.bf16.mxu0 %v4389
        %6439 = vmatpush1.bf16.msra.mxu0 %v4388
        %6440 = vmatprep.subr.bf16.mxu0 %v4393
        %6441 = vmatpush1.bf16.msra.mxu0 %v4392
        %6442 = vmatprep.subr.bf16.mxu0 %v4397
        %6443 = vmatpush1.bf16.msra.mxu0 %v4396
        %6444 = vmatprep.subr.bf16.mxu0 %v4401
        %6445 = vmatpush1.bf16.msra.mxu0 %v4400
        %6446 = vmatprep.subr.bf16.mxu0 %v4405
        %6447 = vmatpush1.bf16.msra.mxu0 %v4404
        %6448 = vmatprep.subr.bf16.mxu0 %v4409
        %6449 = vmatpush1.bf16.msra.mxu0 %v4408
        %6450 = vmatprep.subr.bf16.mxu0 %v4413
        %6451 = vmatpush1.bf16.msra.mxu0 %v4412
        %6452 = vmatprep.subr.bf16.mxu0 %v4417
        %6453 = vmatpush1.bf16.msra.mxu0 %v4416
        %6454 = vmatprep.subr.bf16.mxu0 %v4421
        %6455 = vmatpush1.bf16.msra.mxu0 %v4420
        %6456 = vmatprep.subr.bf16.mxu0 %v4425
        %6457 = vmatpush1.bf16.msra.mxu0 %v4424
        %6458 = vmatprep.subr.bf16.mxu0 %v4429
        %6459 = vmatpush1.bf16.msra.mxu0 %v4428
        %6460 = vmatprep.subr.bf16.mxu0 %v4433
        %6461 = vmatpush1.bf16.msra.mxu0 %v4432
        %6462 = vmatprep.subr.bf16.mxu0 %v4437
        %6463 = vmatpush1.bf16.msra.mxu0 %v4436
        %6464 = vmatprep.subr.bf16.mxu0 %v4441
        %6465 = vmatpush1.bf16.msra.mxu0 %v4440
        %6466 = vmatprep.mubr.bf16.mxu0 %v1107
        %6467 = vmatmul.mubr.bf16.gmra.mrb[0].mxu0 %v1106
        %v6468 = vpop.f32.mrb[0].mxu0
        %v6469 = vadd.f32 %v6276, %v6468
        %v6470 = vpop.f32.mrb[0].mxu0
        %v6471 = vadd.f32 %v6278, %v6470
        %v6472 = vpop.f32.mrb[0].mxu0
        %v6473 = vadd.f32 %v6280, %v6472
        %v6474 = vpop.f32.mrb[0].mxu0
        %v6475 = vadd.f32 %v6282, %v6474
        %6476 = vmatprep.mubr.bf16.mxu0 %v1127
        %6477 = vmatmul.mubr.bf16.gmra.mrb[0].mxu0 %v1126
        %v6478 = vpop.f32.mrb[0].mxu0
        %v6479 = vadd.f32 %v6286, %v6478
        %v6480 = vpop.f32.mrb[0].mxu0
        %v6481 = vadd.f32 %v6288, %v6480
        %v6482 = vpop.f32.mrb[0].mxu0
        %v6483 = vadd.f32 %v6290, %v6482
        %v6484 = vpop.f32.mrb[0].mxu0
        %v6485 = vadd.f32 %v6292, %v6484
        %6486 = vmatprep.mubr.bf16.mxu0 %v1147
        %6487 = vmatmul.mubr.bf16.gmra.mrb[0].mxu0 %v1146
        %v6488 = vpop.f32.mrb[0].mxu0
        %v6489 = vadd.f32 %v6296, %v6488
        %v6490 = vpop.f32.mrb[0].mxu0
        %v6491 = vadd.f32 %v6298, %v6490
        %v6492 = vpop.f32.mrb[0].mxu0
        %v6493 = vadd.f32 %v6300, %v6492
        %v6494 = vpop.f32.mrb[0].mxu0
        %v6495 = vadd.f32 %v6302, %v6494
        %6496 = vmatprep.mubr.bf16.mxu0 %v1167
        %6497 = vmatmul.mubr.bf16.gmra.mrb[0].mxu0 %v1166
        %v6498 = vpop.f32.mrb[0].mxu0
        %v6499 = vadd.f32 %v6306, %v6498
        %v6500 = vpop.f32.mrb[0].mxu0
        %v6501 = vadd.f32 %v6308, %v6500
        %v6502 = vpop.f32.mrb[0].mxu0
        %v6503 = vadd.f32 %v6310, %v6502
        %v6504 = vpop.f32.mrb[0].mxu0
        %v6505 = vadd.f32 %v6312, %v6504
        %6506 = vmatprep.mubr.bf16.mxu0 %v1187
        %6507 = vmatmul.mubr.bf16.gmra.mrb[0].mxu0 %v1186
        %v6508 = vpop.f32.mrb[0].mxu0
        %v6509 = vadd.f32 %v6316, %v6508
        %v6510 = vpop.f32.mrb[0].mxu0
        %v6511 = vadd.f32 %v6318, %v6510
        %v6512 = vpop.f32.mrb[0].mxu0
        %v6513 = vadd.f32 %v6320, %v6512
        %v6514 = vpop.f32.mrb[0].mxu0
        %v6515 = vadd.f32 %v6322, %v6514
        %6516 = vmatprep.mubr.bf16.mxu0 %v1207
        %6517 = vmatmul.mubr.bf16.gmra.mrb[0].mxu0 %v1206
        %v6518 = vpop.f32.mrb[0].mxu0
        %v6519 = vadd.f32 %v6326, %v6518
        %v6520 = vpop.f32.mrb[0].mxu0
        %v6521 = vadd.f32 %v6328, %v6520
        %v6522 = vpop.f32.mrb[0].mxu0
        %v6523 = vadd.f32 %v6330, %v6522
        %v6524 = vpop.f32.mrb[0].mxu0
        %v6525 = vadd.f32 %v6332, %v6524
        %6526 = vmatprep.mubr.bf16.mxu0 %v1227
        %6527 = vmatmul.mubr.bf16.gmra.mrb[0].mxu0 %v1226
        %v6528 = vpop.f32.mrb[0].mxu0
        %v6529 = vadd.f32 %v6336, %v6528
        %v6530 = vpop.f32.mrb[0].mxu0
        %v6531 = vadd.f32 %v6338, %v6530
        %v6532 = vpop.f32.mrb[0].mxu0
        %v6533 = vadd.f32 %v6340, %v6532
        %v6534 = vpop.f32.mrb[0].mxu0
        %v6535 = vadd.f32 %v6342, %v6534
        %6536 = vmatprep.mubr.bf16.mxu0 %v1247
        %6537 = vmatmul.mubr.bf16.gmra.mrb[0].mxu0 %v1246
        %v6538 = vpop.f32.mrb[0].mxu0
        %v6539 = vadd.f32 %v6346, %v6538
        %v6540 = vpop.f32.mrb[0].mxu0
        %v6541 = vadd.f32 %v6348, %v6540
        %v6542 = vpop.f32.mrb[0].mxu0
        %v6543 = vadd.f32 %v6350, %v6542
        %v6544 = vpop.f32.mrb[0].mxu0
        %v6545 = vadd.f32 %v6352, %v6544
        %6546 = vmatprep.mubr.bf16.mxu0 %v1267
        %6547 = vmatmul.mubr.bf16.gmra.mrb[0].mxu0 %v1266
        %v6548 = vpop.f32.mrb[0].mxu0
        %v6549 = vadd.f32 %v6356, %v6548
        %v6550 = vpop.f32.mrb[0].mxu0
        %v6551 = vadd.f32 %v6358, %v6550
        %v6552 = vpop.f32.mrb[0].mxu0
        %v6553 = vadd.f32 %v6360, %v6552
        %v6554 = vpop.f32.mrb[0].mxu0
        %v6555 = vadd.f32 %v6362, %v6554
        %6556 = vmatprep.mubr.bf16.mxu0 %v1287
        %6557 = vmatmul.mubr.bf16.gmra.mrb[0].mxu0 %v1286
        %v6558 = vpop.f32.mrb[0].mxu0
        %v6559 = vadd.f32 %v6366, %v6558
        %v6560 = vpop.f32.mrb[0].mxu0
        %v6561 = vadd.f32 %v6368, %v6560
        %v6562 = vpop.f32.mrb[0].mxu0
        %v6563 = vadd.f32 %v6370, %v6562
        %v6564 = vpop.f32.mrb[0].mxu0
        %v6565 = vadd.f32 %v6372, %v6564
        %6566 = vmatprep.mubr.bf16.mxu0 %v1307
        %6567 = vmatmul.mubr.bf16.gmra.mrb[0].mxu0 %v1306
        %v6568 = vpop.f32.mrb[0].mxu0
        %v6569 = vadd.f32 %v6376, %v6568
        %v6570 = vpop.f32.mrb[0].mxu0
        %v6571 = vadd.f32 %v6378, %v6570
        %v6572 = vpop.f32.mrb[0].mxu0
        %v6573 = vadd.f32 %v6380, %v6572
        %v6574 = vpop.f32.mrb[0].mxu0
        %v6575 = vadd.f32 %v6382, %v6574
        %6576 = vmatprep.mubr.bf16.mxu0 %v1327
        %6577 = vmatmul.mubr.bf16.gmra.mrb[0].mxu0 %v1326
        %v6578 = vpop.f32.mrb[0].mxu0
        %v6579 = vadd.f32 %v6386, %v6578
        %v6580 = vpop.f32.mrb[0].mxu0
        %v6581 = vadd.f32 %v6388, %v6580
        %v6582 = vpop.f32.mrb[0].mxu0
        %v6583 = vadd.f32 %v6390, %v6582
        %v6584 = vpop.f32.mrb[0].mxu0
        %v6585 = vadd.f32 %v6392, %v6584
        %6586 = vmatprep.mubr.bf16.mxu0 %v1347
        %6587 = vmatmul.mubr.bf16.gmra.mrb[0].mxu0 %v1346
        %v6588 = vpop.f32.mrb[0].mxu0
        %v6589 = vadd.f32 %v6396, %v6588
        %v6590 = vpop.f32.mrb[0].mxu0
        %v6591 = vadd.f32 %v6398, %v6590
        %v6592 = vpop.f32.mrb[0].mxu0
        %v6593 = vadd.f32 %v6400, %v6592
        %v6594 = vpop.f32.mrb[0].mxu0
        %v6595 = vadd.f32 %v6402, %v6594
        %6596 = vmatprep.mubr.bf16.mxu0 %v1367
        %6597 = vmatmul.mubr.bf16.gmra.mrb[0].mxu0 %v1366
        %v6598 = vpop.f32.mrb[0].mxu0
        %v6599 = vadd.f32 %v6406, %v6598
        %v6600 = vpop.f32.mrb[0].mxu0
        %v6601 = vadd.f32 %v6408, %v6600
        %v6602 = vpop.f32.mrb[0].mxu0
        %v6603 = vadd.f32 %v6410, %v6602
        %v6604 = vpop.f32.mrb[0].mxu0
        %v6605 = vadd.f32 %v6412, %v6604
        %6606 = vmatprep.mubr.bf16.mxu0 %v1387
        %6607 = vmatmul.mubr.bf16.gmra.mrb[0].mxu0 %v1386
        %v6608 = vpop.f32.mrb[0].mxu0
        %v6609 = vadd.f32 %v6416, %v6608
        %v6610 = vpop.f32.mrb[0].mxu0
        %v6611 = vadd.f32 %v6418, %v6610
        %v6612 = vpop.f32.mrb[0].mxu0
        %v6613 = vadd.f32 %v6420, %v6612
        %v6614 = vpop.f32.mrb[0].mxu0
        %v6615 = vadd.f32 %v6422, %v6614
        %6616 = vmatprep.mubr.bf16.mxu0 %v1407
        %6617 = vmatmul.mubr.bf16.gmra.mrb[0].mxu0 %v1406
        %v6618 = vpop.f32.mrb[0].mxu0
        %v6619 = vadd.f32 %v6426, %v6618
        %v6620 = vpop.f32.mrb[0].mxu0
        %v6621 = vadd.f32 %v6428, %v6620
        %v6622 = vpop.f32.mrb[0].mxu0
        %v6623 = vadd.f32 %v6430, %v6622
        %v6624 = vpop.f32.mrb[0].mxu0
        %v6625 = vadd.f32 %v6432, %v6624
        %6626 = vdwg.mxu0
        %6627 = vmatprep.subr.bf16.mxu0 %v4445
        %6628 = vmatpush1.bf16.msra.mxu0 %v4444
        %6629 = vmatprep.subr.bf16.mxu0 %v4449
        %6630 = vmatpush1.bf16.msra.mxu0 %v4448
        %6631 = vmatprep.subr.bf16.mxu0 %v4453
        %6632 = vmatpush1.bf16.msra.mxu0 %v4452
        %6633 = vmatprep.subr.bf16.mxu0 %v4457
        %6634 = vmatpush1.bf16.msra.mxu0 %v4456
        %6635 = vmatprep.subr.bf16.mxu0 %v4461
        %6636 = vmatpush1.bf16.msra.mxu0 %v4460
        %6637 = vmatprep.subr.bf16.mxu0 %v4465
        %6638 = vmatpush1.bf16.msra.mxu0 %v4464
        %6639 = vmatprep.subr.bf16.mxu0 %v4469
        %6640 = vmatpush1.bf16.msra.mxu0 %v4468
        %6641 = vmatprep.subr.bf16.mxu0 %v4473
        %6642 = vmatpush1.bf16.msra.mxu0 %v4472
        %6643 = vmatprep.subr.bf16.mxu0 %v4477
        %6644 = vmatpush1.bf16.msra.mxu0 %v4476
        %6645 = vmatprep.subr.bf16.mxu0 %v4481
        %6646 = vmatpush1.bf16.msra.mxu0 %v4480
        %6647 = vmatprep.subr.bf16.mxu0 %v4485
        %6648 = vmatpush1.bf16.msra.mxu0 %v4484
        %6649 = vmatprep.subr.bf16.mxu0 %v4489
        %6650 = vmatpush1.bf16.msra.mxu0 %v4488
        %6651 = vmatprep.subr.bf16.mxu0 %v4493
        %6652 = vmatpush1.bf16.msra.mxu0 %v4492
        %6653 = vmatprep.subr.bf16.mxu0 %v4497
        %6654 = vmatpush1.bf16.msra.mxu0 %v4496
        %6655 = vmatprep.subr.bf16.mxu0 %v4501
        %6656 = vmatpush1.bf16.msra.mxu0 %v4500
        %6657 = vmatprep.subr.bf16.mxu0 %v4505
        %6658 = vmatpush1.bf16.msra.mxu0 %v4504
        %6659 = vmatprep.mubr.bf16.mxu0 %v1109
        %6660 = vmatmul.mubr.bf16.gmra.mrb[0].mxu0 %v1108
        %v6661 = vpop.f32.mrb[0].mxu0
        %v6662 = vadd.f32 %v6469, %v6661
        %v6663 = vpop.f32.mrb[0].mxu0
        %v6664 = vadd.f32 %v6471, %v6663
        %v6665 = vpop.f32.mrb[0].mxu0
        %v6666 = vadd.f32 %v6473, %v6665
        %v6667 = vpop.f32.mrb[0].mxu0
        %v6668 = vadd.f32 %v6475, %v6667
        %6669 = vmatprep.mubr.bf16.mxu0 %v1129
        %6670 = vmatmul.mubr.bf16.gmra.mrb[0].mxu0 %v1128
        %v6671 = vpop.f32.mrb[0].mxu0
        %v6672 = vadd.f32 %v6479, %v6671
        %v6673 = vpop.f32.mrb[0].mxu0
        %v6674 = vadd.f32 %v6481, %v6673
        %v6675 = vpop.f32.mrb[0].mxu0
        %v6676 = vadd.f32 %v6483, %v6675
        %v6677 = vpop.f32.mrb[0].mxu0
        %v6678 = vadd.f32 %v6485, %v6677
        %6679 = vmatprep.mubr.bf16.mxu0 %v1149
        %6680 = vmatmul.mubr.bf16.gmra.mrb[0].mxu0 %v1148
        %v6681 = vpop.f32.mrb[0].mxu0
        %v6682 = vadd.f32 %v6489, %v6681
        %v6683 = vpop.f32.mrb[0].mxu0
        %v6684 = vadd.f32 %v6491, %v6683
        %v6685 = vpop.f32.mrb[0].mxu0
        %v6686 = vadd.f32 %v6493, %v6685
        %v6687 = vpop.f32.mrb[0].mxu0
        %v6688 = vadd.f32 %v6495, %v6687
        %6689 = vmatprep.mubr.bf16.mxu0 %v1169
        %6690 = vmatmul.mubr.bf16.gmra.mrb[0].mxu0 %v1168
        %v6691 = vpop.f32.mrb[0].mxu0
        %v6692 = vadd.f32 %v6499, %v6691
        %v6693 = vpop.f32.mrb[0].mxu0
        %v6694 = vadd.f32 %v6501, %v6693
        %v6695 = vpop.f32.mrb[0].mxu0
        %v6696 = vadd.f32 %v6503, %v6695
        %v6697 = vpop.f32.mrb[0].mxu0
        %v6698 = vadd.f32 %v6505, %v6697
        %6699 = vmatprep.mubr.bf16.mxu0 %v1189
        %6700 = vmatmul.mubr.bf16.gmra.mrb[0].mxu0 %v1188
        %v6701 = vpop.f32.mrb[0].mxu0
        %v6702 = vadd.f32 %v6509, %v6701
        %v6703 = vpop.f32.mrb[0].mxu0
        %v6704 = vadd.f32 %v6511, %v6703
        %v6705 = vpop.f32.mrb[0].mxu0
        %v6706 = vadd.f32 %v6513, %v6705
        %v6707 = vpop.f32.mrb[0].mxu0
        %v6708 = vadd.f32 %v6515, %v6707
        %6709 = vmatprep.mubr.bf16.mxu0 %v1209
        %6710 = vmatmul.mubr.bf16.gmra.mrb[0].mxu0 %v1208
        %v6711 = vpop.f32.mrb[0].mxu0
        %v6712 = vadd.f32 %v6519, %v6711
        %v6713 = vpop.f32.mrb[0].mxu0
        %v6714 = vadd.f32 %v6521, %v6713
        %v6715 = vpop.f32.mrb[0].mxu0
        %v6716 = vadd.f32 %v6523, %v6715
        %v6717 = vpop.f32.mrb[0].mxu0
        %v6718 = vadd.f32 %v6525, %v6717
        %6719 = vmatprep.mubr.bf16.mxu0 %v1229
        %6720 = vmatmul.mubr.bf16.gmra.mrb[0].mxu0 %v1228
        %v6721 = vpop.f32.mrb[0].mxu0
        %v6722 = vadd.f32 %v6529, %v6721
        %v6723 = vpop.f32.mrb[0].mxu0
        %v6724 = vadd.f32 %v6531, %v6723
        %v6725 = vpop.f32.mrb[0].mxu0
        %v6726 = vadd.f32 %v6533, %v6725
        %v6727 = vpop.f32.mrb[0].mxu0
        %v6728 = vadd.f32 %v6535, %v6727
        %6729 = vmatprep.mubr.bf16.mxu0 %v1249
        %6730 = vmatmul.mubr.bf16.gmra.mrb[0].mxu0 %v1248
        %v6731 = vpop.f32.mrb[0].mxu0
        %v6732 = vadd.f32 %v6539, %v6731
        %v6733 = vpop.f32.mrb[0].mxu0
        %v6734 = vadd.f32 %v6541, %v6733
        %v6735 = vpop.f32.mrb[0].mxu0
        %v6736 = vadd.f32 %v6543, %v6735
        %v6737 = vpop.f32.mrb[0].mxu0
        %v6738 = vadd.f32 %v6545, %v6737
        %6739 = vmatprep.mubr.bf16.mxu0 %v1269
        %6740 = vmatmul.mubr.bf16.gmra.mrb[0].mxu0 %v1268
        %v6741 = vpop.f32.mrb[0].mxu0
        %v6742 = vadd.f32 %v6549, %v6741
        %v6743 = vpop.f32.mrb[0].mxu0
        %v6744 = vadd.f32 %v6551, %v6743
        %v6745 = vpop.f32.mrb[0].mxu0
        %v6746 = vadd.f32 %v6553, %v6745
        %v6747 = vpop.f32.mrb[0].mxu0
        %v6748 = vadd.f32 %v6555, %v6747
        %6749 = vmatprep.mubr.bf16.mxu0 %v1289
        %6750 = vmatmul.mubr.bf16.gmra.mrb[0].mxu0 %v1288
        %v6751 = vpop.f32.mrb[0].mxu0
        %v6752 = vadd.f32 %v6559, %v6751
        %v6753 = vpop.f32.mrb[0].mxu0
        %v6754 = vadd.f32 %v6561, %v6753
        %v6755 = vpop.f32.mrb[0].mxu0
        %v6756 = vadd.f32 %v6563, %v6755
        %v6757 = vpop.f32.mrb[0].mxu0
        %v6758 = vadd.f32 %v6565, %v6757
        %6759 = vmatprep.mubr.bf16.mxu0 %v1309
        %6760 = vmatmul.mubr.bf16.gmra.mrb[0].mxu0 %v1308
        %v6761 = vpop.f32.mrb[0].mxu0
        %v6762 = vadd.f32 %v6569, %v6761
        %v6763 = vpop.f32.mrb[0].mxu0
        %v6764 = vadd.f32 %v6571, %v6763
        %v6765 = vpop.f32.mrb[0].mxu0
        %v6766 = vadd.f32 %v6573, %v6765
        %v6767 = vpop.f32.mrb[0].mxu0
        %v6768 = vadd.f32 %v6575, %v6767
        %6769 = vmatprep.mubr.bf16.mxu0 %v1329
        %6770 = vmatmul.mubr.bf16.gmra.mrb[0].mxu0 %v1328
        %v6771 = vpop.f32.mrb[0].mxu0
        %v6772 = vadd.f32 %v6579, %v6771
        %v6773 = vpop.f32.mrb[0].mxu0
        %v6774 = vadd.f32 %v6581, %v6773
        %v6775 = vpop.f32.mrb[0].mxu0
        %v6776 = vadd.f32 %v6583, %v6775
        %v6777 = vpop.f32.mrb[0].mxu0
        %v6778 = vadd.f32 %v6585, %v6777
        %6779 = vmatprep.mubr.bf16.mxu0 %v1349
        %6780 = vmatmul.mubr.bf16.gmra.mrb[0].mxu0 %v1348
        %v6781 = vpop.f32.mrb[0].mxu0
        %v6782 = vadd.f32 %v6589, %v6781
        %v6783 = vpop.f32.mrb[0].mxu0
        %v6784 = vadd.f32 %v6591, %v6783
        %v6785 = vpop.f32.mrb[0].mxu0
        %v6786 = vadd.f32 %v6593, %v6785
        %v6787 = vpop.f32.mrb[0].mxu0
        %v6788 = vadd.f32 %v6595, %v6787
        %6789 = vmatprep.mubr.bf16.mxu0 %v1369
        %6790 = vmatmul.mubr.bf16.gmra.mrb[0].mxu0 %v1368
        %v6791 = vpop.f32.mrb[0].mxu0
        %v6792 = vadd.f32 %v6599, %v6791
        %v6793 = vpop.f32.mrb[0].mxu0
        %v6794 = vadd.f32 %v6601, %v6793
        %v6795 = vpop.f32.mrb[0].mxu0
        %v6796 = vadd.f32 %v6603, %v6795
        %v6797 = vpop.f32.mrb[0].mxu0
        %v6798 = vadd.f32 %v6605, %v6797
        %6799 = vmatprep.mubr.bf16.mxu0 %v1389
        %6800 = vmatmul.mubr.bf16.gmra.mrb[0].mxu0 %v1388
        %v6801 = vpop.f32.mrb[0].mxu0
        %v6802 = vadd.f32 %v6609, %v6801
        %v6803 = vpop.f32.mrb[0].mxu0
        %v6804 = vadd.f32 %v6611, %v6803
        %v6805 = vpop.f32.mrb[0].mxu0
        %v6806 = vadd.f32 %v6613, %v6805
        %v6807 = vpop.f32.mrb[0].mxu0
        %v6808 = vadd.f32 %v6615, %v6807
        %6809 = vmatprep.mubr.bf16.mxu0 %v1409
        %6810 = vmatmul.mubr.bf16.gmra.mrb[0].mxu0 %v1408
        %v6811 = vpop.f32.mrb[0].mxu0
        %v6812 = vadd.f32 %v6619, %v6811
        %v6813 = vpop.f32.mrb[0].mxu0
        %v6814 = vadd.f32 %v6621, %v6813
        %v6815 = vpop.f32.mrb[0].mxu0
        %v6816 = vadd.f32 %v6623, %v6815
        %v6817 = vpop.f32.mrb[0].mxu0
        %v6818 = vadd.f32 %v6625, %v6817
        %6819 = vdwg.mxu0
        %6820 = vmatprep.subr.bf16.mxu0 %v4509
        %6821 = vmatpush1.bf16.msra.mxu0 %v4508
        %6822 = vmatprep.subr.bf16.mxu0 %v4513
        %6823 = vmatpush1.bf16.msra.mxu0 %v4512
        %6824 = vmatprep.subr.bf16.mxu0 %v4517
        %6825 = vmatpush1.bf16.msra.mxu0 %v4516
        %6826 = vmatprep.subr.bf16.mxu0 %v4521
        %6827 = vmatpush1.bf16.msra.mxu0 %v4520
        %6828 = vmatprep.subr.bf16.mxu0 %v4525
        %6829 = vmatpush1.bf16.msra.mxu0 %v4524
        %6830 = vmatprep.subr.bf16.mxu0 %v4529
        %6831 = vmatpush1.bf16.msra.mxu0 %v4528
        %6832 = vmatprep.subr.bf16.mxu0 %v4533
        %6833 = vmatpush1.bf16.msra.mxu0 %v4532
        %6834 = vmatprep.subr.bf16.mxu0 %v4537
        %6835 = vmatpush1.bf16.msra.mxu0 %v4536
        %6836 = vmatprep.subr.bf16.mxu0 %v4541
        %6837 = vmatpush1.bf16.msra.mxu0 %v4540
        %6838 = vmatprep.subr.bf16.mxu0 %v4545
        %6839 = vmatpush1.bf16.msra.mxu0 %v4544
        %6840 = vmatprep.subr.bf16.mxu0 %v4549
        %6841 = vmatpush1.bf16.msra.mxu0 %v4548
        %6842 = vmatprep.subr.bf16.mxu0 %v4553
        %6843 = vmatpush1.bf16.msra.mxu0 %v4552
        %6844 = vmatprep.subr.bf16.mxu0 %v4557
        %6845 = vmatpush1.bf16.msra.mxu0 %v4556
        %6846 = vmatprep.subr.bf16.mxu0 %v4561
        %6847 = vmatpush1.bf16.msra.mxu0 %v4560
        %6848 = vmatprep.subr.bf16.mxu0 %v4565
        %6849 = vmatpush1.bf16.msra.mxu0 %v4564
        %6850 = vmatprep.subr.bf16.mxu0 %v4569
        %6851 = vmatpush1.bf16.msra.mxu0 %v4568
        %6852 = vmatprep.mubr.bf16.mxu0 %v1111
        %6853 = vmatmul.mubr.bf16.gmra.mrb[0].mxu0 %v1110
        %v6854 = vpop.f32.mrb[0].mxu0
        %v6855 = vadd.f32 %v6662, %v6854
        %v6856 = vpop.f32.mrb[0].mxu0
        %v6857 = vadd.f32 %v6664, %v6856
        %v6858 = vpop.f32.mrb[0].mxu0
        %v6859 = vadd.f32 %v6666, %v6858
        %v6860 = vpop.f32.mrb[0].mxu0
        %v6861 = vadd.f32 %v6668, %v6860
        %6862 = vmatprep.mubr.bf16.mxu0 %v1131
        %6863 = vmatmul.mubr.bf16.gmra.mrb[0].mxu0 %v1130
        %v6864 = vpop.f32.mrb[0].mxu0
        %v6865 = vadd.f32 %v6672, %v6864
        %v6866 = vpop.f32.mrb[0].mxu0
        %v6867 = vadd.f32 %v6674, %v6866
        %v6868 = vpop.f32.mrb[0].mxu0
        %v6869 = vadd.f32 %v6676, %v6868
        %v6870 = vpop.f32.mrb[0].mxu0
        %v6871 = vadd.f32 %v6678, %v6870
        %6872 = vmatprep.mubr.bf16.mxu0 %v1151
        %6873 = vmatmul.mubr.bf16.gmra.mrb[0].mxu0 %v1150
        %v6874 = vpop.f32.mrb[0].mxu0
        %v6875 = vadd.f32 %v6682, %v6874
        %v6876 = vpop.f32.mrb[0].mxu0
        %v6877 = vadd.f32 %v6684, %v6876
        %v6878 = vpop.f32.mrb[0].mxu0
        %v6879 = vadd.f32 %v6686, %v6878
        %v6880 = vpop.f32.mrb[0].mxu0
        %v6881 = vadd.f32 %v6688, %v6880
        %6882 = vmatprep.mubr.bf16.mxu0 %v1171
        %6883 = vmatmul.mubr.bf16.gmra.mrb[0].mxu0 %v1170
        %v6884 = vpop.f32.mrb[0].mxu0
        %v6885 = vadd.f32 %v6692, %v6884
        %v6886 = vpop.f32.mrb[0].mxu0
        %v6887 = vadd.f32 %v6694, %v6886
        %v6888 = vpop.f32.mrb[0].mxu0
        %v6889 = vadd.f32 %v6696, %v6888
        %v6890 = vpop.f32.mrb[0].mxu0
        %v6891 = vadd.f32 %v6698, %v6890
        %6892 = vmatprep.mubr.bf16.mxu0 %v1191
        %6893 = vmatmul.mubr.bf16.gmra.mrb[0].mxu0 %v1190
        %v6894 = vpop.f32.mrb[0].mxu0
        %v6895 = vadd.f32 %v6702, %v6894
        %v6896 = vpop.f32.mrb[0].mxu0
        %v6897 = vadd.f32 %v6704, %v6896
        %v6898 = vpop.f32.mrb[0].mxu0
        %v6899 = vadd.f32 %v6706, %v6898
        %v6900 = vpop.f32.mrb[0].mxu0
        %v6901 = vadd.f32 %v6708, %v6900
        %6902 = vmatprep.mubr.bf16.mxu0 %v1211
        %6903 = vmatmul.mubr.bf16.gmra.mrb[0].mxu0 %v1210
        %v6904 = vpop.f32.mrb[0].mxu0
        %v6905 = vadd.f32 %v6712, %v6904
        %v6906 = vpop.f32.mrb[0].mxu0
        %v6907 = vadd.f32 %v6714, %v6906
        %v6908 = vpop.f32.mrb[0].mxu0
        %v6909 = vadd.f32 %v6716, %v6908
        %v6910 = vpop.f32.mrb[0].mxu0
        %v6911 = vadd.f32 %v6718, %v6910
        %6912 = vmatprep.mubr.bf16.mxu0 %v1231
        %6913 = vmatmul.mubr.bf16.gmra.mrb[0].mxu0 %v1230
        %v6914 = vpop.f32.mrb[0].mxu0
        %v6915 = vadd.f32 %v6722, %v6914
        %v6916 = vpop.f32.mrb[0].mxu0
        %v6917 = vadd.f32 %v6724, %v6916
        %v6918 = vpop.f32.mrb[0].mxu0
        %v6919 = vadd.f32 %v6726, %v6918
        %v6920 = vpop.f32.mrb[0].mxu0
        %v6921 = vadd.f32 %v6728, %v6920
        %6922 = vmatprep.mubr.bf16.mxu0 %v1251
        %6923 = vmatmul.mubr.bf16.gmra.mrb[0].mxu0 %v1250
        %v6924 = vpop.f32.mrb[0].mxu0
        %v6925 = vadd.f32 %v6732, %v6924
        %v6926 = vpop.f32.mrb[0].mxu0
        %v6927 = vadd.f32 %v6734, %v6926
        %v6928 = vpop.f32.mrb[0].mxu0
        %v6929 = vadd.f32 %v6736, %v6928
        %v6930 = vpop.f32.mrb[0].mxu0
        %v6931 = vadd.f32 %v6738, %v6930
        %6932 = vmatprep.mubr.bf16.mxu0 %v1271
        %6933 = vmatmul.mubr.bf16.gmra.mrb[0].mxu0 %v1270
        %v6934 = vpop.f32.mrb[0].mxu0
        %v6935 = vadd.f32 %v6742, %v6934
        %v6936 = vpop.f32.mrb[0].mxu0
        %v6937 = vadd.f32 %v6744, %v6936
        %v6938 = vpop.f32.mrb[0].mxu0
        %v6939 = vadd.f32 %v6746, %v6938
        %v6940 = vpop.f32.mrb[0].mxu0
        %v6941 = vadd.f32 %v6748, %v6940
        %6942 = vmatprep.mubr.bf16.mxu0 %v1291
        %6943 = vmatmul.mubr.bf16.gmra.mrb[0].mxu0 %v1290
        %v6944 = vpop.f32.mrb[0].mxu0
        %v6945 = vadd.f32 %v6752, %v6944
        %v6946 = vpop.f32.mrb[0].mxu0
        %v6947 = vadd.f32 %v6754, %v6946
        %v6948 = vpop.f32.mrb[0].mxu0
        %v6949 = vadd.f32 %v6756, %v6948
        %v6950 = vpop.f32.mrb[0].mxu0
        %v6951 = vadd.f32 %v6758, %v6950
        %6952 = vmatprep.mubr.bf16.mxu0 %v1311
        %6953 = vmatmul.mubr.bf16.gmra.mrb[0].mxu0 %v1310
        %v6954 = vpop.f32.mrb[0].mxu0
        %v6955 = vadd.f32 %v6762, %v6954
        %v6956 = vpop.f32.mrb[0].mxu0
        %v6957 = vadd.f32 %v6764, %v6956
        %v6958 = vpop.f32.mrb[0].mxu0
        %v6959 = vadd.f32 %v6766, %v6958
        %v6960 = vpop.f32.mrb[0].mxu0
        %v6961 = vadd.f32 %v6768, %v6960
        %6962 = vmatprep.mubr.bf16.mxu0 %v1331
        %6963 = vmatmul.mubr.bf16.gmra.mrb[0].mxu0 %v1330
        %v6964 = vpop.f32.mrb[0].mxu0
        %v6965 = vadd.f32 %v6772, %v6964
        %v6966 = vpop.f32.mrb[0].mxu0
        %v6967 = vadd.f32 %v6774, %v6966
        %v6968 = vpop.f32.mrb[0].mxu0
        %v6969 = vadd.f32 %v6776, %v6968
        %v6970 = vpop.f32.mrb[0].mxu0
        %v6971 = vadd.f32 %v6778, %v6970
        %6972 = vmatprep.mubr.bf16.mxu0 %v1351
        %6973 = vmatmul.mubr.bf16.gmra.mrb[0].mxu0 %v1350
        %v6974 = vpop.f32.mrb[0].mxu0
        %v6975 = vadd.f32 %v6782, %v6974
        %v6976 = vpop.f32.mrb[0].mxu0
        %v6977 = vadd.f32 %v6784, %v6976
        %v6978 = vpop.f32.mrb[0].mxu0
        %v6979 = vadd.f32 %v6786, %v6978
        %v6980 = vpop.f32.mrb[0].mxu0
        %v6981 = vadd.f32 %v6788, %v6980
        %6982 = vmatprep.mubr.bf16.mxu0 %v1371
        %6983 = vmatmul.mubr.bf16.gmra.mrb[0].mxu0 %v1370
        %v6984 = vpop.f32.mrb[0].mxu0
        %v6985 = vadd.f32 %v6792, %v6984
        %v6986 = vpop.f32.mrb[0].mxu0
        %v6987 = vadd.f32 %v6794, %v6986
        %v6988 = vpop.f32.mrb[0].mxu0
        %v6989 = vadd.f32 %v6796, %v6988
        %v6990 = vpop.f32.mrb[0].mxu0
        %v6991 = vadd.f32 %v6798, %v6990
        %6992 = vmatprep.mubr.bf16.mxu0 %v1391
        %6993 = vmatmul.mubr.bf16.gmra.mrb[0].mxu0 %v1390
        %v6994 = vpop.f32.mrb[0].mxu0
        %v6995 = vadd.f32 %v6802, %v6994
        %v6996 = vpop.f32.mrb[0].mxu0
        %v6997 = vadd.f32 %v6804, %v6996
        %v6998 = vpop.f32.mrb[0].mxu0
        %v6999 = vadd.f32 %v6806, %v6998
        %v7000 = vpop.f32.mrb[0].mxu0
        %v7001 = vadd.f32 %v6808, %v7000
        %7002 = vmatprep.mubr.bf16.mxu0 %v1411
        %7003 = vmatmul.mubr.bf16.gmra.mrb[0].mxu0 %v1410
        %v7004 = vpop.f32.mrb[0].mxu0
        %v7005 = vadd.f32 %v6812, %v7004
        %v7006 = vpop.f32.mrb[0].mxu0
        %v7007 = vadd.f32 %v6814, %v7006
        %v7008 = vpop.f32.mrb[0].mxu0
        %v7009 = vadd.f32 %v6816, %v7008
        %v7010 = vpop.f32.mrb[0].mxu0
        %v7011 = vadd.f32 %v6818, %v7010
        %7012 = vdwg.mxu0
        %7013 = vmatprep.subr.bf16.mxu0 %v4573
        %7014 = vmatpush1.bf16.msra.mxu0 %v4572
        %7015 = vmatprep.subr.bf16.mxu0 %v4577
        %7016 = vmatpush1.bf16.msra.mxu0 %v4576
        %7017 = vmatprep.subr.bf16.mxu0 %v4581
        %7018 = vmatpush1.bf16.msra.mxu0 %v4580
        %7019 = vmatprep.subr.bf16.mxu0 %v4585
        %7020 = vmatpush1.bf16.msra.mxu0 %v4584
        %7021 = vmatprep.subr.bf16.mxu0 %v4589
        %7022 = vmatpush1.bf16.msra.mxu0 %v4588
        %7023 = vmatprep.subr.bf16.mxu0 %v4593
        %7024 = vmatpush1.bf16.msra.mxu0 %v4592
        %7025 = vmatprep.subr.bf16.mxu0 %v4597
        %7026 = vmatpush1.bf16.msra.mxu0 %v4596
        %7027 = vmatprep.subr.bf16.mxu0 %v4601
        %7028 = vmatpush1.bf16.msra.mxu0 %v4600
        %7029 = vmatprep.subr.bf16.mxu0 %v4605
        %7030 = vmatpush1.bf16.msra.mxu0 %v4604
        %7031 = vmatprep.subr.bf16.mxu0 %v4609
        %7032 = vmatpush1.bf16.msra.mxu0 %v4608
        %7033 = vmatprep.subr.bf16.mxu0 %v4613
        %7034 = vmatpush1.bf16.msra.mxu0 %v4612
        %7035 = vmatprep.subr.bf16.mxu0 %v4617
        %7036 = vmatpush1.bf16.msra.mxu0 %v4616
        %7037 = vmatprep.subr.bf16.mxu0 %v4621
        %7038 = vmatpush1.bf16.msra.mxu0 %v4620
        %7039 = vmatprep.subr.bf16.mxu0 %v4625
        %7040 = vmatpush1.bf16.msra.mxu0 %v4624
        %7041 = vmatprep.subr.bf16.mxu0 %v4629
        %7042 = vmatpush1.bf16.msra.mxu0 %v4628
        %7043 = vmatprep.subr.bf16.mxu0 %v4633
        %7044 = vmatpush1.bf16.msra.mxu0 %v4632
        %7045 = vmatprep.mubr.bf16.mxu0 %v1113
        %7046 = vmatmul.mubr.bf16.gmra.mrb[0].mxu0 %v1112
        %v7047 = vpop.f32.mrb[0].mxu0
        %v7048 = vadd.f32 %v6855, %v7047
        %v7049 = vpop.f32.mrb[0].mxu0
        %v7050 = vadd.f32 %v6857, %v7049
        %v7051 = vpop.f32.mrb[0].mxu0
        %v7052 = vadd.f32 %v6859, %v7051
        %v7053 = vpop.f32.mrb[0].mxu0
        %v7054 = vadd.f32 %v6861, %v7053
        %7055 = vmatprep.mubr.bf16.mxu0 %v1133
        %7056 = vmatmul.mubr.bf16.gmra.mrb[0].mxu0 %v1132
        %v7057 = vpop.f32.mrb[0].mxu0
        %v7058 = vadd.f32 %v6865, %v7057
        %v7059 = vpop.f32.mrb[0].mxu0
        %v7060 = vadd.f32 %v6867, %v7059
        %v7061 = vpop.f32.mrb[0].mxu0
        %v7062 = vadd.f32 %v6869, %v7061
        %v7063 = vpop.f32.mrb[0].mxu0
        %v7064 = vadd.f32 %v6871, %v7063
        %7065 = vmatprep.mubr.bf16.mxu0 %v1153
        %7066 = vmatmul.mubr.bf16.gmra.mrb[0].mxu0 %v1152
        %v7067 = vpop.f32.mrb[0].mxu0
        %v7068 = vadd.f32 %v6875, %v7067
        %v7069 = vpop.f32.mrb[0].mxu0
        %v7070 = vadd.f32 %v6877, %v7069
        %v7071 = vpop.f32.mrb[0].mxu0
        %v7072 = vadd.f32 %v6879, %v7071
        %v7073 = vpop.f32.mrb[0].mxu0
        %v7074 = vadd.f32 %v6881, %v7073
        %7075 = vmatprep.mubr.bf16.mxu0 %v1173
        %7076 = vmatmul.mubr.bf16.gmra.mrb[0].mxu0 %v1172
        %v7077 = vpop.f32.mrb[0].mxu0
        %v7078 = vadd.f32 %v6885, %v7077
        %v7079 = vpop.f32.mrb[0].mxu0
        %v7080 = vadd.f32 %v6887, %v7079
        %v7081 = vpop.f32.mrb[0].mxu0
        %v7082 = vadd.f32 %v6889, %v7081
        %v7083 = vpop.f32.mrb[0].mxu0
        %v7084 = vadd.f32 %v6891, %v7083
        %7085 = vmatprep.mubr.bf16.mxu0 %v1193
        %7086 = vmatmul.mubr.bf16.gmra.mrb[0].mxu0 %v1192
        %v7087 = vpop.f32.mrb[0].mxu0
        %v7088 = vadd.f32 %v6895, %v7087
        %v7089 = vpop.f32.mrb[0].mxu0
        %v7090 = vadd.f32 %v6897, %v7089
        %v7091 = vpop.f32.mrb[0].mxu0
        %v7092 = vadd.f32 %v6899, %v7091
        %v7093 = vpop.f32.mrb[0].mxu0
        %v7094 = vadd.f32 %v6901, %v7093
        %7095 = vmatprep.mubr.bf16.mxu0 %v1213
        %7096 = vmatmul.mubr.bf16.gmra.mrb[0].mxu0 %v1212
        %v7097 = vpop.f32.mrb[0].mxu0
        %v7098 = vadd.f32 %v6905, %v7097
        %v7099 = vpop.f32.mrb[0].mxu0
        %v7100 = vadd.f32 %v6907, %v7099
        %v7101 = vpop.f32.mrb[0].mxu0
        %v7102 = vadd.f32 %v6909, %v7101
        %v7103 = vpop.f32.mrb[0].mxu0
        %v7104 = vadd.f32 %v6911, %v7103
        %7105 = vmatprep.mubr.bf16.mxu0 %v1233
        %7106 = vmatmul.mubr.bf16.gmra.mrb[0].mxu0 %v1232
        %v7107 = vpop.f32.mrb[0].mxu0
        %v7108 = vadd.f32 %v6915, %v7107
        %v7109 = vpop.f32.mrb[0].mxu0
        %v7110 = vadd.f32 %v6917, %v7109
        %v7111 = vpop.f32.mrb[0].mxu0
        %v7112 = vadd.f32 %v6919, %v7111
        %v7113 = vpop.f32.mrb[0].mxu0
        %v7114 = vadd.f32 %v6921, %v7113
        %7115 = vmatprep.mubr.bf16.mxu0 %v1253
        %7116 = vmatmul.mubr.bf16.gmra.mrb[0].mxu0 %v1252
        %v7117 = vpop.f32.mrb[0].mxu0
        %v7118 = vadd.f32 %v6925, %v7117
        %v7119 = vpop.f32.mrb[0].mxu0
        %v7120 = vadd.f32 %v6927, %v7119
        %v7121 = vpop.f32.mrb[0].mxu0
        %v7122 = vadd.f32 %v6929, %v7121
        %v7123 = vpop.f32.mrb[0].mxu0
        %v7124 = vadd.f32 %v6931, %v7123
        %7125 = vmatprep.mubr.bf16.mxu0 %v1273
        %7126 = vmatmul.mubr.bf16.gmra.mrb[0].mxu0 %v1272
        %v7127 = vpop.f32.mrb[0].mxu0
        %v7128 = vadd.f32 %v6935, %v7127
        %v7129 = vpop.f32.mrb[0].mxu0
        %v7130 = vadd.f32 %v6937, %v7129
        %v7131 = vpop.f32.mrb[0].mxu0
        %v7132 = vadd.f32 %v6939, %v7131
        %v7133 = vpop.f32.mrb[0].mxu0
        %v7134 = vadd.f32 %v6941, %v7133
        %7135 = vmatprep.mubr.bf16.mxu0 %v1293
        %7136 = vmatmul.mubr.bf16.gmra.mrb[0].mxu0 %v1292
        %v7137 = vpop.f32.mrb[0].mxu0
        %v7138 = vadd.f32 %v6945, %v7137
        %v7139 = vpop.f32.mrb[0].mxu0
        %v7140 = vadd.f32 %v6947, %v7139
        %v7141 = vpop.f32.mrb[0].mxu0
        %v7142 = vadd.f32 %v6949, %v7141
        %v7143 = vpop.f32.mrb[0].mxu0
        %v7144 = vadd.f32 %v6951, %v7143
        %7145 = vmatprep.mubr.bf16.mxu0 %v1313
        %7146 = vmatmul.mubr.bf16.gmra.mrb[0].mxu0 %v1312
        %v7147 = vpop.f32.mrb[0].mxu0
        %v7148 = vadd.f32 %v6955, %v7147
        %v7149 = vpop.f32.mrb[0].mxu0
        %v7150 = vadd.f32 %v6957, %v7149
        %v7151 = vpop.f32.mrb[0].mxu0
        %v7152 = vadd.f32 %v6959, %v7151
        %v7153 = vpop.f32.mrb[0].mxu0
        %v7154 = vadd.f32 %v6961, %v7153
        %7155 = vmatprep.mubr.bf16.mxu0 %v1333
        %7156 = vmatmul.mubr.bf16.gmra.mrb[0].mxu0 %v1332
        %v7157 = vpop.f32.mrb[0].mxu0
        %v7158 = vadd.f32 %v6965, %v7157
        %v7159 = vpop.f32.mrb[0].mxu0
        %v7160 = vadd.f32 %v6967, %v7159
        %v7161 = vpop.f32.mrb[0].mxu0
        %v7162 = vadd.f32 %v6969, %v7161
        %v7163 = vpop.f32.mrb[0].mxu0
        %v7164 = vadd.f32 %v6971, %v7163
        %7165 = vmatprep.mubr.bf16.mxu0 %v1353
        %7166 = vmatmul.mubr.bf16.gmra.mrb[0].mxu0 %v1352
        %v7167 = vpop.f32.mrb[0].mxu0
        %v7168 = vadd.f32 %v6975, %v7167
        %v7169 = vpop.f32.mrb[0].mxu0
        %v7170 = vadd.f32 %v6977, %v7169
        %v7171 = vpop.f32.mrb[0].mxu0
        %v7172 = vadd.f32 %v6979, %v7171
        %v7173 = vpop.f32.mrb[0].mxu0
        %v7174 = vadd.f32 %v6981, %v7173
        %7175 = vmatprep.mubr.bf16.mxu0 %v1373
        %7176 = vmatmul.mubr.bf16.gmra.mrb[0].mxu0 %v1372
        %v7177 = vpop.f32.mrb[0].mxu0
        %v7178 = vadd.f32 %v6985, %v7177
        %v7179 = vpop.f32.mrb[0].mxu0
        %v7180 = vadd.f32 %v6987, %v7179
        %v7181 = vpop.f32.mrb[0].mxu0
        %v7182 = vadd.f32 %v6989, %v7181
        %v7183 = vpop.f32.mrb[0].mxu0
        %v7184 = vadd.f32 %v6991, %v7183
        %7185 = vmatprep.mubr.bf16.mxu0 %v1393
        %7186 = vmatmul.mubr.bf16.gmra.mrb[0].mxu0 %v1392
        %v7187 = vpop.f32.mrb[0].mxu0
        %v7188 = vadd.f32 %v6995, %v7187
        %v7189 = vpop.f32.mrb[0].mxu0
        %v7190 = vadd.f32 %v6997, %v7189
        %v7191 = vpop.f32.mrb[0].mxu0
        %v7192 = vadd.f32 %v6999, %v7191
        %v7193 = vpop.f32.mrb[0].mxu0
        %v7194 = vadd.f32 %v7001, %v7193
        %7195 = vmatprep.mubr.bf16.mxu0 %v1413
        %7196 = vmatmul.mubr.bf16.gmra.mrb[0].mxu0 %v1412
        %v7197 = vpop.f32.mrb[0].mxu0
        %v7198 = vadd.f32 %v7005, %v7197
        %v7199 = vpop.f32.mrb[0].mxu0
        %v7200 = vadd.f32 %v7007, %v7199
        %v7201 = vpop.f32.mrb[0].mxu0
        %v7202 = vadd.f32 %v7009, %v7201
        %v7203 = vpop.f32.mrb[0].mxu0
        %v7204 = vadd.f32 %v7011, %v7203
        %7205 = vdwg.mxu0
        %7206 = vmatprep.subr.bf16.mxu0 %v3999
        %7207 = vmatpush1.bf16.msra.mxu0 %v3998
        %7208 = vmatprep.subr.bf16.mxu0 %v4003
        %7209 = vmatpush1.bf16.msra.mxu0 %v4002
        %7210 = vmatprep.subr.bf16.mxu0 %v4007
        %7211 = vmatpush1.bf16.msra.mxu0 %v4006
        %7212 = vmatprep.subr.bf16.mxu0 %v4011
        %7213 = vmatpush1.bf16.msra.mxu0 %v4010
        %7214 = vmatprep.subr.bf16.mxu0 %v4015
        %7215 = vmatpush1.bf16.msra.mxu0 %v4014
        %7216 = vmatprep.subr.bf16.mxu0 %v4019
        %7217 = vmatpush1.bf16.msra.mxu0 %v4018
        %7218 = vmatprep.subr.bf16.mxu0 %v4023
        %7219 = vmatpush1.bf16.msra.mxu0 %v4022
        %7220 = vmatprep.subr.bf16.mxu0 %v4027
        %7221 = vmatpush1.bf16.msra.mxu0 %v4026
        %7222 = vmatprep.subr.bf16.mxu0 %v4031
        %7223 = vmatpush1.bf16.msra.mxu0 %v4030
        %7224 = vmatprep.subr.bf16.mxu0 %v4035
        %7225 = vmatpush1.bf16.msra.mxu0 %v4034
        %7226 = vmatprep.subr.bf16.mxu0 %v4039
        %7227 = vmatpush1.bf16.msra.mxu0 %v4038
        %7228 = vmatprep.subr.bf16.mxu0 %v4043
        %7229 = vmatpush1.bf16.msra.mxu0 %v4042
        %7230 = vmatprep.subr.bf16.mxu0 %v4047
        %7231 = vmatpush1.bf16.msra.mxu0 %v4046
        %7232 = vmatprep.subr.bf16.mxu0 %v4051
        %7233 = vmatpush1.bf16.msra.mxu0 %v4050
        %7234 = vmatprep.subr.bf16.mxu0 %v4055
        %7235 = vmatpush1.bf16.msra.mxu0 %v4054
        %7236 = vmatprep.subr.bf16.mxu0 %v4059
        %7237 = vmatpush1.bf16.msra.mxu0 %v4058
        %7238 = vmatprep.mubr.bf16.mxu0 %v1095
        %7239 = vmatmul.mubr.bf16.gmra.mrb[0].mxu0 %v1094
        %v7240 = vpop.f32.mrb[0].mxu0
        %v7241 = vadd.f32 %v2067, %v7240
        %v7242 = vpop.f32.mrb[0].mxu0
        %v7243 = vadd.f32 %v2071, %v7242
        %v7244 = vpop.f32.mrb[0].mxu0
        %v7245 = vadd.f32 %v2067, %v7244
        %v7246 = vpop.f32.mrb[0].mxu0
        %v7247 = vadd.f32 %v2071, %v7246
        %7248 = vmatprep.mubr.bf16.mxu0 %v1115
        %7249 = vmatmul.mubr.bf16.gmra.mrb[0].mxu0 %v1114
        %v7250 = vpop.f32.mrb[0].mxu0
        %v7251 = vadd.f32 %v2067, %v7250
        %v7252 = vpop.f32.mrb[0].mxu0
        %v7253 = vadd.f32 %v2071, %v7252
        %v7254 = vpop.f32.mrb[0].mxu0
        %v7255 = vadd.f32 %v2067, %v7254
        %v7256 = vpop.f32.mrb[0].mxu0
        %v7257 = vadd.f32 %v2071, %v7256
        %7258 = vmatprep.mubr.bf16.mxu0 %v1135
        %7259 = vmatmul.mubr.bf16.gmra.mrb[0].mxu0 %v1134
        %v7260 = vpop.f32.mrb[0].mxu0
        %v7261 = vadd.f32 %v2067, %v7260
        %v7262 = vpop.f32.mrb[0].mxu0
        %v7263 = vadd.f32 %v2071, %v7262
        %v7264 = vpop.f32.mrb[0].mxu0
        %v7265 = vadd.f32 %v2067, %v7264
        %v7266 = vpop.f32.mrb[0].mxu0
        %v7267 = vadd.f32 %v2071, %v7266
        %7268 = vmatprep.mubr.bf16.mxu0 %v1155
        %7269 = vmatmul.mubr.bf16.gmra.mrb[0].mxu0 %v1154
        %v7270 = vpop.f32.mrb[0].mxu0
        %v7271 = vadd.f32 %v2067, %v7270
        %v7272 = vpop.f32.mrb[0].mxu0
        %v7273 = vadd.f32 %v2071, %v7272
        %v7274 = vpop.f32.mrb[0].mxu0
        %v7275 = vadd.f32 %v2067, %v7274
        %v7276 = vpop.f32.mrb[0].mxu0
        %v7277 = vadd.f32 %v2071, %v7276
        %7278 = vmatprep.mubr.bf16.mxu0 %v1175
        %7279 = vmatmul.mubr.bf16.gmra.mrb[0].mxu0 %v1174
        %v7280 = vpop.f32.mrb[0].mxu0
        %v7281 = vadd.f32 %v2067, %v7280
        %v7282 = vpop.f32.mrb[0].mxu0
        %v7283 = vadd.f32 %v2071, %v7282
        %v7284 = vpop.f32.mrb[0].mxu0
        %v7285 = vadd.f32 %v2067, %v7284
        %v7286 = vpop.f32.mrb[0].mxu0
        %v7287 = vadd.f32 %v2071, %v7286
        %7288 = vmatprep.mubr.bf16.mxu0 %v1195
        %7289 = vmatmul.mubr.bf16.gmra.mrb[0].mxu0 %v1194
        %v7290 = vpop.f32.mrb[0].mxu0
        %v7291 = vadd.f32 %v2067, %v7290
        %v7292 = vpop.f32.mrb[0].mxu0
        %v7293 = vadd.f32 %v2071, %v7292
        %v7294 = vpop.f32.mrb[0].mxu0
        %v7295 = vadd.f32 %v2067, %v7294
        %v7296 = vpop.f32.mrb[0].mxu0
        %v7297 = vadd.f32 %v2071, %v7296
        %7298 = vmatprep.mubr.bf16.mxu0 %v1215
        %7299 = vmatmul.mubr.bf16.gmra.mrb[0].mxu0 %v1214
        %v7300 = vpop.f32.mrb[0].mxu0
        %v7301 = vadd.f32 %v2067, %v7300
        %v7302 = vpop.f32.mrb[0].mxu0
        %v7303 = vadd.f32 %v2071, %v7302
        %v7304 = vpop.f32.mrb[0].mxu0
        %v7305 = vadd.f32 %v2067, %v7304
        %v7306 = vpop.f32.mrb[0].mxu0
        %v7307 = vadd.f32 %v2071, %v7306
        %7308 = vmatprep.mubr.bf16.mxu0 %v1235
        %7309 = vmatmul.mubr.bf16.gmra.mrb[0].mxu0 %v1234
        %v7310 = vpop.f32.mrb[0].mxu0
        %v7311 = vadd.f32 %v2067, %v7310
        %v7312 = vpop.f32.mrb[0].mxu0
        %v7313 = vadd.f32 %v2071, %v7312
        %v7314 = vpop.f32.mrb[0].mxu0
        %v7315 = vadd.f32 %v2067, %v7314
        %v7316 = vpop.f32.mrb[0].mxu0
        %v7317 = vadd.f32 %v2071, %v7316
        %7318 = vmatprep.mubr.bf16.mxu0 %v1255
        %7319 = vmatmul.mubr.bf16.gmra.mrb[0].mxu0 %v1254
        %v7320 = vpop.f32.mrb[0].mxu0
        %v7321 = vadd.f32 %v2067, %v7320
        %v7322 = vpop.f32.mrb[0].mxu0
        %v7323 = vadd.f32 %v2071, %v7322
        %v7324 = vpop.f32.mrb[0].mxu0
        %v7325 = vadd.f32 %v2067, %v7324
        %v7326 = vpop.f32.mrb[0].mxu0
        %v7327 = vadd.f32 %v2071, %v7326
        %7328 = vmatprep.mubr.bf16.mxu0 %v1275
        %7329 = vmatmul.mubr.bf16.gmra.mrb[0].mxu0 %v1274
        %v7330 = vpop.f32.mrb[0].mxu0
        %v7331 = vadd.f32 %v2067, %v7330
        %v7332 = vpop.f32.mrb[0].mxu0
        %v7333 = vadd.f32 %v2071, %v7332
        %v7334 = vpop.f32.mrb[0].mxu0
        %v7335 = vadd.f32 %v2067, %v7334
        %v7336 = vpop.f32.mrb[0].mxu0
        %v7337 = vadd.f32 %v2071, %v7336
        %7338 = vmatprep.mubr.bf16.mxu0 %v1295
        %7339 = vmatmul.mubr.bf16.gmra.mrb[0].mxu0 %v1294
        %v7340 = vpop.f32.mrb[0].mxu0
        %v7341 = vadd.f32 %v2067, %v7340
        %v7342 = vpop.f32.mrb[0].mxu0
        %v7343 = vadd.f32 %v2071, %v7342
        %v7344 = vpop.f32.mrb[0].mxu0
        %v7345 = vadd.f32 %v2067, %v7344
        %v7346 = vpop.f32.mrb[0].mxu0
        %v7347 = vadd.f32 %v2071, %v7346
        %7348 = vmatprep.mubr.bf16.mxu0 %v1315
        %7349 = vmatmul.mubr.bf16.gmra.mrb[0].mxu0 %v1314
        %v7350 = vpop.f32.mrb[0].mxu0
        %v7351 = vadd.f32 %v2067, %v7350
        %v7352 = vpop.f32.mrb[0].mxu0
        %v7353 = vadd.f32 %v2071, %v7352
        %v7354 = vpop.f32.mrb[0].mxu0
        %v7355 = vadd.f32 %v2067, %v7354
        %v7356 = vpop.f32.mrb[0].mxu0
        %v7357 = vadd.f32 %v2071, %v7356
        %7358 = vmatprep.mubr.bf16.mxu0 %v1335
        %7359 = vmatmul.mubr.bf16.gmra.mrb[0].mxu0 %v1334
        %v7360 = vpop.f32.mrb[0].mxu0
        %v7361 = vadd.f32 %v2067, %v7360
        %v7362 = vpop.f32.mrb[0].mxu0
        %v7363 = vadd.f32 %v2071, %v7362
        %v7364 = vpop.f32.mrb[0].mxu0
        %v7365 = vadd.f32 %v2067, %v7364
        %v7366 = vpop.f32.mrb[0].mxu0
        %v7367 = vadd.f32 %v2071, %v7366
        %7368 = vmatprep.mubr.bf16.mxu0 %v1355
        %7369 = vmatmul.mubr.bf16.gmra.mrb[0].mxu0 %v1354
        %v7370 = vpop.f32.mrb[0].mxu0
        %v7371 = vadd.f32 %v2067, %v7370
        %v7372 = vpop.f32.mrb[0].mxu0
        %v7373 = vadd.f32 %v2071, %v7372
        %v7374 = vpop.f32.mrb[0].mxu0
        %v7375 = vadd.f32 %v2067, %v7374
        %v7376 = vpop.f32.mrb[0].mxu0
        %v7377 = vadd.f32 %v2071, %v7376
        %7378 = vmatprep.mubr.bf16.mxu0 %v1375
        %7379 = vmatmul.mubr.bf16.gmra.mrb[0].mxu0 %v1374
        %v7380 = vpop.f32.mrb[0].mxu0
        %v7381 = vadd.f32 %v2067, %v7380
        %v7382 = vpop.f32.mrb[0].mxu0
        %v7383 = vadd.f32 %v2071, %v7382
        %v7384 = vpop.f32.mrb[0].mxu0
        %v7385 = vadd.f32 %v2067, %v7384
        %v7386 = vpop.f32.mrb[0].mxu0
        %v7387 = vadd.f32 %v2071, %v7386
        %7388 = vmatprep.mubr.bf16.mxu0 %v1395
        %7389 = vmatmul.mubr.bf16.gmra.mrb[0].mxu0 %v1394
        %v7390 = vpop.f32.mrb[0].mxu0
        %v7391 = vadd.f32 %v2067, %v7390
        %v7392 = vpop.f32.mrb[0].mxu0
        %v7393 = vadd.f32 %v2071, %v7392
        %v7394 = vpop.f32.mrb[0].mxu0
        %v7395 = vadd.f32 %v2067, %v7394
        %v7396 = vpop.f32.mrb[0].mxu0
        %v7397 = vadd.f32 %v2071, %v7396
        %7398 = vdwg.mxu0
        %7399 = vmatprep.subr.bf16.mxu0 %v4063
        %7400 = vmatpush1.bf16.msra.mxu0 %v4062
        %7401 = vmatprep.subr.bf16.mxu0 %v4067
        %7402 = vmatpush1.bf16.msra.mxu0 %v4066
        %7403 = vmatprep.subr.bf16.mxu0 %v4071
        %7404 = vmatpush1.bf16.msra.mxu0 %v4070
        %7405 = vmatprep.subr.bf16.mxu0 %v4075
        %7406 = vmatpush1.bf16.msra.mxu0 %v4074
        %7407 = vmatprep.subr.bf16.mxu0 %v4079
        %7408 = vmatpush1.bf16.msra.mxu0 %v4078
        %7409 = vmatprep.subr.bf16.mxu0 %v4083
        %7410 = vmatpush1.bf16.msra.mxu0 %v4082
        %7411 = vmatprep.subr.bf16.mxu0 %v4087
        %7412 = vmatpush1.bf16.msra.mxu0 %v4086
        %7413 = vmatprep.subr.bf16.mxu0 %v4091
        %7414 = vmatpush1.bf16.msra.mxu0 %v4090
        %7415 = vmatprep.subr.bf16.mxu0 %v4095
        %7416 = vmatpush1.bf16.msra.mxu0 %v4094
        %7417 = vmatprep.subr.bf16.mxu0 %v4099
        %7418 = vmatpush1.bf16.msra.mxu0 %v4098
        %7419 = vmatprep.subr.bf16.mxu0 %v4103
        %7420 = vmatpush1.bf16.msra.mxu0 %v4102
        %7421 = vmatprep.subr.bf16.mxu0 %v4107
        %7422 = vmatpush1.bf16.msra.mxu0 %v4106
        %7423 = vmatprep.subr.bf16.mxu0 %v4111
        %7424 = vmatpush1.bf16.msra.mxu0 %v4110
        %7425 = vmatprep.subr.bf16.mxu0 %v4115
        %7426 = vmatpush1.bf16.msra.mxu0 %v4114
        %7427 = vmatprep.subr.bf16.mxu0 %v4119
        %7428 = vmatpush1.bf16.msra.mxu0 %v4118
        %7429 = vmatprep.subr.bf16.mxu0 %v4123
        %7430 = vmatpush1.bf16.msra.mxu0 %v4122
        %7431 = vmatprep.mubr.bf16.mxu0 %v1097
        %7432 = vmatmul.mubr.bf16.gmra.mrb[0].mxu0 %v1096
        %v7433 = vpop.f32.mrb[0].mxu0
        %v7434 = vadd.f32 %v7241, %v7433
        %v7435 = vpop.f32.mrb[0].mxu0
        %v7436 = vadd.f32 %v7243, %v7435
        %v7437 = vpop.f32.mrb[0].mxu0
        %v7438 = vadd.f32 %v7245, %v7437
        %v7439 = vpop.f32.mrb[0].mxu0
        %v7440 = vadd.f32 %v7247, %v7439
        %7441 = vmatprep.mubr.bf16.mxu0 %v1117
        %7442 = vmatmul.mubr.bf16.gmra.mrb[0].mxu0 %v1116
        %v7443 = vpop.f32.mrb[0].mxu0
        %v7444 = vadd.f32 %v7251, %v7443
        %v7445 = vpop.f32.mrb[0].mxu0
        %v7446 = vadd.f32 %v7253, %v7445
        %v7447 = vpop.f32.mrb[0].mxu0
        %v7448 = vadd.f32 %v7255, %v7447
        %v7449 = vpop.f32.mrb[0].mxu0
        %v7450 = vadd.f32 %v7257, %v7449
        %7451 = vmatprep.mubr.bf16.mxu0 %v1137
        %7452 = vmatmul.mubr.bf16.gmra.mrb[0].mxu0 %v1136
        %v7453 = vpop.f32.mrb[0].mxu0
        %v7454 = vadd.f32 %v7261, %v7453
        %v7455 = vpop.f32.mrb[0].mxu0
        %v7456 = vadd.f32 %v7263, %v7455
        %v7457 = vpop.f32.mrb[0].mxu0
        %v7458 = vadd.f32 %v7265, %v7457
        %v7459 = vpop.f32.mrb[0].mxu0
        %v7460 = vadd.f32 %v7267, %v7459
        %7461 = vmatprep.mubr.bf16.mxu0 %v1157
        %7462 = vmatmul.mubr.bf16.gmra.mrb[0].mxu0 %v1156
        %v7463 = vpop.f32.mrb[0].mxu0
        %v7464 = vadd.f32 %v7271, %v7463
        %v7465 = vpop.f32.mrb[0].mxu0
        %v7466 = vadd.f32 %v7273, %v7465
        %v7467 = vpop.f32.mrb[0].mxu0
        %v7468 = vadd.f32 %v7275, %v7467
        %v7469 = vpop.f32.mrb[0].mxu0
        %v7470 = vadd.f32 %v7277, %v7469
        %7471 = vmatprep.mubr.bf16.mxu0 %v1177
        %7472 = vmatmul.mubr.bf16.gmra.mrb[0].mxu0 %v1176
        %v7473 = vpop.f32.mrb[0].mxu0
        %v7474 = vadd.f32 %v7281, %v7473
        %v7475 = vpop.f32.mrb[0].mxu0
        %v7476 = vadd.f32 %v7283, %v7475
        %v7477 = vpop.f32.mrb[0].mxu0
        %v7478 = vadd.f32 %v7285, %v7477
        %v7479 = vpop.f32.mrb[0].mxu0
        %v7480 = vadd.f32 %v7287, %v7479
        %7481 = vmatprep.mubr.bf16.mxu0 %v1197
        %7482 = vmatmul.mubr.bf16.gmra.mrb[0].mxu0 %v1196
        %v7483 = vpop.f32.mrb[0].mxu0
        %v7484 = vadd.f32 %v7291, %v7483
        %v7485 = vpop.f32.mrb[0].mxu0
        %v7486 = vadd.f32 %v7293, %v7485
        %v7487 = vpop.f32.mrb[0].mxu0
        %v7488 = vadd.f32 %v7295, %v7487
        %v7489 = vpop.f32.mrb[0].mxu0
        %v7490 = vadd.f32 %v7297, %v7489
        %7491 = vmatprep.mubr.bf16.mxu0 %v1217
        %7492 = vmatmul.mubr.bf16.gmra.mrb[0].mxu0 %v1216
        %v7493 = vpop.f32.mrb[0].mxu0
        %v7494 = vadd.f32 %v7301, %v7493
        %v7495 = vpop.f32.mrb[0].mxu0
        %v7496 = vadd.f32 %v7303, %v7495
        %v7497 = vpop.f32.mrb[0].mxu0
        %v7498 = vadd.f32 %v7305, %v7497
        %v7499 = vpop.f32.mrb[0].mxu0
        %v7500 = vadd.f32 %v7307, %v7499
        %7501 = vmatprep.mubr.bf16.mxu0 %v1237
        %7502 = vmatmul.mubr.bf16.gmra.mrb[0].mxu0 %v1236
        %v7503 = vpop.f32.mrb[0].mxu0
        %v7504 = vadd.f32 %v7311, %v7503
        %v7505 = vpop.f32.mrb[0].mxu0
        %v7506 = vadd.f32 %v7313, %v7505
        %v7507 = vpop.f32.mrb[0].mxu0
        %v7508 = vadd.f32 %v7315, %v7507
        %v7509 = vpop.f32.mrb[0].mxu0
        %v7510 = vadd.f32 %v7317, %v7509
        %7511 = vmatprep.mubr.bf16.mxu0 %v1257
        %7512 = vmatmul.mubr.bf16.gmra.mrb[0].mxu0 %v1256
        %v7513 = vpop.f32.mrb[0].mxu0
        %v7514 = vadd.f32 %v7321, %v7513
        %v7515 = vpop.f32.mrb[0].mxu0
        %v7516 = vadd.f32 %v7323, %v7515
        %v7517 = vpop.f32.mrb[0].mxu0
        %v7518 = vadd.f32 %v7325, %v7517
        %v7519 = vpop.f32.mrb[0].mxu0
        %v7520 = vadd.f32 %v7327, %v7519
        %7521 = vmatprep.mubr.bf16.mxu0 %v1277
        %7522 = vmatmul.mubr.bf16.gmra.mrb[0].mxu0 %v1276
        %v7523 = vpop.f32.mrb[0].mxu0
        %v7524 = vadd.f32 %v7331, %v7523
        %v7525 = vpop.f32.mrb[0].mxu0
        %v7526 = vadd.f32 %v7333, %v7525
        %v7527 = vpop.f32.mrb[0].mxu0
        %v7528 = vadd.f32 %v7335, %v7527
        %v7529 = vpop.f32.mrb[0].mxu0
        %v7530 = vadd.f32 %v7337, %v7529
        %7531 = vmatprep.mubr.bf16.mxu0 %v1297
        %7532 = vmatmul.mubr.bf16.gmra.mrb[0].mxu0 %v1296
        %v7533 = vpop.f32.mrb[0].mxu0
        %v7534 = vadd.f32 %v7341, %v7533
        %v7535 = vpop.f32.mrb[0].mxu0
        %v7536 = vadd.f32 %v7343, %v7535
        %v7537 = vpop.f32.mrb[0].mxu0
        %v7538 = vadd.f32 %v7345, %v7537
        %v7539 = vpop.f32.mrb[0].mxu0
        %v7540 = vadd.f32 %v7347, %v7539
        %7541 = vmatprep.mubr.bf16.mxu0 %v1317
        %7542 = vmatmul.mubr.bf16.gmra.mrb[0].mxu0 %v1316
        %v7543 = vpop.f32.mrb[0].mxu0
        %v7544 = vadd.f32 %v7351, %v7543
        %v7545 = vpop.f32.mrb[0].mxu0
        %v7546 = vadd.f32 %v7353, %v7545
        %v7547 = vpop.f32.mrb[0].mxu0
        %v7548 = vadd.f32 %v7355, %v7547
        %v7549 = vpop.f32.mrb[0].mxu0
        %v7550 = vadd.f32 %v7357, %v7549
        %7551 = vmatprep.mubr.bf16.mxu0 %v1337
        %7552 = vmatmul.mubr.bf16.gmra.mrb[0].mxu0 %v1336
        %v7553 = vpop.f32.mrb[0].mxu0
        %v7554 = vadd.f32 %v7361, %v7553
        %v7555 = vpop.f32.mrb[0].mxu0
        %v7556 = vadd.f32 %v7363, %v7555
        %v7557 = vpop.f32.mrb[0].mxu0
        %v7558 = vadd.f32 %v7365, %v7557
        %v7559 = vpop.f32.mrb[0].mxu0
        %v7560 = vadd.f32 %v7367, %v7559
        %7561 = vmatprep.mubr.bf16.mxu0 %v1357
        %7562 = vmatmul.mubr.bf16.gmra.mrb[0].mxu0 %v1356
        %v7563 = vpop.f32.mrb[0].mxu0
        %v7564 = vadd.f32 %v7371, %v7563
        %v7565 = vpop.f32.mrb[0].mxu0
        %v7566 = vadd.f32 %v7373, %v7565
        %v7567 = vpop.f32.mrb[0].mxu0
        %v7568 = vadd.f32 %v7375, %v7567
        %v7569 = vpop.f32.mrb[0].mxu0
        %v7570 = vadd.f32 %v7377, %v7569
        %7571 = vmatprep.mubr.bf16.mxu0 %v1377
        %7572 = vmatmul.mubr.bf16.gmra.mrb[0].mxu0 %v1376
        %v7573 = vpop.f32.mrb[0].mxu0
        %v7574 = vadd.f32 %v7381, %v7573
        %v7575 = vpop.f32.mrb[0].mxu0
        %v7576 = vadd.f32 %v7383, %v7575
        %v7577 = vpop.f32.mrb[0].mxu0
        %v7578 = vadd.f32 %v7385, %v7577
        %v7579 = vpop.f32.mrb[0].mxu0
        %v7580 = vadd.f32 %v7387, %v7579
        %7581 = vmatprep.mubr.bf16.mxu0 %v1397
        %7582 = vmatmul.mubr.bf16.gmra.mrb[0].mxu0 %v1396
        %v7583 = vpop.f32.mrb[0].mxu0
        %v7584 = vadd.f32 %v7391, %v7583
        %v7585 = vpop.f32.mrb[0].mxu0
        %v7586 = vadd.f32 %v7393, %v7585
        %v7587 = vpop.f32.mrb[0].mxu0
        %v7588 = vadd.f32 %v7395, %v7587
        %v7589 = vpop.f32.mrb[0].mxu0
        %v7590 = vadd.f32 %v7397, %v7589
        %7591 = vdwg.mxu0
        %7592 = vmatprep.subr.bf16.mxu0 %v4127
        %7593 = vmatpush1.bf16.msra.mxu0 %v4126
        %7594 = vmatprep.subr.bf16.mxu0 %v4131
        %7595 = vmatpush1.bf16.msra.mxu0 %v4130
        %7596 = vmatprep.subr.bf16.mxu0 %v4135
        %7597 = vmatpush1.bf16.msra.mxu0 %v4134
        %7598 = vmatprep.subr.bf16.mxu0 %v4139
        %7599 = vmatpush1.bf16.msra.mxu0 %v4138
        %7600 = vmatprep.subr.bf16.mxu0 %v4143
        %7601 = vmatpush1.bf16.msra.mxu0 %v4142
        %7602 = vmatprep.subr.bf16.mxu0 %v4147
        %7603 = vmatpush1.bf16.msra.mxu0 %v4146
        %7604 = vmatprep.subr.bf16.mxu0 %v4151
        %7605 = vmatpush1.bf16.msra.mxu0 %v4150
        %7606 = vmatprep.subr.bf16.mxu0 %v4155
        %7607 = vmatpush1.bf16.msra.mxu0 %v4154
        %7608 = vmatprep.subr.bf16.mxu0 %v4159
        %7609 = vmatpush1.bf16.msra.mxu0 %v4158
        %7610 = vmatprep.subr.bf16.mxu0 %v4163
        %7611 = vmatpush1.bf16.msra.mxu0 %v4162
        %7612 = vmatprep.subr.bf16.mxu0 %v4167
        %7613 = vmatpush1.bf16.msra.mxu0 %v4166
        %7614 = vmatprep.subr.bf16.mxu0 %v4171
        %7615 = vmatpush1.bf16.msra.mxu0 %v4170
        %7616 = vmatprep.subr.bf16.mxu0 %v4175
        %7617 = vmatpush1.bf16.msra.mxu0 %v4174
        %7618 = vmatprep.subr.bf16.mxu0 %v4179
        %7619 = vmatpush1.bf16.msra.mxu0 %v4178
        %7620 = vmatprep.subr.bf16.mxu0 %v4183
        %7621 = vmatpush1.bf16.msra.mxu0 %v4182
        %7622 = vmatprep.subr.bf16.mxu0 %v4187
        %7623 = vmatpush1.bf16.msra.mxu0 %v4186
        %7624 = vmatprep.mubr.bf16.mxu0 %v1099
        %7625 = vmatmul.mubr.bf16.gmra.mrb[0].mxu0 %v1098
        %v7626 = vpop.f32.mrb[0].mxu0
        %v7627 = vadd.f32 %v7434, %v7626
        %v7628 = vpop.f32.mrb[0].mxu0
        %v7629 = vadd.f32 %v7436, %v7628
        %v7630 = vpop.f32.mrb[0].mxu0
        %v7631 = vadd.f32 %v7438, %v7630
        %v7632 = vpop.f32.mrb[0].mxu0
        %v7633 = vadd.f32 %v7440, %v7632
        %7634 = vmatprep.mubr.bf16.mxu0 %v1119
        %7635 = vmatmul.mubr.bf16.gmra.mrb[0].mxu0 %v1118
        %v7636 = vpop.f32.mrb[0].mxu0
        %v7637 = vadd.f32 %v7444, %v7636
        %v7638 = vpop.f32.mrb[0].mxu0
        %v7639 = vadd.f32 %v7446, %v7638
        %v7640 = vpop.f32.mrb[0].mxu0
        %v7641 = vadd.f32 %v7448, %v7640
        %v7642 = vpop.f32.mrb[0].mxu0
        %v7643 = vadd.f32 %v7450, %v7642
        %7644 = vmatprep.mubr.bf16.mxu0 %v1139
        %7645 = vmatmul.mubr.bf16.gmra.mrb[0].mxu0 %v1138
        %v7646 = vpop.f32.mrb[0].mxu0
        %v7647 = vadd.f32 %v7454, %v7646
        %v7648 = vpop.f32.mrb[0].mxu0
        %v7649 = vadd.f32 %v7456, %v7648
        %v7650 = vpop.f32.mrb[0].mxu0
        %v7651 = vadd.f32 %v7458, %v7650
        %v7652 = vpop.f32.mrb[0].mxu0
        %v7653 = vadd.f32 %v7460, %v7652
        %7654 = vmatprep.mubr.bf16.mxu0 %v1159
        %7655 = vmatmul.mubr.bf16.gmra.mrb[0].mxu0 %v1158
        %v7656 = vpop.f32.mrb[0].mxu0
        %v7657 = vadd.f32 %v7464, %v7656
        %v7658 = vpop.f32.mrb[0].mxu0
        %v7659 = vadd.f32 %v7466, %v7658
        %v7660 = vpop.f32.mrb[0].mxu0
        %v7661 = vadd.f32 %v7468, %v7660
        %v7662 = vpop.f32.mrb[0].mxu0
        %v7663 = vadd.f32 %v7470, %v7662
        %7664 = vmatprep.mubr.bf16.mxu0 %v1179
        %7665 = vmatmul.mubr.bf16.gmra.mrb[0].mxu0 %v1178
        %v7666 = vpop.f32.mrb[0].mxu0
        %v7667 = vadd.f32 %v7474, %v7666
        %v7668 = vpop.f32.mrb[0].mxu0
        %v7669 = vadd.f32 %v7476, %v7668
        %v7670 = vpop.f32.mrb[0].mxu0
        %v7671 = vadd.f32 %v7478, %v7670
        %v7672 = vpop.f32.mrb[0].mxu0
        %v7673 = vadd.f32 %v7480, %v7672
        %7674 = vmatprep.mubr.bf16.mxu0 %v1199
        %7675 = vmatmul.mubr.bf16.gmra.mrb[0].mxu0 %v1198
        %v7676 = vpop.f32.mrb[0].mxu0
        %v7677 = vadd.f32 %v7484, %v7676
        %v7678 = vpop.f32.mrb[0].mxu0
        %v7679 = vadd.f32 %v7486, %v7678
        %v7680 = vpop.f32.mrb[0].mxu0
        %v7681 = vadd.f32 %v7488, %v7680
        %v7682 = vpop.f32.mrb[0].mxu0
        %v7683 = vadd.f32 %v7490, %v7682
        %7684 = vmatprep.mubr.bf16.mxu0 %v1219
        %7685 = vmatmul.mubr.bf16.gmra.mrb[0].mxu0 %v1218
        %v7686 = vpop.f32.mrb[0].mxu0
        %v7687 = vadd.f32 %v7494, %v7686
        %v7688 = vpop.f32.mrb[0].mxu0
        %v7689 = vadd.f32 %v7496, %v7688
        %v7690 = vpop.f32.mrb[0].mxu0
        %v7691 = vadd.f32 %v7498, %v7690
        %v7692 = vpop.f32.mrb[0].mxu0
        %v7693 = vadd.f32 %v7500, %v7692
        %7694 = vmatprep.mubr.bf16.mxu0 %v1239
        %7695 = vmatmul.mubr.bf16.gmra.mrb[0].mxu0 %v1238
        %v7696 = vpop.f32.mrb[0].mxu0
        %v7697 = vadd.f32 %v7504, %v7696
        %v7698 = vpop.f32.mrb[0].mxu0
        %v7699 = vadd.f32 %v7506, %v7698
        %v7700 = vpop.f32.mrb[0].mxu0
        %v7701 = vadd.f32 %v7508, %v7700
        %v7702 = vpop.f32.mrb[0].mxu0
        %v7703 = vadd.f32 %v7510, %v7702
        %7704 = vmatprep.mubr.bf16.mxu0 %v1259
        %7705 = vmatmul.mubr.bf16.gmra.mrb[0].mxu0 %v1258
        %v7706 = vpop.f32.mrb[0].mxu0
        %v7707 = vadd.f32 %v7514, %v7706
        %v7708 = vpop.f32.mrb[0].mxu0
        %v7709 = vadd.f32 %v7516, %v7708
        %v7710 = vpop.f32.mrb[0].mxu0
        %v7711 = vadd.f32 %v7518, %v7710
        %v7712 = vpop.f32.mrb[0].mxu0
        %v7713 = vadd.f32 %v7520, %v7712
        %7714 = vmatprep.mubr.bf16.mxu0 %v1279
        %7715 = vmatmul.mubr.bf16.gmra.mrb[0].mxu0 %v1278
        %v7716 = vpop.f32.mrb[0].mxu0
        %v7717 = vadd.f32 %v7524, %v7716
        %v7718 = vpop.f32.mrb[0].mxu0
        %v7719 = vadd.f32 %v7526, %v7718
        %v7720 = vpop.f32.mrb[0].mxu0
        %v7721 = vadd.f32 %v7528, %v7720
        %v7722 = vpop.f32.mrb[0].mxu0
        %v7723 = vadd.f32 %v7530, %v7722
        %7724 = vmatprep.mubr.bf16.mxu0 %v1299
        %7725 = vmatmul.mubr.bf16.gmra.mrb[0].mxu0 %v1298
        %v7726 = vpop.f32.mrb[0].mxu0
        %v7727 = vadd.f32 %v7534, %v7726
        %v7728 = vpop.f32.mrb[0].mxu0
        %v7729 = vadd.f32 %v7536, %v7728
        %v7730 = vpop.f32.mrb[0].mxu0
        %v7731 = vadd.f32 %v7538, %v7730
        %v7732 = vpop.f32.mrb[0].mxu0
        %v7733 = vadd.f32 %v7540, %v7732
        %7734 = vmatprep.mubr.bf16.mxu0 %v1319
        %7735 = vmatmul.mubr.bf16.gmra.mrb[0].mxu0 %v1318
        %v7736 = vpop.f32.mrb[0].mxu0
        %v7737 = vadd.f32 %v7544, %v7736
        %v7738 = vpop.f32.mrb[0].mxu0
        %v7739 = vadd.f32 %v7546, %v7738
        %v7740 = vpop.f32.mrb[0].mxu0
        %v7741 = vadd.f32 %v7548, %v7740
        %v7742 = vpop.f32.mrb[0].mxu0
        %v7743 = vadd.f32 %v7550, %v7742
        %7744 = vmatprep.mubr.bf16.mxu0 %v1339
        %7745 = vmatmul.mubr.bf16.gmra.mrb[0].mxu0 %v1338
        %v7746 = vpop.f32.mrb[0].mxu0
        %v7747 = vadd.f32 %v7554, %v7746
        %v7748 = vpop.f32.mrb[0].mxu0
        %v7749 = vadd.f32 %v7556, %v7748
        %v7750 = vpop.f32.mrb[0].mxu0
        %v7751 = vadd.f32 %v7558, %v7750
        %v7752 = vpop.f32.mrb[0].mxu0
        %v7753 = vadd.f32 %v7560, %v7752
        %7754 = vmatprep.mubr.bf16.mxu0 %v1359
        %7755 = vmatmul.mubr.bf16.gmra.mrb[0].mxu0 %v1358
        %v7756 = vpop.f32.mrb[0].mxu0
        %v7757 = vadd.f32 %v7564, %v7756
        %v7758 = vpop.f32.mrb[0].mxu0
        %v7759 = vadd.f32 %v7566, %v7758
        %v7760 = vpop.f32.mrb[0].mxu0
        %v7761 = vadd.f32 %v7568, %v7760
        %v7762 = vpop.f32.mrb[0].mxu0
        %v7763 = vadd.f32 %v7570, %v7762
        %7764 = vmatprep.mubr.bf16.mxu0 %v1379
        %7765 = vmatmul.mubr.bf16.gmra.mrb[0].mxu0 %v1378
        %v7766 = vpop.f32.mrb[0].mxu0
        %v7767 = vadd.f32 %v7574, %v7766
        %v7768 = vpop.f32.mrb[0].mxu0
        %v7769 = vadd.f32 %v7576, %v7768
        %v7770 = vpop.f32.mrb[0].mxu0
        %v7771 = vadd.f32 %v7578, %v7770
        %v7772 = vpop.f32.mrb[0].mxu0
        %v7773 = vadd.f32 %v7580, %v7772
        %7774 = vmatprep.mubr.bf16.mxu0 %v1399
        %7775 = vmatmul.mubr.bf16.gmra.mrb[0].mxu0 %v1398
        %v7776 = vpop.f32.mrb[0].mxu0
        %v7777 = vadd.f32 %v7584, %v7776
        %v7778 = vpop.f32.mrb[0].mxu0
        %v7779 = vadd.f32 %v7586, %v7778
        %v7780 = vpop.f32.mrb[0].mxu0
        %v7781 = vadd.f32 %v7588, %v7780
        %v7782 = vpop.f32.mrb[0].mxu0
        %v7783 = vadd.f32 %v7590, %v7782
        %7784 = vdwg.mxu0
        %7785 = vmatprep.subr.bf16.mxu0 %v4191
        %7786 = vmatpush1.bf16.msra.mxu0 %v4190
        %7787 = vmatprep.subr.bf16.mxu0 %v4195
        %7788 = vmatpush1.bf16.msra.mxu0 %v4194
        %7789 = vmatprep.subr.bf16.mxu0 %v4199
        %7790 = vmatpush1.bf16.msra.mxu0 %v4198
        %7791 = vmatprep.subr.bf16.mxu0 %v4203
        %7792 = vmatpush1.bf16.msra.mxu0 %v4202
        %7793 = vmatprep.subr.bf16.mxu0 %v4207
        %7794 = vmatpush1.bf16.msra.mxu0 %v4206
        %7795 = vmatprep.subr.bf16.mxu0 %v4211
        %7796 = vmatpush1.bf16.msra.mxu0 %v4210
        %7797 = vmatprep.subr.bf16.mxu0 %v4215
        %7798 = vmatpush1.bf16.msra.mxu0 %v4214
        %7799 = vmatprep.subr.bf16.mxu0 %v4219
        %7800 = vmatpush1.bf16.msra.mxu0 %v4218
        %7801 = vmatprep.subr.bf16.mxu0 %v4223
        %7802 = vmatpush1.bf16.msra.mxu0 %v4222
        %7803 = vmatprep.subr.bf16.mxu0 %v4227
        %7804 = vmatpush1.bf16.msra.mxu0 %v4226
        %7805 = vmatprep.subr.bf16.mxu0 %v4231
        %7806 = vmatpush1.bf16.msra.mxu0 %v4230
        %7807 = vmatprep.subr.bf16.mxu0 %v4235
        %7808 = vmatpush1.bf16.msra.mxu0 %v4234
        %7809 = vmatprep.subr.bf16.mxu0 %v4239
        %7810 = vmatpush1.bf16.msra.mxu0 %v4238
        %7811 = vmatprep.subr.bf16.mxu0 %v4243
        %7812 = vmatpush1.bf16.msra.mxu0 %v4242
        %7813 = vmatprep.subr.bf16.mxu0 %v4247
        %7814 = vmatpush1.bf16.msra.mxu0 %v4246
        %7815 = vmatprep.subr.bf16.mxu0 %v4251
        %7816 = vmatpush1.bf16.msra.mxu0 %v4250
        %7817 = vmatprep.mubr.bf16.mxu0 %v1101
        %7818 = vmatmul.mubr.bf16.gmra.mrb[0].mxu0 %v1100
        %v7819 = vpop.f32.mrb[0].mxu0
        %v7820 = vadd.f32 %v7627, %v7819
        %v7821 = vpop.f32.mrb[0].mxu0
        %v7822 = vadd.f32 %v7629, %v7821
        %v7823 = vpop.f32.mrb[0].mxu0
        %v7824 = vadd.f32 %v7631, %v7823
        %v7825 = vpop.f32.mrb[0].mxu0
        %v7826 = vadd.f32 %v7633, %v7825
        %7827 = vmatprep.mubr.bf16.mxu0 %v1121
        %7828 = vmatmul.mubr.bf16.gmra.mrb[0].mxu0 %v1120
        %v7829 = vpop.f32.mrb[0].mxu0
        %v7830 = vadd.f32 %v7637, %v7829
        %v7831 = vpop.f32.mrb[0].mxu0
        %v7832 = vadd.f32 %v7639, %v7831
        %v7833 = vpop.f32.mrb[0].mxu0
        %v7834 = vadd.f32 %v7641, %v7833
        %v7835 = vpop.f32.mrb[0].mxu0
        %v7836 = vadd.f32 %v7643, %v7835
        %7837 = vmatprep.mubr.bf16.mxu0 %v1141
        %7838 = vmatmul.mubr.bf16.gmra.mrb[0].mxu0 %v1140
        %v7839 = vpop.f32.mrb[0].mxu0
        %v7840 = vadd.f32 %v7647, %v7839
        %v7841 = vpop.f32.mrb[0].mxu0
        %v7842 = vadd.f32 %v7649, %v7841
        %v7843 = vpop.f32.mrb[0].mxu0
        %v7844 = vadd.f32 %v7651, %v7843
        %v7845 = vpop.f32.mrb[0].mxu0
        %v7846 = vadd.f32 %v7653, %v7845
        %7847 = vmatprep.mubr.bf16.mxu0 %v1161
        %7848 = vmatmul.mubr.bf16.gmra.mrb[0].mxu0 %v1160
        %v7849 = vpop.f32.mrb[0].mxu0
        %v7850 = vadd.f32 %v7657, %v7849
        %v7851 = vpop.f32.mrb[0].mxu0
        %v7852 = vadd.f32 %v7659, %v7851
        %v7853 = vpop.f32.mrb[0].mxu0
        %v7854 = vadd.f32 %v7661, %v7853
        %v7855 = vpop.f32.mrb[0].mxu0
        %v7856 = vadd.f32 %v7663, %v7855
        %7857 = vmatprep.mubr.bf16.mxu0 %v1181
        %7858 = vmatmul.mubr.bf16.gmra.mrb[0].mxu0 %v1180
        %v7859 = vpop.f32.mrb[0].mxu0
        %v7860 = vadd.f32 %v7667, %v7859
        %v7861 = vpop.f32.mrb[0].mxu0
        %v7862 = vadd.f32 %v7669, %v7861
        %v7863 = vpop.f32.mrb[0].mxu0
        %v7864 = vadd.f32 %v7671, %v7863
        %v7865 = vpop.f32.mrb[0].mxu0
        %v7866 = vadd.f32 %v7673, %v7865
        %7867 = vmatprep.mubr.bf16.mxu0 %v1201
        %7868 = vmatmul.mubr.bf16.gmra.mrb[0].mxu0 %v1200
        %v7869 = vpop.f32.mrb[0].mxu0
        %v7870 = vadd.f32 %v7677, %v7869
        %v7871 = vpop.f32.mrb[0].mxu0
        %v7872 = vadd.f32 %v7679, %v7871
        %v7873 = vpop.f32.mrb[0].mxu0
        %v7874 = vadd.f32 %v7681, %v7873
        %v7875 = vpop.f32.mrb[0].mxu0
        %v7876 = vadd.f32 %v7683, %v7875
        %7877 = vmatprep.mubr.bf16.mxu0 %v1221
        %7878 = vmatmul.mubr.bf16.gmra.mrb[0].mxu0 %v1220
        %v7879 = vpop.f32.mrb[0].mxu0
        %v7880 = vadd.f32 %v7687, %v7879
        %v7881 = vpop.f32.mrb[0].mxu0
        %v7882 = vadd.f32 %v7689, %v7881
        %v7883 = vpop.f32.mrb[0].mxu0
        %v7884 = vadd.f32 %v7691, %v7883
        %v7885 = vpop.f32.mrb[0].mxu0
        %v7886 = vadd.f32 %v7693, %v7885
        %7887 = vmatprep.mubr.bf16.mxu0 %v1241
        %7888 = vmatmul.mubr.bf16.gmra.mrb[0].mxu0 %v1240
        %v7889 = vpop.f32.mrb[0].mxu0
        %v7890 = vadd.f32 %v7697, %v7889
        %v7891 = vpop.f32.mrb[0].mxu0
        %v7892 = vadd.f32 %v7699, %v7891
        %v7893 = vpop.f32.mrb[0].mxu0
        %v7894 = vadd.f32 %v7701, %v7893
        %v7895 = vpop.f32.mrb[0].mxu0
        %v7896 = vadd.f32 %v7703, %v7895
        %7897 = vmatprep.mubr.bf16.mxu0 %v1261
        %7898 = vmatmul.mubr.bf16.gmra.mrb[0].mxu0 %v1260
        %v7899 = vpop.f32.mrb[0].mxu0
        %v7900 = vadd.f32 %v7707, %v7899
        %v7901 = vpop.f32.mrb[0].mxu0
        %v7902 = vadd.f32 %v7709, %v7901
        %v7903 = vpop.f32.mrb[0].mxu0
        %v7904 = vadd.f32 %v7711, %v7903
        %v7905 = vpop.f32.mrb[0].mxu0
        %v7906 = vadd.f32 %v7713, %v7905
        %7907 = vmatprep.mubr.bf16.mxu0 %v1281
        %7908 = vmatmul.mubr.bf16.gmra.mrb[0].mxu0 %v1280
        %v7909 = vpop.f32.mrb[0].mxu0
        %v7910 = vadd.f32 %v7717, %v7909
        %v7911 = vpop.f32.mrb[0].mxu0
        %v7912 = vadd.f32 %v7719, %v7911
        %v7913 = vpop.f32.mrb[0].mxu0
        %v7914 = vadd.f32 %v7721, %v7913
        %v7915 = vpop.f32.mrb[0].mxu0
        %v7916 = vadd.f32 %v7723, %v7915
        %7917 = vmatprep.mubr.bf16.mxu0 %v1301
        %7918 = vmatmul.mubr.bf16.gmra.mrb[0].mxu0 %v1300
        %v7919 = vpop.f32.mrb[0].mxu0
        %v7920 = vadd.f32 %v7727, %v7919
        %v7921 = vpop.f32.mrb[0].mxu0
        %v7922 = vadd.f32 %v7729, %v7921
        %v7923 = vpop.f32.mrb[0].mxu0
        %v7924 = vadd.f32 %v7731, %v7923
        %v7925 = vpop.f32.mrb[0].mxu0
        %v7926 = vadd.f32 %v7733, %v7925
        %7927 = vmatprep.mubr.bf16.mxu0 %v1321
        %7928 = vmatmul.mubr.bf16.gmra.mrb[0].mxu0 %v1320
        %v7929 = vpop.f32.mrb[0].mxu0
        %v7930 = vadd.f32 %v7737, %v7929
        %v7931 = vpop.f32.mrb[0].mxu0
        %v7932 = vadd.f32 %v7739, %v7931
        %v7933 = vpop.f32.mrb[0].mxu0
        %v7934 = vadd.f32 %v7741, %v7933
        %v7935 = vpop.f32.mrb[0].mxu0
        %v7936 = vadd.f32 %v7743, %v7935
        %7937 = vmatprep.mubr.bf16.mxu0 %v1341
        %7938 = vmatmul.mubr.bf16.gmra.mrb[0].mxu0 %v1340
        %v7939 = vpop.f32.mrb[0].mxu0
        %v7940 = vadd.f32 %v7747, %v7939
        %v7941 = vpop.f32.mrb[0].mxu0
        %v7942 = vadd.f32 %v7749, %v7941
        %v7943 = vpop.f32.mrb[0].mxu0
        %v7944 = vadd.f32 %v7751, %v7943
        %v7945 = vpop.f32.mrb[0].mxu0
        %v7946 = vadd.f32 %v7753, %v7945
        %7947 = vmatprep.mubr.bf16.mxu0 %v1361
        %7948 = vmatmul.mubr.bf16.gmra.mrb[0].mxu0 %v1360
        %v7949 = vpop.f32.mrb[0].mxu0
        %v7950 = vadd.f32 %v7757, %v7949
        %v7951 = vpop.f32.mrb[0].mxu0
        %v7952 = vadd.f32 %v7759, %v7951
        %v7953 = vpop.f32.mrb[0].mxu0
        %v7954 = vadd.f32 %v7761, %v7953
        %v7955 = vpop.f32.mrb[0].mxu0
        %v7956 = vadd.f32 %v7763, %v7955
        %7957 = vmatprep.mubr.bf16.mxu0 %v1381
        %7958 = vmatmul.mubr.bf16.gmra.mrb[0].mxu0 %v1380
        %v7959 = vpop.f32.mrb[0].mxu0
        %v7960 = vadd.f32 %v7767, %v7959
        %v7961 = vpop.f32.mrb[0].mxu0
        %v7962 = vadd.f32 %v7769, %v7961
        %v7963 = vpop.f32.mrb[0].mxu0
        %v7964 = vadd.f32 %v7771, %v7963
        %v7965 = vpop.f32.mrb[0].mxu0
        %v7966 = vadd.f32 %v7773, %v7965
        %7967 = vmatprep.mubr.bf16.mxu0 %v1401
        %7968 = vmatmul.mubr.bf16.gmra.mrb[0].mxu0 %v1400
        %v7969 = vpop.f32.mrb[0].mxu0
        %v7970 = vadd.f32 %v7777, %v7969
        %v7971 = vpop.f32.mrb[0].mxu0
        %v7972 = vadd.f32 %v7779, %v7971
        %v7973 = vpop.f32.mrb[0].mxu0
        %v7974 = vadd.f32 %v7781, %v7973
        %v7975 = vpop.f32.mrb[0].mxu0
        %v7976 = vadd.f32 %v7783, %v7975
        %7977 = vdwg.mxu0
        %7978 = vmatprep.subr.bf16.mxu0 %v4255
        %7979 = vmatpush1.bf16.msra.mxu0 %v4254
        %7980 = vmatprep.subr.bf16.mxu0 %v4259
        %7981 = vmatpush1.bf16.msra.mxu0 %v4258
        %7982 = vmatprep.subr.bf16.mxu0 %v4263
        %7983 = vmatpush1.bf16.msra.mxu0 %v4262
        %7984 = vmatprep.subr.bf16.mxu0 %v4267
        %7985 = vmatpush1.bf16.msra.mxu0 %v4266
        %7986 = vmatprep.subr.bf16.mxu0 %v4271
        %7987 = vmatpush1.bf16.msra.mxu0 %v4270
        %7988 = vmatprep.subr.bf16.mxu0 %v4275
        %7989 = vmatpush1.bf16.msra.mxu0 %v4274
        %7990 = vmatprep.subr.bf16.mxu0 %v4279
        %7991 = vmatpush1.bf16.msra.mxu0 %v4278
        %7992 = vmatprep.subr.bf16.mxu0 %v4283
        %7993 = vmatpush1.bf16.msra.mxu0 %v4282
        %7994 = vmatprep.subr.bf16.mxu0 %v4287
        %7995 = vmatpush1.bf16.msra.mxu0 %v4286
        %7996 = vmatprep.subr.bf16.mxu0 %v4291
        %7997 = vmatpush1.bf16.msra.mxu0 %v4290
        %7998 = vmatprep.subr.bf16.mxu0 %v4295
        %7999 = vmatpush1.bf16.msra.mxu0 %v4294
        %8000 = vmatprep.subr.bf16.mxu0 %v4299
        %8001 = vmatpush1.bf16.msra.mxu0 %v4298
        %8002 = vmatprep.subr.bf16.mxu0 %v4303
        %8003 = vmatpush1.bf16.msra.mxu0 %v4302
        %8004 = vmatprep.subr.bf16.mxu0 %v4307
        %8005 = vmatpush1.bf16.msra.mxu0 %v4306
        %8006 = vmatprep.subr.bf16.mxu0 %v4311
        %8007 = vmatpush1.bf16.msra.mxu0 %v4310
        %8008 = vmatprep.subr.bf16.mxu0 %v4315
        %8009 = vmatpush1.bf16.msra.mxu0 %v4314
        %8010 = vmatprep.mubr.bf16.mxu0 %v1103
        %8011 = vmatmul.mubr.bf16.gmra.mrb[0].mxu0 %v1102
        %v8012 = vpop.f32.mrb[0].mxu0
        %v8013 = vadd.f32 %v7820, %v8012
        %v8014 = vpop.f32.mrb[0].mxu0
        %v8015 = vadd.f32 %v7822, %v8014
        %v8016 = vpop.f32.mrb[0].mxu0
        %v8017 = vadd.f32 %v7824, %v8016
        %v8018 = vpop.f32.mrb[0].mxu0
        %v8019 = vadd.f32 %v7826, %v8018
        %8020 = vmatprep.mubr.bf16.mxu0 %v1123
        %8021 = vmatmul.mubr.bf16.gmra.mrb[0].mxu0 %v1122
        %v8022 = vpop.f32.mrb[0].mxu0
        %v8023 = vadd.f32 %v7830, %v8022
        %v8024 = vpop.f32.mrb[0].mxu0
        %v8025 = vadd.f32 %v7832, %v8024
        %v8026 = vpop.f32.mrb[0].mxu0
        %v8027 = vadd.f32 %v7834, %v8026
        %v8028 = vpop.f32.mrb[0].mxu0
        %v8029 = vadd.f32 %v7836, %v8028
        %8030 = vmatprep.mubr.bf16.mxu0 %v1143
        %8031 = vmatmul.mubr.bf16.gmra.mrb[0].mxu0 %v1142
        %v8032 = vpop.f32.mrb[0].mxu0
        %v8033 = vadd.f32 %v7840, %v8032
        %v8034 = vpop.f32.mrb[0].mxu0
        %v8035 = vadd.f32 %v7842, %v8034
        %v8036 = vpop.f32.mrb[0].mxu0
        %v8037 = vadd.f32 %v7844, %v8036
        %v8038 = vpop.f32.mrb[0].mxu0
        %v8039 = vadd.f32 %v7846, %v8038
        %8040 = vmatprep.mubr.bf16.mxu0 %v1163
        %8041 = vmatmul.mubr.bf16.gmra.mrb[0].mxu0 %v1162
        %v8042 = vpop.f32.mrb[0].mxu0
        %v8043 = vadd.f32 %v7850, %v8042
        %v8044 = vpop.f32.mrb[0].mxu0
        %v8045 = vadd.f32 %v7852, %v8044
        %v8046 = vpop.f32.mrb[0].mxu0
        %v8047 = vadd.f32 %v7854, %v8046
        %v8048 = vpop.f32.mrb[0].mxu0
        %v8049 = vadd.f32 %v7856, %v8048
        %8050 = vmatprep.mubr.bf16.mxu0 %v1183
        %8051 = vmatmul.mubr.bf16.gmra.mrb[0].mxu0 %v1182
        %v8052 = vpop.f32.mrb[0].mxu0
        %v8053 = vadd.f32 %v7860, %v8052
        %v8054 = vpop.f32.mrb[0].mxu0
        %v8055 = vadd.f32 %v7862, %v8054
        %v8056 = vpop.f32.mrb[0].mxu0
        %v8057 = vadd.f32 %v7864, %v8056
        %v8058 = vpop.f32.mrb[0].mxu0
        %v8059 = vadd.f32 %v7866, %v8058
        %8060 = vmatprep.mubr.bf16.mxu0 %v1203
        %8061 = vmatmul.mubr.bf16.gmra.mrb[0].mxu0 %v1202
        %v8062 = vpop.f32.mrb[0].mxu0
        %v8063 = vadd.f32 %v7870, %v8062
        %v8064 = vpop.f32.mrb[0].mxu0
        %v8065 = vadd.f32 %v7872, %v8064
        %v8066 = vpop.f32.mrb[0].mxu0
        %v8067 = vadd.f32 %v7874, %v8066
        %v8068 = vpop.f32.mrb[0].mxu0
        %v8069 = vadd.f32 %v7876, %v8068
        %8070 = vmatprep.mubr.bf16.mxu0 %v1223
        %8071 = vmatmul.mubr.bf16.gmra.mrb[0].mxu0 %v1222
        %v8072 = vpop.f32.mrb[0].mxu0
        %v8073 = vadd.f32 %v7880, %v8072
        %v8074 = vpop.f32.mrb[0].mxu0
        %v8075 = vadd.f32 %v7882, %v8074
        %v8076 = vpop.f32.mrb[0].mxu0
        %v8077 = vadd.f32 %v7884, %v8076
        %v8078 = vpop.f32.mrb[0].mxu0
        %v8079 = vadd.f32 %v7886, %v8078
        %8080 = vmatprep.mubr.bf16.mxu0 %v1243
        %8081 = vmatmul.mubr.bf16.gmra.mrb[0].mxu0 %v1242
        %v8082 = vpop.f32.mrb[0].mxu0
        %v8083 = vadd.f32 %v7890, %v8082
        %v8084 = vpop.f32.mrb[0].mxu0
        %v8085 = vadd.f32 %v7892, %v8084
        %v8086 = vpop.f32.mrb[0].mxu0
        %v8087 = vadd.f32 %v7894, %v8086
        %v8088 = vpop.f32.mrb[0].mxu0
        %v8089 = vadd.f32 %v7896, %v8088
        %8090 = vmatprep.mubr.bf16.mxu0 %v1263
        %8091 = vmatmul.mubr.bf16.gmra.mrb[0].mxu0 %v1262
        %v8092 = vpop.f32.mrb[0].mxu0
        %v8093 = vadd.f32 %v7900, %v8092
        %v8094 = vpop.f32.mrb[0].mxu0
        %v8095 = vadd.f32 %v7902, %v8094
        %v8096 = vpop.f32.mrb[0].mxu0
        %v8097 = vadd.f32 %v7904, %v8096
        %v8098 = vpop.f32.mrb[0].mxu0
        %v8099 = vadd.f32 %v7906, %v8098
        %8100 = vmatprep.mubr.bf16.mxu0 %v1283
        %8101 = vmatmul.mubr.bf16.gmra.mrb[0].mxu0 %v1282
        %v8102 = vpop.f32.mrb[0].mxu0
        %v8103 = vadd.f32 %v7910, %v8102
        %v8104 = vpop.f32.mrb[0].mxu0
        %v8105 = vadd.f32 %v7912, %v8104
        %v8106 = vpop.f32.mrb[0].mxu0
        %v8107 = vadd.f32 %v7914, %v8106
        %v8108 = vpop.f32.mrb[0].mxu0
        %v8109 = vadd.f32 %v7916, %v8108
        %8110 = vmatprep.mubr.bf16.mxu0 %v1303
        %8111 = vmatmul.mubr.bf16.gmra.mrb[0].mxu0 %v1302
        %v8112 = vpop.f32.mrb[0].mxu0
        %v8113 = vadd.f32 %v7920, %v8112
        %v8114 = vpop.f32.mrb[0].mxu0
        %v8115 = vadd.f32 %v7922, %v8114
        %v8116 = vpop.f32.mrb[0].mxu0
        %v8117 = vadd.f32 %v7924, %v8116
        %v8118 = vpop.f32.mrb[0].mxu0
        %v8119 = vadd.f32 %v7926, %v8118
        %8120 = vmatprep.mubr.bf16.mxu0 %v1323
        %8121 = vmatmul.mubr.bf16.gmra.mrb[0].mxu0 %v1322
        %v8122 = vpop.f32.mrb[0].mxu0
        %v8123 = vadd.f32 %v7930, %v8122
        %v8124 = vpop.f32.mrb[0].mxu0
        %v8125 = vadd.f32 %v7932, %v8124
        %v8126 = vpop.f32.mrb[0].mxu0
        %v8127 = vadd.f32 %v7934, %v8126
        %v8128 = vpop.f32.mrb[0].mxu0
        %v8129 = vadd.f32 %v7936, %v8128
        %8130 = vmatprep.mubr.bf16.mxu0 %v1343
        %8131 = vmatmul.mubr.bf16.gmra.mrb[0].mxu0 %v1342
        %v8132 = vpop.f32.mrb[0].mxu0
        %v8133 = vadd.f32 %v7940, %v8132
        %v8134 = vpop.f32.mrb[0].mxu0
        %v8135 = vadd.f32 %v7942, %v8134
        %v8136 = vpop.f32.mrb[0].mxu0
        %v8137 = vadd.f32 %v7944, %v8136
        %v8138 = vpop.f32.mrb[0].mxu0
        %v8139 = vadd.f32 %v7946, %v8138
        %8140 = vmatprep.mubr.bf16.mxu0 %v1363
        %8141 = vmatmul.mubr.bf16.gmra.mrb[0].mxu0 %v1362
        %v8142 = vpop.f32.mrb[0].mxu0
        %v8143 = vadd.f32 %v7950, %v8142
        %v8144 = vpop.f32.mrb[0].mxu0
        %v8145 = vadd.f32 %v7952, %v8144
        %v8146 = vpop.f32.mrb[0].mxu0
        %v8147 = vadd.f32 %v7954, %v8146
        %v8148 = vpop.f32.mrb[0].mxu0
        %v8149 = vadd.f32 %v7956, %v8148
        %8150 = vmatprep.mubr.bf16.mxu0 %v1383
        %8151 = vmatmul.mubr.bf16.gmra.mrb[0].mxu0 %v1382
        %v8152 = vpop.f32.mrb[0].mxu0
        %v8153 = vadd.f32 %v7960, %v8152
        %v8154 = vpop.f32.mrb[0].mxu0
        %v8155 = vadd.f32 %v7962, %v8154
        %v8156 = vpop.f32.mrb[0].mxu0
        %v8157 = vadd.f32 %v7964, %v8156
        %v8158 = vpop.f32.mrb[0].mxu0
        %v8159 = vadd.f32 %v7966, %v8158
        %8160 = vmatprep.mubr.bf16.mxu0 %v1403
        %8161 = vmatmul.mubr.bf16.gmra.mrb[0].mxu0 %v1402
        %v8162 = vpop.f32.mrb[0].mxu0
        %v8163 = vadd.f32 %v7970, %v8162
        %v8164 = vpop.f32.mrb[0].mxu0
        %v8165 = vadd.f32 %v7972, %v8164
        %v8166 = vpop.f32.mrb[0].mxu0
        %v8167 = vadd.f32 %v7974, %v8166
        %v8168 = vpop.f32.mrb[0].mxu0
        %v8169 = vadd.f32 %v7976, %v8168
        %8170 = vdwg.mxu0
        %8171 = vmatprep.subr.bf16.mxu0 %v4319
        %8172 = vmatpush1.bf16.msra.mxu0 %v4318
        %8173 = vmatprep.subr.bf16.mxu0 %v4323
        %8174 = vmatpush1.bf16.msra.mxu0 %v4322
        %8175 = vmatprep.subr.bf16.mxu0 %v4327
        %8176 = vmatpush1.bf16.msra.mxu0 %v4326
        %8177 = vmatprep.subr.bf16.mxu0 %v4331
        %8178 = vmatpush1.bf16.msra.mxu0 %v4330
        %8179 = vmatprep.subr.bf16.mxu0 %v4335
        %8180 = vmatpush1.bf16.msra.mxu0 %v4334
        %8181 = vmatprep.subr.bf16.mxu0 %v4339
        %8182 = vmatpush1.bf16.msra.mxu0 %v4338
        %8183 = vmatprep.subr.bf16.mxu0 %v4343
        %8184 = vmatpush1.bf16.msra.mxu0 %v4342
        %8185 = vmatprep.subr.bf16.mxu0 %v4347
        %8186 = vmatpush1.bf16.msra.mxu0 %v4346
        %8187 = vmatprep.subr.bf16.mxu0 %v4351
        %8188 = vmatpush1.bf16.msra.mxu0 %v4350
        %8189 = vmatprep.subr.bf16.mxu0 %v4355
        %8190 = vmatpush1.bf16.msra.mxu0 %v4354
        %8191 = vmatprep.subr.bf16.mxu0 %v4359
        %8192 = vmatpush1.bf16.msra.mxu0 %v4358
        %8193 = vmatprep.subr.bf16.mxu0 %v4363
        %8194 = vmatpush1.bf16.msra.mxu0 %v4362
        %8195 = vmatprep.subr.bf16.mxu0 %v4367
        %8196 = vmatpush1.bf16.msra.mxu0 %v4366
        %8197 = vmatprep.subr.bf16.mxu0 %v4371
        %8198 = vmatpush1.bf16.msra.mxu0 %v4370
        %8199 = vmatprep.subr.bf16.mxu0 %v4375
        %8200 = vmatpush1.bf16.msra.mxu0 %v4374
        %8201 = vmatprep.subr.bf16.mxu0 %v4379
        %8202 = vmatpush1.bf16.msra.mxu0 %v4378
        %8203 = vmatprep.mubr.bf16.mxu0 %v1105
        %8204 = vmatmul.mubr.bf16.gmra.mrb[0].mxu0 %v1104
        %v8205 = vpop.f32.mrb[0].mxu0
        %v8206 = vadd.f32 %v8013, %v8205
        %v8207 = vpop.f32.mrb[0].mxu0
        %v8208 = vadd.f32 %v8015, %v8207
        %v8209 = vpop.f32.mrb[0].mxu0
        %v8210 = vadd.f32 %v8017, %v8209
        %v8211 = vpop.f32.mrb[0].mxu0
        %v8212 = vadd.f32 %v8019, %v8211
        %8213 = vmatprep.mubr.bf16.mxu0 %v1125
        %8214 = vmatmul.mubr.bf16.gmra.mrb[0].mxu0 %v1124
        %v8215 = vpop.f32.mrb[0].mxu0
        %v8216 = vadd.f32 %v8023, %v8215
        %v8217 = vpop.f32.mrb[0].mxu0
        %v8218 = vadd.f32 %v8025, %v8217
        %v8219 = vpop.f32.mrb[0].mxu0
        %v8220 = vadd.f32 %v8027, %v8219
        %v8221 = vpop.f32.mrb[0].mxu0
        %v8222 = vadd.f32 %v8029, %v8221
        %8223 = vmatprep.mubr.bf16.mxu0 %v1145
        %8224 = vmatmul.mubr.bf16.gmra.mrb[0].mxu0 %v1144
        %v8225 = vpop.f32.mrb[0].mxu0
        %v8226 = vadd.f32 %v8033, %v8225
        %v8227 = vpop.f32.mrb[0].mxu0
        %v8228 = vadd.f32 %v8035, %v8227
        %v8229 = vpop.f32.mrb[0].mxu0
        %v8230 = vadd.f32 %v8037, %v8229
        %v8231 = vpop.f32.mrb[0].mxu0
        %v8232 = vadd.f32 %v8039, %v8231
        %8233 = vmatprep.mubr.bf16.mxu0 %v1165
        %8234 = vmatmul.mubr.bf16.gmra.mrb[0].mxu0 %v1164
        %v8235 = vpop.f32.mrb[0].mxu0
        %v8236 = vadd.f32 %v8043, %v8235
        %v8237 = vpop.f32.mrb[0].mxu0
        %v8238 = vadd.f32 %v8045, %v8237
        %v8239 = vpop.f32.mrb[0].mxu0
        %v8240 = vadd.f32 %v8047, %v8239
        %v8241 = vpop.f32.mrb[0].mxu0
        %v8242 = vadd.f32 %v8049, %v8241
        %8243 = vmatprep.mubr.bf16.mxu0 %v1185
        %8244 = vmatmul.mubr.bf16.gmra.mrb[0].mxu0 %v1184
        %v8245 = vpop.f32.mrb[0].mxu0
        %v8246 = vadd.f32 %v8053, %v8245
        %v8247 = vpop.f32.mrb[0].mxu0
        %v8248 = vadd.f32 %v8055, %v8247
        %v8249 = vpop.f32.mrb[0].mxu0
        %v8250 = vadd.f32 %v8057, %v8249
        %v8251 = vpop.f32.mrb[0].mxu0
        %v8252 = vadd.f32 %v8059, %v8251
        %8253 = vmatprep.mubr.bf16.mxu0 %v1205
        %8254 = vmatmul.mubr.bf16.gmra.mrb[0].mxu0 %v1204
        %v8255 = vpop.f32.mrb[0].mxu0
        %v8256 = vadd.f32 %v8063, %v8255
        %v8257 = vpop.f32.mrb[0].mxu0
        %v8258 = vadd.f32 %v8065, %v8257
        %v8259 = vpop.f32.mrb[0].mxu0
        %v8260 = vadd.f32 %v8067, %v8259
        %v8261 = vpop.f32.mrb[0].mxu0
        %v8262 = vadd.f32 %v8069, %v8261
        %8263 = vmatprep.mubr.bf16.mxu0 %v1225
        %8264 = vmatmul.mubr.bf16.gmra.mrb[0].mxu0 %v1224
        %v8265 = vpop.f32.mrb[0].mxu0
        %v8266 = vadd.f32 %v8073, %v8265
        %v8267 = vpop.f32.mrb[0].mxu0
        %v8268 = vadd.f32 %v8075, %v8267
        %v8269 = vpop.f32.mrb[0].mxu0
        %v8270 = vadd.f32 %v8077, %v8269
        %v8271 = vpop.f32.mrb[0].mxu0
        %v8272 = vadd.f32 %v8079, %v8271
        %8273 = vmatprep.mubr.bf16.mxu0 %v1245
        %8274 = vmatmul.mubr.bf16.gmra.mrb[0].mxu0 %v1244
        %v8275 = vpop.f32.mrb[0].mxu0
        %v8276 = vadd.f32 %v8083, %v8275
        %v8277 = vpop.f32.mrb[0].mxu0
        %v8278 = vadd.f32 %v8085, %v8277
        %v8279 = vpop.f32.mrb[0].mxu0
        %v8280 = vadd.f32 %v8087, %v8279
        %v8281 = vpop.f32.mrb[0].mxu0
        %v8282 = vadd.f32 %v8089, %v8281
        %8283 = vmatprep.mubr.bf16.mxu0 %v1265
        %8284 = vmatmul.mubr.bf16.gmra.mrb[0].mxu0 %v1264
        %v8285 = vpop.f32.mrb[0].mxu0
        %v8286 = vadd.f32 %v8093, %v8285
        %v8287 = vpop.f32.mrb[0].mxu0
        %v8288 = vadd.f32 %v8095, %v8287
        %v8289 = vpop.f32.mrb[0].mxu0
        %v8290 = vadd.f32 %v8097, %v8289
        %v8291 = vpop.f32.mrb[0].mxu0
        %v8292 = vadd.f32 %v8099, %v8291
        %8293 = vmatprep.mubr.bf16.mxu0 %v1285
        %8294 = vmatmul.mubr.bf16.gmra.mrb[0].mxu0 %v1284
        %v8295 = vpop.f32.mrb[0].mxu0
        %v8296 = vadd.f32 %v8103, %v8295
        %v8297 = vpop.f32.mrb[0].mxu0
        %v8298 = vadd.f32 %v8105, %v8297
        %v8299 = vpop.f32.mrb[0].mxu0
        %v8300 = vadd.f32 %v8107, %v8299
        %v8301 = vpop.f32.mrb[0].mxu0
        %v8302 = vadd.f32 %v8109, %v8301
        %8303 = vmatprep.mubr.bf16.mxu0 %v1305
        %8304 = vmatmul.mubr.bf16.gmra.mrb[0].mxu0 %v1304
        %v8305 = vpop.f32.mrb[0].mxu0
        %v8306 = vadd.f32 %v8113, %v8305
        %v8307 = vpop.f32.mrb[0].mxu0
        %v8308 = vadd.f32 %v8115, %v8307
        %v8309 = vpop.f32.mrb[0].mxu0
        %v8310 = vadd.f32 %v8117, %v8309
        %v8311 = vpop.f32.mrb[0].mxu0
        %v8312 = vadd.f32 %v8119, %v8311
        %8313 = vmatprep.mubr.bf16.mxu0 %v1325
        %8314 = vmatmul.mubr.bf16.gmra.mrb[0].mxu0 %v1324
        %v8315 = vpop.f32.mrb[0].mxu0
        %v8316 = vadd.f32 %v8123, %v8315
        %v8317 = vpop.f32.mrb[0].mxu0
        %v8318 = vadd.f32 %v8125, %v8317
        %v8319 = vpop.f32.mrb[0].mxu0
        %v8320 = vadd.f32 %v8127, %v8319
        %v8321 = vpop.f32.mrb[0].mxu0
        %v8322 = vadd.f32 %v8129, %v8321
        %8323 = vmatprep.mubr.bf16.mxu0 %v1345
        %8324 = vmatmul.mubr.bf16.gmra.mrb[0].mxu0 %v1344
        %v8325 = vpop.f32.mrb[0].mxu0
        %v8326 = vadd.f32 %v8133, %v8325
        %v8327 = vpop.f32.mrb[0].mxu0
        %v8328 = vadd.f32 %v8135, %v8327
        %v8329 = vpop.f32.mrb[0].mxu0
        %v8330 = vadd.f32 %v8137, %v8329
        %v8331 = vpop.f32.mrb[0].mxu0
        %v8332 = vadd.f32 %v8139, %v8331
        %8333 = vmatprep.mubr.bf16.mxu0 %v1365
        %8334 = vmatmul.mubr.bf16.gmra.mrb[0].mxu0 %v1364
        %v8335 = vpop.f32.mrb[0].mxu0
        %v8336 = vadd.f32 %v8143, %v8335
        %v8337 = vpop.f32.mrb[0].mxu0
        %v8338 = vadd.f32 %v8145, %v8337
        %v8339 = vpop.f32.mrb[0].mxu0
        %v8340 = vadd.f32 %v8147, %v8339
        %v8341 = vpop.f32.mrb[0].mxu0
        %v8342 = vadd.f32 %v8149, %v8341
        %8343 = vmatprep.mubr.bf16.mxu0 %v1385
        %8344 = vmatmul.mubr.bf16.gmra.mrb[0].mxu0 %v1384
        %v8345 = vpop.f32.mrb[0].mxu0
        %v8346 = vadd.f32 %v8153, %v8345
        %v8347 = vpop.f32.mrb[0].mxu0
        %v8348 = vadd.f32 %v8155, %v8347
        %v8349 = vpop.f32.mrb[0].mxu0
        %v8350 = vadd.f32 %v8157, %v8349
        %v8351 = vpop.f32.mrb[0].mxu0
        %v8352 = vadd.f32 %v8159, %v8351
        %8353 = vmatprep.mubr.bf16.mxu0 %v1405
        %8354 = vmatmul.mubr.bf16.gmra.mrb[0].mxu0 %v1404
        %v8355 = vpop.f32.mrb[0].mxu0
        %v8356 = vadd.f32 %v8163, %v8355
        %v8357 = vpop.f32.mrb[0].mxu0
        %v8358 = vadd.f32 %v8165, %v8357
        %v8359 = vpop.f32.mrb[0].mxu0
        %v8360 = vadd.f32 %v8167, %v8359
        %v8361 = vpop.f32.mrb[0].mxu0
        %v8362 = vadd.f32 %v8169, %v8361
        %8363 = vdwg.mxu0
        %8364 = vmatprep.subr.bf16.mxu0 %v4383
        %8365 = vmatpush1.bf16.msra.mxu0 %v4382
        %8366 = vmatprep.subr.bf16.mxu0 %v4387
        %8367 = vmatpush1.bf16.msra.mxu0 %v4386
        %8368 = vmatprep.subr.bf16.mxu0 %v4391
        %8369 = vmatpush1.bf16.msra.mxu0 %v4390
        %8370 = vmatprep.subr.bf16.mxu0 %v4395
        %8371 = vmatpush1.bf16.msra.mxu0 %v4394
        %8372 = vmatprep.subr.bf16.mxu0 %v4399
        %8373 = vmatpush1.bf16.msra.mxu0 %v4398
        %8374 = vmatprep.subr.bf16.mxu0 %v4403
        %8375 = vmatpush1.bf16.msra.mxu0 %v4402
        %8376 = vmatprep.subr.bf16.mxu0 %v4407
        %8377 = vmatpush1.bf16.msra.mxu0 %v4406
        %8378 = vmatprep.subr.bf16.mxu0 %v4411
        %8379 = vmatpush1.bf16.msra.mxu0 %v4410
        %8380 = vmatprep.subr.bf16.mxu0 %v4415
        %8381 = vmatpush1.bf16.msra.mxu0 %v4414
        %8382 = vmatprep.subr.bf16.mxu0 %v4419
        %8383 = vmatpush1.bf16.msra.mxu0 %v4418
        %8384 = vmatprep.subr.bf16.mxu0 %v4423
        %8385 = vmatpush1.bf16.msra.mxu0 %v4422
        %8386 = vmatprep.subr.bf16.mxu0 %v4427
        %8387 = vmatpush1.bf16.msra.mxu0 %v4426
        %8388 = vmatprep.subr.bf16.mxu0 %v4431
        %8389 = vmatpush1.bf16.msra.mxu0 %v4430
        %8390 = vmatprep.subr.bf16.mxu0 %v4435
        %8391 = vmatpush1.bf16.msra.mxu0 %v4434
        %8392 = vmatprep.subr.bf16.mxu0 %v4439
        %8393 = vmatpush1.bf16.msra.mxu0 %v4438
        %8394 = vmatprep.subr.bf16.mxu0 %v4443
        %8395 = vmatpush1.bf16.msra.mxu0 %v4442
        %8396 = vmatprep.mubr.bf16.mxu0 %v1107
        %8397 = vmatmul.mubr.bf16.gmra.mrb[0].mxu0 %v1106
        %v8398 = vpop.f32.mrb[0].mxu0
        %v8399 = vadd.f32 %v8206, %v8398
        %v8400 = vpop.f32.mrb[0].mxu0
        %v8401 = vadd.f32 %v8208, %v8400
        %v8402 = vpop.f32.mrb[0].mxu0
        %v8403 = vadd.f32 %v8210, %v8402
        %v8404 = vpop.f32.mrb[0].mxu0
        %v8405 = vadd.f32 %v8212, %v8404
        %8406 = vmatprep.mubr.bf16.mxu0 %v1127
        %8407 = vmatmul.mubr.bf16.gmra.mrb[0].mxu0 %v1126
        %v8408 = vpop.f32.mrb[0].mxu0
        %v8409 = vadd.f32 %v8216, %v8408
        %v8410 = vpop.f32.mrb[0].mxu0
        %v8411 = vadd.f32 %v8218, %v8410
        %v8412 = vpop.f32.mrb[0].mxu0
        %v8413 = vadd.f32 %v8220, %v8412
        %v8414 = vpop.f32.mrb[0].mxu0
        %v8415 = vadd.f32 %v8222, %v8414
        %8416 = vmatprep.mubr.bf16.mxu0 %v1147
        %8417 = vmatmul.mubr.bf16.gmra.mrb[0].mxu0 %v1146
        %v8418 = vpop.f32.mrb[0].mxu0
        %v8419 = vadd.f32 %v8226, %v8418
        %v8420 = vpop.f32.mrb[0].mxu0
        %v8421 = vadd.f32 %v8228, %v8420
        %v8422 = vpop.f32.mrb[0].mxu0
        %v8423 = vadd.f32 %v8230, %v8422
        %v8424 = vpop.f32.mrb[0].mxu0
        %v8425 = vadd.f32 %v8232, %v8424
        %8426 = vmatprep.mubr.bf16.mxu0 %v1167
        %8427 = vmatmul.mubr.bf16.gmra.mrb[0].mxu0 %v1166
        %v8428 = vpop.f32.mrb[0].mxu0
        %v8429 = vadd.f32 %v8236, %v8428
        %v8430 = vpop.f32.mrb[0].mxu0
        %v8431 = vadd.f32 %v8238, %v8430
        %v8432 = vpop.f32.mrb[0].mxu0
        %v8433 = vadd.f32 %v8240, %v8432
        %v8434 = vpop.f32.mrb[0].mxu0
        %v8435 = vadd.f32 %v8242, %v8434
        %8436 = vmatprep.mubr.bf16.mxu0 %v1187
        %8437 = vmatmul.mubr.bf16.gmra.mrb[0].mxu0 %v1186
        %v8438 = vpop.f32.mrb[0].mxu0
        %v8439 = vadd.f32 %v8246, %v8438
        %v8440 = vpop.f32.mrb[0].mxu0
        %v8441 = vadd.f32 %v8248, %v8440
        %v8442 = vpop.f32.mrb[0].mxu0
        %v8443 = vadd.f32 %v8250, %v8442
        %v8444 = vpop.f32.mrb[0].mxu0
        %v8445 = vadd.f32 %v8252, %v8444
        %8446 = vmatprep.mubr.bf16.mxu0 %v1207
        %8447 = vmatmul.mubr.bf16.gmra.mrb[0].mxu0 %v1206
        %v8448 = vpop.f32.mrb[0].mxu0
        %v8449 = vadd.f32 %v8256, %v8448
        %v8450 = vpop.f32.mrb[0].mxu0
        %v8451 = vadd.f32 %v8258, %v8450
        %v8452 = vpop.f32.mrb[0].mxu0
        %v8453 = vadd.f32 %v8260, %v8452
        %v8454 = vpop.f32.mrb[0].mxu0
        %v8455 = vadd.f32 %v8262, %v8454
        %8456 = vmatprep.mubr.bf16.mxu0 %v1227
        %8457 = vmatmul.mubr.bf16.gmra.mrb[0].mxu0 %v1226
        %v8458 = vpop.f32.mrb[0].mxu0
        %v8459 = vadd.f32 %v8266, %v8458
        %v8460 = vpop.f32.mrb[0].mxu0
        %v8461 = vadd.f32 %v8268, %v8460
        %v8462 = vpop.f32.mrb[0].mxu0
        %v8463 = vadd.f32 %v8270, %v8462
        %v8464 = vpop.f32.mrb[0].mxu0
        %v8465 = vadd.f32 %v8272, %v8464
        %8466 = vmatprep.mubr.bf16.mxu0 %v1247
        %8467 = vmatmul.mubr.bf16.gmra.mrb[0].mxu0 %v1246
        %v8468 = vpop.f32.mrb[0].mxu0
        %v8469 = vadd.f32 %v8276, %v8468
        %v8470 = vpop.f32.mrb[0].mxu0
        %v8471 = vadd.f32 %v8278, %v8470
        %v8472 = vpop.f32.mrb[0].mxu0
        %v8473 = vadd.f32 %v8280, %v8472
        %v8474 = vpop.f32.mrb[0].mxu0
        %v8475 = vadd.f32 %v8282, %v8474
        %8476 = vmatprep.mubr.bf16.mxu0 %v1267
        %8477 = vmatmul.mubr.bf16.gmra.mrb[0].mxu0 %v1266
        %v8478 = vpop.f32.mrb[0].mxu0
        %v8479 = vadd.f32 %v8286, %v8478
        %v8480 = vpop.f32.mrb[0].mxu0
        %v8481 = vadd.f32 %v8288, %v8480
        %v8482 = vpop.f32.mrb[0].mxu0
        %v8483 = vadd.f32 %v8290, %v8482
        %v8484 = vpop.f32.mrb[0].mxu0
        %v8485 = vadd.f32 %v8292, %v8484
        %8486 = vmatprep.mubr.bf16.mxu0 %v1287
        %8487 = vmatmul.mubr.bf16.gmra.mrb[0].mxu0 %v1286
        %v8488 = vpop.f32.mrb[0].mxu0
        %v8489 = vadd.f32 %v8296, %v8488
        %v8490 = vpop.f32.mrb[0].mxu0
        %v8491 = vadd.f32 %v8298, %v8490
        %v8492 = vpop.f32.mrb[0].mxu0
        %v8493 = vadd.f32 %v8300, %v8492
        %v8494 = vpop.f32.mrb[0].mxu0
        %v8495 = vadd.f32 %v8302, %v8494
        %8496 = vmatprep.mubr.bf16.mxu0 %v1307
        %8497 = vmatmul.mubr.bf16.gmra.mrb[0].mxu0 %v1306
        %v8498 = vpop.f32.mrb[0].mxu0
        %v8499 = vadd.f32 %v8306, %v8498
        %v8500 = vpop.f32.mrb[0].mxu0
        %v8501 = vadd.f32 %v8308, %v8500
        %v8502 = vpop.f32.mrb[0].mxu0
        %v8503 = vadd.f32 %v8310, %v8502
        %v8504 = vpop.f32.mrb[0].mxu0
        %v8505 = vadd.f32 %v8312, %v8504
        %8506 = vmatprep.mubr.bf16.mxu0 %v1327
        %8507 = vmatmul.mubr.bf16.gmra.mrb[0].mxu0 %v1326
        %v8508 = vpop.f32.mrb[0].mxu0
        %v8509 = vadd.f32 %v8316, %v8508
        %v8510 = vpop.f32.mrb[0].mxu0
        %v8511 = vadd.f32 %v8318, %v8510
        %v8512 = vpop.f32.mrb[0].mxu0
        %v8513 = vadd.f32 %v8320, %v8512
        %v8514 = vpop.f32.mrb[0].mxu0
        %v8515 = vadd.f32 %v8322, %v8514
        %8516 = vmatprep.mubr.bf16.mxu0 %v1347
        %8517 = vmatmul.mubr.bf16.gmra.mrb[0].mxu0 %v1346
        %v8518 = vpop.f32.mrb[0].mxu0
        %v8519 = vadd.f32 %v8326, %v8518
        %v8520 = vpop.f32.mrb[0].mxu0
        %v8521 = vadd.f32 %v8328, %v8520
        %v8522 = vpop.f32.mrb[0].mxu0
        %v8523 = vadd.f32 %v8330, %v8522
        %v8524 = vpop.f32.mrb[0].mxu0
        %v8525 = vadd.f32 %v8332, %v8524
        %8526 = vmatprep.mubr.bf16.mxu0 %v1367
        %8527 = vmatmul.mubr.bf16.gmra.mrb[0].mxu0 %v1366
        %v8528 = vpop.f32.mrb[0].mxu0
        %v8529 = vadd.f32 %v8336, %v8528
        %v8530 = vpop.f32.mrb[0].mxu0
        %v8531 = vadd.f32 %v8338, %v8530
        %v8532 = vpop.f32.mrb[0].mxu0
        %v8533 = vadd.f32 %v8340, %v8532
        %v8534 = vpop.f32.mrb[0].mxu0
        %v8535 = vadd.f32 %v8342, %v8534
        %8536 = vmatprep.mubr.bf16.mxu0 %v1387
        %8537 = vmatmul.mubr.bf16.gmra.mrb[0].mxu0 %v1386
        %v8538 = vpop.f32.mrb[0].mxu0
        %v8539 = vadd.f32 %v8346, %v8538
        %v8540 = vpop.f32.mrb[0].mxu0
        %v8541 = vadd.f32 %v8348, %v8540
        %v8542 = vpop.f32.mrb[0].mxu0
        %v8543 = vadd.f32 %v8350, %v8542
        %v8544 = vpop.f32.mrb[0].mxu0
        %v8545 = vadd.f32 %v8352, %v8544
        %8546 = vmatprep.mubr.bf16.mxu0 %v1407
        %8547 = vmatmul.mubr.bf16.gmra.mrb[0].mxu0 %v1406
        %v8548 = vpop.f32.mrb[0].mxu0
        %v8549 = vadd.f32 %v8356, %v8548
        %v8550 = vpop.f32.mrb[0].mxu0
        %v8551 = vadd.f32 %v8358, %v8550
        %v8552 = vpop.f32.mrb[0].mxu0
        %v8553 = vadd.f32 %v8360, %v8552
        %v8554 = vpop.f32.mrb[0].mxu0
        %v8555 = vadd.f32 %v8362, %v8554
        %8556 = vdwg.mxu0
        %8557 = vmatprep.subr.bf16.mxu0 %v4447
        %8558 = vmatpush1.bf16.msra.mxu0 %v4446
        %8559 = vmatprep.subr.bf16.mxu0 %v4451
        %8560 = vmatpush1.bf16.msra.mxu0 %v4450
        %8561 = vmatprep.subr.bf16.mxu0 %v4455
        %8562 = vmatpush1.bf16.msra.mxu0 %v4454
        %8563 = vmatprep.subr.bf16.mxu0 %v4459
        %8564 = vmatpush1.bf16.msra.mxu0 %v4458
        %8565 = vmatprep.subr.bf16.mxu0 %v4463
        %8566 = vmatpush1.bf16.msra.mxu0 %v4462
        %8567 = vmatprep.subr.bf16.mxu0 %v4467
        %8568 = vmatpush1.bf16.msra.mxu0 %v4466
        %8569 = vmatprep.subr.bf16.mxu0 %v4471
        %8570 = vmatpush1.bf16.msra.mxu0 %v4470
        %8571 = vmatprep.subr.bf16.mxu0 %v4475
        %8572 = vmatpush1.bf16.msra.mxu0 %v4474
        %8573 = vmatprep.subr.bf16.mxu0 %v4479
        %8574 = vmatpush1.bf16.msra.mxu0 %v4478
        %8575 = vmatprep.subr.bf16.mxu0 %v4483
        %8576 = vmatpush1.bf16.msra.mxu0 %v4482
        %8577 = vmatprep.subr.bf16.mxu0 %v4487
        %8578 = vmatpush1.bf16.msra.mxu0 %v4486
        %8579 = vmatprep.subr.bf16.mxu0 %v4491
        %8580 = vmatpush1.bf16.msra.mxu0 %v4490
        %8581 = vmatprep.subr.bf16.mxu0 %v4495
        %8582 = vmatpush1.bf16.msra.mxu0 %v4494
        %8583 = vmatprep.subr.bf16.mxu0 %v4499
        %8584 = vmatpush1.bf16.msra.mxu0 %v4498
        %8585 = vmatprep.subr.bf16.mxu0 %v4503
        %8586 = vmatpush1.bf16.msra.mxu0 %v4502
        %8587 = vmatprep.subr.bf16.mxu0 %v4507
        %8588 = vmatpush1.bf16.msra.mxu0 %v4506
        %8589 = vmatprep.mubr.bf16.mxu0 %v1109
        %8590 = vmatmul.mubr.bf16.gmra.mrb[0].mxu0 %v1108
        %v8591 = vpop.f32.mrb[0].mxu0
        %v8592 = vadd.f32 %v8399, %v8591
        %v8593 = vpop.f32.mrb[0].mxu0
        %v8594 = vadd.f32 %v8401, %v8593
        %v8595 = vpop.f32.mrb[0].mxu0
        %v8596 = vadd.f32 %v8403, %v8595
        %v8597 = vpop.f32.mrb[0].mxu0
        %v8598 = vadd.f32 %v8405, %v8597
        %8599 = vmatprep.mubr.bf16.mxu0 %v1129
        %8600 = vmatmul.mubr.bf16.gmra.mrb[0].mxu0 %v1128
        %v8601 = vpop.f32.mrb[0].mxu0
        %v8602 = vadd.f32 %v8409, %v8601
        %v8603 = vpop.f32.mrb[0].mxu0
        %v8604 = vadd.f32 %v8411, %v8603
        %v8605 = vpop.f32.mrb[0].mxu0
        %v8606 = vadd.f32 %v8413, %v8605
        %v8607 = vpop.f32.mrb[0].mxu0
        %v8608 = vadd.f32 %v8415, %v8607
        %8609 = vmatprep.mubr.bf16.mxu0 %v1149
        %8610 = vmatmul.mubr.bf16.gmra.mrb[0].mxu0 %v1148
        %v8611 = vpop.f32.mrb[0].mxu0
        %v8612 = vadd.f32 %v8419, %v8611
        %v8613 = vpop.f32.mrb[0].mxu0
        %v8614 = vadd.f32 %v8421, %v8613
        %v8615 = vpop.f32.mrb[0].mxu0
        %v8616 = vadd.f32 %v8423, %v8615
        %v8617 = vpop.f32.mrb[0].mxu0
        %v8618 = vadd.f32 %v8425, %v8617
        %8619 = vmatprep.mubr.bf16.mxu0 %v1169
        %8620 = vmatmul.mubr.bf16.gmra.mrb[0].mxu0 %v1168
        %v8621 = vpop.f32.mrb[0].mxu0
        %v8622 = vadd.f32 %v8429, %v8621
        %v8623 = vpop.f32.mrb[0].mxu0
        %v8624 = vadd.f32 %v8431, %v8623
        %v8625 = vpop.f32.mrb[0].mxu0
        %v8626 = vadd.f32 %v8433, %v8625
        %v8627 = vpop.f32.mrb[0].mxu0
        %v8628 = vadd.f32 %v8435, %v8627
        %8629 = vmatprep.mubr.bf16.mxu0 %v1189
        %8630 = vmatmul.mubr.bf16.gmra.mrb[0].mxu0 %v1188
        %v8631 = vpop.f32.mrb[0].mxu0
        %v8632 = vadd.f32 %v8439, %v8631
        %v8633 = vpop.f32.mrb[0].mxu0
        %v8634 = vadd.f32 %v8441, %v8633
        %v8635 = vpop.f32.mrb[0].mxu0
        %v8636 = vadd.f32 %v8443, %v8635
        %v8637 = vpop.f32.mrb[0].mxu0
        %v8638 = vadd.f32 %v8445, %v8637
        %8639 = vmatprep.mubr.bf16.mxu0 %v1209
        %8640 = vmatmul.mubr.bf16.gmra.mrb[0].mxu0 %v1208
        %v8641 = vpop.f32.mrb[0].mxu0
        %v8642 = vadd.f32 %v8449, %v8641
        %v8643 = vpop.f32.mrb[0].mxu0
        %v8644 = vadd.f32 %v8451, %v8643
        %v8645 = vpop.f32.mrb[0].mxu0
        %v8646 = vadd.f32 %v8453, %v8645
        %v8647 = vpop.f32.mrb[0].mxu0
        %v8648 = vadd.f32 %v8455, %v8647
        %8649 = vmatprep.mubr.bf16.mxu0 %v1229
        %8650 = vmatmul.mubr.bf16.gmra.mrb[0].mxu0 %v1228
        %v8651 = vpop.f32.mrb[0].mxu0
        %v8652 = vadd.f32 %v8459, %v8651
        %v8653 = vpop.f32.mrb[0].mxu0
        %v8654 = vadd.f32 %v8461, %v8653
        %v8655 = vpop.f32.mrb[0].mxu0
        %v8656 = vadd.f32 %v8463, %v8655
        %v8657 = vpop.f32.mrb[0].mxu0
        %v8658 = vadd.f32 %v8465, %v8657
        %8659 = vmatprep.mubr.bf16.mxu0 %v1249
        %8660 = vmatmul.mubr.bf16.gmra.mrb[0].mxu0 %v1248
        %v8661 = vpop.f32.mrb[0].mxu0
        %v8662 = vadd.f32 %v8469, %v8661
        %v8663 = vpop.f32.mrb[0].mxu0
        %v8664 = vadd.f32 %v8471, %v8663
        %v8665 = vpop.f32.mrb[0].mxu0
        %v8666 = vadd.f32 %v8473, %v8665
        %v8667 = vpop.f32.mrb[0].mxu0
        %v8668 = vadd.f32 %v8475, %v8667
        %8669 = vmatprep.mubr.bf16.mxu0 %v1269
        %8670 = vmatmul.mubr.bf16.gmra.mrb[0].mxu0 %v1268
        %v8671 = vpop.f32.mrb[0].mxu0
        %v8672 = vadd.f32 %v8479, %v8671
        %v8673 = vpop.f32.mrb[0].mxu0
        %v8674 = vadd.f32 %v8481, %v8673
        %v8675 = vpop.f32.mrb[0].mxu0
        %v8676 = vadd.f32 %v8483, %v8675
        %v8677 = vpop.f32.mrb[0].mxu0
        %v8678 = vadd.f32 %v8485, %v8677
        %8679 = vmatprep.mubr.bf16.mxu0 %v1289
        %8680 = vmatmul.mubr.bf16.gmra.mrb[0].mxu0 %v1288
        %v8681 = vpop.f32.mrb[0].mxu0
        %v8682 = vadd.f32 %v8489, %v8681
        %v8683 = vpop.f32.mrb[0].mxu0
        %v8684 = vadd.f32 %v8491, %v8683
        %v8685 = vpop.f32.mrb[0].mxu0
        %v8686 = vadd.f32 %v8493, %v8685
        %v8687 = vpop.f32.mrb[0].mxu0
        %v8688 = vadd.f32 %v8495, %v8687
        %8689 = vmatprep.mubr.bf16.mxu0 %v1309
        %8690 = vmatmul.mubr.bf16.gmra.mrb[0].mxu0 %v1308
        %v8691 = vpop.f32.mrb[0].mxu0
        %v8692 = vadd.f32 %v8499, %v8691
        %v8693 = vpop.f32.mrb[0].mxu0
        %v8694 = vadd.f32 %v8501, %v8693
        %v8695 = vpop.f32.mrb[0].mxu0
        %v8696 = vadd.f32 %v8503, %v8695
        %v8697 = vpop.f32.mrb[0].mxu0
        %v8698 = vadd.f32 %v8505, %v8697
        %8699 = vmatprep.mubr.bf16.mxu0 %v1329
        %8700 = vmatmul.mubr.bf16.gmra.mrb[0].mxu0 %v1328
        %v8701 = vpop.f32.mrb[0].mxu0
        %v8702 = vadd.f32 %v8509, %v8701
        %v8703 = vpop.f32.mrb[0].mxu0
        %v8704 = vadd.f32 %v8511, %v8703
        %v8705 = vpop.f32.mrb[0].mxu0
        %v8706 = vadd.f32 %v8513, %v8705
        %v8707 = vpop.f32.mrb[0].mxu0
        %v8708 = vadd.f32 %v8515, %v8707
        %8709 = vmatprep.mubr.bf16.mxu0 %v1349
        %8710 = vmatmul.mubr.bf16.gmra.mrb[0].mxu0 %v1348
        %v8711 = vpop.f32.mrb[0].mxu0
        %v8712 = vadd.f32 %v8519, %v8711
        %v8713 = vpop.f32.mrb[0].mxu0
        %v8714 = vadd.f32 %v8521, %v8713
        %v8715 = vpop.f32.mrb[0].mxu0
        %v8716 = vadd.f32 %v8523, %v8715
        %v8717 = vpop.f32.mrb[0].mxu0
        %v8718 = vadd.f32 %v8525, %v8717
        %8719 = vmatprep.mubr.bf16.mxu0 %v1369
        %8720 = vmatmul.mubr.bf16.gmra.mrb[0].mxu0 %v1368
        %v8721 = vpop.f32.mrb[0].mxu0
        %v8722 = vadd.f32 %v8529, %v8721
        %v8723 = vpop.f32.mrb[0].mxu0
        %v8724 = vadd.f32 %v8531, %v8723
        %v8725 = vpop.f32.mrb[0].mxu0
        %v8726 = vadd.f32 %v8533, %v8725
        %v8727 = vpop.f32.mrb[0].mxu0
        %v8728 = vadd.f32 %v8535, %v8727
        %8729 = vmatprep.mubr.bf16.mxu0 %v1389
        %8730 = vmatmul.mubr.bf16.gmra.mrb[0].mxu0 %v1388
        %v8731 = vpop.f32.mrb[0].mxu0
        %v8732 = vadd.f32 %v8539, %v8731
        %v8733 = vpop.f32.mrb[0].mxu0
        %v8734 = vadd.f32 %v8541, %v8733
        %v8735 = vpop.f32.mrb[0].mxu0
        %v8736 = vadd.f32 %v8543, %v8735
        %v8737 = vpop.f32.mrb[0].mxu0
        %v8738 = vadd.f32 %v8545, %v8737
        %8739 = vmatprep.mubr.bf16.mxu0 %v1409
        %8740 = vmatmul.mubr.bf16.gmra.mrb[0].mxu0 %v1408
        %v8741 = vpop.f32.mrb[0].mxu0
        %v8742 = vadd.f32 %v8549, %v8741
        %v8743 = vpop.f32.mrb[0].mxu0
        %v8744 = vadd.f32 %v8551, %v8743
        %v8745 = vpop.f32.mrb[0].mxu0
        %v8746 = vadd.f32 %v8553, %v8745
        %v8747 = vpop.f32.mrb[0].mxu0
        %v8748 = vadd.f32 %v8555, %v8747
        %8749 = vdwg.mxu0
        %8750 = vmatprep.subr.bf16.mxu0 %v4511
        %8751 = vmatpush1.bf16.msra.mxu0 %v4510
        %8752 = vmatprep.subr.bf16.mxu0 %v4515
        %8753 = vmatpush1.bf16.msra.mxu0 %v4514
        %8754 = vmatprep.subr.bf16.mxu0 %v4519
        %8755 = vmatpush1.bf16.msra.mxu0 %v4518
        %8756 = vmatprep.subr.bf16.mxu0 %v4523
        %8757 = vmatpush1.bf16.msra.mxu0 %v4522
        %8758 = vmatprep.subr.bf16.mxu0 %v4527
        %8759 = vmatpush1.bf16.msra.mxu0 %v4526
        %8760 = vmatprep.subr.bf16.mxu0 %v4531
        %8761 = vmatpush1.bf16.msra.mxu0 %v4530
        %8762 = vmatprep.subr.bf16.mxu0 %v4535
        %8763 = vmatpush1.bf16.msra.mxu0 %v4534
        %8764 = vmatprep.subr.bf16.mxu0 %v4539
        %8765 = vmatpush1.bf16.msra.mxu0 %v4538
        %8766 = vmatprep.subr.bf16.mxu0 %v4543
        %8767 = vmatpush1.bf16.msra.mxu0 %v4542
        %8768 = vmatprep.subr.bf16.mxu0 %v4547
        %8769 = vmatpush1.bf16.msra.mxu0 %v4546
        %8770 = vmatprep.subr.bf16.mxu0 %v4551
        %8771 = vmatpush1.bf16.msra.mxu0 %v4550
        %8772 = vmatprep.subr.bf16.mxu0 %v4555
        %8773 = vmatpush1.bf16.msra.mxu0 %v4554
        %8774 = vmatprep.subr.bf16.mxu0 %v4559
        %8775 = vmatpush1.bf16.msra.mxu0 %v4558
        %8776 = vmatprep.subr.bf16.mxu0 %v4563
        %8777 = vmatpush1.bf16.msra.mxu0 %v4562
        %8778 = vmatprep.subr.bf16.mxu0 %v4567
        %8779 = vmatpush1.bf16.msra.mxu0 %v4566
        %8780 = vmatprep.subr.bf16.mxu0 %v4571
        %8781 = vmatpush1.bf16.msra.mxu0 %v4570
        %8782 = vmatprep.mubr.bf16.mxu0 %v1111
        %8783 = vmatmul.mubr.bf16.gmra.mrb[0].mxu0 %v1110
        %v8784 = vpop.f32.mrb[0].mxu0
        %v8785 = vadd.f32 %v8592, %v8784
        %v8786 = vpop.f32.mrb[0].mxu0
        %v8787 = vadd.f32 %v8594, %v8786
        %v8788 = vpop.f32.mrb[0].mxu0
        %v8789 = vadd.f32 %v8596, %v8788
        %v8790 = vpop.f32.mrb[0].mxu0
        %v8791 = vadd.f32 %v8598, %v8790
        %8792 = vmatprep.mubr.bf16.mxu0 %v1131
        %8793 = vmatmul.mubr.bf16.gmra.mrb[0].mxu0 %v1130
        %v8794 = vpop.f32.mrb[0].mxu0
        %v8795 = vadd.f32 %v8602, %v8794
        %v8796 = vpop.f32.mrb[0].mxu0
        %v8797 = vadd.f32 %v8604, %v8796
        %v8798 = vpop.f32.mrb[0].mxu0
        %v8799 = vadd.f32 %v8606, %v8798
        %v8800 = vpop.f32.mrb[0].mxu0
        %v8801 = vadd.f32 %v8608, %v8800
        %8802 = vmatprep.mubr.bf16.mxu0 %v1151
        %8803 = vmatmul.mubr.bf16.gmra.mrb[0].mxu0 %v1150
        %v8804 = vpop.f32.mrb[0].mxu0
        %v8805 = vadd.f32 %v8612, %v8804
        %v8806 = vpop.f32.mrb[0].mxu0
        %v8807 = vadd.f32 %v8614, %v8806
        %v8808 = vpop.f32.mrb[0].mxu0
        %v8809 = vadd.f32 %v8616, %v8808
        %v8810 = vpop.f32.mrb[0].mxu0
        %v8811 = vadd.f32 %v8618, %v8810
        %8812 = vmatprep.mubr.bf16.mxu0 %v1171
        %8813 = vmatmul.mubr.bf16.gmra.mrb[0].mxu0 %v1170
        %v8814 = vpop.f32.mrb[0].mxu0
        %v8815 = vadd.f32 %v8622, %v8814
        %v8816 = vpop.f32.mrb[0].mxu0
        %v8817 = vadd.f32 %v8624, %v8816
        %v8818 = vpop.f32.mrb[0].mxu0
        %v8819 = vadd.f32 %v8626, %v8818
        %v8820 = vpop.f32.mrb[0].mxu0
        %v8821 = vadd.f32 %v8628, %v8820
        %8822 = vmatprep.mubr.bf16.mxu0 %v1191
        %8823 = vmatmul.mubr.bf16.gmra.mrb[0].mxu0 %v1190
        %v8824 = vpop.f32.mrb[0].mxu0
        %v8825 = vadd.f32 %v8632, %v8824
        %v8826 = vpop.f32.mrb[0].mxu0
        %v8827 = vadd.f32 %v8634, %v8826
        %v8828 = vpop.f32.mrb[0].mxu0
        %v8829 = vadd.f32 %v8636, %v8828
        %v8830 = vpop.f32.mrb[0].mxu0
        %v8831 = vadd.f32 %v8638, %v8830
        %8832 = vmatprep.mubr.bf16.mxu0 %v1211
        %8833 = vmatmul.mubr.bf16.gmra.mrb[0].mxu0 %v1210
        %v8834 = vpop.f32.mrb[0].mxu0
        %v8835 = vadd.f32 %v8642, %v8834
        %v8836 = vpop.f32.mrb[0].mxu0
        %v8837 = vadd.f32 %v8644, %v8836
        %v8838 = vpop.f32.mrb[0].mxu0
        %v8839 = vadd.f32 %v8646, %v8838
        %v8840 = vpop.f32.mrb[0].mxu0
        %v8841 = vadd.f32 %v8648, %v8840
        %8842 = vmatprep.mubr.bf16.mxu0 %v1231
        %8843 = vmatmul.mubr.bf16.gmra.mrb[0].mxu0 %v1230
        %v8844 = vpop.f32.mrb[0].mxu0
        %v8845 = vadd.f32 %v8652, %v8844
        %v8846 = vpop.f32.mrb[0].mxu0
        %v8847 = vadd.f32 %v8654, %v8846
        %v8848 = vpop.f32.mrb[0].mxu0
        %v8849 = vadd.f32 %v8656, %v8848
        %v8850 = vpop.f32.mrb[0].mxu0
        %v8851 = vadd.f32 %v8658, %v8850
        %8852 = vmatprep.mubr.bf16.mxu0 %v1251
        %8853 = vmatmul.mubr.bf16.gmra.mrb[0].mxu0 %v1250
        %v8854 = vpop.f32.mrb[0].mxu0
        %v8855 = vadd.f32 %v8662, %v8854
        %v8856 = vpop.f32.mrb[0].mxu0
        %v8857 = vadd.f32 %v8664, %v8856
        %v8858 = vpop.f32.mrb[0].mxu0
        %v8859 = vadd.f32 %v8666, %v8858
        %v8860 = vpop.f32.mrb[0].mxu0
        %v8861 = vadd.f32 %v8668, %v8860
        %8862 = vmatprep.mubr.bf16.mxu0 %v1271
        %8863 = vmatmul.mubr.bf16.gmra.mrb[0].mxu0 %v1270
        %v8864 = vpop.f32.mrb[0].mxu0
        %v8865 = vadd.f32 %v8672, %v8864
        %v8866 = vpop.f32.mrb[0].mxu0
        %v8867 = vadd.f32 %v8674, %v8866
        %v8868 = vpop.f32.mrb[0].mxu0
        %v8869 = vadd.f32 %v8676, %v8868
        %v8870 = vpop.f32.mrb[0].mxu0
        %v8871 = vadd.f32 %v8678, %v8870
        %8872 = vmatprep.mubr.bf16.mxu0 %v1291
        %8873 = vmatmul.mubr.bf16.gmra.mrb[0].mxu0 %v1290
        %v8874 = vpop.f32.mrb[0].mxu0
        %v8875 = vadd.f32 %v8682, %v8874
        %v8876 = vpop.f32.mrb[0].mxu0
        %v8877 = vadd.f32 %v8684, %v8876
        %v8878 = vpop.f32.mrb[0].mxu0
        %v8879 = vadd.f32 %v8686, %v8878
        %v8880 = vpop.f32.mrb[0].mxu0
        %v8881 = vadd.f32 %v8688, %v8880
        %8882 = vmatprep.mubr.bf16.mxu0 %v1311
        %8883 = vmatmul.mubr.bf16.gmra.mrb[0].mxu0 %v1310
        %v8884 = vpop.f32.mrb[0].mxu0
        %v8885 = vadd.f32 %v8692, %v8884
        %v8886 = vpop.f32.mrb[0].mxu0
        %v8887 = vadd.f32 %v8694, %v8886
        %v8888 = vpop.f32.mrb[0].mxu0
        %v8889 = vadd.f32 %v8696, %v8888
        %v8890 = vpop.f32.mrb[0].mxu0
        %v8891 = vadd.f32 %v8698, %v8890
        %8892 = vmatprep.mubr.bf16.mxu0 %v1331
        %8893 = vmatmul.mubr.bf16.gmra.mrb[0].mxu0 %v1330
        %v8894 = vpop.f32.mrb[0].mxu0
        %v8895 = vadd.f32 %v8702, %v8894
        %v8896 = vpop.f32.mrb[0].mxu0
        %v8897 = vadd.f32 %v8704, %v8896
        %v8898 = vpop.f32.mrb[0].mxu0
        %v8899 = vadd.f32 %v8706, %v8898
        %v8900 = vpop.f32.mrb[0].mxu0
        %v8901 = vadd.f32 %v8708, %v8900
        %8902 = vmatprep.mubr.bf16.mxu0 %v1351
        %8903 = vmatmul.mubr.bf16.gmra.mrb[0].mxu0 %v1350
        %v8904 = vpop.f32.mrb[0].mxu0
        %v8905 = vadd.f32 %v8712, %v8904
        %v8906 = vpop.f32.mrb[0].mxu0
        %v8907 = vadd.f32 %v8714, %v8906
        %v8908 = vpop.f32.mrb[0].mxu0
        %v8909 = vadd.f32 %v8716, %v8908
        %v8910 = vpop.f32.mrb[0].mxu0
        %v8911 = vadd.f32 %v8718, %v8910
        %8912 = vmatprep.mubr.bf16.mxu0 %v1371
        %8913 = vmatmul.mubr.bf16.gmra.mrb[0].mxu0 %v1370
        %v8914 = vpop.f32.mrb[0].mxu0
        %v8915 = vadd.f32 %v8722, %v8914
        %v8916 = vpop.f32.mrb[0].mxu0
        %v8917 = vadd.f32 %v8724, %v8916
        %v8918 = vpop.f32.mrb[0].mxu0
        %v8919 = vadd.f32 %v8726, %v8918
        %v8920 = vpop.f32.mrb[0].mxu0
        %v8921 = vadd.f32 %v8728, %v8920
        %8922 = vmatprep.mubr.bf16.mxu0 %v1391
        %8923 = vmatmul.mubr.bf16.gmra.mrb[0].mxu0 %v1390
        %v8924 = vpop.f32.mrb[0].mxu0
        %v8925 = vadd.f32 %v8732, %v8924
        %v8926 = vpop.f32.mrb[0].mxu0
        %v8927 = vadd.f32 %v8734, %v8926
        %v8928 = vpop.f32.mrb[0].mxu0
        %v8929 = vadd.f32 %v8736, %v8928
        %v8930 = vpop.f32.mrb[0].mxu0
        %v8931 = vadd.f32 %v8738, %v8930
        %8932 = vmatprep.mubr.bf16.mxu0 %v1411
        %8933 = vmatmul.mubr.bf16.gmra.mrb[0].mxu0 %v1410
        %v8934 = vpop.f32.mrb[0].mxu0
        %v8935 = vadd.f32 %v8742, %v8934
        %v8936 = vpop.f32.mrb[0].mxu0
        %v8937 = vadd.f32 %v8744, %v8936
        %v8938 = vpop.f32.mrb[0].mxu0
        %v8939 = vadd.f32 %v8746, %v8938
        %v8940 = vpop.f32.mrb[0].mxu0
        %v8941 = vadd.f32 %v8748, %v8940
        %8942 = vdwg.mxu0
        %8943 = vmatprep.subr.bf16.mxu0 %v4575
        %8944 = vmatpush1.bf16.msra.mxu0 %v4574
        %8945 = vmatprep.subr.bf16.mxu0 %v4579
        %8946 = vmatpush1.bf16.msra.mxu0 %v4578
        %8947 = vmatprep.subr.bf16.mxu0 %v4583
        %8948 = vmatpush1.bf16.msra.mxu0 %v4582
        %8949 = vmatprep.subr.bf16.mxu0 %v4587
        %8950 = vmatpush1.bf16.msra.mxu0 %v4586
        %8951 = vmatprep.subr.bf16.mxu0 %v4591
        %8952 = vmatpush1.bf16.msra.mxu0 %v4590
        %8953 = vmatprep.subr.bf16.mxu0 %v4595
        %8954 = vmatpush1.bf16.msra.mxu0 %v4594
        %8955 = vmatprep.subr.bf16.mxu0 %v4599
        %8956 = vmatpush1.bf16.msra.mxu0 %v4598
        %8957 = vmatprep.subr.bf16.mxu0 %v4603
        %8958 = vmatpush1.bf16.msra.mxu0 %v4602
        %8959 = vmatprep.subr.bf16.mxu0 %v4607
        %8960 = vmatpush1.bf16.msra.mxu0 %v4606
        %8961 = vmatprep.subr.bf16.mxu0 %v4611
        %8962 = vmatpush1.bf16.msra.mxu0 %v4610
        %8963 = vmatprep.subr.bf16.mxu0 %v4615
        %8964 = vmatpush1.bf16.msra.mxu0 %v4614
        %8965 = vmatprep.subr.bf16.mxu0 %v4619
        %8966 = vmatpush1.bf16.msra.mxu0 %v4618
        %8967 = vmatprep.subr.bf16.mxu0 %v4623
        %8968 = vmatpush1.bf16.msra.mxu0 %v4622
        %8969 = vmatprep.subr.bf16.mxu0 %v4627
        %8970 = vmatpush1.bf16.msra.mxu0 %v4626
        %8971 = vmatprep.subr.bf16.mxu0 %v4631
        %8972 = vmatpush1.bf16.msra.mxu0 %v4630
        %8973 = vmatprep.subr.bf16.mxu0 %v4635
        %8974 = vmatpush1.bf16.msra.mxu0 %v4634
        %8975 = vmatprep.mubr.bf16.mxu0 %v1113
        %8976 = vmatmul.mubr.bf16.gmra.mrb[0].mxu0 %v1112
        %v8977 = vpop.f32.mrb[0].mxu0
        %v8978 = vadd.f32 %v8785, %v8977
        %v8979 = vpop.f32.mrb[0].mxu0
        %v8980 = vadd.f32 %v8787, %v8979
        %v8981 = vpop.f32.mrb[0].mxu0
        %v8982 = vadd.f32 %v8789, %v8981
        %v8983 = vpop.f32.mrb[0].mxu0
        %v8984 = vadd.f32 %v8791, %v8983
        %8985 = vmatprep.mubr.bf16.mxu0 %v1133
        %8986 = vmatmul.mubr.bf16.gmra.mrb[0].mxu0 %v1132
        %v8987 = vpop.f32.mrb[0].mxu0
        %v8988 = vadd.f32 %v8795, %v8987
        %v8989 = vpop.f32.mrb[0].mxu0
        %v8990 = vadd.f32 %v8797, %v8989
        %v8991 = vpop.f32.mrb[0].mxu0
        %v8992 = vadd.f32 %v8799, %v8991
        %v8993 = vpop.f32.mrb[0].mxu0
        %v8994 = vadd.f32 %v8801, %v8993
        %8995 = vmatprep.mubr.bf16.mxu0 %v1153
        %8996 = vmatmul.mubr.bf16.gmra.mrb[0].mxu0 %v1152
        %v8997 = vpop.f32.mrb[0].mxu0
        %v8998 = vadd.f32 %v8805, %v8997
        %v8999 = vpop.f32.mrb[0].mxu0
        %v9000 = vadd.f32 %v8807, %v8999
        %v9001 = vpop.f32.mrb[0].mxu0
        %v9002 = vadd.f32 %v8809, %v9001
        %v9003 = vpop.f32.mrb[0].mxu0
        %v9004 = vadd.f32 %v8811, %v9003
        %9005 = vmatprep.mubr.bf16.mxu0 %v1173
        %9006 = vmatmul.mubr.bf16.gmra.mrb[0].mxu0 %v1172
        %v9007 = vpop.f32.mrb[0].mxu0
        %v9008 = vadd.f32 %v8815, %v9007
        %v9009 = vpop.f32.mrb[0].mxu0
        %v9010 = vadd.f32 %v8817, %v9009
        %v9011 = vpop.f32.mrb[0].mxu0
        %v9012 = vadd.f32 %v8819, %v9011
        %v9013 = vpop.f32.mrb[0].mxu0
        %v9014 = vadd.f32 %v8821, %v9013
        %9015 = vmatprep.mubr.bf16.mxu0 %v1193
        %9016 = vmatmul.mubr.bf16.gmra.mrb[0].mxu0 %v1192
        %v9017 = vpop.f32.mrb[0].mxu0
        %v9018 = vadd.f32 %v8825, %v9017
        %v9019 = vpop.f32.mrb[0].mxu0
        %v9020 = vadd.f32 %v8827, %v9019
        %v9021 = vpop.f32.mrb[0].mxu0
        %v9022 = vadd.f32 %v8829, %v9021
        %v9023 = vpop.f32.mrb[0].mxu0
        %v9024 = vadd.f32 %v8831, %v9023
        %9025 = vmatprep.mubr.bf16.mxu0 %v1213
        %9026 = vmatmul.mubr.bf16.gmra.mrb[0].mxu0 %v1212
        %v9027 = vpop.f32.mrb[0].mxu0
        %v9028 = vadd.f32 %v8835, %v9027
        %v9029 = vpop.f32.mrb[0].mxu0
        %v9030 = vadd.f32 %v8837, %v9029
        %v9031 = vpop.f32.mrb[0].mxu0
        %v9032 = vadd.f32 %v8839, %v9031
        %v9033 = vpop.f32.mrb[0].mxu0
        %v9034 = vadd.f32 %v8841, %v9033
        %9035 = vmatprep.mubr.bf16.mxu0 %v1233
        %9036 = vmatmul.mubr.bf16.gmra.mrb[0].mxu0 %v1232
        %v9037 = vpop.f32.mrb[0].mxu0
        %v9038 = vadd.f32 %v8845, %v9037
        %v9039 = vpop.f32.mrb[0].mxu0
        %v9040 = vadd.f32 %v8847, %v9039
        %v9041 = vpop.f32.mrb[0].mxu0
        %v9042 = vadd.f32 %v8849, %v9041
        %v9043 = vpop.f32.mrb[0].mxu0
        %v9044 = vadd.f32 %v8851, %v9043
        %9045 = vmatprep.mubr.bf16.mxu0 %v1253
        %9046 = vmatmul.mubr.bf16.gmra.mrb[0].mxu0 %v1252
        %v9047 = vpop.f32.mrb[0].mxu0
        %v9048 = vadd.f32 %v8855, %v9047
        %v9049 = vpop.f32.mrb[0].mxu0
        %v9050 = vadd.f32 %v8857, %v9049
        %v9051 = vpop.f32.mrb[0].mxu0
        %v9052 = vadd.f32 %v8859, %v9051
        %v9053 = vpop.f32.mrb[0].mxu0
        %v9054 = vadd.f32 %v8861, %v9053
        %9055 = vmatprep.mubr.bf16.mxu0 %v1273
        %9056 = vmatmul.mubr.bf16.gmra.mrb[0].mxu0 %v1272
        %v9057 = vpop.f32.mrb[0].mxu0
        %v9058 = vadd.f32 %v8865, %v9057
        %v9059 = vpop.f32.mrb[0].mxu0
        %v9060 = vadd.f32 %v8867, %v9059
        %v9061 = vpop.f32.mrb[0].mxu0
        %v9062 = vadd.f32 %v8869, %v9061
        %v9063 = vpop.f32.mrb[0].mxu0
        %v9064 = vadd.f32 %v8871, %v9063
        %9065 = vmatprep.mubr.bf16.mxu0 %v1293
        %9066 = vmatmul.mubr.bf16.gmra.mrb[0].mxu0 %v1292
        %v9067 = vpop.f32.mrb[0].mxu0
        %v9068 = vadd.f32 %v8875, %v9067
        %v9069 = vpop.f32.mrb[0].mxu0
        %v9070 = vadd.f32 %v8877, %v9069
        %v9071 = vpop.f32.mrb[0].mxu0
        %v9072 = vadd.f32 %v8879, %v9071
        %v9073 = vpop.f32.mrb[0].mxu0
        %v9074 = vadd.f32 %v8881, %v9073
        %9075 = vmatprep.mubr.bf16.mxu0 %v1313
        %9076 = vmatmul.mubr.bf16.gmra.mrb[0].mxu0 %v1312
        %v9077 = vpop.f32.mrb[0].mxu0
        %v9078 = vadd.f32 %v8885, %v9077
        %v9079 = vpop.f32.mrb[0].mxu0
        %v9080 = vadd.f32 %v8887, %v9079
        %v9081 = vpop.f32.mrb[0].mxu0
        %v9082 = vadd.f32 %v8889, %v9081
        %v9083 = vpop.f32.mrb[0].mxu0
        %v9084 = vadd.f32 %v8891, %v9083
        %9085 = vmatprep.mubr.bf16.mxu0 %v1333
        %9086 = vmatmul.mubr.bf16.gmra.mrb[0].mxu0 %v1332
        %v9087 = vpop.f32.mrb[0].mxu0
        %v9088 = vadd.f32 %v8895, %v9087
        %v9089 = vpop.f32.mrb[0].mxu0
        %v9090 = vadd.f32 %v8897, %v9089
        %v9091 = vpop.f32.mrb[0].mxu0
        %v9092 = vadd.f32 %v8899, %v9091
        %v9093 = vpop.f32.mrb[0].mxu0
        %v9094 = vadd.f32 %v8901, %v9093
        %9095 = vmatprep.mubr.bf16.mxu0 %v1353
        %9096 = vmatmul.mubr.bf16.gmra.mrb[0].mxu0 %v1352
        %v9097 = vpop.f32.mrb[0].mxu0
        %v9098 = vadd.f32 %v8905, %v9097
        %v9099 = vpop.f32.mrb[0].mxu0
        %v9100 = vadd.f32 %v8907, %v9099
        %v9101 = vpop.f32.mrb[0].mxu0
        %v9102 = vadd.f32 %v8909, %v9101
        %v9103 = vpop.f32.mrb[0].mxu0
        %v9104 = vadd.f32 %v8911, %v9103
        %9105 = vmatprep.mubr.bf16.mxu0 %v1373
        %9106 = vmatmul.mubr.bf16.gmra.mrb[0].mxu0 %v1372
        %v9107 = vpop.f32.mrb[0].mxu0
        %v9108 = vadd.f32 %v8915, %v9107
        %v9109 = vpop.f32.mrb[0].mxu0
        %v9110 = vadd.f32 %v8917, %v9109
        %v9111 = vpop.f32.mrb[0].mxu0
        %v9112 = vadd.f32 %v8919, %v9111
        %v9113 = vpop.f32.mrb[0].mxu0
        %v9114 = vadd.f32 %v8921, %v9113
        %9115 = vmatprep.mubr.bf16.mxu0 %v1393
        %9116 = vmatmul.mubr.bf16.gmra.mrb[0].mxu0 %v1392
        %v9117 = vpop.f32.mrb[0].mxu0
        %v9118 = vadd.f32 %v8925, %v9117
        %v9119 = vpop.f32.mrb[0].mxu0
        %v9120 = vadd.f32 %v8927, %v9119
        %v9121 = vpop.f32.mrb[0].mxu0
        %v9122 = vadd.f32 %v8929, %v9121
        %v9123 = vpop.f32.mrb[0].mxu0
        %v9124 = vadd.f32 %v8931, %v9123
        %9125 = vmatprep.mubr.bf16.mxu0 %v1413
        %9126 = vmatmul.mubr.bf16.gmra.mrb[0].mxu0 %v1412
        %v9127 = vpop.f32.mrb[0].mxu0
        %v9128 = vadd.f32 %v8935, %v9127
        %v9129 = vpop.f32.mrb[0].mxu0
        %v9130 = vadd.f32 %v8937, %v9129
        %v9131 = vpop.f32.mrb[0].mxu0
        %v9132 = vadd.f32 %v8939, %v9131
        %v9133 = vpop.f32.mrb[0].mxu0
        %v9134 = vadd.f32 %v8941, %v9133
        %9135 = vdwg.mxu0
        %v9136 = vmax.f32 %v7048, 0.0
        %v9137 = vmax.f32 %v7050, 0.0
        %v9138 = vmax.f32 %v8978, 0.0
        %v9139 = vmax.f32 %v8980, 0.0
        %v9140 = vmax.f32 %v7052, 0.0
        %v9141 = vmax.f32 %v7054, 0.0
        %v9142 = vmax.f32 %v8982, 0.0
        %v9143 = vmax.f32 %v8984, 0.0
        %v9144 = vmax.f32 %v7058, 0.0
        %v9145 = vmax.f32 %v7060, 0.0
        %v9146 = vmax.f32 %v8988, 0.0
        %v9147 = vmax.f32 %v8990, 0.0
        %v9148 = vmax.f32 %v7062, 0.0
        %v9149 = vmax.f32 %v7064, 0.0
        %v9150 = vmax.f32 %v8992, 0.0
        %v9151 = vmax.f32 %v8994, 0.0
        %v9152 = vmax.f32 %v7068, 0.0
        %v9153 = vmax.f32 %v7070, 0.0
        %v9154 = vmax.f32 %v8998, 0.0
        %v9155 = vmax.f32 %v9000, 0.0
        %v9156 = vmax.f32 %v7072, 0.0
        %v9157 = vmax.f32 %v7074, 0.0
        %v9158 = vmax.f32 %v9002, 0.0
        %v9159 = vmax.f32 %v9004, 0.0
        %v9160 = vmax.f32 %v7078, 0.0
        %v9161 = vmax.f32 %v7080, 0.0
        %v9162 = vmax.f32 %v9008, 0.0
        %v9163 = vmax.f32 %v9010, 0.0
        %v9164 = vmax.f32 %v7082, 0.0
        %v9165 = vmax.f32 %v7084, 0.0
        %v9166 = vmax.f32 %v9012, 0.0
        %v9167 = vmax.f32 %v9014, 0.0
        %v9168 = vmax.f32 %v7088, 0.0
        %v9169 = vmax.f32 %v7090, 0.0
        %v9170 = vmax.f32 %v9018, 0.0
        %v9171 = vmax.f32 %v9020, 0.0
        %v9172 = vmax.f32 %v7092, 0.0
        %v9173 = vmax.f32 %v7094, 0.0
        %v9174 = vmax.f32 %v9022, 0.0
        %v9175 = vmax.f32 %v9024, 0.0
        %v9176 = vmax.f32 %v7098, 0.0
        %v9177 = vmax.f32 %v7100, 0.0
        %v9178 = vmax.f32 %v9028, 0.0
        %v9179 = vmax.f32 %v9030, 0.0
        %v9180 = vmax.f32 %v7102, 0.0
        %v9181 = vmax.f32 %v7104, 0.0
        %v9182 = vmax.f32 %v9032, 0.0
        %v9183 = vmax.f32 %v9034, 0.0
        %v9184 = vmax.f32 %v7108, 0.0
        %v9185 = vmax.f32 %v7110, 0.0
        %v9186 = vmax.f32 %v9038, 0.0
        %v9187 = vmax.f32 %v9040, 0.0
        %v9188 = vmax.f32 %v7112, 0.0
        %v9189 = vmax.f32 %v7114, 0.0
        %v9190 = vmax.f32 %v9042, 0.0
        %v9191 = vmax.f32 %v9044, 0.0
        %v9192 = vmax.f32 %v7118, 0.0
        %v9193 = vmax.f32 %v7120, 0.0
        %v9194 = vmax.f32 %v9048, 0.0
        %v9195 = vmax.f32 %v9050, 0.0
        %v9196 = vmax.f32 %v7122, 0.0
        %v9197 = vmax.f32 %v7124, 0.0
        %v9198 = vmax.f32 %v9052, 0.0
        %v9199 = vmax.f32 %v9054, 0.0
        %v9200 = vmax.f32 %v7128, 0.0
        %v9201 = vmax.f32 %v7130, 0.0
        %v9202 = vmax.f32 %v9058, 0.0
        %v9203 = vmax.f32 %v9060, 0.0
        %v9204 = vmax.f32 %v7132, 0.0
        %v9205 = vmax.f32 %v7134, 0.0
        %v9206 = vmax.f32 %v9062, 0.0
        %v9207 = vmax.f32 %v9064, 0.0
        %v9208 = vmax.f32 %v7138, 0.0
        %v9209 = vmax.f32 %v7140, 0.0
        %v9210 = vmax.f32 %v9068, 0.0
        %v9211 = vmax.f32 %v9070, 0.0
        %v9212 = vmax.f32 %v7142, 0.0
        %v9213 = vmax.f32 %v7144, 0.0
        %v9214 = vmax.f32 %v9072, 0.0
        %v9215 = vmax.f32 %v9074, 0.0
        %v9216 = vmax.f32 %v7148, 0.0
        %v9217 = vmax.f32 %v7150, 0.0
        %v9218 = vmax.f32 %v9078, 0.0
        %v9219 = vmax.f32 %v9080, 0.0
        %v9220 = vmax.f32 %v7152, 0.0
        %v9221 = vmax.f32 %v7154, 0.0
        %v9222 = vmax.f32 %v9082, 0.0
        %v9223 = vmax.f32 %v9084, 0.0
        %v9224 = vmax.f32 %v7158, 0.0
        %v9225 = vmax.f32 %v7160, 0.0
        %v9226 = vmax.f32 %v9088, 0.0
        %v9227 = vmax.f32 %v9090, 0.0
        %v9228 = vmax.f32 %v7162, 0.0
        %v9229 = vmax.f32 %v7164, 0.0
        %v9230 = vmax.f32 %v9092, 0.0
        %v9231 = vmax.f32 %v9094, 0.0
        %v9232 = vmax.f32 %v7168, 0.0
        %v9233 = vmax.f32 %v7170, 0.0
        %v9234 = vmax.f32 %v9098, 0.0
        %v9235 = vmax.f32 %v9100, 0.0
        %v9236 = vmax.f32 %v7172, 0.0
        %v9237 = vmax.f32 %v7174, 0.0
        %v9238 = vmax.f32 %v9102, 0.0
        %v9239 = vmax.f32 %v9104, 0.0
        %v9240 = vmax.f32 %v7178, 0.0
        %v9241 = vmax.f32 %v7180, 0.0
        %v9242 = vmax.f32 %v9108, 0.0
        %v9243 = vmax.f32 %v9110, 0.0
        %v9244 = vmax.f32 %v7182, 0.0
        %v9245 = vmax.f32 %v7184, 0.0
        %v9246 = vmax.f32 %v9112, 0.0
        %v9247 = vmax.f32 %v9114, 0.0
        %v9248 = vmax.f32 %v7188, 0.0
        %v9249 = vmax.f32 %v7190, 0.0
        %v9250 = vmax.f32 %v9118, 0.0
        %v9251 = vmax.f32 %v9120, 0.0
        %v9252 = vmax.f32 %v7192, 0.0
        %v9253 = vmax.f32 %v7194, 0.0
        %v9254 = vmax.f32 %v9122, 0.0
        %v9255 = vmax.f32 %v9124, 0.0
        %v9256 = vmax.f32 %v7198, 0.0
        %v9257 = vmax.f32 %v7200, 0.0
        %v9258 = vmax.f32 %v9128, 0.0
        %v9259 = vmax.f32 %v9130, 0.0
        %v9260 = vmax.f32 %v7202, 0.0
        %v9261 = vmax.f32 %v7204, 0.0
        %v9262 = vmax.f32 %v9132, 0.0
        %v9263 = vmax.f32 %v9134, 0.0
        %v9264 = vpack.c.bf16 %v9140, %v9136
        %v9265 = vpack.c.bf16 %v9141, %v9137
        %v9266 = vpack.c.bf16 %v9142, %v9138
        %v9267 = vpack.c.bf16 %v9143, %v9139
        %v9268 = vpack.c.bf16 %v9148, %v9144
        %v9269 = vpack.c.bf16 %v9149, %v9145
        %v9270 = vpack.c.bf16 %v9150, %v9146
        %v9271 = vpack.c.bf16 %v9151, %v9147
        %v9272 = vpack.c.bf16 %v9156, %v9152
        %v9273 = vpack.c.bf16 %v9157, %v9153
        %v9274 = vpack.c.bf16 %v9158, %v9154
        %v9275 = vpack.c.bf16 %v9159, %v9155
        %v9276 = vpack.c.bf16 %v9164, %v9160
        %v9277 = vpack.c.bf16 %v9165, %v9161
        %v9278 = vpack.c.bf16 %v9166, %v9162
        %v9279 = vpack.c.bf16 %v9167, %v9163
        %v9280 = vpack.c.bf16 %v9172, %v9168
        %v9281 = vpack.c.bf16 %v9173, %v9169
        %v9282 = vpack.c.bf16 %v9174, %v9170
        %v9283 = vpack.c.bf16 %v9175, %v9171
        %v9284 = vpack.c.bf16 %v9180, %v9176
        %v9285 = vpack.c.bf16 %v9181, %v9177
        %v9286 = vpack.c.bf16 %v9182, %v9178
        %v9287 = vpack.c.bf16 %v9183, %v9179
        %v9288 = vpack.c.bf16 %v9188, %v9184
        %v9289 = vpack.c.bf16 %v9189, %v9185
        %v9290 = vpack.c.bf16 %v9190, %v9186
        %v9291 = vpack.c.bf16 %v9191, %v9187
        %v9292 = vpack.c.bf16 %v9196, %v9192
        %v9293 = vpack.c.bf16 %v9197, %v9193
        %v9294 = vpack.c.bf16 %v9198, %v9194
        %v9295 = vpack.c.bf16 %v9199, %v9195
        %v9296 = vpack.c.bf16 %v9204, %v9200
        %v9297 = vpack.c.bf16 %v9205, %v9201
        %v9298 = vpack.c.bf16 %v9206, %v9202
        %v9299 = vpack.c.bf16 %v9207, %v9203
        %v9300 = vpack.c.bf16 %v9212, %v9208
        %v9301 = vpack.c.bf16 %v9213, %v9209
        %v9302 = vpack.c.bf16 %v9214, %v9210
        %v9303 = vpack.c.bf16 %v9215, %v9211
        %v9304 = vpack.c.bf16 %v9220, %v9216
        %v9305 = vpack.c.bf16 %v9221, %v9217
        %v9306 = vpack.c.bf16 %v9222, %v9218
        %v9307 = vpack.c.bf16 %v9223, %v9219
        %v9308 = vpack.c.bf16 %v9228, %v9224
        %v9309 = vpack.c.bf16 %v9229, %v9225
        %v9310 = vpack.c.bf16 %v9230, %v9226
        %v9311 = vpack.c.bf16 %v9231, %v9227
        %v9312 = vpack.c.bf16 %v9236, %v9232
        %v9313 = vpack.c.bf16 %v9237, %v9233
        %v9314 = vpack.c.bf16 %v9238, %v9234
        %v9315 = vpack.c.bf16 %v9239, %v9235
        %v9316 = vpack.c.bf16 %v9244, %v9240
        %v9317 = vpack.c.bf16 %v9245, %v9241
        %v9318 = vpack.c.bf16 %v9246, %v9242
        %v9319 = vpack.c.bf16 %v9247, %v9243
        %v9320 = vpack.c.bf16 %v9252, %v9248
        %v9321 = vpack.c.bf16 %v9253, %v9249
        %v9322 = vpack.c.bf16 %v9254, %v9250
        %v9323 = vpack.c.bf16 %v9255, %v9251
        %v9324 = vpack.c.bf16 %v9260, %v9256
        %v9325 = vpack.c.bf16 %v9261, %v9257
        %v9326 = vpack.c.bf16 %v9262, %v9258
        %v9327 = vpack.c.bf16 %v9263, %v9259
        %v9328 = vld [vmem:[#allocation9] sm:$0xff]
        %v9329 = vld [vmem:[#allocation9 + $0x8] sm:$0xff]
        %v9330 = vld [vmem:[#allocation9 + $0x10] sm:$0xff]
        %v9331 = vld [vmem:[#allocation9 + $0x18] sm:$0xff]
        %v9332 = vld [vmem:[#allocation9 + $0x20] sm:$0xff]
        %v9333 = vld [vmem:[#allocation9 + $0x28] sm:$0xff]
        %v9334 = vld [vmem:[#allocation9 + $0x30] sm:$0xff]
        %v9335 = vld [vmem:[#allocation9 + $0x38] sm:$0xff]
        %v9336 = vld [vmem:[#allocation9 + $0x40] sm:$0xff]
        %v9337 = vld [vmem:[#allocation9 + $0x48] sm:$0xff]
        %v9338 = vld [vmem:[#allocation9 + $0x50] sm:$0xff]
        %v9339 = vld [vmem:[#allocation9 + $0x58] sm:$0xff]
        %v9340 = vld [vmem:[#allocation9 + $0x60] sm:$0xff]
        %v9341 = vld [vmem:[#allocation9 + $0x68] sm:$0xff]
        %v9342 = vld [vmem:[#allocation9 + $0x70] sm:$0xff]
        %v9343 = vld [vmem:[#allocation9 + $0x78] sm:$0xff]
        %v9344 = vld [vmem:[#allocation9 + $0x80] sm:$0xff]
        %v9345 = vld [vmem:[#allocation9 + $0x88] sm:$0xff]
        %v9346 = vld [vmem:[#allocation9 + $0x90] sm:$0xff]
        %v9347 = vld [vmem:[#allocation9 + $0x98] sm:$0xff]
        %v9348 = vld [vmem:[#allocation9 + $0xa0] sm:$0xff]
        %v9349 = vld [vmem:[#allocation9 + $0xa8] sm:$0xff]
        %v9350 = vld [vmem:[#allocation9 + $0xb0] sm:$0xff]
        %v9351 = vld [vmem:[#allocation9 + $0xb8] sm:$0xff]
        %v9352 = vld [vmem:[#allocation9 + $0xc0] sm:$0xff]
        %v9353 = vld [vmem:[#allocation9 + $0xc8] sm:$0xff]
        %v9354 = vld [vmem:[#allocation9 + $0xd0] sm:$0xff]
        %v9355 = vld [vmem:[#allocation9 + $0xd8] sm:$0xff]
        %v9356 = vld [vmem:[#allocation9 + $0xe0] sm:$0xff]
        %v9357 = vld [vmem:[#allocation9 + $0xe8] sm:$0xff]
        %v9358 = vld [vmem:[#allocation9 + $0xf0] sm:$0xff]
        %v9359 = vld [vmem:[#allocation9 + $0xf8] sm:$0xff]
        %v9360 = vld [vmem:[#allocation9 + $0x100] sm:$0xff]
        %v9361 = vld [vmem:[#allocation9 + $0x108] sm:$0xff]
        %v9362 = vld [vmem:[#allocation9 + $0x110] sm:$0xff]
        %v9363 = vld [vmem:[#allocation9 + $0x118] sm:$0xff]
        %v9364 = vld [vmem:[#allocation9 + $0x120] sm:$0xff]
        %v9365 = vld [vmem:[#allocation9 + $0x128] sm:$0xff]
        %v9366 = vld [vmem:[#allocation9 + $0x130] sm:$0xff]
        %v9367 = vld [vmem:[#allocation9 + $0x138] sm:$0xff]
        %v9368 = vld [vmem:[#allocation9 + $0x140] sm:$0xff]
        %v9369 = vld [vmem:[#allocation9 + $0x148] sm:$0xff]
        %v9370 = vld [vmem:[#allocation9 + $0x150] sm:$0xff]
        %v9371 = vld [vmem:[#allocation9 + $0x158] sm:$0xff]
        %v9372 = vld [vmem:[#allocation9 + $0x160] sm:$0xff]
        %v9373 = vld [vmem:[#allocation9 + $0x168] sm:$0xff]
        %v9374 = vld [vmem:[#allocation9 + $0x170] sm:$0xff]
        %v9375 = vld [vmem:[#allocation9 + $0x178] sm:$0xff]
        %v9376 = vld [vmem:[#allocation9 + $0x180] sm:$0xff]
        %v9377 = vld [vmem:[#allocation9 + $0x188] sm:$0xff]
        %v9378 = vld [vmem:[#allocation9 + $0x190] sm:$0xff]
        %v9379 = vld [vmem:[#allocation9 + $0x198] sm:$0xff]
        %v9380 = vld [vmem:[#allocation9 + $0x1a0] sm:$0xff]
        %v9381 = vld [vmem:[#allocation9 + $0x1a8] sm:$0xff]
        %v9382 = vld [vmem:[#allocation9 + $0x1b0] sm:$0xff]
        %v9383 = vld [vmem:[#allocation9 + $0x1b8] sm:$0xff]
        %v9384 = vld [vmem:[#allocation9 + $0x1c0] sm:$0xff]
        %v9385 = vld [vmem:[#allocation9 + $0x1c8] sm:$0xff]
        %v9386 = vld [vmem:[#allocation9 + $0x1d0] sm:$0xff]
        %v9387 = vld [vmem:[#allocation9 + $0x1d8] sm:$0xff]
        %v9388 = vld [vmem:[#allocation9 + $0x1e0] sm:$0xff]
        %v9389 = vld [vmem:[#allocation9 + $0x1e8] sm:$0xff]
        %v9390 = vld [vmem:[#allocation9 + $0x1f0] sm:$0xff]
        %v9391 = vld [vmem:[#allocation9 + $0x1f8] sm:$0xff]
        %v9392 = vld [vmem:[#allocation11] sm:$0x3]
        %v9394 = vlaneseq
        %v9395 = vshrl.u32 %v9394, 7
        %v9396 = vsub.s32 0, %v9395
        %v9397 = vrot.slane %v9392, %v9396
        %v9398 = vlaneseq
        %v9399 = vshrl.u32 %v9398, 7
        %v9400 = vsub.s32 1, %v9399
        %v9401 = vrot.slane %v9392, %v9400
        %v9468 = vunpack.c.l.b16 %v9328
        %v9469 = vunpack.c.h.b16 %v9328
        %v9470 = vunpack.c.l.b16 %v9329
        %v9471 = vunpack.c.h.b16 %v9329
        %v9472 = vunpack.c.l.b16 %v9330
        %v9473 = vunpack.c.h.b16 %v9330
        %v9474 = vunpack.c.l.b16 %v9331
        %v9475 = vunpack.c.h.b16 %v9331
        %v9476 = vunpack.c.l.b16 %v9332
        %v9477 = vunpack.c.h.b16 %v9332
        %v9478 = vunpack.c.l.b16 %v9333
        %v9479 = vunpack.c.h.b16 %v9333
        %v9480 = vunpack.c.l.b16 %v9334
        %v9481 = vunpack.c.h.b16 %v9334
        %v9482 = vunpack.c.l.b16 %v9335
        %v9483 = vunpack.c.h.b16 %v9335
        %v9484 = vunpack.c.l.b16 %v9336
        %v9485 = vunpack.c.h.b16 %v9336
        %v9486 = vunpack.c.l.b16 %v9337
        %v9487 = vunpack.c.h.b16 %v9337
        %v9488 = vunpack.c.l.b16 %v9338
        %v9489 = vunpack.c.h.b16 %v9338
        %v9490 = vunpack.c.l.b16 %v9339
        %v9491 = vunpack.c.h.b16 %v9339
        %v9492 = vunpack.c.l.b16 %v9340
        %v9493 = vunpack.c.h.b16 %v9340
        %v9494 = vunpack.c.l.b16 %v9341
        %v9495 = vunpack.c.h.b16 %v9341
        %v9496 = vunpack.c.l.b16 %v9342
        %v9497 = vunpack.c.h.b16 %v9342
        %v9498 = vunpack.c.l.b16 %v9343
        %v9499 = vunpack.c.h.b16 %v9343
        %v9500 = vunpack.c.l.b16 %v9344
        %v9501 = vunpack.c.h.b16 %v9344
        %v9502 = vunpack.c.l.b16 %v9345
        %v9503 = vunpack.c.h.b16 %v9345
        %v9504 = vunpack.c.l.b16 %v9346
        %v9505 = vunpack.c.h.b16 %v9346
        %v9506 = vunpack.c.l.b16 %v9347
        %v9507 = vunpack.c.h.b16 %v9347
        %v9508 = vunpack.c.l.b16 %v9348
        %v9509 = vunpack.c.h.b16 %v9348
        %v9510 = vunpack.c.l.b16 %v9349
        %v9511 = vunpack.c.h.b16 %v9349
        %v9512 = vunpack.c.l.b16 %v9350
        %v9513 = vunpack.c.h.b16 %v9350
        %v9514 = vunpack.c.l.b16 %v9351
        %v9515 = vunpack.c.h.b16 %v9351
        %v9516 = vunpack.c.l.b16 %v9352
        %v9517 = vunpack.c.h.b16 %v9352
        %v9518 = vunpack.c.l.b16 %v9353
        %v9519 = vunpack.c.h.b16 %v9353
        %v9520 = vunpack.c.l.b16 %v9354
        %v9521 = vunpack.c.h.b16 %v9354
        %v9522 = vunpack.c.l.b16 %v9355
        %v9523 = vunpack.c.h.b16 %v9355
        %v9524 = vunpack.c.l.b16 %v9356
        %v9525 = vunpack.c.h.b16 %v9356
        %v9526 = vunpack.c.l.b16 %v9357
        %v9527 = vunpack.c.h.b16 %v9357
        %v9528 = vunpack.c.l.b16 %v9358
        %v9529 = vunpack.c.h.b16 %v9358
        %v9530 = vunpack.c.l.b16 %v9359
        %v9531 = vunpack.c.h.b16 %v9359
        %v9532 = vunpack.c.l.b16 %v9360
        %v9533 = vunpack.c.h.b16 %v9360
        %v9534 = vunpack.c.l.b16 %v9361
        %v9535 = vunpack.c.h.b16 %v9361
        %v9536 = vunpack.c.l.b16 %v9362
        %v9537 = vunpack.c.h.b16 %v9362
        %v9538 = vunpack.c.l.b16 %v9363
        %v9539 = vunpack.c.h.b16 %v9363
        %v9540 = vunpack.c.l.b16 %v9364
        %v9541 = vunpack.c.h.b16 %v9364
        %v9542 = vunpack.c.l.b16 %v9365
        %v9543 = vunpack.c.h.b16 %v9365
        %v9544 = vunpack.c.l.b16 %v9366
        %v9545 = vunpack.c.h.b16 %v9366
        %v9546 = vunpack.c.l.b16 %v9367
        %v9547 = vunpack.c.h.b16 %v9367
        %v9548 = vunpack.c.l.b16 %v9368
        %v9549 = vunpack.c.h.b16 %v9368
        %v9550 = vunpack.c.l.b16 %v9369
        %v9551 = vunpack.c.h.b16 %v9369
        %v9552 = vunpack.c.l.b16 %v9370
        %v9553 = vunpack.c.h.b16 %v9370
        %v9554 = vunpack.c.l.b16 %v9371
        %v9555 = vunpack.c.h.b16 %v9371
        %v9556 = vunpack.c.l.b16 %v9372
        %v9557 = vunpack.c.h.b16 %v9372
        %v9558 = vunpack.c.l.b16 %v9373
        %v9559 = vunpack.c.h.b16 %v9373
        %v9560 = vunpack.c.l.b16 %v9374
        %v9561 = vunpack.c.h.b16 %v9374
        %v9562 = vunpack.c.l.b16 %v9375
        %v9563 = vunpack.c.h.b16 %v9375
        %v9564 = vunpack.c.l.b16 %v9376
        %v9565 = vunpack.c.h.b16 %v9376
        %v9566 = vunpack.c.l.b16 %v9377
        %v9567 = vunpack.c.h.b16 %v9377
        %v9568 = vunpack.c.l.b16 %v9378
        %v9569 = vunpack.c.h.b16 %v9378
        %v9570 = vunpack.c.l.b16 %v9379
        %v9571 = vunpack.c.h.b16 %v9379
        %v9572 = vunpack.c.l.b16 %v9380
        %v9573 = vunpack.c.h.b16 %v9380
        %v9574 = vunpack.c.l.b16 %v9381
        %v9575 = vunpack.c.h.b16 %v9381
        %v9576 = vunpack.c.l.b16 %v9382
        %v9577 = vunpack.c.h.b16 %v9382
        %v9578 = vunpack.c.l.b16 %v9383
        %v9579 = vunpack.c.h.b16 %v9383
        %v9580 = vunpack.c.l.b16 %v9384
        %v9581 = vunpack.c.h.b16 %v9384
        %v9582 = vunpack.c.l.b16 %v9385
        %v9583 = vunpack.c.h.b16 %v9385
        %v9584 = vunpack.c.l.b16 %v9386
        %v9585 = vunpack.c.h.b16 %v9386
        %v9586 = vunpack.c.l.b16 %v9387
        %v9587 = vunpack.c.h.b16 %v9387
        %v9588 = vunpack.c.l.b16 %v9388
        %v9589 = vunpack.c.h.b16 %v9388
        %v9590 = vunpack.c.l.b16 %v9389
        %v9591 = vunpack.c.h.b16 %v9389
        %v9592 = vunpack.c.l.b16 %v9390
        %v9593 = vunpack.c.h.b16 %v9390
        %v9594 = vunpack.c.l.b16 %v9391
        %v9595 = vunpack.c.h.b16 %v9391
        %v9596 = vpack.c.b16 %v9470, %v9468
        %v9597 = vpack.c.b16 %v9471, %v9469
        %v9598 = vpack.c.b16 %v9474, %v9472
        %v9599 = vpack.c.b16 %v9475, %v9473
        %v9600 = vpack.c.b16 %v9478, %v9476
        %v9601 = vpack.c.b16 %v9479, %v9477
        %v9602 = vpack.c.b16 %v9482, %v9480
        %v9603 = vpack.c.b16 %v9483, %v9481
        %v9604 = vpack.c.b16 %v9486, %v9484
        %v9605 = vpack.c.b16 %v9487, %v9485
        %v9606 = vpack.c.b16 %v9490, %v9488
        %v9607 = vpack.c.b16 %v9491, %v9489
        %v9608 = vpack.c.b16 %v9494, %v9492
        %v9609 = vpack.c.b16 %v9495, %v9493
        %v9610 = vpack.c.b16 %v9498, %v9496
        %v9611 = vpack.c.b16 %v9499, %v9497
        %v9612 = vpack.c.b16 %v9502, %v9500
        %v9613 = vpack.c.b16 %v9503, %v9501
        %v9614 = vpack.c.b16 %v9506, %v9504
        %v9615 = vpack.c.b16 %v9507, %v9505
        %v9616 = vpack.c.b16 %v9510, %v9508
        %v9617 = vpack.c.b16 %v9511, %v9509
        %v9618 = vpack.c.b16 %v9514, %v9512
        %v9619 = vpack.c.b16 %v9515, %v9513
        %v9620 = vpack.c.b16 %v9518, %v9516
        %v9621 = vpack.c.b16 %v9519, %v9517
        %v9622 = vpack.c.b16 %v9522, %v9520
        %v9623 = vpack.c.b16 %v9523, %v9521
        %v9624 = vpack.c.b16 %v9526, %v9524
        %v9625 = vpack.c.b16 %v9527, %v9525
        %v9626 = vpack.c.b16 %v9530, %v9528
        %v9627 = vpack.c.b16 %v9531, %v9529
        %v9628 = vpack.c.b16 %v9534, %v9532
        %v9629 = vpack.c.b16 %v9535, %v9533
        %v9630 = vpack.c.b16 %v9538, %v9536
        %v9631 = vpack.c.b16 %v9539, %v9537
        %v9632 = vpack.c.b16 %v9542, %v9540
        %v9633 = vpack.c.b16 %v9543, %v9541
        %v9634 = vpack.c.b16 %v9546, %v9544
        %v9635 = vpack.c.b16 %v9547, %v9545
        %v9636 = vpack.c.b16 %v9550, %v9548
        %v9637 = vpack.c.b16 %v9551, %v9549
        %v9638 = vpack.c.b16 %v9554, %v9552
        %v9639 = vpack.c.b16 %v9555, %v9553
        %v9640 = vpack.c.b16 %v9558, %v9556
        %v9641 = vpack.c.b16 %v9559, %v9557
        %v9642 = vpack.c.b16 %v9562, %v9560
        %v9643 = vpack.c.b16 %v9563, %v9561
        %v9644 = vpack.c.b16 %v9566, %v9564
        %v9645 = vpack.c.b16 %v9567, %v9565
        %v9646 = vpack.c.b16 %v9570, %v9568
        %v9647 = vpack.c.b16 %v9571, %v9569
        %v9648 = vpack.c.b16 %v9574, %v9572
        %v9649 = vpack.c.b16 %v9575, %v9573
        %v9650 = vpack.c.b16 %v9578, %v9576
        %v9651 = vpack.c.b16 %v9579, %v9577
        %v9652 = vpack.c.b16 %v9582, %v9580
        %v9653 = vpack.c.b16 %v9583, %v9581
        %v9654 = vpack.c.b16 %v9586, %v9584
        %v9655 = vpack.c.b16 %v9587, %v9585
        %v9656 = vpack.c.b16 %v9590, %v9588
        %v9657 = vpack.c.b16 %v9591, %v9589
        %v9658 = vpack.c.b16 %v9594, %v9592
        %v9659 = vpack.c.b16 %v9595, %v9593
        %9724 = vmatprep.subr.bf16.mxu0 %v9597
        %9725 = vmatpush1.bf16.msra.mxu0 %v9596
        %9726 = vmatprep.subr.bf16.mxu0 %v9599
        %9727 = vmatpush1.bf16.msra.mxu0 %v9598
        %9728 = vmatprep.subr.bf16.mxu0 %v9601
        %9729 = vmatpush1.bf16.msra.mxu0 %v9600
        %9730 = vmatprep.subr.bf16.mxu0 %v9603
        %9731 = vmatpush1.bf16.msra.mxu0 %v9602
        %9732 = vmatprep.subr.bf16.mxu0 %v9605
        %9733 = vmatpush1.bf16.msra.mxu0 %v9604
        %9734 = vmatprep.subr.bf16.mxu0 %v9607
        %9735 = vmatpush1.bf16.msra.mxu0 %v9606
        %9736 = vmatprep.subr.bf16.mxu0 %v9609
        %9737 = vmatpush1.bf16.msra.mxu0 %v9608
        %9738 = vmatprep.subr.bf16.mxu0 %v9611
        %9739 = vmatpush1.bf16.msra.mxu0 %v9610
        %9740 = vmatprep.subr.bf16.mxu0 %v9613
        %9741 = vmatpush1.bf16.msra.mxu0 %v9612
        %9742 = vmatprep.subr.bf16.mxu0 %v9615
        %9743 = vmatpush1.bf16.msra.mxu0 %v9614
        %9744 = vmatprep.subr.bf16.mxu0 %v9617
        %9745 = vmatpush1.bf16.msra.mxu0 %v9616
        %9746 = vmatprep.subr.bf16.mxu0 %v9619
        %9747 = vmatpush1.bf16.msra.mxu0 %v9618
        %9748 = vmatprep.subr.bf16.mxu0 %v9621
        %9749 = vmatpush1.bf16.msra.mxu0 %v9620
        %9750 = vmatprep.subr.bf16.mxu0 %v9623
        %9751 = vmatpush1.bf16.msra.mxu0 %v9622
        %9752 = vmatprep.subr.bf16.mxu0 %v9625
        %9753 = vmatpush1.bf16.msra.mxu0 %v9624
        %9754 = vmatprep.subr.bf16.mxu0 %v9627
        %9755 = vmatpush1.bf16.msra.mxu0 %v9626
        %9756 = vmatprep.mubr.bf16.mxu0 %v9265
        %9757 = vmatmul.mubr.bf16.gmra.mrb[0].mxu0 %v9264
        %v9758 = vpop.f32.mrb[0].mxu0
        %v9759 = vadd.f32 %v9397, %v9758
        %v9760 = vpop.f32.mrb[0].mxu0
        %v9761 = vadd.f32 %v9401, %v9760
        %v9762 = vpop.f32.mrb[0].mxu0
        %v9763 = vadd.f32 %v9397, %v9762
        %v9764 = vpop.f32.mrb[0].mxu0
        %v9765 = vadd.f32 %v9401, %v9764
        %9766 = vmatprep.mubr.bf16.mxu0 %v9269
        %9767 = vmatmul.mubr.bf16.gmra.mrb[0].mxu0 %v9268
        %v9768 = vpop.f32.mrb[0].mxu0
        %v9769 = vadd.f32 %v9397, %v9768
        %v9770 = vpop.f32.mrb[0].mxu0
        %v9771 = vadd.f32 %v9401, %v9770
        %v9772 = vpop.f32.mrb[0].mxu0
        %v9773 = vadd.f32 %v9397, %v9772
        %v9774 = vpop.f32.mrb[0].mxu0
        %v9775 = vadd.f32 %v9401, %v9774
        %9776 = vmatprep.mubr.bf16.mxu0 %v9273
        %9777 = vmatmul.mubr.bf16.gmra.mrb[0].mxu0 %v9272
        %v9778 = vpop.f32.mrb[0].mxu0
        %v9779 = vadd.f32 %v9397, %v9778
        %v9780 = vpop.f32.mrb[0].mxu0
        %v9781 = vadd.f32 %v9401, %v9780
        %v9782 = vpop.f32.mrb[0].mxu0
        %v9783 = vadd.f32 %v9397, %v9782
        %v9784 = vpop.f32.mrb[0].mxu0
        %v9785 = vadd.f32 %v9401, %v9784
        %9786 = vmatprep.mubr.bf16.mxu0 %v9277
        %9787 = vmatmul.mubr.bf16.gmra.mrb[0].mxu0 %v9276
        %v9788 = vpop.f32.mrb[0].mxu0
        %v9789 = vadd.f32 %v9397, %v9788
        %v9790 = vpop.f32.mrb[0].mxu0
        %v9791 = vadd.f32 %v9401, %v9790
        %v9792 = vpop.f32.mrb[0].mxu0
        %v9793 = vadd.f32 %v9397, %v9792
        %v9794 = vpop.f32.mrb[0].mxu0
        %v9795 = vadd.f32 %v9401, %v9794
        %9796 = vmatprep.mubr.bf16.mxu0 %v9281
        %9797 = vmatmul.mubr.bf16.gmra.mrb[0].mxu0 %v9280
        %v9798 = vpop.f32.mrb[0].mxu0
        %v9799 = vadd.f32 %v9397, %v9798
        %v9800 = vpop.f32.mrb[0].mxu0
        %v9801 = vadd.f32 %v9401, %v9800
        %v9802 = vpop.f32.mrb[0].mxu0
        %v9803 = vadd.f32 %v9397, %v9802
        %v9804 = vpop.f32.mrb[0].mxu0
        %v9805 = vadd.f32 %v9401, %v9804
        %9806 = vmatprep.mubr.bf16.mxu0 %v9285
        %9807 = vmatmul.mubr.bf16.gmra.mrb[0].mxu0 %v9284
        %v9808 = vpop.f32.mrb[0].mxu0
        %v9809 = vadd.f32 %v9397, %v9808
        %v9810 = vpop.f32.mrb[0].mxu0
        %v9811 = vadd.f32 %v9401, %v9810
        %v9812 = vpop.f32.mrb[0].mxu0
        %v9813 = vadd.f32 %v9397, %v9812
        %v9814 = vpop.f32.mrb[0].mxu0
        %v9815 = vadd.f32 %v9401, %v9814
        %9816 = vmatprep.mubr.bf16.mxu0 %v9289
        %9817 = vmatmul.mubr.bf16.gmra.mrb[0].mxu0 %v9288
        %v9818 = vpop.f32.mrb[0].mxu0
        %v9819 = vadd.f32 %v9397, %v9818
        %v9820 = vpop.f32.mrb[0].mxu0
        %v9821 = vadd.f32 %v9401, %v9820
        %v9822 = vpop.f32.mrb[0].mxu0
        %v9823 = vadd.f32 %v9397, %v9822
        %v9824 = vpop.f32.mrb[0].mxu0
        %v9825 = vadd.f32 %v9401, %v9824
        %9826 = vmatprep.mubr.bf16.mxu0 %v9293
        %9827 = vmatmul.mubr.bf16.gmra.mrb[0].mxu0 %v9292
        %v9828 = vpop.f32.mrb[0].mxu0
        %v9829 = vadd.f32 %v9397, %v9828
        %v9830 = vpop.f32.mrb[0].mxu0
        %v9831 = vadd.f32 %v9401, %v9830
        %v9832 = vpop.f32.mrb[0].mxu0
        %v9833 = vadd.f32 %v9397, %v9832
        %v9834 = vpop.f32.mrb[0].mxu0
        %v9835 = vadd.f32 %v9401, %v9834
        %9836 = vmatprep.mubr.bf16.mxu0 %v9297
        %9837 = vmatmul.mubr.bf16.gmra.mrb[0].mxu0 %v9296
        %v9838 = vpop.f32.mrb[0].mxu0
        %v9839 = vadd.f32 %v9397, %v9838
        %v9840 = vpop.f32.mrb[0].mxu0
        %v9841 = vadd.f32 %v9401, %v9840
        %v9842 = vpop.f32.mrb[0].mxu0
        %v9843 = vadd.f32 %v9397, %v9842
        %v9844 = vpop.f32.mrb[0].mxu0
        %v9845 = vadd.f32 %v9401, %v9844
        %9846 = vmatprep.mubr.bf16.mxu0 %v9301
        %9847 = vmatmul.mubr.bf16.gmra.mrb[0].mxu0 %v9300
        %v9848 = vpop.f32.mrb[0].mxu0
        %v9849 = vadd.f32 %v9397, %v9848
        %v9850 = vpop.f32.mrb[0].mxu0
        %v9851 = vadd.f32 %v9401, %v9850
        %v9852 = vpop.f32.mrb[0].mxu0
        %v9853 = vadd.f32 %v9397, %v9852
        %v9854 = vpop.f32.mrb[0].mxu0
        %v9855 = vadd.f32 %v9401, %v9854
        %9856 = vmatprep.mubr.bf16.mxu0 %v9305
        %9857 = vmatmul.mubr.bf16.gmra.mrb[0].mxu0 %v9304
        %v9858 = vpop.f32.mrb[0].mxu0
        %v9859 = vadd.f32 %v9397, %v9858
        %v9860 = vpop.f32.mrb[0].mxu0
        %v9861 = vadd.f32 %v9401, %v9860
        %v9862 = vpop.f32.mrb[0].mxu0
        %v9863 = vadd.f32 %v9397, %v9862
        %v9864 = vpop.f32.mrb[0].mxu0
        %v9865 = vadd.f32 %v9401, %v9864
        %9866 = vmatprep.mubr.bf16.mxu0 %v9309
        %9867 = vmatmul.mubr.bf16.gmra.mrb[0].mxu0 %v9308
        %v9868 = vpop.f32.mrb[0].mxu0
        %v9869 = vadd.f32 %v9397, %v9868
        %v9870 = vpop.f32.mrb[0].mxu0
        %v9871 = vadd.f32 %v9401, %v9870
        %v9872 = vpop.f32.mrb[0].mxu0
        %v9873 = vadd.f32 %v9397, %v9872
        %v9874 = vpop.f32.mrb[0].mxu0
        %v9875 = vadd.f32 %v9401, %v9874
        %9876 = vmatprep.mubr.bf16.mxu0 %v9313
        %9877 = vmatmul.mubr.bf16.gmra.mrb[0].mxu0 %v9312
        %v9878 = vpop.f32.mrb[0].mxu0
        %v9879 = vadd.f32 %v9397, %v9878
        %v9880 = vpop.f32.mrb[0].mxu0
        %v9881 = vadd.f32 %v9401, %v9880
        %v9882 = vpop.f32.mrb[0].mxu0
        %v9883 = vadd.f32 %v9397, %v9882
        %v9884 = vpop.f32.mrb[0].mxu0
        %v9885 = vadd.f32 %v9401, %v9884
        %9886 = vmatprep.mubr.bf16.mxu0 %v9317
        %9887 = vmatmul.mubr.bf16.gmra.mrb[0].mxu0 %v9316
        %v9888 = vpop.f32.mrb[0].mxu0
        %v9889 = vadd.f32 %v9397, %v9888
        %v9890 = vpop.f32.mrb[0].mxu0
        %v9891 = vadd.f32 %v9401, %v9890
        %v9892 = vpop.f32.mrb[0].mxu0
        %v9893 = vadd.f32 %v9397, %v9892
        %v9894 = vpop.f32.mrb[0].mxu0
        %v9895 = vadd.f32 %v9401, %v9894
        %9896 = vmatprep.mubr.bf16.mxu0 %v9321
        %9897 = vmatmul.mubr.bf16.gmra.mrb[0].mxu0 %v9320
        %v9898 = vpop.f32.mrb[0].mxu0
        %v9899 = vadd.f32 %v9397, %v9898
        %v9900 = vpop.f32.mrb[0].mxu0
        %v9901 = vadd.f32 %v9401, %v9900
        %v9902 = vpop.f32.mrb[0].mxu0
        %v9903 = vadd.f32 %v9397, %v9902
        %v9904 = vpop.f32.mrb[0].mxu0
        %v9905 = vadd.f32 %v9401, %v9904
        %9906 = vmatprep.mubr.bf16.mxu0 %v9325
        %9907 = vmatmul.mubr.bf16.gmra.mrb[0].mxu0 %v9324
        %v9908 = vpop.f32.mrb[0].mxu0
        %v9909 = vadd.f32 %v9397, %v9908
        %v9910 = vpop.f32.mrb[0].mxu0
        %v9911 = vadd.f32 %v9401, %v9910
        %v9912 = vpop.f32.mrb[0].mxu0
        %v9913 = vadd.f32 %v9397, %v9912
        %v9914 = vpop.f32.mrb[0].mxu0
        %v9915 = vadd.f32 %v9401, %v9914
        %9916 = vdwg.mxu0
        %9917 = vmatprep.subr.bf16.mxu0 %v9629
        %9918 = vmatpush1.bf16.msra.mxu0 %v9628
        %9919 = vmatprep.subr.bf16.mxu0 %v9631
        %9920 = vmatpush1.bf16.msra.mxu0 %v9630
        %9921 = vmatprep.subr.bf16.mxu0 %v9633
        %9922 = vmatpush1.bf16.msra.mxu0 %v9632
        %9923 = vmatprep.subr.bf16.mxu0 %v9635
        %9924 = vmatpush1.bf16.msra.mxu0 %v9634
        %9925 = vmatprep.subr.bf16.mxu0 %v9637
        %9926 = vmatpush1.bf16.msra.mxu0 %v9636
        %9927 = vmatprep.subr.bf16.mxu0 %v9639
        %9928 = vmatpush1.bf16.msra.mxu0 %v9638
        %9929 = vmatprep.subr.bf16.mxu0 %v9641
        %9930 = vmatpush1.bf16.msra.mxu0 %v9640
        %9931 = vmatprep.subr.bf16.mxu0 %v9643
        %9932 = vmatpush1.bf16.msra.mxu0 %v9642
        %9933 = vmatprep.subr.bf16.mxu0 %v9645
        %9934 = vmatpush1.bf16.msra.mxu0 %v9644
        %9935 = vmatprep.subr.bf16.mxu0 %v9647
        %9936 = vmatpush1.bf16.msra.mxu0 %v9646
        %9937 = vmatprep.subr.bf16.mxu0 %v9649
        %9938 = vmatpush1.bf16.msra.mxu0 %v9648
        %9939 = vmatprep.subr.bf16.mxu0 %v9651
        %9940 = vmatpush1.bf16.msra.mxu0 %v9650
        %9941 = vmatprep.subr.bf16.mxu0 %v9653
        %9942 = vmatpush1.bf16.msra.mxu0 %v9652
        %9943 = vmatprep.subr.bf16.mxu0 %v9655
        %9944 = vmatpush1.bf16.msra.mxu0 %v9654
        %9945 = vmatprep.subr.bf16.mxu0 %v9657
        %9946 = vmatpush1.bf16.msra.mxu0 %v9656
        %9947 = vmatprep.subr.bf16.mxu0 %v9659
        %9948 = vmatpush1.bf16.msra.mxu0 %v9658
        %9949 = vmatprep.mubr.bf16.mxu0 %v9267
        %9950 = vmatmul.mubr.bf16.gmra.mrb[0].mxu0 %v9266
        %v9951 = vpop.f32.mrb[0].mxu0
        %v9952 = vadd.f32 %v9759, %v9951
        %v9953 = vpop.f32.mrb[0].mxu0
        %v9954 = vadd.f32 %v9761, %v9953
        %v9955 = vpop.f32.mrb[0].mxu0
        %v9956 = vadd.f32 %v9763, %v9955
        %v9957 = vpop.f32.mrb[0].mxu0
        %v9958 = vadd.f32 %v9765, %v9957
        %9959 = vmatprep.mubr.bf16.mxu0 %v9271
        %9960 = vmatmul.mubr.bf16.gmra.mrb[0].mxu0 %v9270
        %v9961 = vpop.f32.mrb[0].mxu0
        %v9962 = vadd.f32 %v9769, %v9961
        %v9963 = vpop.f32.mrb[0].mxu0
        %v9964 = vadd.f32 %v9771, %v9963
        %v9965 = vpop.f32.mrb[0].mxu0
        %v9966 = vadd.f32 %v9773, %v9965
        %v9967 = vpop.f32.mrb[0].mxu0
        %v9968 = vadd.f32 %v9775, %v9967
        %9969 = vmatprep.mubr.bf16.mxu0 %v9275
        %9970 = vmatmul.mubr.bf16.gmra.mrb[0].mxu0 %v9274
        %v9971 = vpop.f32.mrb[0].mxu0
        %v9972 = vadd.f32 %v9779, %v9971
        %v9973 = vpop.f32.mrb[0].mxu0
        %v9974 = vadd.f32 %v9781, %v9973
        %v9975 = vpop.f32.mrb[0].mxu0
        %v9976 = vadd.f32 %v9783, %v9975
        %v9977 = vpop.f32.mrb[0].mxu0
        %v9978 = vadd.f32 %v9785, %v9977
        %9979 = vmatprep.mubr.bf16.mxu0 %v9279
        %9980 = vmatmul.mubr.bf16.gmra.mrb[0].mxu0 %v9278
        %v9981 = vpop.f32.mrb[0].mxu0
        %v9982 = vadd.f32 %v9789, %v9981
        %v9983 = vpop.f32.mrb[0].mxu0
        %v9984 = vadd.f32 %v9791, %v9983
        %v9985 = vpop.f32.mrb[0].mxu0
        %v9986 = vadd.f32 %v9793, %v9985
        %v9987 = vpop.f32.mrb[0].mxu0
        %v9988 = vadd.f32 %v9795, %v9987
        %9989 = vmatprep.mubr.bf16.mxu0 %v9283
        %9990 = vmatmul.mubr.bf16.gmra.mrb[0].mxu0 %v9282
        %v9991 = vpop.f32.mrb[0].mxu0
        %v9992 = vadd.f32 %v9799, %v9991
        %v9993 = vpop.f32.mrb[0].mxu0
        %v9994 = vadd.f32 %v9801, %v9993
        %v9995 = vpop.f32.mrb[0].mxu0
        %v9996 = vadd.f32 %v9803, %v9995
        %v9997 = vpop.f32.mrb[0].mxu0
        %v9998 = vadd.f32 %v9805, %v9997
        %9999 = vmatprep.mubr.bf16.mxu0 %v9287
        %10000 = vmatmul.mubr.bf16.gmra.mrb[0].mxu0 %v9286
        %v10001 = vpop.f32.mrb[0].mxu0
        %v10002 = vadd.f32 %v9809, %v10001
        %v10003 = vpop.f32.mrb[0].mxu0
        %v10004 = vadd.f32 %v9811, %v10003
        %v10005 = vpop.f32.mrb[0].mxu0
        %v10006 = vadd.f32 %v9813, %v10005
        %v10007 = vpop.f32.mrb[0].mxu0
        %v10008 = vadd.f32 %v9815, %v10007
        %10009 = vmatprep.mubr.bf16.mxu0 %v9291
        %10010 = vmatmul.mubr.bf16.gmra.mrb[0].mxu0 %v9290
        %v10011 = vpop.f32.mrb[0].mxu0
        %v10012 = vadd.f32 %v9819, %v10011
        %v10013 = vpop.f32.mrb[0].mxu0
        %v10014 = vadd.f32 %v9821, %v10013
        %v10015 = vpop.f32.mrb[0].mxu0
        %v10016 = vadd.f32 %v9823, %v10015
        %v10017 = vpop.f32.mrb[0].mxu0
        %v10018 = vadd.f32 %v9825, %v10017
        %10019 = vmatprep.mubr.bf16.mxu0 %v9295
        %10020 = vmatmul.mubr.bf16.gmra.mrb[0].mxu0 %v9294
        %v10021 = vpop.f32.mrb[0].mxu0
        %v10022 = vadd.f32 %v9829, %v10021
        %v10023 = vpop.f32.mrb[0].mxu0
        %v10024 = vadd.f32 %v9831, %v10023
        %v10025 = vpop.f32.mrb[0].mxu0
        %v10026 = vadd.f32 %v9833, %v10025
        %v10027 = vpop.f32.mrb[0].mxu0
        %v10028 = vadd.f32 %v9835, %v10027
        %10029 = vmatprep.mubr.bf16.mxu0 %v9299
        %10030 = vmatmul.mubr.bf16.gmra.mrb[0].mxu0 %v9298
        %v10031 = vpop.f32.mrb[0].mxu0
        %v10032 = vadd.f32 %v9839, %v10031
        %v10033 = vpop.f32.mrb[0].mxu0
        %v10034 = vadd.f32 %v9841, %v10033
        %v10035 = vpop.f32.mrb[0].mxu0
        %v10036 = vadd.f32 %v9843, %v10035
        %v10037 = vpop.f32.mrb[0].mxu0
        %v10038 = vadd.f32 %v9845, %v10037
        %10039 = vmatprep.mubr.bf16.mxu0 %v9303
        %10040 = vmatmul.mubr.bf16.gmra.mrb[0].mxu0 %v9302
        %v10041 = vpop.f32.mrb[0].mxu0
        %v10042 = vadd.f32 %v9849, %v10041
        %v10043 = vpop.f32.mrb[0].mxu0
        %v10044 = vadd.f32 %v9851, %v10043
        %v10045 = vpop.f32.mrb[0].mxu0
        %v10046 = vadd.f32 %v9853, %v10045
        %v10047 = vpop.f32.mrb[0].mxu0
        %v10048 = vadd.f32 %v9855, %v10047
        %10049 = vmatprep.mubr.bf16.mxu0 %v9307
        %10050 = vmatmul.mubr.bf16.gmra.mrb[0].mxu0 %v9306
        %v10051 = vpop.f32.mrb[0].mxu0
        %v10052 = vadd.f32 %v9859, %v10051
        %v10053 = vpop.f32.mrb[0].mxu0
        %v10054 = vadd.f32 %v9861, %v10053
        %v10055 = vpop.f32.mrb[0].mxu0
        %v10056 = vadd.f32 %v9863, %v10055
        %v10057 = vpop.f32.mrb[0].mxu0
        %v10058 = vadd.f32 %v9865, %v10057
        %10059 = vmatprep.mubr.bf16.mxu0 %v9311
        %10060 = vmatmul.mubr.bf16.gmra.mrb[0].mxu0 %v9310
        %v10061 = vpop.f32.mrb[0].mxu0
        %v10062 = vadd.f32 %v9869, %v10061
        %v10063 = vpop.f32.mrb[0].mxu0
        %v10064 = vadd.f32 %v9871, %v10063
        %v10065 = vpop.f32.mrb[0].mxu0
        %v10066 = vadd.f32 %v9873, %v10065
        %v10067 = vpop.f32.mrb[0].mxu0
        %v10068 = vadd.f32 %v9875, %v10067
        %10069 = vmatprep.mubr.bf16.mxu0 %v9315
        %10070 = vmatmul.mubr.bf16.gmra.mrb[0].mxu0 %v9314
        %v10071 = vpop.f32.mrb[0].mxu0
        %v10072 = vadd.f32 %v9879, %v10071
        %v10073 = vpop.f32.mrb[0].mxu0
        %v10074 = vadd.f32 %v9881, %v10073
        %v10075 = vpop.f32.mrb[0].mxu0
        %v10076 = vadd.f32 %v9883, %v10075
        %v10077 = vpop.f32.mrb[0].mxu0
        %v10078 = vadd.f32 %v9885, %v10077
        %10079 = vmatprep.mubr.bf16.mxu0 %v9319
        %10080 = vmatmul.mubr.bf16.gmra.mrb[0].mxu0 %v9318
        %v10081 = vpop.f32.mrb[0].mxu0
        %v10082 = vadd.f32 %v9889, %v10081
        %v10083 = vpop.f32.mrb[0].mxu0
        %v10084 = vadd.f32 %v9891, %v10083
        %v10085 = vpop.f32.mrb[0].mxu0
        %v10086 = vadd.f32 %v9893, %v10085
        %v10087 = vpop.f32.mrb[0].mxu0
        %v10088 = vadd.f32 %v9895, %v10087
        %10089 = vmatprep.mubr.bf16.mxu0 %v9323
        %10090 = vmatmul.mubr.bf16.gmra.mrb[0].mxu0 %v9322
        %v10091 = vpop.f32.mrb[0].mxu0
        %v10092 = vadd.f32 %v9899, %v10091
        %v10093 = vpop.f32.mrb[0].mxu0
        %v10094 = vadd.f32 %v9901, %v10093
        %v10095 = vpop.f32.mrb[0].mxu0
        %v10096 = vadd.f32 %v9903, %v10095
        %v10097 = vpop.f32.mrb[0].mxu0
        %v10098 = vadd.f32 %v9905, %v10097
        %10099 = vmatprep.mubr.bf16.mxu0 %v9327
        %10100 = vmatmul.mubr.bf16.gmra.mrb[0].mxu0 %v9326
        %v10101 = vpop.f32.mrb[0].mxu0
        %v10102 = vadd.f32 %v9909, %v10101
        %v10103 = vpop.f32.mrb[0].mxu0
        %v10104 = vadd.f32 %v9911, %v10103
        %v10105 = vpop.f32.mrb[0].mxu0
        %v10106 = vadd.f32 %v9913, %v10105
        %v10107 = vpop.f32.mrb[0].mxu0
        %v10108 = vadd.f32 %v9915, %v10107
        %10109 = vdwg.mxu0
        %v10110 = vmax.f32 %v9952, 0.0
        %v10111 = vmax.f32 %v9954, 0.0
        %v10112 = vmax.f32 %v9956, 0.0
        %v10113 = vmax.f32 %v9958, 0.0
        %v10114 = vmax.f32 %v9962, 0.0
        %v10115 = vmax.f32 %v9964, 0.0
        %v10116 = vmax.f32 %v9966, 0.0
        %v10117 = vmax.f32 %v9968, 0.0
        %v10118 = vmax.f32 %v9972, 0.0
        %v10119 = vmax.f32 %v9974, 0.0
        %v10120 = vmax.f32 %v9976, 0.0
        %v10121 = vmax.f32 %v9978, 0.0
        %v10122 = vmax.f32 %v9982, 0.0
        %v10123 = vmax.f32 %v9984, 0.0
        %v10124 = vmax.f32 %v9986, 0.0
        %v10125 = vmax.f32 %v9988, 0.0
        %v10126 = vmax.f32 %v9992, 0.0
        %v10127 = vmax.f32 %v9994, 0.0
        %v10128 = vmax.f32 %v9996, 0.0
        %v10129 = vmax.f32 %v9998, 0.0
        %v10130 = vmax.f32 %v10002, 0.0
        %v10131 = vmax.f32 %v10004, 0.0
        %v10132 = vmax.f32 %v10006, 0.0
        %v10133 = vmax.f32 %v10008, 0.0
        %v10134 = vmax.f32 %v10012, 0.0
        %v10135 = vmax.f32 %v10014, 0.0
        %v10136 = vmax.f32 %v10016, 0.0
        %v10137 = vmax.f32 %v10018, 0.0
        %v10138 = vmax.f32 %v10022, 0.0
        %v10139 = vmax.f32 %v10024, 0.0
        %v10140 = vmax.f32 %v10026, 0.0
        %v10141 = vmax.f32 %v10028, 0.0
        %v10142 = vmax.f32 %v10032, 0.0
        %v10143 = vmax.f32 %v10034, 0.0
        %v10144 = vmax.f32 %v10036, 0.0
        %v10145 = vmax.f32 %v10038, 0.0
        %v10146 = vmax.f32 %v10042, 0.0
        %v10147 = vmax.f32 %v10044, 0.0
        %v10148 = vmax.f32 %v10046, 0.0
        %v10149 = vmax.f32 %v10048, 0.0
        %v10150 = vmax.f32 %v10052, 0.0
        %v10151 = vmax.f32 %v10054, 0.0
        %v10152 = vmax.f32 %v10056, 0.0
        %v10153 = vmax.f32 %v10058, 0.0
        %v10154 = vmax.f32 %v10062, 0.0
        %v10155 = vmax.f32 %v10064, 0.0
        %v10156 = vmax.f32 %v10066, 0.0
        %v10157 = vmax.f32 %v10068, 0.0
        %v10158 = vmax.f32 %v10072, 0.0
        %v10159 = vmax.f32 %v10074, 0.0
        %v10160 = vmax.f32 %v10076, 0.0
        %v10161 = vmax.f32 %v10078, 0.0
        %v10162 = vmax.f32 %v10082, 0.0
        %v10163 = vmax.f32 %v10084, 0.0
        %v10164 = vmax.f32 %v10086, 0.0
        %v10165 = vmax.f32 %v10088, 0.0
        %v10166 = vmax.f32 %v10092, 0.0
        %v10167 = vmax.f32 %v10094, 0.0
        %v10168 = vmax.f32 %v10096, 0.0
        %v10169 = vmax.f32 %v10098, 0.0
        %v10170 = vmax.f32 %v10102, 0.0
        %v10171 = vmax.f32 %v10104, 0.0
        %v10172 = vmax.f32 %v10106, 0.0
        %v10173 = vmax.f32 %v10108, 0.0
        %v10174 = vpack.c.bf16 %v10112, %v10110
        %v10175 = vpack.c.bf16 %v10113, %v10111
        %v10176 = vpack.c.bf16 %v10116, %v10114
        %v10177 = vpack.c.bf16 %v10117, %v10115
        %v10178 = vpack.c.bf16 %v10120, %v10118
        %v10179 = vpack.c.bf16 %v10121, %v10119
        %v10180 = vpack.c.bf16 %v10124, %v10122
        %v10181 = vpack.c.bf16 %v10125, %v10123
        %v10182 = vpack.c.bf16 %v10128, %v10126
        %v10183 = vpack.c.bf16 %v10129, %v10127
        %v10184 = vpack.c.bf16 %v10132, %v10130
        %v10185 = vpack.c.bf16 %v10133, %v10131
        %v10186 = vpack.c.bf16 %v10136, %v10134
        %v10187 = vpack.c.bf16 %v10137, %v10135
        %v10188 = vpack.c.bf16 %v10140, %v10138
        %v10189 = vpack.c.bf16 %v10141, %v10139
        %v10190 = vpack.c.bf16 %v10144, %v10142
        %v10191 = vpack.c.bf16 %v10145, %v10143
        %v10192 = vpack.c.bf16 %v10148, %v10146
        %v10193 = vpack.c.bf16 %v10149, %v10147
        %v10194 = vpack.c.bf16 %v10152, %v10150
        %v10195 = vpack.c.bf16 %v10153, %v10151
        %v10196 = vpack.c.bf16 %v10156, %v10154
        %v10197 = vpack.c.bf16 %v10157, %v10155
        %v10198 = vpack.c.bf16 %v10160, %v10158
        %v10199 = vpack.c.bf16 %v10161, %v10159
        %v10200 = vpack.c.bf16 %v10164, %v10162
        %v10201 = vpack.c.bf16 %v10165, %v10163
        %v10202 = vpack.c.bf16 %v10168, %v10166
        %v10203 = vpack.c.bf16 %v10169, %v10167
        %v10204 = vpack.c.bf16 %v10172, %v10170
        %v10205 = vpack.c.bf16 %v10173, %v10171
        %v10206 = vld [vmem:[#allocation12] sm:$0xf]
        %v10207 = vld [vmem:[#allocation12 + $0x4] sm:$0xf]
        %v10208 = vld [vmem:[#allocation12 + $0x8] sm:$0xf]
        %v10209 = vld [vmem:[#allocation12 + $0xc] sm:$0xf]
        %v10210 = vld [vmem:[#allocation12 + $0x10] sm:$0xf]
        %v10211 = vld [vmem:[#allocation12 + $0x14] sm:$0xf]
        %v10212 = vld [vmem:[#allocation12 + $0x18] sm:$0xf]
        %v10213 = vld [vmem:[#allocation12 + $0x1c] sm:$0xf]
        %v10214 = vld [vmem:[#allocation12 + $0x20] sm:$0xf]
        %v10215 = vld [vmem:[#allocation12 + $0x24] sm:$0xf]
        %v10216 = vld [vmem:[#allocation12 + $0x28] sm:$0xf]
        %v10217 = vld [vmem:[#allocation12 + $0x2c] sm:$0xf]
        %v10218 = vld [vmem:[#allocation12 + $0x30] sm:$0xf]
        %v10219 = vld [vmem:[#allocation12 + $0x34] sm:$0xf]
        %v10220 = vld [vmem:[#allocation12 + $0x38] sm:$0xf]
        %v10221 = vld [vmem:[#allocation12 + $0x3c] sm:$0xf]
        %v10222 = vld [vmem:[#allocation12 + $0x40] sm:$0xf]
        %v10223 = vld [vmem:[#allocation12 + $0x44] sm:$0xf]
        %v10224 = vld [vmem:[#allocation12 + $0x48] sm:$0xf]
        %v10225 = vld [vmem:[#allocation12 + $0x4c] sm:$0xf]
        %v10226 = vld [vmem:[#allocation12 + $0x50] sm:$0xf]
        %v10227 = vld [vmem:[#allocation12 + $0x54] sm:$0xf]
        %v10228 = vld [vmem:[#allocation12 + $0x58] sm:$0xf]
        %v10229 = vld [vmem:[#allocation12 + $0x5c] sm:$0xf]
        %v10230 = vld [vmem:[#allocation12 + $0x60] sm:$0xf]
        %v10231 = vld [vmem:[#allocation12 + $0x64] sm:$0xf]
        %v10232 = vld [vmem:[#allocation12 + $0x68] sm:$0xf]
        %v10233 = vld [vmem:[#allocation12 + $0x6c] sm:$0xf]
        %v10234 = vld [vmem:[#allocation12 + $0x70] sm:$0xf]
        %v10235 = vld [vmem:[#allocation12 + $0x74] sm:$0xf]
        %v10236 = vld [vmem:[#allocation12 + $0x78] sm:$0xf]
        %v10237 = vld [vmem:[#allocation12 + $0x7c] sm:$0xf]
        %v10238 = vld [vmem:[#allocation14] sm:$0x1]
        %v10240 = vlaneseq
        %v10241 = vshrl.u32 %v10240, 7
        %v10242 = vsub.s32 0, %v10241
        %v10243 = vrot.slane %v10238, %v10242
        %v10277 = vunpack.c.l.b16 %v10206
        %v10278 = vunpack.c.l.b16 %v10207
        %v10279 = vunpack.c.l.b16 %v10208
        %v10280 = vunpack.c.l.b16 %v10209
        %v10281 = vunpack.c.l.b16 %v10210
        %v10282 = vunpack.c.l.b16 %v10211
        %v10283 = vunpack.c.l.b16 %v10212
        %v10284 = vunpack.c.l.b16 %v10213
        %v10285 = vunpack.c.l.b16 %v10214
        %v10286 = vunpack.c.l.b16 %v10215
        %v10287 = vunpack.c.l.b16 %v10216
        %v10288 = vunpack.c.l.b16 %v10217
        %v10289 = vunpack.c.l.b16 %v10218
        %v10290 = vunpack.c.l.b16 %v10219
        %v10291 = vunpack.c.l.b16 %v10220
        %v10292 = vunpack.c.l.b16 %v10221
        %v10293 = vunpack.c.l.b16 %v10222
        %v10294 = vunpack.c.l.b16 %v10223
        %v10295 = vunpack.c.l.b16 %v10224
        %v10296 = vunpack.c.l.b16 %v10225
        %v10297 = vunpack.c.l.b16 %v10226
        %v10298 = vunpack.c.l.b16 %v10227
        %v10299 = vunpack.c.l.b16 %v10228
        %v10300 = vunpack.c.l.b16 %v10229
        %v10301 = vunpack.c.l.b16 %v10230
        %v10302 = vunpack.c.l.b16 %v10231
        %v10303 = vunpack.c.l.b16 %v10232
        %v10304 = vunpack.c.l.b16 %v10233
        %v10305 = vunpack.c.l.b16 %v10234
        %v10306 = vunpack.c.l.b16 %v10235
        %v10307 = vunpack.c.l.b16 %v10236
        %v10308 = vunpack.c.l.b16 %v10237
        %v10309 = vpack.c.b16 %v10278, %v10277
        %v10310 = vpack.c.b16 %v10280, %v10279
        %v10311 = vpack.c.b16 %v10282, %v10281
        %v10312 = vpack.c.b16 %v10284, %v10283
        %v10313 = vpack.c.b16 %v10286, %v10285
        %v10314 = vpack.c.b16 %v10288, %v10287
        %v10315 = vpack.c.b16 %v10290, %v10289
        %v10316 = vpack.c.b16 %v10292, %v10291
        %v10317 = vpack.c.b16 %v10294, %v10293
        %v10318 = vpack.c.b16 %v10296, %v10295
        %v10319 = vpack.c.b16 %v10298, %v10297
        %v10320 = vpack.c.b16 %v10300, %v10299
        %v10321 = vpack.c.b16 %v10302, %v10301
        %v10322 = vpack.c.b16 %v10304, %v10303
        %v10323 = vpack.c.b16 %v10306, %v10305
        %v10324 = vpack.c.b16 %v10308, %v10307
        %10341 = vmatprep.subr.bf16.mxu0 0
        %10342 = vmatpush1.bf16.msra.mxu0 %v10309
        %10343 = vmatprep.subr.bf16.mxu0 0
        %10344 = vmatpush1.bf16.msra.mxu0 %v10310
        %10345 = vmatprep.subr.bf16.mxu0 0
        %10346 = vmatpush1.bf16.msra.mxu0 %v10311
        %10347 = vmatprep.subr.bf16.mxu0 0
        %10348 = vmatpush1.bf16.msra.mxu0 %v10312
        %10349 = vmatprep.subr.bf16.mxu0 0
        %10350 = vmatpush1.bf16.msra.mxu0 %v10313
        %10351 = vmatprep.subr.bf16.mxu0 0
        %10352 = vmatpush1.bf16.msra.mxu0 %v10314
        %10353 = vmatprep.subr.bf16.mxu0 0
        %10354 = vmatpush1.bf16.msra.mxu0 %v10315
        %10355 = vmatprep.subr.bf16.mxu0 0
        %10356 = vmatpush1.bf16.msra.mxu0 %v10316
        %10357 = vmatprep.subr.bf16.mxu0 0
        %10358 = vmatpush1.bf16.msra.mxu0 %v10317
        %10359 = vmatprep.subr.bf16.mxu0 0
        %10360 = vmatpush1.bf16.msra.mxu0 %v10318
        %10361 = vmatprep.subr.bf16.mxu0 0
        %10362 = vmatpush1.bf16.msra.mxu0 %v10319
        %10363 = vmatprep.subr.bf16.mxu0 0
        %10364 = vmatpush1.bf16.msra.mxu0 %v10320
        %10365 = vmatprep.subr.bf16.mxu0 0
        %10366 = vmatpush1.bf16.msra.mxu0 %v10321
        %10367 = vmatprep.subr.bf16.mxu0 0
        %10368 = vmatpush1.bf16.msra.mxu0 %v10322
        %10369 = vmatprep.subr.bf16.mxu0 0
        %10370 = vmatpush1.bf16.msra.mxu0 %v10323
        %10371 = vmatprep.subr.bf16.mxu0 0
        %10372 = vmatpush1.bf16.msra.mxu0 %v10324
        %10373 = vmatprep.mubr.bf16.mxu0 %v10175
        %10374 = vmatmul.mubr.bf16.gmra.mrb[0].mxu0 %v10174
        %v10375 = vpop.f32.mrb[0].mxu0
        %v10376 = vadd.f32 %v10243, %v10375
        %v10377 = vpop.f32.mrb[0].mxu0
        %v10378 = vpop.f32.mrb[0].mxu0
        %v10379 = vadd.f32 %v10243, %v10378
        %v10380 = vpop.f32.mrb[0].mxu0
        %10381 = vmatprep.mubr.bf16.mxu0 %v10177
        %10382 = vmatmul.mubr.bf16.gmra.mrb[0].mxu0 %v10176
        %v10383 = vpop.f32.mrb[0].mxu0
        %v10384 = vadd.f32 %v10243, %v10383
        %v10385 = vpop.f32.mrb[0].mxu0
        %v10386 = vpop.f32.mrb[0].mxu0
        %v10387 = vadd.f32 %v10243, %v10386
        %v10388 = vpop.f32.mrb[0].mxu0
        %10389 = vmatprep.mubr.bf16.mxu0 %v10179
        %10390 = vmatmul.mubr.bf16.gmra.mrb[0].mxu0 %v10178
        %v10391 = vpop.f32.mrb[0].mxu0
        %v10392 = vadd.f32 %v10243, %v10391
        %v10393 = vpop.f32.mrb[0].mxu0
        %v10394 = vpop.f32.mrb[0].mxu0
        %v10395 = vadd.f32 %v10243, %v10394
        %v10396 = vpop.f32.mrb[0].mxu0
        %10397 = vmatprep.mubr.bf16.mxu0 %v10181
        %10398 = vmatmul.mubr.bf16.gmra.mrb[0].mxu0 %v10180
        %v10399 = vpop.f32.mrb[0].mxu0
        %v10400 = vadd.f32 %v10243, %v10399
        %v10401 = vpop.f32.mrb[0].mxu0
        %v10402 = vpop.f32.mrb[0].mxu0
        %v10403 = vadd.f32 %v10243, %v10402
        %v10404 = vpop.f32.mrb[0].mxu0
        %10405 = vmatprep.mubr.bf16.mxu0 %v10183
        %10406 = vmatmul.mubr.bf16.gmra.mrb[0].mxu0 %v10182
        %v10407 = vpop.f32.mrb[0].mxu0
        %v10408 = vadd.f32 %v10243, %v10407
        %v10409 = vpop.f32.mrb[0].mxu0
        %v10410 = vpop.f32.mrb[0].mxu0
        %v10411 = vadd.f32 %v10243, %v10410
        %v10412 = vpop.f32.mrb[0].mxu0
        %10413 = vmatprep.mubr.bf16.mxu0 %v10185
        %10414 = vmatmul.mubr.bf16.gmra.mrb[0].mxu0 %v10184
        %v10415 = vpop.f32.mrb[0].mxu0
        %v10416 = vadd.f32 %v10243, %v10415
        %v10417 = vpop.f32.mrb[0].mxu0
        %v10418 = vpop.f32.mrb[0].mxu0
        %v10419 = vadd.f32 %v10243, %v10418
        %v10420 = vpop.f32.mrb[0].mxu0
        %10421 = vmatprep.mubr.bf16.mxu0 %v10187
        %10422 = vmatmul.mubr.bf16.gmra.mrb[0].mxu0 %v10186
        %v10423 = vpop.f32.mrb[0].mxu0
        %v10424 = vadd.f32 %v10243, %v10423
        %v10425 = vpop.f32.mrb[0].mxu0
        %v10426 = vpop.f32.mrb[0].mxu0
        %v10427 = vadd.f32 %v10243, %v10426
        %v10428 = vpop.f32.mrb[0].mxu0
        %10429 = vmatprep.mubr.bf16.mxu0 %v10189
        %10430 = vmatmul.mubr.bf16.gmra.mrb[0].mxu0 %v10188
        %v10431 = vpop.f32.mrb[0].mxu0
        %v10432 = vadd.f32 %v10243, %v10431
        %v10433 = vpop.f32.mrb[0].mxu0
        %v10434 = vpop.f32.mrb[0].mxu0
        %v10435 = vadd.f32 %v10243, %v10434
        %v10436 = vpop.f32.mrb[0].mxu0
        %10437 = vmatprep.mubr.bf16.mxu0 %v10191
        %10438 = vmatmul.mubr.bf16.gmra.mrb[0].mxu0 %v10190
        %v10439 = vpop.f32.mrb[0].mxu0
        %v10440 = vadd.f32 %v10243, %v10439
        %v10441 = vpop.f32.mrb[0].mxu0
        %v10442 = vpop.f32.mrb[0].mxu0
        %v10443 = vadd.f32 %v10243, %v10442
        %v10444 = vpop.f32.mrb[0].mxu0
        %10445 = vmatprep.mubr.bf16.mxu0 %v10193
        %10446 = vmatmul.mubr.bf16.gmra.mrb[0].mxu0 %v10192
        %v10447 = vpop.f32.mrb[0].mxu0
        %v10448 = vadd.f32 %v10243, %v10447
        %v10449 = vpop.f32.mrb[0].mxu0
        %v10450 = vpop.f32.mrb[0].mxu0
        %v10451 = vadd.f32 %v10243, %v10450
        %v10452 = vpop.f32.mrb[0].mxu0
        %10453 = vmatprep.mubr.bf16.mxu0 %v10195
        %10454 = vmatmul.mubr.bf16.gmra.mrb[0].mxu0 %v10194
        %v10455 = vpop.f32.mrb[0].mxu0
        %v10456 = vadd.f32 %v10243, %v10455
        %v10457 = vpop.f32.mrb[0].mxu0
        %v10458 = vpop.f32.mrb[0].mxu0
        %v10459 = vadd.f32 %v10243, %v10458
        %v10460 = vpop.f32.mrb[0].mxu0
        %10461 = vmatprep.mubr.bf16.mxu0 %v10197
        %10462 = vmatmul.mubr.bf16.gmra.mrb[0].mxu0 %v10196
        %v10463 = vpop.f32.mrb[0].mxu0
        %v10464 = vadd.f32 %v10243, %v10463
        %v10465 = vpop.f32.mrb[0].mxu0
        %v10466 = vpop.f32.mrb[0].mxu0
        %v10467 = vadd.f32 %v10243, %v10466
        %v10468 = vpop.f32.mrb[0].mxu0
        %10469 = vmatprep.mubr.bf16.mxu0 %v10199
        %10470 = vmatmul.mubr.bf16.gmra.mrb[0].mxu0 %v10198
        %v10471 = vpop.f32.mrb[0].mxu0
        %v10472 = vadd.f32 %v10243, %v10471
        %v10473 = vpop.f32.mrb[0].mxu0
        %v10474 = vpop.f32.mrb[0].mxu0
        %v10475 = vadd.f32 %v10243, %v10474
        %v10476 = vpop.f32.mrb[0].mxu0
        %10477 = vmatprep.mubr.bf16.mxu0 %v10201
        %10478 = vmatmul.mubr.bf16.gmra.mrb[0].mxu0 %v10200
        %v10479 = vpop.f32.mrb[0].mxu0
        %v10480 = vadd.f32 %v10243, %v10479
        %v10481 = vpop.f32.mrb[0].mxu0
        %v10482 = vpop.f32.mrb[0].mxu0
        %v10483 = vadd.f32 %v10243, %v10482
        %v10484 = vpop.f32.mrb[0].mxu0
        %10485 = vmatprep.mubr.bf16.mxu0 %v10203
        %10486 = vmatmul.mubr.bf16.gmra.mrb[0].mxu0 %v10202
        %v10487 = vpop.f32.mrb[0].mxu0
        %v10488 = vadd.f32 %v10243, %v10487
        %v10489 = vpop.f32.mrb[0].mxu0
        %v10490 = vpop.f32.mrb[0].mxu0
        %v10491 = vadd.f32 %v10243, %v10490
        %v10492 = vpop.f32.mrb[0].mxu0
        %10493 = vmatprep.mubr.bf16.mxu0 %v10205
        %10494 = vmatmul.mubr.bf16.gmra.mrb[0].mxu0 %v10204
        %v10495 = vpop.f32.mrb[0].mxu0
        %v10496 = vadd.f32 %v10243, %v10495
        %v10497 = vpop.f32.mrb[0].mxu0
        %v10498 = vpop.f32.mrb[0].mxu0
        %v10499 = vadd.f32 %v10243, %v10498
        %v10500 = vpop.f32.mrb[0].mxu0
        %10501 = vdwg.mxu0
        %v10502 = vmax.f32 %v10376, 0.0
        %v10503 = vmax.f32 %v10379, 0.0
        %v10504 = vmax.f32 %v10384, 0.0
        %v10505 = vmax.f32 %v10387, 0.0
        %v10506 = vmax.f32 %v10392, 0.0
        %v10507 = vmax.f32 %v10395, 0.0
        %v10508 = vmax.f32 %v10400, 0.0
        %v10509 = vmax.f32 %v10403, 0.0
        %v10510 = vmax.f32 %v10408, 0.0
        %v10511 = vmax.f32 %v10411, 0.0
        %v10512 = vmax.f32 %v10416, 0.0
        %v10513 = vmax.f32 %v10419, 0.0
        %v10514 = vmax.f32 %v10424, 0.0
        %v10515 = vmax.f32 %v10427, 0.0
        %v10516 = vmax.f32 %v10432, 0.0
        %v10517 = vmax.f32 %v10435, 0.0
        %v10518 = vmax.f32 %v10440, 0.0
        %v10519 = vmax.f32 %v10443, 0.0
        %v10520 = vmax.f32 %v10448, 0.0
        %v10521 = vmax.f32 %v10451, 0.0
        %v10522 = vmax.f32 %v10456, 0.0
        %v10523 = vmax.f32 %v10459, 0.0
        %v10524 = vmax.f32 %v10464, 0.0
        %v10525 = vmax.f32 %v10467, 0.0
        %v10526 = vmax.f32 %v10472, 0.0
        %v10527 = vmax.f32 %v10475, 0.0
        %v10528 = vmax.f32 %v10480, 0.0
        %v10529 = vmax.f32 %v10483, 0.0
        %v10530 = vmax.f32 %v10488, 0.0
        %v10531 = vmax.f32 %v10491, 0.0
        %v10532 = vmax.f32 %v10496, 0.0
        %v10533 = vmax.f32 %v10499, 0.0
        %10534 = vxpose.xlu0.b32.start [1/16] %v10502, 128
        %10535 = vxpose.xlu0.b32.cont [2/16] %v10503, 128
        %10536 = vxpose.xlu0.b32.cont [3/16] %v10504, 128
        %10537 = vxpose.xlu0.b32.cont [4/16] %v10505, 128
        %10538 = vxpose.xlu0.b32.cont [5/16] %v10506, 128
        %10539 = vxpose.xlu0.b32.cont [6/16] %v10507, 128
        %10540 = vxpose.xlu0.b32.cont [7/16] %v10508, 128
        %10541 = vxpose.xlu0.b32.cont [8/16] %v10509, 128
        %10542 = vxpose.xlu0.b32.cont [9/16] %v10510, 128
        %10543 = vxpose.xlu0.b32.cont [10/16] %v10511, 128
        %10544 = vxpose.xlu0.b32.cont [11/16] %v10512, 128
        %10545 = vxpose.xlu0.b32.cont [12/16] %v10513, 128
        %10546 = vxpose.xlu0.b32.cont [13/16] %v10514, 128
        %10547 = vxpose.xlu0.b32.cont [14/16] %v10515, 128
        %10548 = vxpose.xlu0.b32.cont [15/16] %v10516, 128
        %10549 = vxpose.xlu0.b32.end [16/16] %v10517, 128
        %v10550 = vpop.trf.xlu0
        %v10551 = vpop.trf.xlu0
        %v10552 = vpop.trf.xlu0
        %v10553 = vpop.trf.xlu0
        %v10554 = vpop.trf.xlu0
        %v10555 = vpop.trf.xlu0
        %v10556 = vpop.trf.xlu0
        %v10557 = vpop.trf.xlu0
        %v10558 = vpop.trf.xlu0
        %v10559 = vpop.trf.xlu0
        %v10560 = vpop.trf.xlu0
        %v10561 = vpop.trf.xlu0
        %v10562 = vpop.trf.xlu0
        %v10563 = vpop.trf.xlu0
        %v10564 = vpop.trf.xlu0
        %v10565 = vpop.trf.xlu0
        %10566 = vxpose.xlu0.b32.start [1/16] %v10518, 128
        %10567 = vxpose.xlu0.b32.cont [2/16] %v10519, 128
        %10568 = vxpose.xlu0.b32.cont [3/16] %v10520, 128
        %10569 = vxpose.xlu0.b32.cont [4/16] %v10521, 128
        %10570 = vxpose.xlu0.b32.cont [5/16] %v10522, 128
        %10571 = vxpose.xlu0.b32.cont [6/16] %v10523, 128
        %10572 = vxpose.xlu0.b32.cont [7/16] %v10524, 128
        %10573 = vxpose.xlu0.b32.cont [8/16] %v10525, 128
        %10574 = vxpose.xlu0.b32.cont [9/16] %v10526, 128
        %10575 = vxpose.xlu0.b32.cont [10/16] %v10527, 128
        %10576 = vxpose.xlu0.b32.cont [11/16] %v10528, 128
        %10577 = vxpose.xlu0.b32.cont [12/16] %v10529, 128
        %10578 = vxpose.xlu0.b32.cont [13/16] %v10530, 128
        %10579 = vxpose.xlu0.b32.cont [14/16] %v10531, 128
        %10580 = vxpose.xlu0.b32.cont [15/16] %v10532, 128
        %10581 = vxpose.xlu0.b32.end [16/16] %v10533, 128
        %v10582 = vpop.trf.xlu0
        %v10583 = vpop.trf.xlu0
        %v10584 = vpop.trf.xlu0
        %v10585 = vpop.trf.xlu0
        %v10586 = vpop.trf.xlu0
        %v10587 = vpop.trf.xlu0
        %v10588 = vpop.trf.xlu0
        %v10589 = vpop.trf.xlu0
        %v10590 = vpop.trf.xlu0
        %v10591 = vpop.trf.xlu0
        %v10592 = vpop.trf.xlu0
        %v10593 = vpop.trf.xlu0
        %v10594 = vpop.trf.xlu0
        %v10595 = vpop.trf.xlu0
        %v10596 = vpop.trf.xlu0
        %v10597 = vpop.trf.xlu0
        %v10598 = vld [vmem:[%s7] sm:$0xff]
        %v10599 = vld [vmem:[%s7 + $0x8] sm:$0xff]
        %v10600 = vld [vmem:[%s7 + $0x10] sm:$0xff]
        %v10601 = vld [vmem:[%s7 + $0x18] sm:$0xff]
        %v10602 = vld [vmem:[%s7 + $0x20] sm:$0xff]
        %v10603 = vld [vmem:[%s7 + $0x28] sm:$0xff]
        %v10604 = vld [vmem:[%s7 + $0x30] sm:$0xff]
        %v10605 = vld [vmem:[%s7 + $0x38] sm:$0xff]
        %v10606 = vld [vmem:[%s7 + $0x40] sm:$0xff]
        %v10607 = vld [vmem:[%s7 + $0x48] sm:$0xff]
        %v10608 = vld [vmem:[%s7 + $0x50] sm:$0xff]
        %v10609 = vld [vmem:[%s7 + $0x58] sm:$0xff]
        %v10610 = vld [vmem:[%s7 + $0x60] sm:$0xff]
        %v10611 = vld [vmem:[%s7 + $0x68] sm:$0xff]
        %v10612 = vld [vmem:[%s7 + $0x70] sm:$0xff]
        %v10613 = vld [vmem:[%s7 + $0x78] sm:$0xff]
        %10615 = vset.pattern.permute.xlu0 0
        %10616 = vperm.xlu0 %10615, %v10598
        %v10617 = vpop.permute.xlu0 %10616
        %10620 = vset.pattern.permute.xlu0 0
        %10621 = vperm.xlu0 %10620, %v10599
        %v10622 = vpop.permute.xlu0 %10621
        %10625 = vset.pattern.permute.xlu0 0
        %10626 = vperm.xlu0 %10625, %v10600
        %v10627 = vpop.permute.xlu0 %10626
        %10630 = vset.pattern.permute.xlu0 0
        %10631 = vperm.xlu0 %10630, %v10601
        %v10632 = vpop.permute.xlu0 %10631
        %10635 = vset.pattern.permute.xlu0 0
        %10636 = vperm.xlu0 %10635, %v10602
        %v10637 = vpop.permute.xlu0 %10636
        %10640 = vset.pattern.permute.xlu0 0
        %10641 = vperm.xlu0 %10640, %v10603
        %v10642 = vpop.permute.xlu0 %10641
        %10645 = vset.pattern.permute.xlu0 0
        %10646 = vperm.xlu0 %10645, %v10604
        %v10647 = vpop.permute.xlu0 %10646
        %10650 = vset.pattern.permute.xlu0 0
        %10651 = vperm.xlu0 %10650, %v10605
        %v10652 = vpop.permute.xlu0 %10651
        %10655 = vset.pattern.permute.xlu0 0
        %10656 = vperm.xlu0 %10655, %v10606
        %v10657 = vpop.permute.xlu0 %10656
        %10660 = vset.pattern.permute.xlu0 0
        %10661 = vperm.xlu0 %10660, %v10607
        %v10662 = vpop.permute.xlu0 %10661
        %10665 = vset.pattern.permute.xlu0 0
        %10666 = vperm.xlu0 %10665, %v10608
        %v10667 = vpop.permute.xlu0 %10666
        %10670 = vset.pattern.permute.xlu0 0
        %10671 = vperm.xlu0 %10670, %v10609
        %v10672 = vpop.permute.xlu0 %10671
        %10675 = vset.pattern.permute.xlu0 0
        %10676 = vperm.xlu0 %10675, %v10610
        %v10677 = vpop.permute.xlu0 %10676
        %10680 = vset.pattern.permute.xlu0 0
        %10681 = vperm.xlu0 %10680, %v10611
        %v10682 = vpop.permute.xlu0 %10681
        %10685 = vset.pattern.permute.xlu0 0
        %10686 = vperm.xlu0 %10685, %v10612
        %v10687 = vpop.permute.xlu0 %10686
        %10690 = vset.pattern.permute.xlu0 0
        %10691 = vperm.xlu0 %10690, %v10613
        %v10692 = vpop.permute.xlu0 %10691
        %v10694 = vmul.f32 %v10550, %v10617
        %v10695 = vmul.f32 %v10582, %v10617
        %v10696 = vmul.f32 %v10551, %v10622
        %v10697 = vmul.f32 %v10583, %v10622
        %v10698 = vmul.f32 %v10552, %v10627
        %v10699 = vmul.f32 %v10584, %v10627
        %v10700 = vmul.f32 %v10553, %v10632
        %v10701 = vmul.f32 %v10585, %v10632
        %v10702 = vmul.f32 %v10554, %v10637
        %v10703 = vmul.f32 %v10586, %v10637
        %v10704 = vmul.f32 %v10555, %v10642
        %v10705 = vmul.f32 %v10587, %v10642
        %v10706 = vmul.f32 %v10556, %v10647
        %v10707 = vmul.f32 %v10588, %v10647
        %v10708 = vmul.f32 %v10557, %v10652
        %v10709 = vmul.f32 %v10589, %v10652
        %v10710 = vmul.f32 %v10558, %v10657
        %v10711 = vmul.f32 %v10590, %v10657
        %v10712 = vmul.f32 %v10559, %v10662
        %v10713 = vmul.f32 %v10591, %v10662
        %v10714 = vmul.f32 %v10560, %v10667
        %v10715 = vmul.f32 %v10592, %v10667
        %v10716 = vmul.f32 %v10561, %v10672
        %v10717 = vmul.f32 %v10593, %v10672
        %v10718 = vmul.f32 %v10562, %v10677
        %v10719 = vmul.f32 %v10594, %v10677
        %v10720 = vmul.f32 %v10563, %v10682
        %v10721 = vmul.f32 %v10595, %v10682
        %v10722 = vmul.f32 %v10564, %v10687
        %v10723 = vmul.f32 %v10596, %v10687
        %v10724 = vmul.f32 %v10565, %v10692
        %v10725 = vmul.f32 %v10597, %v10692
        %v10726 = vadd.f32 %v10694, %v10696
        %v10727 = vadd.f32 %v10726, %v10698
        %v10728 = vadd.f32 %v10727, %v10700
        %v10729 = vadd.f32 %v10728, %v10702
        %v10730 = vadd.f32 %v10729, %v10704
        %v10731 = vadd.f32 %v10730, %v10706
        %v10732 = vadd.f32 %v10731, %v10708
        %v10733 = vadd.f32 %v10732, %v10710
        %v10734 = vadd.f32 %v10733, %v10712
        %v10735 = vadd.f32 %v10734, %v10714
        %v10736 = vadd.f32 %v10735, %v10716
        %v10737 = vadd.f32 %v10736, %v10718
        %v10738 = vadd.f32 %v10737, %v10720
        %v10739 = vadd.f32 %v10738, %v10722
        %v10740 = vadd.f32 %v10739, %v10724
        %v10741 = vrot.slane %v10740, 4
        %v10742 = vadd.f32 %v10740, %v10741
        %v10743 = vrot.slane %v10742, 2
        %v10744 = vadd.f32 %v10742, %v10743
        %v10745 = vrot.slane %v10744, 1
        %v10746 = vadd.f32 %v10744, %v10745
        %v10747 = vadd.f32 %v10695, %v10697
        %v10748 = vadd.f32 %v10747, %v10699
        %v10749 = vadd.f32 %v10748, %v10701
        %v10750 = vadd.f32 %v10749, %v10703
        %v10751 = vadd.f32 %v10750, %v10705
        %v10752 = vadd.f32 %v10751, %v10707
        %v10753 = vadd.f32 %v10752, %v10709
        %v10754 = vadd.f32 %v10753, %v10711
        %v10755 = vadd.f32 %v10754, %v10713
        %v10756 = vadd.f32 %v10755, %v10715
        %v10757 = vadd.f32 %v10756, %v10717
        %v10758 = vadd.f32 %v10757, %v10719
        %v10759 = vadd.f32 %v10758, %v10721
        %v10760 = vadd.f32 %v10759, %v10723
        %v10761 = vadd.f32 %v10760, %v10725
        %v10762 = vrot.slane %v10761, 4
        %v10763 = vadd.f32 %v10761, %v10762
        %v10764 = vrot.slane %v10763, 2
        %v10765 = vadd.f32 %v10763, %v10764
        %v10766 = vrot.slane %v10765, 1
        %v10767 = vadd.f32 %v10765, %v10766
        %v10768 = vld [vmem:[#allocation2] sm:$0x1]
        %10770 = vset.pattern.permute.xlu0 0
        %10771 = vperm.xlu0 %10770, %v10768
        %v10772 = vpop.permute.xlu0 %10771
        %v10774 = vlaneseq
        %v10775 = vshrl.u32 %v10774, 7
        %v10776 = vsub.s32 0, %v10775
        %v10777 = vrot.slane %v10772, %v10776
        %v10778 = vadd.f32 %v10746, %v10777
        %v10779 = vadd.f32 %v10767, %v10777
        %v10782 = vcombine.low %v10778, %v10779
        %v10784 = vunpack.c.l.s4 1966171168
        %v10785 = vunpack.c.0.s8 %v10784
        %v10786 = vlaneseq
        %v10787 = vshrl.u32 %v10786, 7
        %v10788 = vsub.s32 %v10785, %v10787
        %v10789 = vrot.slane %v10782, %v10788
        %v10791 = vunpack.c.l.s4 1966171168
        %v10792 = vunpack.c.0.s8 %v10791
        %v10793 = vlaneseq
        %v10794 = vshrl.u32 %v10793, 7
        %v10795 = vsub.s32 %v10792, %v10794
        %v10796 = vrot.slane %v10789, %v10795
        %v10798 = vlaneseq
        %vm10799 = vcmp.ge.s32.totalorder %v10798, 0
        %vm10800 = vcmp.lt.s32.totalorder %v10798, 256
        %vm10801 = vmand %vm10799, %vm10800
        %10802 = vst.msk [vmem:[%s441] sm:$0x3] %vm10801, %v10796
        %s10803 = sand.u32 %s233, 1
        %s10804 = scalar_lea.sflag [#allocation5], %s10803
        %s10805 = sand.u32 %s233, 1
        %s10806 = smul.addr %s10805, 2
        %s10807 = scalar_lea.vmem [#allocation15], %s10806
        // Predicated region
        $region85: #{tpu_custom_call.1} parent=55 // pred_check
          %p10808 = pneg %p243
        $region86: #{tpu_custom_call.1} parent=55 // pred_check_branch
          %10810 = sbr.rel (%p10808) target = $region88
        $region87: #{tpu_custom_call.1} parent=55 // pred_region
          %s10811 = smul.u32 2, %s31
          %s10812 = ssub.s32 3, %s10811
          %p10813 = scmp.lt.s32.totalorder %s10812, 2
          %s10814 = scalar_select %p10813, %s10812, 2
          %s10815 = smul.u32 16, %s10814
          %s10817 = ssub.s32 32, %s10815
          %10818 = vsyncadd %s10804, %s10817
          %p10819 = scmp.ne.s32.totalorder 0, %s10815
          %s10820 = smul.addr %s10811, 16
          %s10821 = scalar_lea.hbm %s9, %s10820
          %s10822 = sshll.u32 %s10814, 4
          %s10823 = sshll.u32 %s10807, 4
          %s10824 = int_to_ptr.vmem [resolvable:$true] %s10823
          %10826 = dma.vmem_to_hbm [thread:$0]  (%p10819), %s10824, %s10822, %s10821, %s10804
        $region88: #{tpu_custom_call.1} parent=55 // pred_fallthru
          _
      $region56: #{tpu_custom_call.1} parent=5 // pred_fallthru
        _
      %p10827 = scmp.le.s32.totalorder 2, %s26
      // Predicated region
      $region89: #{tpu_custom_call.1} parent=5 // pred_check
        %p10828 = pneg %p10827
      $region90: #{tpu_custom_call.1} parent=5 // pred_check_branch
        %10830 = sbr.rel (%p10828) target = $region92
      $region91: #{tpu_custom_call.1} parent=5 // pred_region
        %s10831 = ssub.s32 %s26, 2
        // Predicated region
        $region93: #{tpu_custom_call.1} parent=91 // pred_check
          %p10832 = pneg %p249
        $region94: #{tpu_custom_call.1} parent=91 // pred_check_branch
          %10834 = sbr.rel (%p10832) target = $region96
        $region95: #{tpu_custom_call.1} parent=91 // pred_region
          %s10835 = sand.u32 %s234, 1
          %s10836 = scalar_lea.sflag [#allocation5], %s10835
          %s10837 = sand.u32 %s234, 1
          %s10838 = smul.addr %s10837, 2
          %s10839 = scalar_lea.vmem [#allocation15], %s10838
          %10840 = dma.done %s10836, 32
        $region96: #{tpu_custom_call.1} parent=91 // pred_fallthru
          _
      $region92: #{tpu_custom_call.1} parent=5 // pred_fallthru
        _
    $region6: #{tpu_custom_call.1} parent=1 // loop_footer
      %s30 = sadd.s32 1, %s26
    $region7: #{tpu_custom_call.1} parent=1 // loop_footer_branch
      %25 = sbr.rel target = $region3
    $region8: #{tpu_custom_call.1} parent=1 // loop_exit
      _
    %10841 = vsyncpa [#allocation4], 1
    %s10842 = scalar_lea.sflag [#allocation4], 1
    %10843 = vsyncpa %s10842, 1
    %10844 = vsyncpa [#allocation7], 1
    %10845 = vsyncpa [#allocation10], 1
    %10846 = vsyncpa [#allocation13], 1
    %10847 = vsyncpa [#allocation5], 1
    %s10848 = scalar_lea.sflag [#allocation5], 1
    %10849 = vsyncpa %s10848, 1

</llo_original>
